<compile_context>
chip_gen: v7x
topology: tpu7x:2x2x1
jax: 0.10.0
libtpu: 0.0.40
codegen_flags: <defaults>
</compile_context>

<pallas_src>
import jax
import jax.numpy as jnp
from jax import lax
from jax.experimental import pallas as pl
from jax.experimental.pallas import tpu as pltpu

KH = 5  # conv kernel height
KW = 5  # conv kernel width
_VMEM_LIMIT = 12 * 1024 * 1024


# ---------------------------------------------------------------------------
# Pallas kernels
# ---------------------------------------------------------------------------
def _conv_relu_pool_kernel(xe0_ref, xe1_ref, w0_ref, w1_ref, b_ref, o_ref):
    """Fused 5x5 conv + bias + ReLU + 2x2/2 max-pool for a tile of pooled rows.

    xe0_ref: (1, tp, K)  input patches for conv rows 2p   (K = KH*(W+4)*Cin), bf16
    xe1_ref: (1, tp, K)  input patches for conv rows 2p+1, bf16
    w0_ref:  (K, F)      Toeplitz weight slab for conv cols 2q   (F = PW*O), bf16
    w1_ref:  (K, F)      Toeplitz weight slab for conv cols 2q+1, bf16
    b_ref:   (1, F)      bias broadcast over pooled cols, f32
    o_ref:   (1, tp, F)  pooled output rows (lane-dense), bf16
    """
    a0 = xe0_ref[0]
    a1 = xe1_ref[0]
    w0 = w0_ref[...]
    w1 = w1_ref[...]
    # The four 2x2 pool candidates: conv rows {2p, 2p+1} x conv cols {2q, 2q+1}.
    y00 = jnp.dot(a0, w0, preferred_element_type=jnp.float32)
    y01 = jnp.dot(a0, w1, preferred_element_type=jnp.float32)
    y10 = jnp.dot(a1, w0, preferred_element_type=jnp.float32)
    y11 = jnp.dot(a1, w1, preferred_element_type=jnp.float32)
    m = jnp.maximum(jnp.maximum(y00, y01), jnp.maximum(y10, y11))
    # bias is constant over the pool window and ReLU is monotone, so
    # maxpool(relu(conv + b)) == relu(max(conv) + b).
    o_ref[0] = jnp.maximum(m + b_ref[...], 0.0).astype(o_ref.dtype)


def _linear_kernel(x_ref, w_ref, b_ref, o_ref):
    """y = x @ w.T + b with f32 accumulation (w kept lane-dense as (Nout, K))."""
    acc = lax.dot_general(
        x_ref[...], w_ref[...],
        dimension_numbers=(((1,), (1,)), ((), ())),
        preferred_element_type=jnp.float32)
    o_ref[...] = (acc + b_ref[...]).astype(o_ref.dtype)


# ---------------------------------------------------------------------------
# Glue helpers (tiny, fused XLA)
# ---------------------------------------------------------------------------
def _pick_tile(ph, cap=128):
    """Pooled-row tile: multiple of 8, <= cap, >= 2 tiles whenever ph > 8."""
    tp = (-(-ph // 2) + 7) // 8 * 8          # ceil(ph/2) rounded up to mult of 8
    tp = max(8, min(cap, tp))
    t = -(-ph // tp)
    return tp, t, tp * t


def _build_patch_rows(x_nhwc, ph):
    """xe_s[n, p, (kh, wi, c)] = xpad[n, 2p + s + kh, wi, c] for s in {0, 1}."""
    n, h, w, c = x_nhwc.shape
    xp = jnp.pad(x_nhwc, ((0, 0), (2, 2), (2, 2), (0, 0)))

    def gather(s):
        taps = [xp[:, s + kh: s + kh + 2 * ph: 2, :, :] for kh in range(KH)]
        xe = jnp.stack(taps, axis=2)                        # (n, ph, KH, w+4, c)
        return xe.reshape(n, ph, KH * (w + 4) * c).astype(jnp.bfloat16)

    return gather(0), gather(1)


def _conv_weight_slabs(w, W, pw):
    """Toeplitz-in-kw slabs: slab_t[(kh, wi, c), (q, o)] = w[o, c, kh, wi-2q-t]."""
    o, c, kh_, kw_ = w.shape
    wp = W + 4
    wt = jnp.transpose(w, (2, 3, 1, 0))                     # (KH, KW, C, O)
    wi = jnp.arange(wp)[:, None]
    q = jnp.arange(pw)[None, :]
    slabs = []
    for t in (0, 1):
        kw = wi - (2 * q + t)                               # (wp, pw)
        valid = (kw >= 0) & (kw < kw_)
        sel = wt[:, jnp.clip(kw, 0, kw_ - 1), :, :]         # (KH, wp, pw, C, O)
        sel = jnp.where(valid[None, :, :, None, None], sel, 0.0)
        slab = jnp.transpose(sel, (0, 1, 3, 2, 4)).reshape(kh_ * wp * c, pw * o)
        slabs.append(slab.astype(jnp.bfloat16))
    return slabs


# ---------------------------------------------------------------------------
# Wrappers
# ---------------------------------------------------------------------------
def conv5x5_relu_pool(x_nhwc, w, b):
    """Conv2d(5x5, stride 1, pad 2) + ReLU + MaxPool2d(2).

    x_nhwc: (N, H, W, C);  w: torch layout (O, C, 5, 5);  b: (O,)
    Returns pooled activations (N, H//2, W//2, O) in bf16.
    """
    N, H, W, C = x_nhwc.shape
    O = w.shape[0]
    assert w.shape == (O, C, KH, KW)
    assert H % 2 == 0 and W % 2 == 0, "MaxPool2d(2) needs even spatial dims"
    PH, PW = H // 2, W // 2
    F = PW * O                     # pooled-row lane width (= 160 for both convs)
    K = KH * (W + 4) * C           # patch length per conv row

    xe0, xe1 = _build_patch_rows(x_nhwc, PH)
    w0, w1 = _conv_weight_slabs(w, W, PW)
    brow = jnp.tile(b.astype(jnp.float32), PW).reshape(1, F)

    tp, T, ph_pad = _pick_tile(PH)
    if ph_pad != PH:
        pad = ((0, 0), (0, ph_pad - PH), (0, 0))
        xe0 = jnp.pad(xe0, pad)
        xe1 = jnp.pad(xe1, pad)

    out = pl.pallas_call(
        _conv_relu_pool_kernel,
        out_shape=jax.ShapeDtypeStruct((N, ph_pad, F), jnp.bfloat16),
        grid=(N, T),
        in_specs=[
            pl.BlockSpec((1, tp, K), lambda n, i: (n, i, 0)),
            pl.BlockSpec((1, tp, K), lambda n, i: (n, i, 0)),
            pl.BlockSpec((K, F), lambda n, i: (0, 0)),
            pl.BlockSpec((K, F), lambda n, i: (0, 0)),
            pl.BlockSpec((1, F), lambda n, i: (0, 0)),
        ],
        out_specs=pl.BlockSpec((1, tp, F), lambda n, i: (n, i, 0)),
        compiler_params=pltpu.CompilerParams(
            dimension_semantics=("parallel", "parallel"),
            vmem_limit_bytes=_VMEM_LIMIT),
    )(xe0, xe1, w0, w1, brow)

    # Drop the zero-padded tail rows (cheap slice, fuses into next stage's glue).
    return out[:, :PH, :].reshape(N, PH, PW, O)


def linear(x, w, b):
    """x: (N, K);  w: (Nout, K) lane-dense;  b: (Nout,).  Returns f32 (N, Nout)."""
    N, K = x.shape
    Nout = w.shape[0]
    return pl.pallas_call(
        _linear_kernel,
        out_shape=jax.ShapeDtypeStruct((N, Nout), jnp.float32),
        grid=(1,),
        in_specs=[
            pl.BlockSpec((N, K), lambda i: (0, 0)),
            pl.BlockSpec((Nout, K), lambda i: (0, 0)),
            pl.BlockSpec((1, Nout), lambda i: (0, 0)),
        ],
        out_specs=pl.BlockSpec((N, Nout), lambda i: (0, 0)),
        compiler_params=pltpu.CompilerParams(
            dimension_semantics=("arbitrary",),
            vmem_limit_bytes=_VMEM_LIMIT),
    )(x.astype(jnp.bfloat16), w.astype(jnp.bfloat16),
      b.reshape(1, Nout).astype(jnp.float32))


# ---------------------------------------------------------------------------
# Full forward pass (matches torch CNN.forward; the debug print()s are omitted)
# ---------------------------------------------------------------------------
def cnn_forward(x_nchw, params):
    x = jnp.transpose(x_nchw, (0, 2, 3, 1))                    # NCHW -> NHWC
    x = conv5x5_relu_pool(x, params["w1"], params["b1"])       # conv1+ReLU+pool
    x = conv5x5_relu_pool(x, params["w2"], params["b2"])       # conv2+ReLU+pool
    N, PH2, PW2, O2 = x.shape
    x_flat = x.reshape(N, PH2 * PW2 * O2)                      # (h, w, c) flatten
    # Pre-permute w_out's K axis from torch's (c, h, w) order to our (h, w, c)
    # order, so no runtime transpose of the activations is needed.
    nout = params["w_out"].shape[0]
    w_perm = (params["w_out"].reshape(nout, O2, PH2, PW2)
              .transpose(0, 2, 3, 1).reshape(nout, -1))
    return linear(x_flat, w_perm, params["b_out"])


# Pure-JAX f32 reference (same math, for a sanity check).
def cnn_reference(x_nchw, params):
    def block(x, w, b):
        y = lax.conv_general_dilated(
            x, w, window_strides=(1, 1), padding=((2, 2), (2, 2)),
            dimension_numbers=("NCHW", "OIHW", "NCHW"))
        y = jnp.maximum(y + b[None, :, None, None], 0.0)
        return lax.reduce_window(y, -jnp.inf, lax.max,
                                 (1, 1, 2, 2), (1, 1, 2, 2), "VALID")

    y = block(x_nchw, params["w1"], params["b1"])
    y = block(y, params["w2"], params["b2"])
    y = y.reshape(y.shape[0], -1)
    return y @ params["w_out"].T + params["b_out"]


def init_params(key):
    k1, k2, k3 = jax.random.split(key, 3)
    return {
        "w1": 0.05 * jax.random.normal(k1, (16, 5, 5, 5), jnp.float32),
        "b1": jnp.linspace(-0.1, 0.1, 16, dtype=jnp.float32),
        "w2": 0.05 * jax.random.normal(k2, (32, 16, 5, 5), jnp.float32),
        "b2": jnp.linspace(-0.1, 0.1, 32, dtype=jnp.float32),
        "w_out": 0.01 * jax.random.normal(k3, (10, 32 * 127 * 5), jnp.float32),
        "b_out": jnp.linspace(-0.1, 0.1, 10, dtype=jnp.float32),
    }


if __name__ == "__main__":
    key = jax.random.PRNGKey(0)
    k_params, k_x = jax.random.split(key)
    params = init_params(k_params)
    # Smallest input consistent with the hard-coded Linear(32*127*5, 10):
    # (H, W) = (508, 20) -> pool -> (254, 10) -> pool -> (127, 5).
    x = jax.random.normal(k_x, (2, 5, 508, 20), jnp.float32)

    out = jax.jit(cnn_forward)(x, params)
    jax.block_until_ready(out)
    assert out.shape == (2, 10) and out.dtype == jnp.float32

    ref = jax.jit(cnn_reference)(x, params)
    jax.block_until_ready(ref)
    err = float(jnp.max(jnp.abs(out - ref)))
    # bf16 matmul inputs + f32 accumulation: expected deviation ~1e-2.
    assert err < 0.2, f"numerical mismatch vs f32 reference: max|diff|={err}"
    print("KERNEL_OK")
</pallas_src>

<mosaic_0001>
module attributes {stable_mosaic.version = 11 : i64} {
  func.func @_conv_relu_pool_kernel(%arg0: i32, %arg1: i32, %arg2: memref<1x128x600xbf16, #tpu.memory_space<vmem>>, %arg3: memref<1x128x600xbf16, #tpu.memory_space<vmem>>, %arg4: memref<600x160xbf16, #tpu.memory_space<vmem>>, %arg5: memref<600x160xbf16, #tpu.memory_space<vmem>>, %arg6: memref<1x160xf32, #tpu.memory_space<vmem>>, %arg7: memref<1x128x160xbf16, #tpu.memory_space<vmem>>) attributes {dimension_semantics = [#tpu.dimension_semantics<parallel>, #tpu.dimension_semantics<parallel>], iteration_bounds = array<i64: 2, 2>, scalar_prefetch = 0 : i64, scratch_operands = 0 : i64, tpu.core_type = #tpu.core_type<tc>, window_params = [{transform_indices = @transform_0, window_bounds = array<i64: 1, 128, 600>}, {transform_indices = @transform_1, window_bounds = array<i64: 1, 128, 600>}, {pipeline_mode = #tpu.pipeline_mode<synchronous>, transform_indices = @transform_2, window_bounds = array<i64: 600, 160>}, {pipeline_mode = #tpu.pipeline_mode<synchronous>, transform_indices = @transform_3, window_bounds = array<i64: 600, 160>}, {pipeline_mode = #tpu.pipeline_mode<synchronous>, transform_indices = @transform_4, window_bounds = array<i64: 1, 160>}, {transform_indices = @transform_5, window_bounds = array<i64: 1, 128, 160>}]} {
    %c0 = arith.constant 0 : index
    %c0_0 = arith.constant 0 : index
    %c0_1 = arith.constant 0 : index
    %0 = vector.load %arg2[%c0, %c0_0, %c0_1] : memref<1x128x600xbf16, #tpu.memory_space<vmem>>, vector<1x128x600xbf16>
    %1 = vector.shape_cast %0 : vector<1x128x600xbf16> to vector<128x600xbf16>
    %c0_2 = arith.constant 0 : index
    %c0_3 = arith.constant 0 : index
    %c0_4 = arith.constant 0 : index
    %2 = vector.load %arg3[%c0_2, %c0_3, %c0_4] : memref<1x128x600xbf16, #tpu.memory_space<vmem>>, vector<1x128x600xbf16>
    %3 = vector.shape_cast %2 : vector<1x128x600xbf16> to vector<128x600xbf16>
    %c0_5 = arith.constant 0 : index
    %c0_6 = arith.constant 0 : index
    %4 = vector.load %arg4[%c0_5, %c0_6] : memref<600x160xbf16, #tpu.memory_space<vmem>>, vector<600x160xbf16>
    %c0_7 = arith.constant 0 : index
    %c0_8 = arith.constant 0 : index
    %5 = vector.load %arg5[%c0_7, %c0_8] : memref<600x160xbf16, #tpu.memory_space<vmem>>, vector<600x160xbf16>
    %cst = arith.constant dense<0.000000e+00> : vector<128x160xf32>
    %6 = tpu.matmul %1, %4, %cst {dimension_numbers = #tpu.dot_dimension_numbers<[1], [0], [0], [1], [0, 0, 1, 1], [], []>} : vector<128x600xbf16>, vector<600x160xbf16>, vector<128x160xf32> -> vector<128x160xf32>
    %cst_9 = arith.constant dense<0.000000e+00> : vector<128x160xf32>
    %7 = tpu.matmul %1, %5, %cst_9 {dimension_numbers = #tpu.dot_dimension_numbers<[1], [0], [0], [1], [0, 0, 1, 1], [], []>} : vector<128x600xbf16>, vector<600x160xbf16>, vector<128x160xf32> -> vector<128x160xf32>
    %cst_10 = arith.constant dense<0.000000e+00> : vector<128x160xf32>
    %8 = tpu.matmul %3, %4, %cst_10 {dimension_numbers = #tpu.dot_dimension_numbers<[1], [0], [0], [1], [0, 0, 1, 1], [], []>} : vector<128x600xbf16>, vector<600x160xbf16>, vector<128x160xf32> -> vector<128x160xf32>
    %cst_11 = arith.constant dense<0.000000e+00> : vector<128x160xf32>
    %9 = tpu.matmul %3, %5, %cst_11 {dimension_numbers = #tpu.dot_dimension_numbers<[1], [0], [0], [1], [0, 0, 1, 1], [], []>} : vector<128x600xbf16>, vector<600x160xbf16>, vector<128x160xf32> -> vector<128x160xf32>
    %10 = arith.maximumf %6, %7 : vector<128x160xf32>
    %11 = arith.maximumf %8, %9 : vector<128x160xf32>
    %12 = arith.maximumf %10, %11 : vector<128x160xf32>
    %c0_12 = arith.constant 0 : index
    %c0_13 = arith.constant 0 : index
    %13 = vector.load %arg6[%c0_12, %c0_13] : memref<1x160xf32, #tpu.memory_space<vmem>>, vector<1x160xf32>
    %14 = vector.broadcast %13 : vector<1x160xf32> to vector<128x160xf32>
    %15 = arith.addf %12, %14 : vector<128x160xf32>
    %cst_14 = arith.constant 0.000000e+00 : f32
    %16 = vector.broadcast %cst_14 : f32 to vector<128x160xf32>
    %17 = arith.maximumf %15, %16 : vector<128x160xf32>
    %18 = arith.truncf %17 : vector<128x160xf32> to vector<128x160xbf16>
    %c0_15 = arith.constant 0 : index
    %c0_16 = arith.constant 0 : index
    %c0_17 = arith.constant 0 : index
    %19 = vector.load %arg7[%c0_15, %c0_16, %c0_17] : memref<1x128x160xbf16, #tpu.memory_space<vmem>>, vector<1x128x160xbf16>
    %20 = vector.shape_cast %19 : vector<1x128x160xbf16> to vector<128x160xbf16>
    %21 = vector.shape_cast %18 : vector<128x160xbf16> to vector<1x128x160xbf16>
    tpu.vector_store %arg7[%c0_15, %c0_16, %c0_17], %21 {strides = array<i32>} : memref<1x128x160xbf16, #tpu.memory_space<vmem>>, vector<1x128x160xbf16>,
    return
  }
  func.func @transform_0(%arg0: i32, %arg1: i32) -> (i32, i32, i32) {
    %c0_i32 = arith.constant 0 : i32
    %c0_i32_0 = arith.constant 0 : i32
    return %arg0, %arg1, %c0_i32 : i32, i32, i32
  }
  func.func @transform_1(%arg0: i32, %arg1: i32) -> (i32, i32, i32) {
    %c0_i32 = arith.constant 0 : i32
    %c0_i32_0 = arith.constant 0 : i32
    return %arg0, %arg1, %c0_i32 : i32, i32, i32
  }
  func.func @transform_2(%arg0: i32, %arg1: i32) -> (i32, i32) {
    %c0_i32 = arith.constant 0 : i32
    %c0_i32_0 = arith.constant 0 : i32
    %c0_i32_1 = arith.constant 0 : i32
    return %c0_i32, %c0_i32_0 : i32, i32
  }
  func.func @transform_3(%arg0: i32, %arg1: i32) -> (i32, i32) {
    %c0_i32 = arith.constant 0 : i32
    %c0_i32_0 = arith.constant 0 : i32
    %c0_i32_1 = arith.constant 0 : i32
    return %c0_i32, %c0_i32_0 : i32, i32
  }
  func.func @transform_4(%arg0: i32, %arg1: i32) -> (i32, i32) {
    %c0_i32 = arith.constant 0 : i32
    %c0_i32_0 = arith.constant 0 : i32
    %c0_i32_1 = arith.constant 0 : i32
    return %c0_i32, %c0_i32_0 : i32, i32
  }
  func.func @transform_5(%arg0: i32, %arg1: i32) -> (i32, i32, i32) {
    %c0_i32 = arith.constant 0 : i32
    %c0_i32_0 = arith.constant 0 : i32
    return %arg0, %arg1, %c0_i32 : i32, i32, i32
  }
}

module attributes {stable_mosaic.version = 11 : i64} {
  func.func @_conv_relu_pool_kernel(%arg0: i32, %arg1: i32, %arg2: memref<1x64x1120xbf16, #tpu.memory_space<vmem>>, %arg3: memref<1x64x1120xbf16, #tpu.memory_space<vmem>>, %arg4: memref<1120x160xbf16, #tpu.memory_space<vmem>>, %arg5: memref<1120x160xbf16, #tpu.memory_space<vmem>>, %arg6: memref<1x160xf32, #tpu.memory_space<vmem>>, %arg7: memref<1x64x160xbf16, #tpu.memory_space<vmem>>) attributes {dimension_semantics = [#tpu.dimension_semantics<parallel>, #tpu.dimension_semantics<parallel>], iteration_bounds = array<i64: 2, 2>, scalar_prefetch = 0 : i64, scratch_operands = 0 : i64, tpu.core_type = #tpu.core_type<tc>, window_params = [{transform_indices = @transform_0, window_bounds = array<i64: 1, 64, 1120>}, {transform_indices = @transform_1, window_bounds = array<i64: 1, 64, 1120>}, {pipeline_mode = #tpu.pipeline_mode<synchronous>, transform_indices = @transform_2, window_bounds = array<i64: 1120, 160>}, {pipeline_mode = #tpu.pipeline_mode<synchronous>, transform_indices = @transform_3, window_bounds = array<i64: 1120, 160>}, {pipeline_mode = #tpu.pipeline_mode<synchronous>, transform_indices = @transform_4, window_bounds = array<i64: 1, 160>}, {transform_indices = @transform_5, window_bounds = array<i64: 1, 64, 160>}]} {
    %c0 = arith.constant 0 : index
    %c0_0 = arith.constant 0 : index
    %c0_1 = arith.constant 0 : index
    %0 = vector.load %arg2[%c0, %c0_0, %c0_1] : memref<1x64x1120xbf16, #tpu.memory_space<vmem>>, vector<1x64x1120xbf16>
    %1 = vector.shape_cast %0 : vector<1x64x1120xbf16> to vector<64x1120xbf16>
    %c0_2 = arith.constant 0 : index
    %c0_3 = arith.constant 0 : index
    %c0_4 = arith.constant 0 : index
    %2 = vector.load %arg3[%c0_2, %c0_3, %c0_4] : memref<1x64x1120xbf16, #tpu.memory_space<vmem>>, vector<1x64x1120xbf16>
    %3 = vector.shape_cast %2 : vector<1x64x1120xbf16> to vector<64x1120xbf16>
    %c0_5 = arith.constant 0 : index
    %c0_6 = arith.constant 0 : index
    %4 = vector.load %arg4[%c0_5, %c0_6] : memref<1120x160xbf16, #tpu.memory_space<vmem>>, vector<1120x160xbf16>
    %c0_7 = arith.constant 0 : index
    %c0_8 = arith.constant 0 : index
    %5 = vector.load %arg5[%c0_7, %c0_8] : memref<1120x160xbf16, #tpu.memory_space<vmem>>, vector<1120x160xbf16>
    %cst = arith.constant dense<0.000000e+00> : vector<64x160xf32>
    %6 = tpu.matmul %1, %4, %cst {dimension_numbers = #tpu.dot_dimension_numbers<[1], [0], [0], [1], [0, 0, 1, 1], [], []>} : vector<64x1120xbf16>, vector<1120x160xbf16>, vector<64x160xf32> -> vector<64x160xf32>
    %cst_9 = arith.constant dense<0.000000e+00> : vector<64x160xf32>
    %7 = tpu.matmul %1, %5, %cst_9 {dimension_numbers = #tpu.dot_dimension_numbers<[1], [0], [0], [1], [0, 0, 1, 1], [], []>} : vector<64x1120xbf16>, vector<1120x160xbf16>, vector<64x160xf32> -> vector<64x160xf32>
    %cst_10 = arith.constant dense<0.000000e+00> : vector<64x160xf32>
    %8 = tpu.matmul %3, %4, %cst_10 {dimension_numbers = #tpu.dot_dimension_numbers<[1], [0], [0], [1], [0, 0, 1, 1], [], []>} : vector<64x1120xbf16>, vector<1120x160xbf16>, vector<64x160xf32> -> vector<64x160xf32>
    %cst_11 = arith.constant dense<0.000000e+00> : vector<64x160xf32>
    %9 = tpu.matmul %3, %5, %cst_11 {dimension_numbers = #tpu.dot_dimension_numbers<[1], [0], [0], [1], [0, 0, 1, 1], [], []>} : vector<64x1120xbf16>, vector<1120x160xbf16>, vector<64x160xf32> -> vector<64x160xf32>
    %10 = arith.maximumf %6, %7 : vector<64x160xf32>
    %11 = arith.maximumf %8, %9 : vector<64x160xf32>
    %12 = arith.maximumf %10, %11 : vector<64x160xf32>
    %c0_12 = arith.constant 0 : index
    %c0_13 = arith.constant 0 : index
    %13 = vector.load %arg6[%c0_12, %c0_13] : memref<1x160xf32, #tpu.memory_space<vmem>>, vector<1x160xf32>
    %14 = vector.broadcast %13 : vector<1x160xf32> to vector<64x160xf32>
    %15 = arith.addf %12, %14 : vector<64x160xf32>
    %cst_14 = arith.constant 0.000000e+00 : f32
    %16 = vector.broadcast %cst_14 : f32 to vector<64x160xf32>
    %17 = arith.maximumf %15, %16 : vector<64x160xf32>
    %18 = arith.truncf %17 : vector<64x160xf32> to vector<64x160xbf16>
    %c0_15 = arith.constant 0 : index
    %c0_16 = arith.constant 0 : index
    %c0_17 = arith.constant 0 : index
    %19 = vector.load %arg7[%c0_15, %c0_16, %c0_17] : memref<1x64x160xbf16, #tpu.memory_space<vmem>>, vector<1x64x160xbf16>
    %20 = vector.shape_cast %19 : vector<1x64x160xbf16> to vector<64x160xbf16>
    %21 = vector.shape_cast %18 : vector<64x160xbf16> to vector<1x64x160xbf16>
    tpu.vector_store %arg7[%c0_15, %c0_16, %c0_17], %21 {strides = array<i32>} : memref<1x64x160xbf16, #tpu.memory_space<vmem>>, vector<1x64x160xbf16>,
    return
  }
  func.func @transform_0(%arg0: i32, %arg1: i32) -> (i32, i32, i32) {
    %c0_i32 = arith.constant 0 : i32
    %c0_i32_0 = arith.constant 0 : i32
    return %arg0, %arg1, %c0_i32 : i32, i32, i32
  }
  func.func @transform_1(%arg0: i32, %arg1: i32) -> (i32, i32, i32) {
    %c0_i32 = arith.constant 0 : i32
    %c0_i32_0 = arith.constant 0 : i32
    return %arg0, %arg1, %c0_i32 : i32, i32, i32
  }
  func.func @transform_2(%arg0: i32, %arg1: i32) -> (i32, i32) {
    %c0_i32 = arith.constant 0 : i32
    %c0_i32_0 = arith.constant 0 : i32
    %c0_i32_1 = arith.constant 0 : i32
    return %c0_i32, %c0_i32_0 : i32, i32
  }
  func.func @transform_3(%arg0: i32, %arg1: i32) -> (i32, i32) {
    %c0_i32 = arith.constant 0 : i32
    %c0_i32_0 = arith.constant 0 : i32
    %c0_i32_1 = arith.constant 0 : i32
    return %c0_i32, %c0_i32_0 : i32, i32
  }
  func.func @transform_4(%arg0: i32, %arg1: i32) -> (i32, i32) {
    %c0_i32 = arith.constant 0 : i32
    %c0_i32_0 = arith.constant 0 : i32
    %c0_i32_1 = arith.constant 0 : i32
    return %c0_i32, %c0_i32_0 : i32, i32
  }
  func.func @transform_5(%arg0: i32, %arg1: i32) -> (i32, i32, i32) {
    %c0_i32 = arith.constant 0 : i32
    %c0_i32_0 = arith.constant 0 : i32
    return %arg0, %arg1, %c0_i32 : i32, i32, i32
  }
}

module attributes {stable_mosaic.version = 11 : i64} {
  func.func @_linear_kernel(%arg0: i32, %arg1: memref<2x20320xbf16, #tpu.memory_space<vmem>>, %arg2: memref<10x20320xbf16, #tpu.memory_space<vmem>>, %arg3: memref<1x10xf32, #tpu.memory_space<vmem>>, %arg4: memref<2x10xf32, #tpu.memory_space<vmem>>) attributes {dimension_semantics = [#tpu.dimension_semantics<arbitrary>], iteration_bounds = array<i64: 1>, scalar_prefetch = 0 : i64, scratch_operands = 0 : i64, tpu.core_type = #tpu.core_type<tc>, window_params = [{pipeline_mode = #tpu.pipeline_mode<synchronous>, transform_indices = @transform_0, window_bounds = array<i64: 2, 20320>}, {pipeline_mode = #tpu.pipeline_mode<synchronous>, transform_indices = @transform_1, window_bounds = array<i64: 10, 20320>}, {pipeline_mode = #tpu.pipeline_mode<synchronous>, transform_indices = @transform_2, window_bounds = array<i64: 1, 10>}, {pipeline_mode = #tpu.pipeline_mode<synchronous>, transform_indices = @transform_3, window_bounds = array<i64: 2, 10>}]} {
    %c0 = arith.constant 0 : index
    %c0_0 = arith.constant 0 : index
    %0 = vector.load %arg1[%c0, %c0_0] : memref<2x20320xbf16, #tpu.memory_space<vmem>>, vector<2x20320xbf16>
    %c0_1 = arith.constant 0 : index
    %c0_2 = arith.constant 0 : index
    %1 = vector.load %arg2[%c0_1, %c0_2] : memref<10x20320xbf16, #tpu.memory_space<vmem>>, vector<10x20320xbf16>
    %cst = arith.constant dense<0.000000e+00> : vector<2x10xf32>
    %2 = tpu.matmul %0, %1, %cst {dimension_numbers = #tpu.dot_dimension_numbers<[1], [1], [0], [0], [0, 0, 1, 0], [], []>} : vector<2x20320xbf16>, vector<10x20320xbf16>, vector<2x10xf32> -> vector<2x10xf32>
    %c0_3 = arith.constant 0 : index
    %c0_4 = arith.constant 0 : index
    %3 = vector.load %arg3[%c0_3, %c0_4] : memref<1x10xf32, #tpu.memory_space<vmem>>, vector<1x10xf32>
    %4 = vector.broadcast %3 : vector<1x10xf32> to vector<2x10xf32>
    %5 = arith.addf %2, %4 : vector<2x10xf32>
    %c0_5 = arith.constant 0 : index
    %c0_6 = arith.constant 0 : index
    %6 = vector.load %arg4[%c0_5, %c0_6] : memref<2x10xf32, #tpu.memory_space<vmem>>, vector<2x10xf32>
    tpu.vector_store %arg4[%c0_5, %c0_6], %5 {strides = array<i32>} : memref<2x10xf32, #tpu.memory_space<vmem>>, vector<2x10xf32>,
    return
  }
  func.func @transform_0(%arg0: i32) -> (i32, i32) {
    %c0_i32 = arith.constant 0 : i32
    %c0_i32_0 = arith.constant 0 : i32
    %c0_i32_1 = arith.constant 0 : i32
    return %c0_i32, %c0_i32_0 : i32, i32
  }
  func.func @transform_1(%arg0: i32) -> (i32, i32) {
    %c0_i32 = arith.constant 0 : i32
    %c0_i32_0 = arith.constant 0 : i32
    %c0_i32_1 = arith.constant 0 : i32
    return %c0_i32, %c0_i32_0 : i32, i32
  }
  func.func @transform_2(%arg0: i32) -> (i32, i32) {
    %c0_i32 = arith.constant 0 : i32
    %c0_i32_0 = arith.constant 0 : i32
    %c0_i32_1 = arith.constant 0 : i32
    return %c0_i32, %c0_i32_0 : i32, i32
  }
  func.func @transform_3(%arg0: i32) -> (i32, i32) {
    %c0_i32 = arith.constant 0 : i32
    %c0_i32_0 = arith.constant 0 : i32
    %c0_i32_1 = arith.constant 0 : i32
    return %c0_i32, %c0_i32_0 : i32, i32
  }
}

</mosaic_0001>

<llo_original>
// kernel: tile.18
$region0: #{tile.18}
  #allocation2 [shape = 's32[1]{0}', space=sflag, size = 0x4, scoped, tag = 'scoped memory for tile.18']
  %s0 = inlined_call_operand.hbm [shape: f32[32], index: 0, kind: input, shape index: {}]
  %s1 = inlined_call_operand.vmem [shape: f32[5,32], index: 1, kind: output, shape index: {}]
  $region1: #{tile.18} parent=0
    #allocation0 [shape = 'u8[512]{0}', space=vmem, size = 0x400, scoped, tag = 'operand span for operand 0']
    #allocation1 [shape = 's32[1]{0}', space=sflag, size = 0x4, scoped, tag = 'scoped memory for tile.18']
    %2 = vsyncpa [#allocation1], 0
    // Predicated region
    $region2: #{tile.18} parent=1 // pred_check
      _
    $region3: #{tile.18} parent=1 // pred_check_branch
      %4 = sbr.rel (0) target = $region5
    $region4: #{tile.18} parent=1 // pred_region
      %s6 = ssub.s32 16, 16
      %7 = vsyncadd [#allocation1], %s6
      %s9 = sshll.u32 [#allocation0], 4
      %s10 = int_to_ptr.vmem [resolvable:$true] %s9
      %12 = dma.hbm_to_vmem [thread:$0]  %s0, 16, %s10, [#allocation1]
    $region5: #{tile.18} parent=1 // pred_fallthru
      _
    // Predicated region
    $region6: #{tile.18} parent=1 // pred_check
      _
    $region7: #{tile.18} parent=1 // pred_check_branch
      %14 = sbr.rel (0) target = $region9
    $region8: #{tile.18} parent=1 // pred_region
      %15 = dma.done [#allocation1], 16
    $region9: #{tile.18} parent=1 // pred_fallthru
      _
    %v16 = vld [vmem:[#allocation0] ss:$0 sm:$0xff]
    %17 = vst [vmem:[%s1] sm:$0xff] %v16
    %18 = vsyncpa [#allocation1], 1

// kernel: tile.19
$region0: #{tile.19}
  %s0 = inlined_call_operand.vmem [shape: f32[5,32], index: 0, kind: input, shape index: {}]
  %s1 = inlined_call_operand.vmem [shape: f32[1,160], index: 1, kind: output, shape index: {}]
  $region1: #{tile.19} parent=0
    #allocation0 [shape = 'u8[8192]{0}', space=vmem, size = 0x2000, scoped, tag = 'scoped mem for output reshape']
    %s2 = smov 3
    %v3 = vld [vmem:[%s0] ss:$4 sm:%s2]
    %vm4 = vcmask 261120
    %5 = vst.msk [vmem:[#allocation0] ss:$8 sm:$0x3] %vm4, %v3
    %s6 = scalar_lea.vmem %s0, 3
    %v7 = vld [vmem:[%s6] sm:$0x1]
    %8 = vrot.lane.b32.xlu0 %v7, 96
    %v9 = vpop.permute.xlu0 %8
    %vm10 = vcmask 1048320
    %11 = vst.msk [vmem:[#allocation0] sm:$0x1] %vm10, %v9
    %s12 = scalar_lea.vmem %s0, 2
    %v13 = vld [vmem:[%s12] sm:$0x1]
    %14 = vrot.lane.b32.xlu0 %v13, 64
    %v15 = vpop.permute.xlu0 %14
    %vm16 = vcmask 785920
    %17 = vst.msk [vmem:[#allocation0] sm:$0x1] %vm16, %v15
    %s18 = scalar_lea.vmem %s0, 1
    %v19 = vld [vmem:[%s18] sm:$0x1]
    %20 = vrot.lane.b32.xlu0 %v19, 32
    %v21 = vpop.permute.xlu0 %20
    %vm22 = vcmask 523520
    %23 = vst.msk [vmem:[#allocation0] sm:$0x1] %vm22, %v21
    %s25 = sshllo.u32 0, 1
    %v27 = vld [vmem:[#allocation0] sm:%s25]
    %s28 = sshllo.u32 0, 1
    %29 = vst [vmem:[%s1] sm:%s28] %v27
    %s30 = scalar_lea.vmem [#allocation0], 8
    %v31 = vld [vmem:[%s30] sm:%s25]
    %s32 = sshllo.u32 0, 1
    %s33 = scalar_lea.vmem %s1, 1
    %34 = vst [vmem:[%s33] sm:%s32] %v31

// kernel: tile.13
$region0: #{tile.13}
  #allocation2 [shape = 's32[1]{0}', space=sflag, size = 0x4, scoped, tag = 'scoped memory for tile.13']
  %s0 = inlined_call_operand.hbm [shape: f32[16], index: 0, kind: input, shape index: {}]
  %s1 = inlined_call_operand.vmem [shape: f32[10,16], index: 1, kind: output, shape index: {}]
  $region1: #{tile.13} parent=0
    #allocation0 [shape = 'u8[512]{0}', space=vmem, size = 0x400, scoped, tag = 'operand span for operand 0']
    #allocation1 [shape = 's32[1]{0}', space=sflag, size = 0x4, scoped, tag = 'scoped memory for tile.13']
    %2 = vsyncpa [#allocation1], 0
    // Predicated region
    $region2: #{tile.13} parent=1 // pred_check
      _
    $region3: #{tile.13} parent=1 // pred_check_branch
      %4 = sbr.rel (0) target = $region5
    $region4: #{tile.13} parent=1 // pred_region
      %s6 = ssub.s32 16, 16
      %7 = vsyncadd [#allocation1], %s6
      %s9 = sshll.u32 [#allocation0], 4
      %s10 = int_to_ptr.vmem [resolvable:$true] %s9
      %12 = dma.hbm_to_vmem [thread:$0]  %s0, 16, %s10, [#allocation1]
    $region5: #{tile.13} parent=1 // pred_fallthru
      _
    // Predicated region
    $region6: #{tile.13} parent=1 // pred_check
      _
    $region7: #{tile.13} parent=1 // pred_check_branch
      %14 = sbr.rel (0) target = $region9
    $region8: #{tile.13} parent=1 // pred_region
      %15 = dma.done [#allocation1], 16
    $region9: #{tile.13} parent=1 // pred_fallthru
      _
    %v16 = vld [vmem:[#allocation0] ss:$0 sm:$0xff]
    %17 = vst [vmem:[%s1] sm:$0xff] %v16
    %s18 = scalar_lea.vmem %s1, 8
    %19 = vst [vmem:[%s18] sm:$0xff] %v16
    %20 = vsyncpa [#allocation1], 1

// kernel: tile.14
$region0: #{tile.14}
  %s0 = inlined_call_operand.vmem [shape: f32[10,16], index: 0, kind: input, shape index: {}]
  %s1 = inlined_call_operand.vmem [shape: f32[1,160], index: 1, kind: output, shape index: {}]
  $region1: #{tile.14} parent=0
    #allocation0 [shape = 'u8[8192]{0}', space=vmem, size = 0x2000, scoped, tag = 'scoped mem for output reshape']
    %s2 = smov 3
    %v3 = vld [vmem:[%s0] ss:$8 sm:%s2]
    %vm4 = vcmask 130048
    %5 = vst.msk [vmem:[#allocation0] ss:$8 sm:$0x3] %vm4, %v3
    %s6 = scalar_lea.vmem %s0, 7
    %v7 = vld [vmem:[%s6] sm:$0x1]
    %8 = vrot.lane.b32.xlu0 %v7, 112
    %v9 = vpop.permute.xlu0 %8
    %vm10 = vcmask 1048448
    %11 = vst.msk [vmem:[#allocation0] sm:$0x1] %vm10, %v9
    %s12 = scalar_lea.vmem %s0, 6
    %v13 = vld [vmem:[%s12] sm:$0x1]
    %14 = vrot.lane.b32.xlu0 %v13, 96
    %v15 = vpop.permute.xlu0 %14
    %vm16 = vcmask 917248
    %17 = vst.msk [vmem:[#allocation0] sm:$0x1] %vm16, %v15
    %s18 = scalar_lea.vmem %s0, 5
    %v19 = vld [vmem:[%s18] sm:$0x1]
    %20 = vrot.lane.b32.xlu0 %v19, 80
    %v21 = vpop.permute.xlu0 %20
    %vm22 = vcmask 786048
    %23 = vst.msk [vmem:[#allocation0] sm:$0x1] %vm22, %v21
    %s24 = scalar_lea.vmem %s0, 4
    %v25 = vld [vmem:[%s24] sm:$0x1]
    %26 = vrot.lane.b32.xlu0 %v25, 64
    %v27 = vpop.permute.xlu0 %26
    %vm28 = vcmask 654848
    %29 = vst.msk [vmem:[#allocation0] sm:$0x1] %vm28, %v27
    %s30 = scalar_lea.vmem %s0, 3
    %v31 = vld [vmem:[%s30] sm:$0x1]
    %32 = vrot.lane.b32.xlu0 %v31, 48
    %v33 = vpop.permute.xlu0 %32
    %vm34 = vcmask 523648
    %35 = vst.msk [vmem:[#allocation0] sm:$0x1] %vm34, %v33
    %s36 = scalar_lea.vmem %s0, 2
    %v37 = vld [vmem:[%s36] sm:$0x1]
    %38 = vrot.lane.b32.xlu0 %v37, 32
    %v39 = vpop.permute.xlu0 %38
    %vm40 = vcmask 392448
    %41 = vst.msk [vmem:[#allocation0] sm:$0x1] %vm40, %v39
    %s42 = scalar_lea.vmem %s0, 1
    %s43 = smov 3
    %v44 = vld [vmem:[%s42] ss:$8 sm:%s43]
    %45 = vrot.lane.b32.xlu0 %v44, 16
    %v46 = vpop.permute.xlu0 %45
    %vm47 = vcmask 261248
    %48 = vst.msk [vmem:[#allocation0] ss:$8 sm:$0x3] %vm47, %v46
    %s50 = sshllo.u32 0, 1
    %v52 = vld [vmem:[#allocation0] sm:%s50]
    %s53 = sshllo.u32 0, 1
    %54 = vst [vmem:[%s1] sm:%s53] %v52
    %s55 = scalar_lea.vmem [#allocation0], 8
    %v56 = vld [vmem:[%s55] sm:%s50]
    %s57 = sshllo.u32 0, 1
    %s58 = scalar_lea.vmem %s1, 1
    %59 = vst [vmem:[%s58] sm:%s57] %v56

// kernel: cnn_forward.3
$region0: #{cnn_forward.3}
  #allocation0 [shape = 'u32[]', space=smem, size = 0x4, offset = 0x4, fixed_abs, tag = 'smem constant byte address 0x4 - core index']
  #allocation1 [shape = 'u32[144,128]{1,0:T(1,128)}', space=vmem, size = 0x12000, scoped, tag = 'internal scratch']
  %s0 = inlined_call_operand.vmem [shape: bf16[2,256,600], index: 0, kind: input, shape index: {}]
  %s1 = inlined_call_operand.vmem [shape: bf16[2,256,600], index: 1, kind: input, shape index: {}]
  %s2 = inlined_call_operand.vmem [shape: bf16[600,160], index: 2, kind: input, shape index: {}]
  %s3 = inlined_call_operand.vmem [shape: bf16[600,160], index: 3, kind: input, shape index: {}]
  %s4 = inlined_call_operand.vmem [shape: f32[1,160], index: 4, kind: input, shape index: {}]
  %s5 = inlined_call_operand.vmem [shape: bf16[2,256,160], index: 5, kind: output, shape index: {}]
  %s6 = sld [smem:[#allocation0]]
  $region53: #{cnn_forward.3} parent=0
    _
  %s8 = ssub.s32 1, %s6
  %s9 = scalar_select 0, %s8, %s6
  loop: start=0, step=1, limit=6
  $region2: #{cnn_forward.3} parent=0 // loop_pre_header
    _
  $region3: #{cnn_forward.3} parent=0 // loop_header
    %s11 = sphi 0, %s15
    %p12 = scmp.ge.s32.totalorder %s11, 6
    %s18 = sphi 0, %s30
    %s19 = sphi 0, %s26
    %s20 = sphi 0, %s18
    %s21 = sphi 0, %s19
    %s22 = sphi 0, %s20
    %s23 = sphi 0, %s21
    %s35 = sphi 0, %s37
    %s38 = sphi 0, %s35
    %s39 = sphi 0, %s38
    %s55 = sphi 0, %s39
    %s63 = sphi 0, %s65
    %s66 = sphi 0, %s63
    %s67 = sphi 0, %s66
    %s83 = sphi 0, %s67
    %s87 = sphi 0, %s87
    %s89 = sphi 0, %s87
    %s90 = sphi 0, %s89
    %s104 = sphi 0, %s90
    %s108 = sphi 0, %s108
    %s110 = sphi 0, %s108
    %s111 = sphi 0, %s110
    %s125 = sphi 0, %s111
    %s129 = sphi 0, %s129
    %s131 = sphi 0, %s129
    %s132 = sphi 0, %s131
    %s146 = sphi 0, %s132
    %s154 = sphi 0, %s156
    %s157 = sphi 0, %s154
    %s158 = sphi 0, %s157
    %s174 = sphi 0, %s158
  $region4: #{cnn_forward.3} parent=0 // loop_header_branch
    %14 = sbr.rel (%p12) target = $region8
  $region5: #{cnn_forward.3} parent=0 // loop_body
    %s16 = ssub.s32 %s11, 1
    %s17 = ssub.s32 %s11, 2
    %s24 = sadd.s32 1, %s19
    %p25 = scmp.ge.s32.totalorder %s24, 2
    %s26 = scalar_select %p25, 0, %s24
    %s27 = sadd.s32 1, %s18
    %s28 = scalar_select %p25, %s27, %s18
    %p29 = scmp.ge.s32.totalorder %s28, 2
    %s30 = scalar_select %p29, 0, %s28
    %s31 = ssub.s32 %s18, %s30
    %s32 = ssub.s32 %s19, %s26
    %s33 = sor.u32 %s31, %s32
    %p34 = scmp.eq.s32.totalorder %s33, 0
    %s36 = sadd.s32 %s35, 1
    %s37 = scalar_select %p34, %s35, %s36
    %p40 = pneg %p34
    %p41 = scmp.eq.s32.totalorder %s11, 3
    %p42 = por %p40, %p41
    %p43 = scmp.ne.s32.totalorder %s35, %s38
    %p44 = scmp.eq.s32.totalorder %s11, 0
    %p45 = por %p43, %p44
    %p46 = scmp.ne.s32.totalorder %s35, %s38
    %p47 = scmp.eq.s32.totalorder %s16, 3
    %p48 = por %p46, %p47
    %p49 = scmp.ne.s32.totalorder %s38, %s39
    %p50 = scmp.eq.s32.totalorder %s16, 0
    %p51 = por %p49, %p50
    %p52 = scmp.ne.s32.totalorder %s38, %s39
    %p53 = scmp.eq.s32.totalorder %s17, 3
    %p54 = por %p52, %p53
    %p56 = scmp.ne.s32.totalorder %s39, %s55
    %p57 = scmp.eq.s32.totalorder %s17, 0
    %p58 = por %p56, %p57
    %s59 = ssub.s32 %s18, %s30
    %s60 = ssub.s32 %s19, %s26
    %s61 = sor.u32 %s59, %s60
    %p62 = scmp.eq.s32.totalorder %s61, 0
    %s64 = sadd.s32 %s63, 1
    %s65 = scalar_select %p62, %s63, %s64
    %p68 = pneg %p62
    %p69 = scmp.eq.s32.totalorder %s11, 3
    %p70 = por %p68, %p69
    %p71 = scmp.ne.s32.totalorder %s63, %s66
    %p72 = scmp.eq.s32.totalorder %s11, 0
    %p73 = por %p71, %p72
    %p74 = scmp.ne.s32.totalorder %s63, %s66
    %p75 = scmp.eq.s32.totalorder %s16, 3
    %p76 = por %p74, %p75
    %p77 = scmp.ne.s32.totalorder %s66, %s67
    %p78 = scmp.eq.s32.totalorder %s16, 0
    %p79 = por %p77, %p78
    %p80 = scmp.ne.s32.totalorder %s66, %s67
    %p81 = scmp.eq.s32.totalorder %s17, 3
    %p82 = por %p80, %p81
    %p84 = scmp.ne.s32.totalorder %s67, %s83
    %p85 = scmp.eq.s32.totalorder %s17, 0
    %p86 = por %p84, %p85
    %s88 = sadd.s32 %s87, 1
    %p91 = scmp.eq.s32.totalorder %s11, 3
    %p92 = scmp.ne.s32.totalorder %s87, %s89
    %p93 = scmp.eq.s32.totalorder %s11, 0
    %p94 = por %p92, %p93
    %p95 = scmp.ne.s32.totalorder %s87, %s89
    %p96 = scmp.eq.s32.totalorder %s16, 3
    %p97 = por %p95, %p96
    %p98 = scmp.ne.s32.totalorder %s89, %s90
    %p99 = scmp.eq.s32.totalorder %s16, 0
    %p100 = por %p98, %p99
    %p101 = scmp.ne.s32.totalorder %s89, %s90
    %p102 = scmp.eq.s32.totalorder %s17, 3
    %p103 = por %p101, %p102
    %p105 = scmp.ne.s32.totalorder %s90, %s104
    %p106 = scmp.eq.s32.totalorder %s17, 0
    %p107 = por %p105, %p106
    %s109 = sadd.s32 %s108, 1
    %p112 = scmp.eq.s32.totalorder %s11, 3
    %p113 = scmp.ne.s32.totalorder %s108, %s110
    %p114 = scmp.eq.s32.totalorder %s11, 0
    %p115 = por %p113, %p114
    %p116 = scmp.ne.s32.totalorder %s108, %s110
    %p117 = scmp.eq.s32.totalorder %s16, 3
    %p118 = por %p116, %p117
    %p119 = scmp.ne.s32.totalorder %s110, %s111
    %p120 = scmp.eq.s32.totalorder %s16, 0
    %p121 = por %p119, %p120
    %p122 = scmp.ne.s32.totalorder %s110, %s111
    %p123 = scmp.eq.s32.totalorder %s17, 3
    %p124 = por %p122, %p123
    %p126 = scmp.ne.s32.totalorder %s111, %s125
    %p127 = scmp.eq.s32.totalorder %s17, 0
    %p128 = por %p126, %p127
    %s130 = sadd.s32 %s129, 1
    %p133 = scmp.eq.s32.totalorder %s11, 3
    %p134 = scmp.ne.s32.totalorder %s129, %s131
    %p135 = scmp.eq.s32.totalorder %s11, 0
    %p136 = por %p134, %p135
    %p137 = scmp.ne.s32.totalorder %s129, %s131
    %p138 = scmp.eq.s32.totalorder %s16, 3
    %p139 = por %p137, %p138
    %p140 = scmp.ne.s32.totalorder %s131, %s132
    %p141 = scmp.eq.s32.totalorder %s16, 0
    %p142 = por %p140, %p141
    %p143 = scmp.ne.s32.totalorder %s131, %s132
    %p144 = scmp.eq.s32.totalorder %s17, 3
    %p145 = por %p143, %p144
    %p147 = scmp.ne.s32.totalorder %s132, %s146
    %p148 = scmp.eq.s32.totalorder %s17, 0
    %p149 = por %p147, %p148
    %s150 = ssub.s32 %s18, %s30
    %s151 = ssub.s32 %s19, %s26
    %s152 = sor.u32 %s150, %s151
    %p153 = scmp.eq.s32.totalorder %s152, 0
    %s155 = sadd.s32 %s154, 1
    %s156 = scalar_select %p153, %s154, %s155
    %p159 = pneg %p153
    %p160 = scmp.eq.s32.totalorder %s11, 3
    %p161 = por %p159, %p160
    %p162 = scmp.ne.s32.totalorder %s154, %s157
    %p163 = scmp.eq.s32.totalorder %s11, 0
    %p164 = por %p162, %p163
    %p165 = scmp.ne.s32.totalorder %s154, %s157
    %p166 = scmp.eq.s32.totalorder %s16, 3
    %p167 = por %p165, %p166
    %p168 = scmp.ne.s32.totalorder %s157, %s158
    %p169 = scmp.eq.s32.totalorder %s16, 0
    %p170 = por %p168, %p169
    %p171 = scmp.ne.s32.totalorder %s157, %s158
    %p172 = scmp.eq.s32.totalorder %s17, 3
    %p173 = por %p171, %p172
    %p175 = scmp.ne.s32.totalorder %s158, %s174
    %p176 = scmp.eq.s32.totalorder %s17, 0
    %p177 = por %p175, %p176
    %p178 = scmp.le.s32.totalorder 1, %s11
    %p179 = scmp.lt.s32.totalorder %s11, 5
    %p180 = pnand %p178, %p179
    %p181 = pneg %p180
    // Predicated region
    $region9: #{cnn_forward.3} parent=5 // pred_check
      _
    $region10: #{cnn_forward.3} parent=5 // pred_check_branch
      %183 = sbr.rel (%p180) target = $region12
    $region11: #{cnn_forward.3} parent=5 // pred_region
      %s184 = ssub.s32 %s11, 1
      // Predicated region
      $region13: #{cnn_forward.3} parent=11 // pred_check
        %p185 = pneg %p100
      $region14: #{cnn_forward.3} parent=11 // pred_check_branch
        %187 = sbr.rel (%p185) target = $region16
      $region15: #{cnn_forward.3} parent=11 // pred_region
        _
      $region16: #{cnn_forward.3} parent=11 // pred_fallthru
        _
      // Predicated region
      $region17: #{cnn_forward.3} parent=11 // pred_check
        %p188 = pneg %p121
      $region18: #{cnn_forward.3} parent=11 // pred_check_branch
        %190 = sbr.rel (%p188) target = $region20
      $region19: #{cnn_forward.3} parent=11 // pred_region
        _
      $region20: #{cnn_forward.3} parent=11 // pred_fallthru
        _
      // Predicated region
      $region21: #{cnn_forward.3} parent=11 // pred_check
        %p191 = pneg %p142
      $region22: #{cnn_forward.3} parent=11 // pred_check_branch
        %193 = sbr.rel (%p191) target = $region24
      $region23: #{cnn_forward.3} parent=11 // pred_region
        _
      $region24: #{cnn_forward.3} parent=11 // pred_fallthru
        _
    $region12: #{cnn_forward.3} parent=5 // pred_fallthru
      _
    %p194 = scmp.lt.s32.totalorder %s11, 4
    // Predicated region
    $region25: #{cnn_forward.3} parent=5 // pred_check
      %p195 = pneg %p194
    $region26: #{cnn_forward.3} parent=5 // pred_check_branch
      %197 = sbr.rel (%p195) target = $region28
    $region27: #{cnn_forward.3} parent=5 // pred_region
      // Predicated region
      $region29: #{cnn_forward.3} parent=27 // pred_check
        %p198 = pneg %p45
      $region30: #{cnn_forward.3} parent=27 // pred_check_branch
        %200 = sbr.rel (%p198) target = $region32
      $region31: #{cnn_forward.3} parent=27 // pred_region
        %s201 = smul.u32 16, %s19
        %p202 = scmp.lt.s32.totalorder %s18, 1
        %s203 = scalar_select %p202, %s18, 1
        %p204 = scmp.lt.s32.totalorder %s201, 31
        %s205 = scalar_select %p204, %s201, 31
        %s206 = smul.addr %s205, 5
        %s207 = smul.addr %s203, 160
        %s208 = sadd.s32 %s206, %s207
        %s209 = smul.addr %s208, 4
        %s210 = scalar_lea.vmem %s0, %s209
        %s211 = smul.u32 16, %s19
      $region32: #{cnn_forward.3} parent=27 // pred_fallthru
        _
      // Predicated region
      $region33: #{cnn_forward.3} parent=27 // pred_check
        %p212 = pneg %p73
      $region34: #{cnn_forward.3} parent=27 // pred_check_branch
        %214 = sbr.rel (%p212) target = $region36
      $region35: #{cnn_forward.3} parent=27 // pred_region
        %s215 = smul.u32 16, %s19
        %p216 = scmp.lt.s32.totalorder %s18, 1
        %s217 = scalar_select %p216, %s18, 1
        %p218 = scmp.lt.s32.totalorder %s215, 31
        %s219 = scalar_select %p218, %s215, 31
        %s220 = smul.addr %s219, 5
        %s221 = smul.addr %s217, 160
        %s222 = sadd.s32 %s220, %s221
        %s223 = smul.addr %s222, 4
        %s224 = scalar_lea.vmem %s1, %s223
        %s225 = smul.u32 16, %s19
      $region36: #{cnn_forward.3} parent=27 // pred_fallthru
        _
    $region28: #{cnn_forward.3} parent=5 // pred_fallthru
      _
    %p226 = scmp.le.s32.totalorder 1, %s11
    %p227 = scmp.lt.s32.totalorder %s11, 5
    %p228 = pnand %p226, %p227
    %p229 = pneg %p228
    // Predicated region
    $region37: #{cnn_forward.3} parent=5 // pred_check
      _
    $region38: #{cnn_forward.3} parent=5 // pred_check_branch
      %231 = sbr.rel (%p228) target = $region40
    $region39: #{cnn_forward.3} parent=5 // pred_region
      %s232 = ssub.s32 %s11, 1
      %s233 = smul.u32 16, %s21
      %p234 = scmp.lt.s32.totalorder %s20, 1
      %s235 = scalar_select %p234, %s20, 1
      %p236 = scmp.lt.s32.totalorder %s233, 31
      %s237 = scalar_select %p236, %s233, 31
      %s238 = smul.addr %s237, 5
      %s239 = smul.addr %s235, 160
      %s240 = sadd.s32 %s238, %s239
      %s241 = smul.addr %s240, 4
      %s242 = scalar_lea.vmem %s0, %s241
      %p243 = pneg %p51
      %p244 = pneg %p48
      %s245 = smul.u32 16, %s21
      %p246 = scmp.lt.s32.totalorder %s20, 1
      %s247 = scalar_select %p246, %s20, 1
      %p248 = scmp.lt.s32.totalorder %s245, 31
      %s249 = scalar_select %p248, %s245, 31
      %s250 = smul.addr %s249, 5
      %s251 = smul.addr %s247, 160
      %s252 = sadd.s32 %s250, %s251
      %s253 = smul.addr %s252, 4
      %s254 = scalar_lea.vmem %s1, %s253
      %p255 = pneg %p79
      %p256 = pneg %p76
      %p257 = pneg %p100
      %p258 = pneg %p97
      %p259 = pneg %p121
      %p260 = pneg %p118
      %p261 = pneg %p142
      %p262 = pneg %p139
      %p263 = pneg %p170
      %p264 = pneg %p167
      %s265 = smul.u32 16, %s21
      %p266 = scmp.lt.s32.totalorder %s20, 1
      %s267 = scalar_select %p266, %s20, 1
      %p268 = scmp.lt.s32.totalorder %s265, 31
      %s269 = scalar_select %p268, %s265, 31
      %s270 = smul.addr %s269, 2
      %s271 = smul.addr %s267, 64
      %s272 = sadd.s32 %s270, %s271
      %s273 = smul.addr %s272, 4
      %s274 = scalar_lea.vmem %s5, %s273
      %s275 = smul.u32 16, %s21
      %p276 = scmp.lt.s32.totalorder %s20, 1
      %s277 = scalar_select %p276, %s20, 1
      %p278 = scmp.lt.s32.totalorder %s275, 31
      %s279 = scalar_select %p278, %s275, 31
      %s280 = smul.addr %s279, 5
      %s281 = smul.addr %s277, 160
      %s282 = sadd.s32 %s280, %s281
      %s283 = smul.addr %s282, 4
      %s284 = scalar_lea.vmem %s0, %s283
      %s285 = smul.u32 16, %s21
      %s286 = smul.u32 16, %s21
      %p287 = scmp.lt.s32.totalorder %s20, 1
      %s288 = scalar_select %p287, %s20, 1
      %p289 = scmp.lt.s32.totalorder %s286, 31
      %s290 = scalar_select %p289, %s286, 31
      %s291 = smul.addr %s290, 5
      %s292 = smul.addr %s288, 160
      %s293 = sadd.s32 %s291, %s292
      %s294 = smul.addr %s293, 4
      %s295 = scalar_lea.vmem %s1, %s294
      %s296 = smul.u32 16, %s21
      %s297 = smul.u32 16, %s21
      %p298 = scmp.lt.s32.totalorder %s20, 1
      %s299 = scalar_select %p298, %s20, 1
      %p300 = scmp.lt.s32.totalorder %s297, 31
      %s301 = scalar_select %p300, %s297, 31
      %s302 = smul.addr %s301, 2
      %s303 = smul.addr %s299, 64
      %s304 = sadd.s32 %s302, %s303
      %s305 = smul.addr %s304, 4
      %s306 = scalar_lea.vmem %s5, %s305
      %s307 = smul.u32 16, %s21
      %v309 = vld [vmem:[%s284] sm:$0xff]
      %v310 = vld [vmem:[%s284 + $0x8] sm:$0xff]
      %v311 = vld [vmem:[%s284 + $0x10] sm:$0xf]
      %v312 = vld [vmem:[%s284 + $0x14] sm:$0xff]
      %v313 = vld [vmem:[%s284 + $0x1c] sm:$0xff]
      %v314 = vld [vmem:[%s284 + $0x24] sm:$0xf]
      %v315 = vld [vmem:[%s284 + $0x28] sm:$0xff]
      %v316 = vld [vmem:[%s284 + $0x30] sm:$0xff]
      %v317 = vld [vmem:[%s284 + $0x38] sm:$0xf]
      %v318 = vld [vmem:[%s284 + $0x3c] sm:$0xff]
      %v319 = vld [vmem:[%s284 + $0x44] sm:$0xff]
      %v320 = vld [vmem:[%s284 + $0x4c] sm:$0xf]
      %v321 = vld [vmem:[%s284 + $0x50] sm:$0xff]
      %v322 = vld [vmem:[%s284 + $0x58] sm:$0xff]
      %v323 = vld [vmem:[%s284 + $0x60] sm:$0xf]
      %v324 = vld [vmem:[%s284 + $0x64] sm:$0xff]
      %v325 = vld [vmem:[%s284 + $0x6c] sm:$0xff]
      %v326 = vld [vmem:[%s284 + $0x74] sm:$0xf]
      %v327 = vld [vmem:[%s284 + $0x78] sm:$0xff]
      %v328 = vld [vmem:[%s284 + $0x80] sm:$0xff]
      %v329 = vld [vmem:[%s284 + $0x88] sm:$0xf]
      %v330 = vld [vmem:[%s284 + $0x8c] sm:$0xff]
      %v331 = vld [vmem:[%s284 + $0x94] sm:$0xff]
      %v332 = vld [vmem:[%s284 + $0x9c] sm:$0xf]
      %v333 = vld [vmem:[%s284 + $0xa0] sm:$0xff]
      %v334 = vld [vmem:[%s284 + $0xa8] sm:$0xff]
      %v335 = vld [vmem:[%s284 + $0xb0] sm:$0xf]
      %v336 = vld [vmem:[%s284 + $0xb4] sm:$0xff]
      %v337 = vld [vmem:[%s284 + $0xbc] sm:$0xff]
      %v338 = vld [vmem:[%s284 + $0xc4] sm:$0xf]
      %v339 = vld [vmem:[%s284 + $0xc8] sm:$0xff]
      %v340 = vld [vmem:[%s284 + $0xd0] sm:$0xff]
      %v341 = vld [vmem:[%s284 + $0xd8] sm:$0xf]
      %v342 = vld [vmem:[%s284 + $0xdc] sm:$0xff]
      %v343 = vld [vmem:[%s284 + $0xe4] sm:$0xff]
      %v344 = vld [vmem:[%s284 + $0xec] sm:$0xf]
      %v345 = vld [vmem:[%s284 + $0xf0] sm:$0xff]
      %v346 = vld [vmem:[%s284 + $0xf8] sm:$0xff]
      %v347 = vld [vmem:[%s284 + $0x100] sm:$0xf]
      %v348 = vld [vmem:[%s284 + $0x104] sm:$0xff]
      %v349 = vld [vmem:[%s284 + $0x10c] sm:$0xff]
      %v350 = vld [vmem:[%s284 + $0x114] sm:$0xf]
      %v351 = vld [vmem:[%s284 + $0x118] sm:$0xff]
      %v352 = vld [vmem:[%s284 + $0x120] sm:$0xff]
      %v353 = vld [vmem:[%s284 + $0x128] sm:$0xf]
      %v354 = vld [vmem:[%s284 + $0x12c] sm:$0xff]
      %v355 = vld [vmem:[%s284 + $0x134] sm:$0xff]
      %v356 = vld [vmem:[%s284 + $0x13c] sm:$0xf]
      %v357 = vld [vmem:[%s295] sm:$0xff]
      %v358 = vld [vmem:[%s295 + $0x8] sm:$0xff]
      %v359 = vld [vmem:[%s295 + $0x10] sm:$0xf]
      %v360 = vld [vmem:[%s295 + $0x14] sm:$0xff]
      %v361 = vld [vmem:[%s295 + $0x1c] sm:$0xff]
      %v362 = vld [vmem:[%s295 + $0x24] sm:$0xf]
      %v363 = vld [vmem:[%s295 + $0x28] sm:$0xff]
      %v364 = vld [vmem:[%s295 + $0x30] sm:$0xff]
      %v365 = vld [vmem:[%s295 + $0x38] sm:$0xf]
      %v366 = vld [vmem:[%s295 + $0x3c] sm:$0xff]
      %v367 = vld [vmem:[%s295 + $0x44] sm:$0xff]
      %v368 = vld [vmem:[%s295 + $0x4c] sm:$0xf]
      %v369 = vld [vmem:[%s295 + $0x50] sm:$0xff]
      %v370 = vld [vmem:[%s295 + $0x58] sm:$0xff]
      %v371 = vld [vmem:[%s295 + $0x60] sm:$0xf]
      %v372 = vld [vmem:[%s295 + $0x64] sm:$0xff]
      %v373 = vld [vmem:[%s295 + $0x6c] sm:$0xff]
      %v374 = vld [vmem:[%s295 + $0x74] sm:$0xf]
      %v375 = vld [vmem:[%s295 + $0x78] sm:$0xff]
      %v376 = vld [vmem:[%s295 + $0x80] sm:$0xff]
      %v377 = vld [vmem:[%s295 + $0x88] sm:$0xf]
      %v378 = vld [vmem:[%s295 + $0x8c] sm:$0xff]
      %v379 = vld [vmem:[%s295 + $0x94] sm:$0xff]
      %v380 = vld [vmem:[%s295 + $0x9c] sm:$0xf]
      %v381 = vld [vmem:[%s295 + $0xa0] sm:$0xff]
      %v382 = vld [vmem:[%s295 + $0xa8] sm:$0xff]
      %v383 = vld [vmem:[%s295 + $0xb0] sm:$0xf]
      %v384 = vld [vmem:[%s295 + $0xb4] sm:$0xff]
      %v385 = vld [vmem:[%s295 + $0xbc] sm:$0xff]
      %v386 = vld [vmem:[%s295 + $0xc4] sm:$0xf]
      %v387 = vld [vmem:[%s295 + $0xc8] sm:$0xff]
      %v388 = vld [vmem:[%s295 + $0xd0] sm:$0xff]
      %v389 = vld [vmem:[%s295 + $0xd8] sm:$0xf]
      %v390 = vld [vmem:[%s295 + $0xdc] sm:$0xff]
      %v391 = vld [vmem:[%s295 + $0xe4] sm:$0xff]
      %v392 = vld [vmem:[%s295 + $0xec] sm:$0xf]
      %v393 = vld [vmem:[%s295 + $0xf0] sm:$0xff]
      %v394 = vld [vmem:[%s295 + $0xf8] sm:$0xff]
      %v395 = vld [vmem:[%s295 + $0x100] sm:$0xf]
      %v396 = vld [vmem:[%s295 + $0x104] sm:$0xff]
      %v397 = vld [vmem:[%s295 + $0x10c] sm:$0xff]
      %v398 = vld [vmem:[%s295 + $0x114] sm:$0xf]
      %v399 = vld [vmem:[%s295 + $0x118] sm:$0xff]
      %v400 = vld [vmem:[%s295 + $0x120] sm:$0xff]
      %v401 = vld [vmem:[%s295 + $0x128] sm:$0xf]
      %v402 = vld [vmem:[%s295 + $0x12c] sm:$0xff]
      %v403 = vld [vmem:[%s295 + $0x134] sm:$0xff]
      %v404 = vld [vmem:[%s295 + $0x13c] sm:$0xf]
      %v405 = vld [vmem:[%s2] sm:$0xff]
      %v406 = vld [vmem:[%s2 + $0x8] sm:$0xff]
      %v407 = vld [vmem:[%s2 + $0x10] sm:$0xff]
      %v408 = vld [vmem:[%s2 + $0x18] sm:$0xff]
      %v409 = vld [vmem:[%s2 + $0x20] sm:$0xff]
      %v410 = vld [vmem:[%s2 + $0x28] sm:$0xff]
      %v411 = vld [vmem:[%s2 + $0x30] sm:$0xff]
      %v412 = vld [vmem:[%s2 + $0x38] sm:$0xff]
      %v413 = vld [vmem:[%s2 + $0x40] sm:$0xff]
      %v414 = vld [vmem:[%s2 + $0x48] sm:$0xff]
      %v415 = vld [vmem:[%s2 + $0x50] sm:$0xff]
      %v416 = vld [vmem:[%s2 + $0x58] sm:$0xff]
      %v417 = vld [vmem:[%s2 + $0x60] sm:$0xff]
      %v418 = vld [vmem:[%s2 + $0x68] sm:$0xff]
      %v419 = vld [vmem:[%s2 + $0x70] sm:$0xff]
      %v420 = vld [vmem:[%s2 + $0x78] sm:$0xff]
      %v421 = vld [vmem:[%s2 + $0x80] sm:$0xff]
      %v422 = vld [vmem:[%s2 + $0x88] sm:$0xff]
      %v423 = vld [vmem:[%s2 + $0x90] sm:$0xff]
      %v424 = vld [vmem:[%s2 + $0x98] sm:$0xff]
      %v425 = vld [vmem:[%s2 + $0xa0] sm:$0xff]
      %v426 = vld [vmem:[%s2 + $0xa8] sm:$0xff]
      %v427 = vld [vmem:[%s2 + $0xb0] sm:$0xff]
      %v428 = vld [vmem:[%s2 + $0xb8] sm:$0xff]
      %v429 = vld [vmem:[%s2 + $0xc0] sm:$0xff]
      %v430 = vld [vmem:[%s2 + $0xc8] sm:$0xff]
      %v431 = vld [vmem:[%s2 + $0xd0] sm:$0xff]
      %v432 = vld [vmem:[%s2 + $0xd8] sm:$0xff]
      %v433 = vld [vmem:[%s2 + $0xe0] sm:$0xff]
      %v434 = vld [vmem:[%s2 + $0xe8] sm:$0xff]
      %v435 = vld [vmem:[%s2 + $0xf0] sm:$0xff]
      %v436 = vld [vmem:[%s2 + $0xf8] sm:$0xff]
      %v437 = vld [vmem:[%s2 + $0x100] sm:$0xff]
      %v438 = vld [vmem:[%s2 + $0x108] sm:$0xff]
      %v439 = vld [vmem:[%s2 + $0x110] sm:$0xff]
      %v440 = vld [vmem:[%s2 + $0x118] sm:$0xff]
      %v441 = vld [vmem:[%s2 + $0x120] sm:$0xff]
      %v442 = vld [vmem:[%s2 + $0x128] sm:$0xff]
      %v443 = vld [vmem:[%s2 + $0x130] sm:$0xff]
      %v444 = vld [vmem:[%s2 + $0x138] sm:$0xff]
      %v445 = vld [vmem:[%s2 + $0x140] sm:$0xff]
      %v446 = vld [vmem:[%s2 + $0x148] sm:$0xff]
      %v447 = vld [vmem:[%s2 + $0x150] sm:$0xff]
      %v448 = vld [vmem:[%s2 + $0x158] sm:$0xff]
      %v449 = vld [vmem:[%s2 + $0x160] sm:$0xff]
      %v450 = vld [vmem:[%s2 + $0x168] sm:$0xff]
      %v451 = vld [vmem:[%s2 + $0x170] sm:$0xff]
      %v452 = vld [vmem:[%s2 + $0x178] sm:$0xff]
      %v453 = vld [vmem:[%s2 + $0x180] sm:$0xff]
      %v454 = vld [vmem:[%s2 + $0x188] sm:$0xff]
      %v455 = vld [vmem:[%s2 + $0x190] sm:$0xff]
      %v456 = vld [vmem:[%s2 + $0x198] sm:$0xff]
      %v457 = vld [vmem:[%s2 + $0x1a0] sm:$0xff]
      %v458 = vld [vmem:[%s2 + $0x1a8] sm:$0xff]
      %v459 = vld [vmem:[%s2 + $0x1b0] sm:$0xff]
      %v460 = vld [vmem:[%s2 + $0x1b8] sm:$0xff]
      %v461 = vld [vmem:[%s2 + $0x1c0] sm:$0xff]
      %v462 = vld [vmem:[%s2 + $0x1c8] sm:$0xff]
      %v463 = vld [vmem:[%s2 + $0x1d0] sm:$0xff]
      %v464 = vld [vmem:[%s2 + $0x1d8] sm:$0xff]
      %v465 = vld [vmem:[%s2 + $0x1e0] sm:$0xff]
      %v466 = vld [vmem:[%s2 + $0x1e8] sm:$0xff]
      %v467 = vld [vmem:[%s2 + $0x1f0] sm:$0xff]
      %v468 = vld [vmem:[%s2 + $0x1f8] sm:$0xff]
      %v469 = vld [vmem:[%s2 + $0x200] sm:$0xff]
      %v470 = vld [vmem:[%s2 + $0x208] sm:$0xff]
      %v471 = vld [vmem:[%s2 + $0x210] sm:$0xff]
      %v472 = vld [vmem:[%s2 + $0x218] sm:$0xff]
      %v473 = vld [vmem:[%s2 + $0x220] sm:$0xff]
      %v474 = vld [vmem:[%s2 + $0x228] sm:$0xff]
      %v475 = vld [vmem:[%s2 + $0x230] sm:$0xff]
      %v476 = vld [vmem:[%s2 + $0x238] sm:$0xff]
      %v477 = vld [vmem:[%s2 + $0x240] sm:$0xff]
      %v478 = vld [vmem:[%s2 + $0x248] sm:$0xff]
      %v479 = vld [vmem:[%s2 + $0x250] sm:$0xff]
      %v480 = vld [vmem:[%s3] sm:$0xff]
      %v481 = vld [vmem:[%s3 + $0x8] sm:$0xff]
      %v482 = vld [vmem:[%s3 + $0x10] sm:$0xff]
      %v483 = vld [vmem:[%s3 + $0x18] sm:$0xff]
      %v484 = vld [vmem:[%s3 + $0x20] sm:$0xff]
      %v485 = vld [vmem:[%s3 + $0x28] sm:$0xff]
      %v486 = vld [vmem:[%s3 + $0x30] sm:$0xff]
      %v487 = vld [vmem:[%s3 + $0x38] sm:$0xff]
      %v488 = vld [vmem:[%s3 + $0x40] sm:$0xff]
      %v489 = vld [vmem:[%s3 + $0x48] sm:$0xff]
      %v490 = vld [vmem:[%s3 + $0x50] sm:$0xff]
      %v491 = vld [vmem:[%s3 + $0x58] sm:$0xff]
      %v492 = vld [vmem:[%s3 + $0x60] sm:$0xff]
      %v493 = vld [vmem:[%s3 + $0x68] sm:$0xff]
      %v494 = vld [vmem:[%s3 + $0x70] sm:$0xff]
      %v495 = vld [vmem:[%s3 + $0x78] sm:$0xff]
      %v496 = vld [vmem:[%s3 + $0x80] sm:$0xff]
      %v497 = vld [vmem:[%s3 + $0x88] sm:$0xff]
      %v498 = vld [vmem:[%s3 + $0x90] sm:$0xff]
      %v499 = vld [vmem:[%s3 + $0x98] sm:$0xff]
      %v500 = vld [vmem:[%s3 + $0xa0] sm:$0xff]
      %v501 = vld [vmem:[%s3 + $0xa8] sm:$0xff]
      %v502 = vld [vmem:[%s3 + $0xb0] sm:$0xff]
      %v503 = vld [vmem:[%s3 + $0xb8] sm:$0xff]
      %v504 = vld [vmem:[%s3 + $0xc0] sm:$0xff]
      %v505 = vld [vmem:[%s3 + $0xc8] sm:$0xff]
      %v506 = vld [vmem:[%s3 + $0xd0] sm:$0xff]
      %v507 = vld [vmem:[%s3 + $0xd8] sm:$0xff]
      %v508 = vld [vmem:[%s3 + $0xe0] sm:$0xff]
      %v509 = vld [vmem:[%s3 + $0xe8] sm:$0xff]
      %v510 = vld [vmem:[%s3 + $0xf0] sm:$0xff]
      %v511 = vld [vmem:[%s3 + $0xf8] sm:$0xff]
      %v512 = vld [vmem:[%s3 + $0x100] sm:$0xff]
      %v513 = vld [vmem:[%s3 + $0x108] sm:$0xff]
      %v514 = vld [vmem:[%s3 + $0x110] sm:$0xff]
      %v515 = vld [vmem:[%s3 + $0x118] sm:$0xff]
      %v516 = vld [vmem:[%s3 + $0x120] sm:$0xff]
      %v517 = vld [vmem:[%s3 + $0x128] sm:$0xff]
      %v518 = vld [vmem:[%s3 + $0x130] sm:$0xff]
      %v519 = vld [vmem:[%s3 + $0x138] sm:$0xff]
      %v520 = vld [vmem:[%s3 + $0x140] sm:$0xff]
      %v521 = vld [vmem:[%s3 + $0x148] sm:$0xff]
      %v522 = vld [vmem:[%s3 + $0x150] sm:$0xff]
      %v523 = vld [vmem:[%s3 + $0x158] sm:$0xff]
      %v524 = vld [vmem:[%s3 + $0x160] sm:$0xff]
      %v525 = vld [vmem:[%s3 + $0x168] sm:$0xff]
      %v526 = vld [vmem:[%s3 + $0x170] sm:$0xff]
      %v527 = vld [vmem:[%s3 + $0x178] sm:$0xff]
      %v528 = vld [vmem:[%s3 + $0x180] sm:$0xff]
      %v529 = vld [vmem:[%s3 + $0x188] sm:$0xff]
      %v530 = vld [vmem:[%s3 + $0x190] sm:$0xff]
      %v531 = vld [vmem:[%s3 + $0x198] sm:$0xff]
      %v532 = vld [vmem:[%s3 + $0x1a0] sm:$0xff]
      %v533 = vld [vmem:[%s3 + $0x1a8] sm:$0xff]
      %v534 = vld [vmem:[%s3 + $0x1b0] sm:$0xff]
      %v535 = vld [vmem:[%s3 + $0x1b8] sm:$0xff]
      %v536 = vld [vmem:[%s3 + $0x1c0] sm:$0xff]
      %v537 = vld [vmem:[%s3 + $0x1c8] sm:$0xff]
      %v538 = vld [vmem:[%s3 + $0x1d0] sm:$0xff]
      %v539 = vld [vmem:[%s3 + $0x1d8] sm:$0xff]
      %v540 = vld [vmem:[%s3 + $0x1e0] sm:$0xff]
      %v541 = vld [vmem:[%s3 + $0x1e8] sm:$0xff]
      %v542 = vld [vmem:[%s3 + $0x1f0] sm:$0xff]
      %v543 = vld [vmem:[%s3 + $0x1f8] sm:$0xff]
      %v544 = vld [vmem:[%s3 + $0x200] sm:$0xff]
      %v545 = vld [vmem:[%s3 + $0x208] sm:$0xff]
      %v546 = vld [vmem:[%s3 + $0x210] sm:$0xff]
      %v547 = vld [vmem:[%s3 + $0x218] sm:$0xff]
      %v548 = vld [vmem:[%s3 + $0x220] sm:$0xff]
      %v549 = vld [vmem:[%s3 + $0x228] sm:$0xff]
      %v550 = vld [vmem:[%s3 + $0x230] sm:$0xff]
      %v551 = vld [vmem:[%s3 + $0x238] sm:$0xff]
      %v552 = vld [vmem:[%s3 + $0x240] sm:$0xff]
      %v553 = vld [vmem:[%s3 + $0x248] sm:$0xff]
      %v554 = vld [vmem:[%s3 + $0x250] sm:$0xff]
      %v603 = vunpack.c.l.b16 %v309
      %v604 = vunpack.c.h.b16 %v309
      %v605 = vunpack.c.l.b16 %v310
      %v606 = vunpack.c.h.b16 %v310
      %v607 = vunpack.c.l.b16 %v311
      %v608 = vunpack.c.l.b16 %v312
      %v609 = vunpack.c.h.b16 %v312
      %v610 = vunpack.c.l.b16 %v313
      %v611 = vunpack.c.h.b16 %v313
      %v612 = vunpack.c.l.b16 %v314
      %v613 = vunpack.c.l.b16 %v315
      %v614 = vunpack.c.h.b16 %v315
      %v615 = vunpack.c.l.b16 %v316
      %v616 = vunpack.c.h.b16 %v316
      %v617 = vunpack.c.l.b16 %v317
      %v618 = vunpack.c.l.b16 %v318
      %v619 = vunpack.c.h.b16 %v318
      %v620 = vunpack.c.l.b16 %v319
      %v621 = vunpack.c.h.b16 %v319
      %v622 = vunpack.c.l.b16 %v320
      %v623 = vunpack.c.l.b16 %v321
      %v624 = vunpack.c.h.b16 %v321
      %v625 = vunpack.c.l.b16 %v322
      %v626 = vunpack.c.h.b16 %v322
      %v627 = vunpack.c.l.b16 %v323
      %v628 = vunpack.c.l.b16 %v324
      %v629 = vunpack.c.h.b16 %v324
      %v630 = vunpack.c.l.b16 %v325
      %v631 = vunpack.c.h.b16 %v325
      %v632 = vunpack.c.l.b16 %v326
      %v633 = vunpack.c.l.b16 %v327
      %v634 = vunpack.c.h.b16 %v327
      %v635 = vunpack.c.l.b16 %v328
      %v636 = vunpack.c.h.b16 %v328
      %v637 = vunpack.c.l.b16 %v329
      %v638 = vunpack.c.l.b16 %v330
      %v639 = vunpack.c.h.b16 %v330
      %v640 = vunpack.c.l.b16 %v331
      %v641 = vunpack.c.h.b16 %v331
      %v642 = vunpack.c.l.b16 %v332
      %v643 = vunpack.c.l.b16 %v333
      %v644 = vunpack.c.h.b16 %v333
      %v645 = vunpack.c.l.b16 %v334
      %v646 = vunpack.c.h.b16 %v334
      %v647 = vunpack.c.l.b16 %v335
      %v648 = vunpack.c.l.b16 %v336
      %v649 = vunpack.c.h.b16 %v336
      %v650 = vunpack.c.l.b16 %v337
      %v651 = vunpack.c.h.b16 %v337
      %v652 = vunpack.c.l.b16 %v338
      %v653 = vunpack.c.l.b16 %v339
      %v654 = vunpack.c.h.b16 %v339
      %v655 = vunpack.c.l.b16 %v340
      %v656 = vunpack.c.h.b16 %v340
      %v657 = vunpack.c.l.b16 %v341
      %v658 = vunpack.c.l.b16 %v342
      %v659 = vunpack.c.h.b16 %v342
      %v660 = vunpack.c.l.b16 %v343
      %v661 = vunpack.c.h.b16 %v343
      %v662 = vunpack.c.l.b16 %v344
      %v663 = vunpack.c.l.b16 %v345
      %v664 = vunpack.c.h.b16 %v345
      %v665 = vunpack.c.l.b16 %v346
      %v666 = vunpack.c.h.b16 %v346
      %v667 = vunpack.c.l.b16 %v347
      %v668 = vunpack.c.l.b16 %v348
      %v669 = vunpack.c.h.b16 %v348
      %v670 = vunpack.c.l.b16 %v349
      %v671 = vunpack.c.h.b16 %v349
      %v672 = vunpack.c.l.b16 %v350
      %v673 = vunpack.c.l.b16 %v351
      %v674 = vunpack.c.h.b16 %v351
      %v675 = vunpack.c.l.b16 %v352
      %v676 = vunpack.c.h.b16 %v352
      %v677 = vunpack.c.l.b16 %v353
      %v678 = vunpack.c.l.b16 %v354
      %v679 = vunpack.c.h.b16 %v354
      %v680 = vunpack.c.l.b16 %v355
      %v681 = vunpack.c.h.b16 %v355
      %v682 = vunpack.c.l.b16 %v356
      %v683 = vpack.c.b16 %v608, %v603
      %v684 = vpack.c.b16 %v609, %v604
      %v685 = vpack.c.b16 %v610, %v605
      %v686 = vpack.c.b16 %v611, %v606
      %v687 = vpack.c.b16 %v612, %v607
      %v688 = vpack.c.b16 %v618, %v613
      %v689 = vpack.c.b16 %v619, %v614
      %v690 = vpack.c.b16 %v620, %v615
      %v691 = vpack.c.b16 %v621, %v616
      %v692 = vpack.c.b16 %v622, %v617
      %v693 = vpack.c.b16 %v628, %v623
      %v694 = vpack.c.b16 %v629, %v624
      %v695 = vpack.c.b16 %v630, %v625
      %v696 = vpack.c.b16 %v631, %v626
      %v697 = vpack.c.b16 %v632, %v627
      %v698 = vpack.c.b16 %v638, %v633
      %v699 = vpack.c.b16 %v639, %v634
      %v700 = vpack.c.b16 %v640, %v635
      %v701 = vpack.c.b16 %v641, %v636
      %v702 = vpack.c.b16 %v642, %v637
      %v703 = vpack.c.b16 %v648, %v643
      %v704 = vpack.c.b16 %v649, %v644
      %v705 = vpack.c.b16 %v650, %v645
      %v706 = vpack.c.b16 %v651, %v646
      %v707 = vpack.c.b16 %v652, %v647
      %v708 = vpack.c.b16 %v658, %v653
      %v709 = vpack.c.b16 %v659, %v654
      %v710 = vpack.c.b16 %v660, %v655
      %v711 = vpack.c.b16 %v661, %v656
      %v712 = vpack.c.b16 %v662, %v657
      %v713 = vpack.c.b16 %v668, %v663
      %v714 = vpack.c.b16 %v669, %v664
      %v715 = vpack.c.b16 %v670, %v665
      %v716 = vpack.c.b16 %v671, %v666
      %v717 = vpack.c.b16 %v672, %v667
      %v718 = vpack.c.b16 %v678, %v673
      %v719 = vpack.c.b16 %v679, %v674
      %v720 = vpack.c.b16 %v680, %v675
      %v721 = vpack.c.b16 %v681, %v676
      %v722 = vpack.c.b16 %v682, %v677
      %v830 = vunpack.c.l.b16 %v405
      %v831 = vunpack.c.h.b16 %v405
      %v832 = vunpack.c.l.b16 %v406
      %v833 = vunpack.c.h.b16 %v406
      %v834 = vunpack.c.l.b16 %v407
      %v835 = vunpack.c.h.b16 %v407
      %v836 = vunpack.c.l.b16 %v408
      %v837 = vunpack.c.h.b16 %v408
      %v838 = vunpack.c.l.b16 %v409
      %v839 = vunpack.c.h.b16 %v409
      %v840 = vunpack.c.l.b16 %v410
      %v841 = vunpack.c.h.b16 %v410
      %v842 = vunpack.c.l.b16 %v411
      %v843 = vunpack.c.h.b16 %v411
      %v844 = vunpack.c.l.b16 %v412
      %v845 = vunpack.c.h.b16 %v412
      %v846 = vunpack.c.l.b16 %v413
      %v847 = vunpack.c.h.b16 %v413
      %v848 = vunpack.c.l.b16 %v414
      %v849 = vunpack.c.h.b16 %v414
      %v850 = vunpack.c.l.b16 %v415
      %v851 = vunpack.c.h.b16 %v415
      %v852 = vunpack.c.l.b16 %v416
      %v853 = vunpack.c.h.b16 %v416
      %v854 = vunpack.c.l.b16 %v417
      %v855 = vunpack.c.h.b16 %v417
      %v856 = vunpack.c.l.b16 %v418
      %v857 = vunpack.c.h.b16 %v418
      %v858 = vunpack.c.l.b16 %v419
      %v859 = vunpack.c.h.b16 %v419
      %v860 = vunpack.c.l.b16 %v420
      %v861 = vunpack.c.h.b16 %v420
      %v862 = vunpack.c.l.b16 %v421
      %v863 = vunpack.c.h.b16 %v421
      %v864 = vunpack.c.l.b16 %v422
      %v865 = vunpack.c.h.b16 %v422
      %v866 = vunpack.c.l.b16 %v423
      %v867 = vunpack.c.h.b16 %v423
      %v868 = vunpack.c.l.b16 %v424
      %v869 = vunpack.c.h.b16 %v424
      %v870 = vunpack.c.l.b16 %v425
      %v871 = vunpack.c.h.b16 %v425
      %v872 = vunpack.c.l.b16 %v426
      %v873 = vunpack.c.h.b16 %v426
      %v874 = vunpack.c.l.b16 %v427
      %v875 = vunpack.c.h.b16 %v427
      %v876 = vunpack.c.l.b16 %v428
      %v877 = vunpack.c.h.b16 %v428
      %v878 = vunpack.c.l.b16 %v429
      %v879 = vunpack.c.h.b16 %v429
      %v880 = vunpack.c.l.b16 %v430
      %v881 = vunpack.c.h.b16 %v430
      %v882 = vunpack.c.l.b16 %v431
      %v883 = vunpack.c.h.b16 %v431
      %v884 = vunpack.c.l.b16 %v432
      %v885 = vunpack.c.h.b16 %v432
      %v886 = vunpack.c.l.b16 %v433
      %v887 = vunpack.c.h.b16 %v433
      %v888 = vunpack.c.l.b16 %v434
      %v889 = vunpack.c.h.b16 %v434
      %v890 = vunpack.c.l.b16 %v435
      %v891 = vunpack.c.h.b16 %v435
      %v892 = vunpack.c.l.b16 %v436
      %v893 = vunpack.c.h.b16 %v436
      %v894 = vunpack.c.l.b16 %v437
      %v895 = vunpack.c.h.b16 %v437
      %v896 = vunpack.c.l.b16 %v438
      %v897 = vunpack.c.h.b16 %v438
      %v898 = vunpack.c.l.b16 %v439
      %v899 = vunpack.c.h.b16 %v439
      %v900 = vunpack.c.l.b16 %v440
      %v901 = vunpack.c.h.b16 %v440
      %v902 = vunpack.c.l.b16 %v441
      %v903 = vunpack.c.h.b16 %v441
      %v904 = vunpack.c.l.b16 %v442
      %v905 = vunpack.c.h.b16 %v442
      %v906 = vunpack.c.l.b16 %v443
      %v907 = vunpack.c.h.b16 %v443
      %v908 = vunpack.c.l.b16 %v444
      %v909 = vunpack.c.h.b16 %v444
      %v910 = vunpack.c.l.b16 %v445
      %v911 = vunpack.c.h.b16 %v445
      %v912 = vunpack.c.l.b16 %v446
      %v913 = vunpack.c.h.b16 %v446
      %v914 = vunpack.c.l.b16 %v447
      %v915 = vunpack.c.h.b16 %v447
      %v916 = vunpack.c.l.b16 %v448
      %v917 = vunpack.c.h.b16 %v448
      %v918 = vunpack.c.l.b16 %v449
      %v919 = vunpack.c.h.b16 %v449
      %v920 = vunpack.c.l.b16 %v450
      %v921 = vunpack.c.h.b16 %v450
      %v922 = vunpack.c.l.b16 %v451
      %v923 = vunpack.c.h.b16 %v451
      %v924 = vunpack.c.l.b16 %v452
      %v925 = vunpack.c.h.b16 %v452
      %v926 = vunpack.c.l.b16 %v453
      %v927 = vunpack.c.h.b16 %v453
      %v928 = vunpack.c.l.b16 %v454
      %v929 = vunpack.c.h.b16 %v454
      %v930 = vunpack.c.l.b16 %v455
      %v931 = vunpack.c.h.b16 %v455
      %v932 = vunpack.c.l.b16 %v456
      %v933 = vunpack.c.h.b16 %v456
      %v934 = vunpack.c.l.b16 %v457
      %v935 = vunpack.c.h.b16 %v457
      %v936 = vunpack.c.l.b16 %v458
      %v937 = vunpack.c.h.b16 %v458
      %v938 = vunpack.c.l.b16 %v459
      %v939 = vunpack.c.h.b16 %v459
      %v940 = vunpack.c.l.b16 %v460
      %v941 = vunpack.c.h.b16 %v460
      %v942 = vunpack.c.l.b16 %v461
      %v943 = vunpack.c.h.b16 %v461
      %v944 = vunpack.c.l.b16 %v462
      %v945 = vunpack.c.h.b16 %v462
      %v946 = vunpack.c.l.b16 %v463
      %v947 = vunpack.c.h.b16 %v463
      %v948 = vunpack.c.l.b16 %v464
      %v949 = vunpack.c.h.b16 %v464
      %v950 = vunpack.c.l.b16 %v465
      %v951 = vunpack.c.h.b16 %v465
      %v952 = vunpack.c.l.b16 %v466
      %v953 = vunpack.c.h.b16 %v466
      %v954 = vunpack.c.l.b16 %v467
      %v955 = vunpack.c.h.b16 %v467
      %v956 = vunpack.c.l.b16 %v468
      %v957 = vunpack.c.h.b16 %v468
      %v958 = vunpack.c.l.b16 %v469
      %v959 = vunpack.c.h.b16 %v469
      %v960 = vunpack.c.l.b16 %v470
      %v961 = vunpack.c.h.b16 %v470
      %v962 = vunpack.c.l.b16 %v471
      %v963 = vunpack.c.h.b16 %v471
      %v964 = vunpack.c.l.b16 %v472
      %v965 = vunpack.c.h.b16 %v472
      %v966 = vunpack.c.l.b16 %v473
      %v967 = vunpack.c.h.b16 %v473
      %v968 = vunpack.c.l.b16 %v474
      %v969 = vunpack.c.h.b16 %v474
      %v970 = vunpack.c.l.b16 %v475
      %v971 = vunpack.c.h.b16 %v475
      %v972 = vunpack.c.l.b16 %v476
      %v973 = vunpack.c.h.b16 %v476
      %v974 = vunpack.c.l.b16 %v477
      %v975 = vunpack.c.h.b16 %v477
      %v976 = vunpack.c.l.b16 %v478
      %v977 = vunpack.c.h.b16 %v478
      %v978 = vunpack.c.l.b16 %v479
      %v979 = vunpack.c.h.b16 %v479
      %v980 = vpack.c.b16 %v832, %v830
      %v981 = vpack.c.b16 %v833, %v831
      %v982 = vpack.c.b16 %v836, %v834
      %v983 = vpack.c.b16 %v837, %v835
      %v984 = vpack.c.b16 %v840, %v838
      %v985 = vpack.c.b16 %v841, %v839
      %v986 = vpack.c.b16 %v844, %v842
      %v987 = vpack.c.b16 %v845, %v843
      %v988 = vpack.c.b16 %v848, %v846
      %v989 = vpack.c.b16 %v849, %v847
      %v990 = vpack.c.b16 %v852, %v850
      %v991 = vpack.c.b16 %v853, %v851
      %v992 = vpack.c.b16 %v856, %v854
      %v993 = vpack.c.b16 %v857, %v855
      %v994 = vpack.c.b16 %v860, %v858
      %v995 = vpack.c.b16 %v861, %v859
      %v996 = vpack.c.b16 %v864, %v862
      %v997 = vpack.c.b16 %v865, %v863
      %v998 = vpack.c.b16 %v868, %v866
      %v999 = vpack.c.b16 %v869, %v867
      %v1000 = vpack.c.b16 %v872, %v870
      %v1001 = vpack.c.b16 %v873, %v871
      %v1002 = vpack.c.b16 %v876, %v874
      %v1003 = vpack.c.b16 %v877, %v875
      %v1004 = vpack.c.b16 %v880, %v878
      %v1005 = vpack.c.b16 %v881, %v879
      %v1006 = vpack.c.b16 %v884, %v882
      %v1007 = vpack.c.b16 %v885, %v883
      %v1008 = vpack.c.b16 %v888, %v886
      %v1009 = vpack.c.b16 %v889, %v887
      %v1010 = vpack.c.b16 %v892, %v890
      %v1011 = vpack.c.b16 %v893, %v891
      %v1012 = vpack.c.b16 %v896, %v894
      %v1013 = vpack.c.b16 %v897, %v895
      %v1014 = vpack.c.b16 %v900, %v898
      %v1015 = vpack.c.b16 %v901, %v899
      %v1016 = vpack.c.b16 %v904, %v902
      %v1017 = vpack.c.b16 %v905, %v903
      %v1018 = vpack.c.b16 %v908, %v906
      %v1019 = vpack.c.b16 %v909, %v907
      %v1020 = vpack.c.b16 %v912, %v910
      %v1021 = vpack.c.b16 %v913, %v911
      %v1022 = vpack.c.b16 %v916, %v914
      %v1023 = vpack.c.b16 %v917, %v915
      %v1024 = vpack.c.b16 %v920, %v918
      %v1025 = vpack.c.b16 %v921, %v919
      %v1026 = vpack.c.b16 %v924, %v922
      %v1027 = vpack.c.b16 %v925, %v923
      %v1028 = vpack.c.b16 %v928, %v926
      %v1029 = vpack.c.b16 %v929, %v927
      %v1030 = vpack.c.b16 %v932, %v930
      %v1031 = vpack.c.b16 %v933, %v931
      %v1032 = vpack.c.b16 %v936, %v934
      %v1033 = vpack.c.b16 %v937, %v935
      %v1034 = vpack.c.b16 %v940, %v938
      %v1035 = vpack.c.b16 %v941, %v939
      %v1036 = vpack.c.b16 %v944, %v942
      %v1037 = vpack.c.b16 %v945, %v943
      %v1038 = vpack.c.b16 %v948, %v946
      %v1039 = vpack.c.b16 %v949, %v947
      %v1040 = vpack.c.b16 %v952, %v950
      %v1041 = vpack.c.b16 %v953, %v951
      %v1042 = vpack.c.b16 %v956, %v954
      %v1043 = vpack.c.b16 %v957, %v955
      %v1044 = vpack.c.b16 %v960, %v958
      %v1045 = vpack.c.b16 %v961, %v959
      %v1046 = vpack.c.b16 %v964, %v962
      %v1047 = vpack.c.b16 %v965, %v963
      %v1048 = vpack.c.b16 %v968, %v966
      %v1049 = vpack.c.b16 %v969, %v967
      %v1050 = vpack.c.b16 %v972, %v970
      %v1051 = vpack.c.b16 %v973, %v971
      %v1052 = vpack.c.b16 %v976, %v974
      %v1053 = vpack.c.b16 %v977, %v975
      %v1054 = vpack.c.b16 %v978, %v978
      %v1055 = vpack.c.b16 %v979, %v979
      %vm1130 = vcmask 719872
      %v1132 = vsel %vm1130, %v687, 0
      %v1135 = vsel %vm1130, %v692, 0
      %v1138 = vsel %vm1130, %v697, 0
      %v1141 = vsel %vm1130, %v702, 0
      %v1144 = vsel %vm1130, %v707, 0
      %v1147 = vsel %vm1130, %v712, 0
      %v1150 = vsel %vm1130, %v717, 0
      %v1153 = vsel %vm1130, %v722, 0
      %vm1155 = vcmask 1043456
      %v1157 = vsel %vm1155, %v1054, 0
      %v1160 = vsel %vm1155, %v1055, 0
      %1162 = vmatprep.subr.bf16.mxu0 %v981
      %1163 = vmatpush1.bf16.msra.mxu0 %v980
      %1164 = vmatprep.subr.bf16.mxu0 %v983
      %1165 = vmatpush1.bf16.msra.mxu0 %v982
      %1166 = vmatprep.subr.bf16.mxu0 %v985
      %1167 = vmatpush1.bf16.msra.mxu0 %v984
      %1168 = vmatprep.subr.bf16.mxu0 %v987
      %1169 = vmatpush1.bf16.msra.mxu0 %v986
      %1170 = vmatprep.subr.bf16.mxu0 %v989
      %1171 = vmatpush1.bf16.msra.mxu0 %v988
      %1172 = vmatprep.subr.bf16.mxu0 %v991
      %1173 = vmatpush1.bf16.msra.mxu0 %v990
      %1174 = vmatprep.subr.bf16.mxu0 %v993
      %1175 = vmatpush1.bf16.msra.mxu0 %v992
      %1176 = vmatprep.subr.bf16.mxu0 %v995
      %1177 = vmatpush1.bf16.msra.mxu0 %v994
      %1178 = vmatprep.subr.bf16.mxu0 %v997
      %1179 = vmatpush1.bf16.msra.mxu0 %v996
      %1180 = vmatprep.subr.bf16.mxu0 %v999
      %1181 = vmatpush1.bf16.msra.mxu0 %v998
      %1182 = vmatprep.subr.bf16.mxu0 %v1001
      %1183 = vmatpush1.bf16.msra.mxu0 %v1000
      %1184 = vmatprep.subr.bf16.mxu0 %v1003
      %1185 = vmatpush1.bf16.msra.mxu0 %v1002
      %1186 = vmatprep.subr.bf16.mxu0 %v1005
      %1187 = vmatpush1.bf16.msra.mxu0 %v1004
      %1188 = vmatprep.subr.bf16.mxu0 %v1007
      %1189 = vmatpush1.bf16.msra.mxu0 %v1006
      %1190 = vmatprep.subr.bf16.mxu0 %v1009
      %1191 = vmatpush1.bf16.msra.mxu0 %v1008
      %1192 = vmatprep.subr.bf16.mxu0 %v1011
      %1193 = vmatpush1.bf16.msra.mxu0 %v1010
      %1194 = vmatprep.mubr.bf16.mxu0 %v684
      %1195 = vmatmul.mubr.bf16.gmra.mrb[0].mxu0 %v683
      %v1196 = vpop.f32.mrb[0].mxu0
      %v1197 = vadd.f32 0.0, %v1196
      %v1198 = vpop.f32.mrb[0].mxu0
      %v1199 = vadd.f32 0.0, %v1198
      %v1200 = vpop.f32.mrb[0].mxu0
      %v1201 = vadd.f32 0.0, %v1200
      %v1202 = vpop.f32.mrb[0].mxu0
      %v1203 = vadd.f32 0.0, %v1202
      %1204 = vmatprep.mubr.bf16.mxu0 %v689
      %1205 = vmatmul.mubr.bf16.gmra.mrb[0].mxu0 %v688
      %v1206 = vpop.f32.mrb[0].mxu0
      %v1207 = vadd.f32 0.0, %v1206
      %v1208 = vpop.f32.mrb[0].mxu0
      %v1209 = vadd.f32 0.0, %v1208
      %v1210 = vpop.f32.mrb[0].mxu0
      %v1211 = vadd.f32 0.0, %v1210
      %v1212 = vpop.f32.mrb[0].mxu0
      %v1213 = vadd.f32 0.0, %v1212
      %1214 = vmatprep.mubr.bf16.mxu0 %v694
      %1215 = vmatmul.mubr.bf16.gmra.mrb[0].mxu0 %v693
      %v1216 = vpop.f32.mrb[0].mxu0
      %v1217 = vadd.f32 0.0, %v1216
      %v1218 = vpop.f32.mrb[0].mxu0
      %v1219 = vadd.f32 0.0, %v1218
      %v1220 = vpop.f32.mrb[0].mxu0
      %v1221 = vadd.f32 0.0, %v1220
      %v1222 = vpop.f32.mrb[0].mxu0
      %v1223 = vadd.f32 0.0, %v1222
      %1224 = vmatprep.mubr.bf16.mxu0 %v699
      %1225 = vmatmul.mubr.bf16.gmra.mrb[0].mxu0 %v698
      %v1226 = vpop.f32.mrb[0].mxu0
      %v1227 = vadd.f32 0.0, %v1226
      %v1228 = vpop.f32.mrb[0].mxu0
      %v1229 = vadd.f32 0.0, %v1228
      %v1230 = vpop.f32.mrb[0].mxu0
      %v1231 = vadd.f32 0.0, %v1230
      %v1232 = vpop.f32.mrb[0].mxu0
      %v1233 = vadd.f32 0.0, %v1232
      %1234 = vmatprep.mubr.bf16.mxu0 %v704
      %1235 = vmatmul.mubr.bf16.gmra.mrb[0].mxu0 %v703
      %v1236 = vpop.f32.mrb[0].mxu0
      %v1237 = vadd.f32 0.0, %v1236
      %v1238 = vpop.f32.mrb[0].mxu0
      %v1239 = vadd.f32 0.0, %v1238
      %v1240 = vpop.f32.mrb[0].mxu0
      %v1241 = vadd.f32 0.0, %v1240
      %v1242 = vpop.f32.mrb[0].mxu0
      %v1243 = vadd.f32 0.0, %v1242
      %1244 = vmatprep.mubr.bf16.mxu0 %v709
      %1245 = vmatmul.mubr.bf16.gmra.mrb[0].mxu0 %v708
      %v1246 = vpop.f32.mrb[0].mxu0
      %v1247 = vadd.f32 0.0, %v1246
      %v1248 = vpop.f32.mrb[0].mxu0
      %v1249 = vadd.f32 0.0, %v1248
      %v1250 = vpop.f32.mrb[0].mxu0
      %v1251 = vadd.f32 0.0, %v1250
      %v1252 = vpop.f32.mrb[0].mxu0
      %v1253 = vadd.f32 0.0, %v1252
      %1254 = vmatprep.mubr.bf16.mxu0 %v714
      %1255 = vmatmul.mubr.bf16.gmra.mrb[0].mxu0 %v713
      %v1256 = vpop.f32.mrb[0].mxu0
      %v1257 = vadd.f32 0.0, %v1256
      %v1258 = vpop.f32.mrb[0].mxu0
      %v1259 = vadd.f32 0.0, %v1258
      %v1260 = vpop.f32.mrb[0].mxu0
      %v1261 = vadd.f32 0.0, %v1260
      %v1262 = vpop.f32.mrb[0].mxu0
      %v1263 = vadd.f32 0.0, %v1262
      %1264 = vmatprep.mubr.bf16.mxu0 %v719
      %1265 = vmatmul.mubr.bf16.gmra.mrb[0].mxu0 %v718
      %v1266 = vpop.f32.mrb[0].mxu0
      %v1267 = vadd.f32 0.0, %v1266
      %v1268 = vpop.f32.mrb[0].mxu0
      %v1269 = vadd.f32 0.0, %v1268
      %v1270 = vpop.f32.mrb[0].mxu0
      %v1271 = vadd.f32 0.0, %v1270
      %v1272 = vpop.f32.mrb[0].mxu0
      %v1273 = vadd.f32 0.0, %v1272
      %1274 = vdwg.mxu0
      %1275 = vmatprep.subr.bf16.mxu0 %v1013
      %1276 = vmatpush1.bf16.msra.mxu0 %v1012
      %1277 = vmatprep.subr.bf16.mxu0 %v1015
      %1278 = vmatpush1.bf16.msra.mxu0 %v1014
      %1279 = vmatprep.subr.bf16.mxu0 %v1017
      %1280 = vmatpush1.bf16.msra.mxu0 %v1016
      %1281 = vmatprep.subr.bf16.mxu0 %v1019
      %1282 = vmatpush1.bf16.msra.mxu0 %v1018
      %1283 = vmatprep.subr.bf16.mxu0 %v1021
      %1284 = vmatpush1.bf16.msra.mxu0 %v1020
      %1285 = vmatprep.subr.bf16.mxu0 %v1023
      %1286 = vmatpush1.bf16.msra.mxu0 %v1022
      %1287 = vmatprep.subr.bf16.mxu0 %v1025
      %1288 = vmatpush1.bf16.msra.mxu0 %v1024
      %1289 = vmatprep.subr.bf16.mxu0 %v1027
      %1290 = vmatpush1.bf16.msra.mxu0 %v1026
      %1291 = vmatprep.subr.bf16.mxu0 %v1029
      %1292 = vmatpush1.bf16.msra.mxu0 %v1028
      %1293 = vmatprep.subr.bf16.mxu0 %v1031
      %1294 = vmatpush1.bf16.msra.mxu0 %v1030
      %1295 = vmatprep.subr.bf16.mxu0 %v1033
      %1296 = vmatpush1.bf16.msra.mxu0 %v1032
      %1297 = vmatprep.subr.bf16.mxu0 %v1035
      %1298 = vmatpush1.bf16.msra.mxu0 %v1034
      %1299 = vmatprep.subr.bf16.mxu0 %v1037
      %1300 = vmatpush1.bf16.msra.mxu0 %v1036
      %1301 = vmatprep.subr.bf16.mxu0 %v1039
      %1302 = vmatpush1.bf16.msra.mxu0 %v1038
      %1303 = vmatprep.subr.bf16.mxu0 %v1041
      %1304 = vmatpush1.bf16.msra.mxu0 %v1040
      %1305 = vmatprep.subr.bf16.mxu0 %v1043
      %1306 = vmatpush1.bf16.msra.mxu0 %v1042
      %1307 = vmatprep.mubr.bf16.mxu0 %v686
      %1308 = vmatmul.mubr.bf16.gmra.mrb[0].mxu0 %v685
      %v1309 = vpop.f32.mrb[0].mxu0
      %v1310 = vadd.f32 %v1197, %v1309
      %v1311 = vpop.f32.mrb[0].mxu0
      %v1312 = vadd.f32 %v1199, %v1311
      %v1313 = vpop.f32.mrb[0].mxu0
      %v1314 = vadd.f32 %v1201, %v1313
      %v1315 = vpop.f32.mrb[0].mxu0
      %v1316 = vadd.f32 %v1203, %v1315
      %1317 = vmatprep.mubr.bf16.mxu0 %v691
      %1318 = vmatmul.mubr.bf16.gmra.mrb[0].mxu0 %v690
      %v1319 = vpop.f32.mrb[0].mxu0
      %v1320 = vadd.f32 %v1207, %v1319
      %v1321 = vpop.f32.mrb[0].mxu0
      %v1322 = vadd.f32 %v1209, %v1321
      %v1323 = vpop.f32.mrb[0].mxu0
      %v1324 = vadd.f32 %v1211, %v1323
      %v1325 = vpop.f32.mrb[0].mxu0
      %v1326 = vadd.f32 %v1213, %v1325
      %1327 = vmatprep.mubr.bf16.mxu0 %v696
      %1328 = vmatmul.mubr.bf16.gmra.mrb[0].mxu0 %v695
      %v1329 = vpop.f32.mrb[0].mxu0
      %v1330 = vadd.f32 %v1217, %v1329
      %v1331 = vpop.f32.mrb[0].mxu0
      %v1332 = vadd.f32 %v1219, %v1331
      %v1333 = vpop.f32.mrb[0].mxu0
      %v1334 = vadd.f32 %v1221, %v1333
      %v1335 = vpop.f32.mrb[0].mxu0
      %v1336 = vadd.f32 %v1223, %v1335
      %1337 = vmatprep.mubr.bf16.mxu0 %v701
      %1338 = vmatmul.mubr.bf16.gmra.mrb[0].mxu0 %v700
      %v1339 = vpop.f32.mrb[0].mxu0
      %v1340 = vadd.f32 %v1227, %v1339
      %v1341 = vpop.f32.mrb[0].mxu0
      %v1342 = vadd.f32 %v1229, %v1341
      %v1343 = vpop.f32.mrb[0].mxu0
      %v1344 = vadd.f32 %v1231, %v1343
      %v1345 = vpop.f32.mrb[0].mxu0
      %v1346 = vadd.f32 %v1233, %v1345
      %1347 = vmatprep.mubr.bf16.mxu0 %v706
      %1348 = vmatmul.mubr.bf16.gmra.mrb[0].mxu0 %v705
      %v1349 = vpop.f32.mrb[0].mxu0
      %v1350 = vadd.f32 %v1237, %v1349
      %v1351 = vpop.f32.mrb[0].mxu0
      %v1352 = vadd.f32 %v1239, %v1351
      %v1353 = vpop.f32.mrb[0].mxu0
      %v1354 = vadd.f32 %v1241, %v1353
      %v1355 = vpop.f32.mrb[0].mxu0
      %v1356 = vadd.f32 %v1243, %v1355
      %1357 = vmatprep.mubr.bf16.mxu0 %v711
      %1358 = vmatmul.mubr.bf16.gmra.mrb[0].mxu0 %v710
      %v1359 = vpop.f32.mrb[0].mxu0
      %v1360 = vadd.f32 %v1247, %v1359
      %v1361 = vpop.f32.mrb[0].mxu0
      %v1362 = vadd.f32 %v1249, %v1361
      %v1363 = vpop.f32.mrb[0].mxu0
      %v1364 = vadd.f32 %v1251, %v1363
      %v1365 = vpop.f32.mrb[0].mxu0
      %v1366 = vadd.f32 %v1253, %v1365
      %1367 = vmatprep.mubr.bf16.mxu0 %v716
      %1368 = vmatmul.mubr.bf16.gmra.mrb[0].mxu0 %v715
      %v1369 = vpop.f32.mrb[0].mxu0
      %v1370 = vadd.f32 %v1257, %v1369
      %v1371 = vpop.f32.mrb[0].mxu0
      %v1372 = vadd.f32 %v1259, %v1371
      %v1373 = vpop.f32.mrb[0].mxu0
      %v1374 = vadd.f32 %v1261, %v1373
      %v1375 = vpop.f32.mrb[0].mxu0
      %v1376 = vadd.f32 %v1263, %v1375
      %1377 = vmatprep.mubr.bf16.mxu0 %v721
      %1378 = vmatmul.mubr.bf16.gmra.mrb[0].mxu0 %v720
      %v1379 = vpop.f32.mrb[0].mxu0
      %v1380 = vadd.f32 %v1267, %v1379
      %v1381 = vpop.f32.mrb[0].mxu0
      %v1382 = vadd.f32 %v1269, %v1381
      %v1383 = vpop.f32.mrb[0].mxu0
      %v1384 = vadd.f32 %v1271, %v1383
      %v1385 = vpop.f32.mrb[0].mxu0
      %v1386 = vadd.f32 %v1273, %v1385
      %1387 = vdwg.mxu0
      %1388 = vmatprep.subr.bf16.mxu0 %v1045
      %1389 = vmatpush1.bf16.msra.mxu0 %v1044
      %1390 = vmatprep.subr.bf16.mxu0 %v1047
      %1391 = vmatpush1.bf16.msra.mxu0 %v1046
      %1392 = vmatprep.subr.bf16.mxu0 %v1049
      %1393 = vmatpush1.bf16.msra.mxu0 %v1048
      %1394 = vmatprep.subr.bf16.mxu0 %v1051
      %1395 = vmatpush1.bf16.msra.mxu0 %v1050
      %1396 = vmatprep.subr.bf16.mxu0 %v1053
      %1397 = vmatpush1.bf16.msra.mxu0 %v1052
      %1398 = vmatprep.subr.bf16.mxu0 %v1160
      %1399 = vmatpush1.bf16.msra.mxu0 %v1157
      %1400 = vmatprep.subr.bf16.mxu0 0
      %1401 = vmatpush1.bf16.msra.mxu0 0
      %1402 = vmatprep.subr.bf16.mxu0 0
      %1403 = vmatpush1.bf16.msra.mxu0 0
      %1404 = vmatprep.subr.bf16.mxu0 0
      %1405 = vmatpush1.bf16.msra.mxu0 0
      %1406 = vmatprep.subr.bf16.mxu0 0
      %1407 = vmatpush1.bf16.msra.mxu0 0
      %1408 = vmatprep.subr.bf16.mxu0 0
      %1409 = vmatpush1.bf16.msra.mxu0 0
      %1410 = vmatprep.subr.bf16.mxu0 0
      %1411 = vmatpush1.bf16.msra.mxu0 0
      %1412 = vmatprep.subr.bf16.mxu0 0
      %1413 = vmatpush1.bf16.msra.mxu0 0
      %1414 = vmatprep.subr.bf16.mxu0 0
      %1415 = vmatpush1.bf16.msra.mxu0 0
      %1416 = vmatprep.subr.bf16.mxu0 0
      %1417 = vmatpush1.bf16.msra.mxu0 0
      %1418 = vmatprep.subr.bf16.mxu0 0
      %1419 = vmatpush1.bf16.msra.mxu0 0
      %1420 = vmatprep.mubr.bf16.mxu0 0
      %1421 = vmatmul.mubr.bf16.gmra.mrb[0].mxu0 %v1132
      %v1422 = vpop.f32.mrb[0].mxu0
      %v1423 = vadd.f32 %v1310, %v1422
      %v1424 = vpop.f32.mrb[0].mxu0
      %v1425 = vadd.f32 %v1312, %v1424
      %v1426 = vpop.f32.mrb[0].mxu0
      %v1427 = vadd.f32 %v1314, %v1426
      %v1428 = vpop.f32.mrb[0].mxu0
      %v1429 = vadd.f32 %v1316, %v1428
      %1430 = vmatprep.mubr.bf16.mxu0 0
      %1431 = vmatmul.mubr.bf16.gmra.mrb[0].mxu0 %v1135
      %v1432 = vpop.f32.mrb[0].mxu0
      %v1433 = vadd.f32 %v1320, %v1432
      %v1434 = vpop.f32.mrb[0].mxu0
      %v1435 = vadd.f32 %v1322, %v1434
      %v1436 = vpop.f32.mrb[0].mxu0
      %v1437 = vadd.f32 %v1324, %v1436
      %v1438 = vpop.f32.mrb[0].mxu0
      %v1439 = vadd.f32 %v1326, %v1438
      %1440 = vmatprep.mubr.bf16.mxu0 0
      %1441 = vmatmul.mubr.bf16.gmra.mrb[0].mxu0 %v1138
      %v1442 = vpop.f32.mrb[0].mxu0
      %v1443 = vadd.f32 %v1330, %v1442
      %v1444 = vpop.f32.mrb[0].mxu0
      %v1445 = vadd.f32 %v1332, %v1444
      %v1446 = vpop.f32.mrb[0].mxu0
      %v1447 = vadd.f32 %v1334, %v1446
      %v1448 = vpop.f32.mrb[0].mxu0
      %v1449 = vadd.f32 %v1336, %v1448
      %1450 = vmatprep.mubr.bf16.mxu0 0
      %1451 = vmatmul.mubr.bf16.gmra.mrb[0].mxu0 %v1141
      %v1452 = vpop.f32.mrb[0].mxu0
      %v1453 = vadd.f32 %v1340, %v1452
      %v1454 = vpop.f32.mrb[0].mxu0
      %v1455 = vadd.f32 %v1342, %v1454
      %v1456 = vpop.f32.mrb[0].mxu0
      %v1457 = vadd.f32 %v1344, %v1456
      %v1458 = vpop.f32.mrb[0].mxu0
      %v1459 = vadd.f32 %v1346, %v1458
      %1460 = vmatprep.mubr.bf16.mxu0 0
      %1461 = vmatmul.mubr.bf16.gmra.mrb[0].mxu0 %v1144
      %v1462 = vpop.f32.mrb[0].mxu0
      %v1463 = vadd.f32 %v1350, %v1462
      %v1464 = vpop.f32.mrb[0].mxu0
      %v1465 = vadd.f32 %v1352, %v1464
      %v1466 = vpop.f32.mrb[0].mxu0
      %v1467 = vadd.f32 %v1354, %v1466
      %v1468 = vpop.f32.mrb[0].mxu0
      %v1469 = vadd.f32 %v1356, %v1468
      %1470 = vmatprep.mubr.bf16.mxu0 0
      %1471 = vmatmul.mubr.bf16.gmra.mrb[0].mxu0 %v1147
      %v1472 = vpop.f32.mrb[0].mxu0
      %v1473 = vadd.f32 %v1360, %v1472
      %v1474 = vpop.f32.mrb[0].mxu0
      %v1475 = vadd.f32 %v1362, %v1474
      %v1476 = vpop.f32.mrb[0].mxu0
      %v1477 = vadd.f32 %v1364, %v1476
      %v1478 = vpop.f32.mrb[0].mxu0
      %v1479 = vadd.f32 %v1366, %v1478
      %1480 = vmatprep.mubr.bf16.mxu0 0
      %1481 = vmatmul.mubr.bf16.gmra.mrb[0].mxu0 %v1150
      %v1482 = vpop.f32.mrb[0].mxu0
      %v1483 = vadd.f32 %v1370, %v1482
      %v1484 = vpop.f32.mrb[0].mxu0
      %v1485 = vadd.f32 %v1372, %v1484
      %v1486 = vpop.f32.mrb[0].mxu0
      %v1487 = vadd.f32 %v1374, %v1486
      %v1488 = vpop.f32.mrb[0].mxu0
      %v1489 = vadd.f32 %v1376, %v1488
      %1490 = vmatprep.mubr.bf16.mxu0 0
      %1491 = vmatmul.mubr.bf16.gmra.mrb[0].mxu0 %v1153
      %v1492 = vpop.f32.mrb[0].mxu0
      %v1493 = vadd.f32 %v1380, %v1492
      %v1494 = vpop.f32.mrb[0].mxu0
      %v1495 = vadd.f32 %v1382, %v1494
      %v1496 = vpop.f32.mrb[0].mxu0
      %v1497 = vadd.f32 %v1384, %v1496
      %v1498 = vpop.f32.mrb[0].mxu0
      %v1499 = vadd.f32 %v1386, %v1498
      %1500 = vdwg.mxu0
      %v1576 = vunpack.c.l.b16 %v480
      %v1577 = vunpack.c.h.b16 %v480
      %v1578 = vunpack.c.l.b16 %v481
      %v1579 = vunpack.c.h.b16 %v481
      %v1580 = vunpack.c.l.b16 %v482
      %v1581 = vunpack.c.h.b16 %v482
      %v1582 = vunpack.c.l.b16 %v483
      %v1583 = vunpack.c.h.b16 %v483
      %v1584 = vunpack.c.l.b16 %v484
      %v1585 = vunpack.c.h.b16 %v484
      %v1586 = vunpack.c.l.b16 %v485
      %v1587 = vunpack.c.h.b16 %v485
      %v1588 = vunpack.c.l.b16 %v486
      %v1589 = vunpack.c.h.b16 %v486
      %v1590 = vunpack.c.l.b16 %v487
      %v1591 = vunpack.c.h.b16 %v487
      %v1592 = vunpack.c.l.b16 %v488
      %v1593 = vunpack.c.h.b16 %v488
      %v1594 = vunpack.c.l.b16 %v489
      %v1595 = vunpack.c.h.b16 %v489
      %v1596 = vunpack.c.l.b16 %v490
      %v1597 = vunpack.c.h.b16 %v490
      %v1598 = vunpack.c.l.b16 %v491
      %v1599 = vunpack.c.h.b16 %v491
      %v1600 = vunpack.c.l.b16 %v492
      %v1601 = vunpack.c.h.b16 %v492
      %v1602 = vunpack.c.l.b16 %v493
      %v1603 = vunpack.c.h.b16 %v493
      %v1604 = vunpack.c.l.b16 %v494
      %v1605 = vunpack.c.h.b16 %v494
      %v1606 = vunpack.c.l.b16 %v495
      %v1607 = vunpack.c.h.b16 %v495
      %v1608 = vunpack.c.l.b16 %v496
      %v1609 = vunpack.c.h.b16 %v496
      %v1610 = vunpack.c.l.b16 %v497
      %v1611 = vunpack.c.h.b16 %v497
      %v1612 = vunpack.c.l.b16 %v498
      %v1613 = vunpack.c.h.b16 %v498
      %v1614 = vunpack.c.l.b16 %v499
      %v1615 = vunpack.c.h.b16 %v499
      %v1616 = vunpack.c.l.b16 %v500
      %v1617 = vunpack.c.h.b16 %v500
      %v1618 = vunpack.c.l.b16 %v501
      %v1619 = vunpack.c.h.b16 %v501
      %v1620 = vunpack.c.l.b16 %v502
      %v1621 = vunpack.c.h.b16 %v502
      %v1622 = vunpack.c.l.b16 %v503
      %v1623 = vunpack.c.h.b16 %v503
      %v1624 = vunpack.c.l.b16 %v504
      %v1625 = vunpack.c.h.b16 %v504
      %v1626 = vunpack.c.l.b16 %v505
      %v1627 = vunpack.c.h.b16 %v505
      %v1628 = vunpack.c.l.b16 %v506
      %v1629 = vunpack.c.h.b16 %v506
      %v1630 = vunpack.c.l.b16 %v507
      %v1631 = vunpack.c.h.b16 %v507
      %v1632 = vunpack.c.l.b16 %v508
      %v1633 = vunpack.c.h.b16 %v508
      %v1634 = vunpack.c.l.b16 %v509
      %v1635 = vunpack.c.h.b16 %v509
      %v1636 = vunpack.c.l.b16 %v510
      %v1637 = vunpack.c.h.b16 %v510
      %v1638 = vunpack.c.l.b16 %v511
      %v1639 = vunpack.c.h.b16 %v511
      %v1640 = vunpack.c.l.b16 %v512
      %v1641 = vunpack.c.h.b16 %v512
      %v1642 = vunpack.c.l.b16 %v513
      %v1643 = vunpack.c.h.b16 %v513
      %v1644 = vunpack.c.l.b16 %v514
      %v1645 = vunpack.c.h.b16 %v514
      %v1646 = vunpack.c.l.b16 %v515
      %v1647 = vunpack.c.h.b16 %v515
      %v1648 = vunpack.c.l.b16 %v516
      %v1649 = vunpack.c.h.b16 %v516
      %v1650 = vunpack.c.l.b16 %v517
      %v1651 = vunpack.c.h.b16 %v517
      %v1652 = vunpack.c.l.b16 %v518
      %v1653 = vunpack.c.h.b16 %v518
      %v1654 = vunpack.c.l.b16 %v519
      %v1655 = vunpack.c.h.b16 %v519
      %v1656 = vunpack.c.l.b16 %v520
      %v1657 = vunpack.c.h.b16 %v520
      %v1658 = vunpack.c.l.b16 %v521
      %v1659 = vunpack.c.h.b16 %v521
      %v1660 = vunpack.c.l.b16 %v522
      %v1661 = vunpack.c.h.b16 %v522
      %v1662 = vunpack.c.l.b16 %v523
      %v1663 = vunpack.c.h.b16 %v523
      %v1664 = vunpack.c.l.b16 %v524
      %v1665 = vunpack.c.h.b16 %v524
      %v1666 = vunpack.c.l.b16 %v525
      %v1667 = vunpack.c.h.b16 %v525
      %v1668 = vunpack.c.l.b16 %v526
      %v1669 = vunpack.c.h.b16 %v526
      %v1670 = vunpack.c.l.b16 %v527
      %v1671 = vunpack.c.h.b16 %v527
      %v1672 = vunpack.c.l.b16 %v528
      %v1673 = vunpack.c.h.b16 %v528
      %v1674 = vunpack.c.l.b16 %v529
      %v1675 = vunpack.c.h.b16 %v529
      %v1676 = vunpack.c.l.b16 %v530
      %v1677 = vunpack.c.h.b16 %v530
      %v1678 = vunpack.c.l.b16 %v531
      %v1679 = vunpack.c.h.b16 %v531
      %v1680 = vunpack.c.l.b16 %v532
      %v1681 = vunpack.c.h.b16 %v532
      %v1682 = vunpack.c.l.b16 %v533
      %v1683 = vunpack.c.h.b16 %v533
      %v1684 = vunpack.c.l.b16 %v534
      %v1685 = vunpack.c.h.b16 %v534
      %v1686 = vunpack.c.l.b16 %v535
      %v1687 = vunpack.c.h.b16 %v535
      %v1688 = vunpack.c.l.b16 %v536
      %v1689 = vunpack.c.h.b16 %v536
      %v1690 = vunpack.c.l.b16 %v537
      %v1691 = vunpack.c.h.b16 %v537
      %v1692 = vunpack.c.l.b16 %v538
      %v1693 = vunpack.c.h.b16 %v538
      %v1694 = vunpack.c.l.b16 %v539
      %v1695 = vunpack.c.h.b16 %v539
      %v1696 = vunpack.c.l.b16 %v540
      %v1697 = vunpack.c.h.b16 %v540
      %v1698 = vunpack.c.l.b16 %v541
      %v1699 = vunpack.c.h.b16 %v541
      %v1700 = vunpack.c.l.b16 %v542
      %v1701 = vunpack.c.h.b16 %v542
      %v1702 = vunpack.c.l.b16 %v543
      %v1703 = vunpack.c.h.b16 %v543
      %v1704 = vunpack.c.l.b16 %v544
      %v1705 = vunpack.c.h.b16 %v544
      %v1706 = vunpack.c.l.b16 %v545
      %v1707 = vunpack.c.h.b16 %v545
      %v1708 = vunpack.c.l.b16 %v546
      %v1709 = vunpack.c.h.b16 %v546
      %v1710 = vunpack.c.l.b16 %v547
      %v1711 = vunpack.c.h.b16 %v547
      %v1712 = vunpack.c.l.b16 %v548
      %v1713 = vunpack.c.h.b16 %v548
      %v1714 = vunpack.c.l.b16 %v549
      %v1715 = vunpack.c.h.b16 %v549
      %v1716 = vunpack.c.l.b16 %v550
      %v1717 = vunpack.c.h.b16 %v550
      %v1718 = vunpack.c.l.b16 %v551
      %v1719 = vunpack.c.h.b16 %v551
      %v1720 = vunpack.c.l.b16 %v552
      %v1721 = vunpack.c.h.b16 %v552
      %v1722 = vunpack.c.l.b16 %v553
      %v1723 = vunpack.c.h.b16 %v553
      %v1724 = vunpack.c.l.b16 %v554
      %v1725 = vunpack.c.h.b16 %v554
      %v1726 = vpack.c.b16 %v1578, %v1576
      %v1727 = vpack.c.b16 %v1579, %v1577
      %v1728 = vpack.c.b16 %v1582, %v1580
      %v1729 = vpack.c.b16 %v1583, %v1581
      %v1730 = vpack.c.b16 %v1586, %v1584
      %v1731 = vpack.c.b16 %v1587, %v1585
      %v1732 = vpack.c.b16 %v1590, %v1588
      %v1733 = vpack.c.b16 %v1591, %v1589
      %v1734 = vpack.c.b16 %v1594, %v1592
      %v1735 = vpack.c.b16 %v1595, %v1593
      %v1736 = vpack.c.b16 %v1598, %v1596
      %v1737 = vpack.c.b16 %v1599, %v1597
      %v1738 = vpack.c.b16 %v1602, %v1600
      %v1739 = vpack.c.b16 %v1603, %v1601
      %v1740 = vpack.c.b16 %v1606, %v1604
      %v1741 = vpack.c.b16 %v1607, %v1605
      %v1742 = vpack.c.b16 %v1610, %v1608
      %v1743 = vpack.c.b16 %v1611, %v1609
      %v1744 = vpack.c.b16 %v1614, %v1612
      %v1745 = vpack.c.b16 %v1615, %v1613
      %v1746 = vpack.c.b16 %v1618, %v1616
      %v1747 = vpack.c.b16 %v1619, %v1617
      %v1748 = vpack.c.b16 %v1622, %v1620
      %v1749 = vpack.c.b16 %v1623, %v1621
      %v1750 = vpack.c.b16 %v1626, %v1624
      %v1751 = vpack.c.b16 %v1627, %v1625
      %v1752 = vpack.c.b16 %v1630, %v1628
      %v1753 = vpack.c.b16 %v1631, %v1629
      %v1754 = vpack.c.b16 %v1634, %v1632
      %v1755 = vpack.c.b16 %v1635, %v1633
      %v1756 = vpack.c.b16 %v1638, %v1636
      %v1757 = vpack.c.b16 %v1639, %v1637
      %v1758 = vpack.c.b16 %v1642, %v1640
      %v1759 = vpack.c.b16 %v1643, %v1641
      %v1760 = vpack.c.b16 %v1646, %v1644
      %v1761 = vpack.c.b16 %v1647, %v1645
      %v1762 = vpack.c.b16 %v1650, %v1648
      %v1763 = vpack.c.b16 %v1651, %v1649
      %v1764 = vpack.c.b16 %v1654, %v1652
      %v1765 = vpack.c.b16 %v1655, %v1653
      %v1766 = vpack.c.b16 %v1658, %v1656
      %v1767 = vpack.c.b16 %v1659, %v1657
      %v1768 = vpack.c.b16 %v1662, %v1660
      %v1769 = vpack.c.b16 %v1663, %v1661
      %v1770 = vpack.c.b16 %v1666, %v1664
      %v1771 = vpack.c.b16 %v1667, %v1665
      %v1772 = vpack.c.b16 %v1670, %v1668
      %v1773 = vpack.c.b16 %v1671, %v1669
      %v1774 = vpack.c.b16 %v1674, %v1672
      %v1775 = vpack.c.b16 %v1675, %v1673
      %v1776 = vpack.c.b16 %v1678, %v1676
      %v1777 = vpack.c.b16 %v1679, %v1677
      %v1778 = vpack.c.b16 %v1682, %v1680
      %v1779 = vpack.c.b16 %v1683, %v1681
      %v1780 = vpack.c.b16 %v1686, %v1684
      %v1781 = vpack.c.b16 %v1687, %v1685
      %v1782 = vpack.c.b16 %v1690, %v1688
      %v1783 = vpack.c.b16 %v1691, %v1689
      %v1784 = vpack.c.b16 %v1694, %v1692
      %v1785 = vpack.c.b16 %v1695, %v1693
      %v1786 = vpack.c.b16 %v1698, %v1696
      %v1787 = vpack.c.b16 %v1699, %v1697
      %v1788 = vpack.c.b16 %v1702, %v1700
      %v1789 = vpack.c.b16 %v1703, %v1701
      %v1790 = vpack.c.b16 %v1706, %v1704
      %v1791 = vpack.c.b16 %v1707, %v1705
      %v1792 = vpack.c.b16 %v1710, %v1708
      %v1793 = vpack.c.b16 %v1711, %v1709
      %v1794 = vpack.c.b16 %v1714, %v1712
      %v1795 = vpack.c.b16 %v1715, %v1713
      %v1796 = vpack.c.b16 %v1718, %v1716
      %v1797 = vpack.c.b16 %v1719, %v1717
      %v1798 = vpack.c.b16 %v1722, %v1720
      %v1799 = vpack.c.b16 %v1723, %v1721
      %v1800 = vpack.c.b16 %v1724, %v1724
      %v1801 = vpack.c.b16 %v1725, %v1725
      %v1877 = vsel %vm1155, %v1800, 0
      %v1880 = vsel %vm1155, %v1801, 0
      %1882 = vmatprep.subr.bf16.mxu0 %v1727
      %1883 = vmatpush1.bf16.msra.mxu0 %v1726
      %1884 = vmatprep.subr.bf16.mxu0 %v1729
      %1885 = vmatpush1.bf16.msra.mxu0 %v1728
      %1886 = vmatprep.subr.bf16.mxu0 %v1731
      %1887 = vmatpush1.bf16.msra.mxu0 %v1730
      %1888 = vmatprep.subr.bf16.mxu0 %v1733
      %1889 = vmatpush1.bf16.msra.mxu0 %v1732
      %1890 = vmatprep.subr.bf16.mxu0 %v1735
      %1891 = vmatpush1.bf16.msra.mxu0 %v1734
      %1892 = vmatprep.subr.bf16.mxu0 %v1737
      %1893 = vmatpush1.bf16.msra.mxu0 %v1736
      %1894 = vmatprep.subr.bf16.mxu0 %v1739
      %1895 = vmatpush1.bf16.msra.mxu0 %v1738
      %1896 = vmatprep.subr.bf16.mxu0 %v1741
      %1897 = vmatpush1.bf16.msra.mxu0 %v1740
      %1898 = vmatprep.subr.bf16.mxu0 %v1743
      %1899 = vmatpush1.bf16.msra.mxu0 %v1742
      %1900 = vmatprep.subr.bf16.mxu0 %v1745
      %1901 = vmatpush1.bf16.msra.mxu0 %v1744
      %1902 = vmatprep.subr.bf16.mxu0 %v1747
      %1903 = vmatpush1.bf16.msra.mxu0 %v1746
      %1904 = vmatprep.subr.bf16.mxu0 %v1749
      %1905 = vmatpush1.bf16.msra.mxu0 %v1748
      %1906 = vmatprep.subr.bf16.mxu0 %v1751
      %1907 = vmatpush1.bf16.msra.mxu0 %v1750
      %1908 = vmatprep.subr.bf16.mxu0 %v1753
      %1909 = vmatpush1.bf16.msra.mxu0 %v1752
      %1910 = vmatprep.subr.bf16.mxu0 %v1755
      %1911 = vmatpush1.bf16.msra.mxu0 %v1754
      %1912 = vmatprep.subr.bf16.mxu0 %v1757
      %1913 = vmatpush1.bf16.msra.mxu0 %v1756
      %1914 = vmatprep.mubr.bf16.mxu0 %v684
      %1915 = vmatmul.mubr.bf16.gmra.mrb[0].mxu0 %v683
      %v1916 = vpop.f32.mrb[0].mxu0
      %v1917 = vadd.f32 0.0, %v1916
      %v1918 = vpop.f32.mrb[0].mxu0
      %v1919 = vadd.f32 0.0, %v1918
      %v1920 = vpop.f32.mrb[0].mxu0
      %v1921 = vadd.f32 0.0, %v1920
      %v1922 = vpop.f32.mrb[0].mxu0
      %v1923 = vadd.f32 0.0, %v1922
      %1924 = vmatprep.mubr.bf16.mxu0 %v689
      %1925 = vmatmul.mubr.bf16.gmra.mrb[0].mxu0 %v688
      %v1926 = vpop.f32.mrb[0].mxu0
      %v1927 = vadd.f32 0.0, %v1926
      %v1928 = vpop.f32.mrb[0].mxu0
      %v1929 = vadd.f32 0.0, %v1928
      %v1930 = vpop.f32.mrb[0].mxu0
      %v1931 = vadd.f32 0.0, %v1930
      %v1932 = vpop.f32.mrb[0].mxu0
      %v1933 = vadd.f32 0.0, %v1932
      %1934 = vmatprep.mubr.bf16.mxu0 %v694
      %1935 = vmatmul.mubr.bf16.gmra.mrb[0].mxu0 %v693
      %v1936 = vpop.f32.mrb[0].mxu0
      %v1937 = vadd.f32 0.0, %v1936
      %v1938 = vpop.f32.mrb[0].mxu0
      %v1939 = vadd.f32 0.0, %v1938
      %v1940 = vpop.f32.mrb[0].mxu0
      %v1941 = vadd.f32 0.0, %v1940
      %v1942 = vpop.f32.mrb[0].mxu0
      %v1943 = vadd.f32 0.0, %v1942
      %1944 = vmatprep.mubr.bf16.mxu0 %v699
      %1945 = vmatmul.mubr.bf16.gmra.mrb[0].mxu0 %v698
      %v1946 = vpop.f32.mrb[0].mxu0
      %v1947 = vadd.f32 0.0, %v1946
      %v1948 = vpop.f32.mrb[0].mxu0
      %v1949 = vadd.f32 0.0, %v1948
      %v1950 = vpop.f32.mrb[0].mxu0
      %v1951 = vadd.f32 0.0, %v1950
      %v1952 = vpop.f32.mrb[0].mxu0
      %v1953 = vadd.f32 0.0, %v1952
      %1954 = vmatprep.mubr.bf16.mxu0 %v704
      %1955 = vmatmul.mubr.bf16.gmra.mrb[0].mxu0 %v703
      %v1956 = vpop.f32.mrb[0].mxu0
      %v1957 = vadd.f32 0.0, %v1956
      %v1958 = vpop.f32.mrb[0].mxu0
      %v1959 = vadd.f32 0.0, %v1958
      %v1960 = vpop.f32.mrb[0].mxu0
      %v1961 = vadd.f32 0.0, %v1960
      %v1962 = vpop.f32.mrb[0].mxu0
      %v1963 = vadd.f32 0.0, %v1962
      %1964 = vmatprep.mubr.bf16.mxu0 %v709
      %1965 = vmatmul.mubr.bf16.gmra.mrb[0].mxu0 %v708
      %v1966 = vpop.f32.mrb[0].mxu0
      %v1967 = vadd.f32 0.0, %v1966
      %v1968 = vpop.f32.mrb[0].mxu0
      %v1969 = vadd.f32 0.0, %v1968
      %v1970 = vpop.f32.mrb[0].mxu0
      %v1971 = vadd.f32 0.0, %v1970
      %v1972 = vpop.f32.mrb[0].mxu0
      %v1973 = vadd.f32 0.0, %v1972
      %1974 = vmatprep.mubr.bf16.mxu0 %v714
      %1975 = vmatmul.mubr.bf16.gmra.mrb[0].mxu0 %v713
      %v1976 = vpop.f32.mrb[0].mxu0
      %v1977 = vadd.f32 0.0, %v1976
      %v1978 = vpop.f32.mrb[0].mxu0
      %v1979 = vadd.f32 0.0, %v1978
      %v1980 = vpop.f32.mrb[0].mxu0
      %v1981 = vadd.f32 0.0, %v1980
      %v1982 = vpop.f32.mrb[0].mxu0
      %v1983 = vadd.f32 0.0, %v1982
      %1984 = vmatprep.mubr.bf16.mxu0 %v719
      %1985 = vmatmul.mubr.bf16.gmra.mrb[0].mxu0 %v718
      %v1986 = vpop.f32.mrb[0].mxu0
      %v1987 = vadd.f32 0.0, %v1986
      %v1988 = vpop.f32.mrb[0].mxu0
      %v1989 = vadd.f32 0.0, %v1988
      %v1990 = vpop.f32.mrb[0].mxu0
      %v1991 = vadd.f32 0.0, %v1990
      %v1992 = vpop.f32.mrb[0].mxu0
      %v1993 = vadd.f32 0.0, %v1992
      %1994 = vdwg.mxu0
      %1995 = vmatprep.subr.bf16.mxu0 %v1759
      %1996 = vmatpush1.bf16.msra.mxu0 %v1758
      %1997 = vmatprep.subr.bf16.mxu0 %v1761
      %1998 = vmatpush1.bf16.msra.mxu0 %v1760
      %1999 = vmatprep.subr.bf16.mxu0 %v1763
      %2000 = vmatpush1.bf16.msra.mxu0 %v1762
      %2001 = vmatprep.subr.bf16.mxu0 %v1765
      %2002 = vmatpush1.bf16.msra.mxu0 %v1764
      %2003 = vmatprep.subr.bf16.mxu0 %v1767
      %2004 = vmatpush1.bf16.msra.mxu0 %v1766
      %2005 = vmatprep.subr.bf16.mxu0 %v1769
      %2006 = vmatpush1.bf16.msra.mxu0 %v1768
      %2007 = vmatprep.subr.bf16.mxu0 %v1771
      %2008 = vmatpush1.bf16.msra.mxu0 %v1770
      %2009 = vmatprep.subr.bf16.mxu0 %v1773
      %2010 = vmatpush1.bf16.msra.mxu0 %v1772
      %2011 = vmatprep.subr.bf16.mxu0 %v1775
      %2012 = vmatpush1.bf16.msra.mxu0 %v1774
      %2013 = vmatprep.subr.bf16.mxu0 %v1777
      %2014 = vmatpush1.bf16.msra.mxu0 %v1776
      %2015 = vmatprep.subr.bf16.mxu0 %v1779
      %2016 = vmatpush1.bf16.msra.mxu0 %v1778
      %2017 = vmatprep.subr.bf16.mxu0 %v1781
      %2018 = vmatpush1.bf16.msra.mxu0 %v1780
      %2019 = vmatprep.subr.bf16.mxu0 %v1783
      %2020 = vmatpush1.bf16.msra.mxu0 %v1782
      %2021 = vmatprep.subr.bf16.mxu0 %v1785
      %2022 = vmatpush1.bf16.msra.mxu0 %v1784
      %2023 = vmatprep.subr.bf16.mxu0 %v1787
      %2024 = vmatpush1.bf16.msra.mxu0 %v1786
      %2025 = vmatprep.subr.bf16.mxu0 %v1789
      %2026 = vmatpush1.bf16.msra.mxu0 %v1788
      %2027 = vmatprep.mubr.bf16.mxu0 %v686
      %2028 = vmatmul.mubr.bf16.gmra.mrb[0].mxu0 %v685
      %v2029 = vpop.f32.mrb[0].mxu0
      %v2030 = vadd.f32 %v1917, %v2029
      %v2031 = vpop.f32.mrb[0].mxu0
      %v2032 = vadd.f32 %v1919, %v2031
      %v2033 = vpop.f32.mrb[0].mxu0
      %v2034 = vadd.f32 %v1921, %v2033
      %v2035 = vpop.f32.mrb[0].mxu0
      %v2036 = vadd.f32 %v1923, %v2035
      %2037 = vmatprep.mubr.bf16.mxu0 %v691
      %2038 = vmatmul.mubr.bf16.gmra.mrb[0].mxu0 %v690
      %v2039 = vpop.f32.mrb[0].mxu0
      %v2040 = vadd.f32 %v1927, %v2039
      %v2041 = vpop.f32.mrb[0].mxu0
      %v2042 = vadd.f32 %v1929, %v2041
      %v2043 = vpop.f32.mrb[0].mxu0
      %v2044 = vadd.f32 %v1931, %v2043
      %v2045 = vpop.f32.mrb[0].mxu0
      %v2046 = vadd.f32 %v1933, %v2045
      %2047 = vmatprep.mubr.bf16.mxu0 %v696
      %2048 = vmatmul.mubr.bf16.gmra.mrb[0].mxu0 %v695
      %v2049 = vpop.f32.mrb[0].mxu0
      %v2050 = vadd.f32 %v1937, %v2049
      %v2051 = vpop.f32.mrb[0].mxu0
      %v2052 = vadd.f32 %v1939, %v2051
      %v2053 = vpop.f32.mrb[0].mxu0
      %v2054 = vadd.f32 %v1941, %v2053
      %v2055 = vpop.f32.mrb[0].mxu0
      %v2056 = vadd.f32 %v1943, %v2055
      %2057 = vmatprep.mubr.bf16.mxu0 %v701
      %2058 = vmatmul.mubr.bf16.gmra.mrb[0].mxu0 %v700
      %v2059 = vpop.f32.mrb[0].mxu0
      %v2060 = vadd.f32 %v1947, %v2059
      %v2061 = vpop.f32.mrb[0].mxu0
      %v2062 = vadd.f32 %v1949, %v2061
      %v2063 = vpop.f32.mrb[0].mxu0
      %v2064 = vadd.f32 %v1951, %v2063
      %v2065 = vpop.f32.mrb[0].mxu0
      %v2066 = vadd.f32 %v1953, %v2065
      %2067 = vmatprep.mubr.bf16.mxu0 %v706
      %2068 = vmatmul.mubr.bf16.gmra.mrb[0].mxu0 %v705
      %v2069 = vpop.f32.mrb[0].mxu0
      %v2070 = vadd.f32 %v1957, %v2069
      %v2071 = vpop.f32.mrb[0].mxu0
      %v2072 = vadd.f32 %v1959, %v2071
      %v2073 = vpop.f32.mrb[0].mxu0
      %v2074 = vadd.f32 %v1961, %v2073
      %v2075 = vpop.f32.mrb[0].mxu0
      %v2076 = vadd.f32 %v1963, %v2075
      %2077 = vmatprep.mubr.bf16.mxu0 %v711
      %2078 = vmatmul.mubr.bf16.gmra.mrb[0].mxu0 %v710
      %v2079 = vpop.f32.mrb[0].mxu0
      %v2080 = vadd.f32 %v1967, %v2079
      %v2081 = vpop.f32.mrb[0].mxu0
      %v2082 = vadd.f32 %v1969, %v2081
      %v2083 = vpop.f32.mrb[0].mxu0
      %v2084 = vadd.f32 %v1971, %v2083
      %v2085 = vpop.f32.mrb[0].mxu0
      %v2086 = vadd.f32 %v1973, %v2085
      %2087 = vmatprep.mubr.bf16.mxu0 %v716
      %2088 = vmatmul.mubr.bf16.gmra.mrb[0].mxu0 %v715
      %v2089 = vpop.f32.mrb[0].mxu0
      %v2090 = vadd.f32 %v1977, %v2089
      %v2091 = vpop.f32.mrb[0].mxu0
      %v2092 = vadd.f32 %v1979, %v2091
      %v2093 = vpop.f32.mrb[0].mxu0
      %v2094 = vadd.f32 %v1981, %v2093
      %v2095 = vpop.f32.mrb[0].mxu0
      %v2096 = vadd.f32 %v1983, %v2095
      %2097 = vmatprep.mubr.bf16.mxu0 %v721
      %2098 = vmatmul.mubr.bf16.gmra.mrb[0].mxu0 %v720
      %v2099 = vpop.f32.mrb[0].mxu0
      %v2100 = vadd.f32 %v1987, %v2099
      %v2101 = vpop.f32.mrb[0].mxu0
      %v2102 = vadd.f32 %v1989, %v2101
      %v2103 = vpop.f32.mrb[0].mxu0
      %v2104 = vadd.f32 %v1991, %v2103
      %v2105 = vpop.f32.mrb[0].mxu0
      %v2106 = vadd.f32 %v1993, %v2105
      %2107 = vdwg.mxu0
      %2108 = vmatprep.subr.bf16.mxu0 %v1791
      %2109 = vmatpush1.bf16.msra.mxu0 %v1790
      %2110 = vmatprep.subr.bf16.mxu0 %v1793
      %2111 = vmatpush1.bf16.msra.mxu0 %v1792
      %2112 = vmatprep.subr.bf16.mxu0 %v1795
      %2113 = vmatpush1.bf16.msra.mxu0 %v1794
      %2114 = vmatprep.subr.bf16.mxu0 %v1797
      %2115 = vmatpush1.bf16.msra.mxu0 %v1796
      %2116 = vmatprep.subr.bf16.mxu0 %v1799
      %2117 = vmatpush1.bf16.msra.mxu0 %v1798
      %2118 = vmatprep.subr.bf16.mxu0 %v1880
      %2119 = vmatpush1.bf16.msra.mxu0 %v1877
      %2120 = vmatprep.subr.bf16.mxu0 0
      %2121 = vmatpush1.bf16.msra.mxu0 0
      %2122 = vmatprep.subr.bf16.mxu0 0
      %2123 = vmatpush1.bf16.msra.mxu0 0
      %2124 = vmatprep.subr.bf16.mxu0 0
      %2125 = vmatpush1.bf16.msra.mxu0 0
      %2126 = vmatprep.subr.bf16.mxu0 0
      %2127 = vmatpush1.bf16.msra.mxu0 0
      %2128 = vmatprep.subr.bf16.mxu0 0
      %2129 = vmatpush1.bf16.msra.mxu0 0
      %2130 = vmatprep.subr.bf16.mxu0 0
      %2131 = vmatpush1.bf16.msra.mxu0 0
      %2132 = vmatprep.subr.bf16.mxu0 0
      %2133 = vmatpush1.bf16.msra.mxu0 0
      %2134 = vmatprep.subr.bf16.mxu0 0
      %2135 = vmatpush1.bf16.msra.mxu0 0
      %2136 = vmatprep.subr.bf16.mxu0 0
      %2137 = vmatpush1.bf16.msra.mxu0 0
      %2138 = vmatprep.subr.bf16.mxu0 0
      %2139 = vmatpush1.bf16.msra.mxu0 0
      %2140 = vmatprep.mubr.bf16.mxu0 0
      %2141 = vmatmul.mubr.bf16.gmra.mrb[0].mxu0 %v1132
      %v2142 = vpop.f32.mrb[0].mxu0
      %v2143 = vadd.f32 %v2030, %v2142
      %v2144 = vpop.f32.mrb[0].mxu0
      %v2145 = vadd.f32 %v2032, %v2144
      %v2146 = vpop.f32.mrb[0].mxu0
      %v2147 = vadd.f32 %v2034, %v2146
      %v2148 = vpop.f32.mrb[0].mxu0
      %v2149 = vadd.f32 %v2036, %v2148
      %2150 = vmatprep.mubr.bf16.mxu0 0
      %2151 = vmatmul.mubr.bf16.gmra.mrb[0].mxu0 %v1135
      %v2152 = vpop.f32.mrb[0].mxu0
      %v2153 = vadd.f32 %v2040, %v2152
      %v2154 = vpop.f32.mrb[0].mxu0
      %v2155 = vadd.f32 %v2042, %v2154
      %v2156 = vpop.f32.mrb[0].mxu0
      %v2157 = vadd.f32 %v2044, %v2156
      %v2158 = vpop.f32.mrb[0].mxu0
      %v2159 = vadd.f32 %v2046, %v2158
      %2160 = vmatprep.mubr.bf16.mxu0 0
      %2161 = vmatmul.mubr.bf16.gmra.mrb[0].mxu0 %v1138
      %v2162 = vpop.f32.mrb[0].mxu0
      %v2163 = vadd.f32 %v2050, %v2162
      %v2164 = vpop.f32.mrb[0].mxu0
      %v2165 = vadd.f32 %v2052, %v2164
      %v2166 = vpop.f32.mrb[0].mxu0
      %v2167 = vadd.f32 %v2054, %v2166
      %v2168 = vpop.f32.mrb[0].mxu0
      %v2169 = vadd.f32 %v2056, %v2168
      %2170 = vmatprep.mubr.bf16.mxu0 0
      %2171 = vmatmul.mubr.bf16.gmra.mrb[0].mxu0 %v1141
      %v2172 = vpop.f32.mrb[0].mxu0
      %v2173 = vadd.f32 %v2060, %v2172
      %v2174 = vpop.f32.mrb[0].mxu0
      %v2175 = vadd.f32 %v2062, %v2174
      %v2176 = vpop.f32.mrb[0].mxu0
      %v2177 = vadd.f32 %v2064, %v2176
      %v2178 = vpop.f32.mrb[0].mxu0
      %v2179 = vadd.f32 %v2066, %v2178
      %2180 = vmatprep.mubr.bf16.mxu0 0
      %2181 = vmatmul.mubr.bf16.gmra.mrb[0].mxu0 %v1144
      %v2182 = vpop.f32.mrb[0].mxu0
      %v2183 = vadd.f32 %v2070, %v2182
      %v2184 = vpop.f32.mrb[0].mxu0
      %v2185 = vadd.f32 %v2072, %v2184
      %v2186 = vpop.f32.mrb[0].mxu0
      %v2187 = vadd.f32 %v2074, %v2186
      %v2188 = vpop.f32.mrb[0].mxu0
      %v2189 = vadd.f32 %v2076, %v2188
      %2190 = vmatprep.mubr.bf16.mxu0 0
      %2191 = vmatmul.mubr.bf16.gmra.mrb[0].mxu0 %v1147
      %v2192 = vpop.f32.mrb[0].mxu0
      %v2193 = vadd.f32 %v2080, %v2192
      %v2194 = vpop.f32.mrb[0].mxu0
      %v2195 = vadd.f32 %v2082, %v2194
      %v2196 = vpop.f32.mrb[0].mxu0
      %v2197 = vadd.f32 %v2084, %v2196
      %v2198 = vpop.f32.mrb[0].mxu0
      %v2199 = vadd.f32 %v2086, %v2198
      %2200 = vmatprep.mubr.bf16.mxu0 0
      %2201 = vmatmul.mubr.bf16.gmra.mrb[0].mxu0 %v1150
      %v2202 = vpop.f32.mrb[0].mxu0
      %v2203 = vadd.f32 %v2090, %v2202
      %v2204 = vpop.f32.mrb[0].mxu0
      %v2205 = vadd.f32 %v2092, %v2204
      %v2206 = vpop.f32.mrb[0].mxu0
      %v2207 = vadd.f32 %v2094, %v2206
      %v2208 = vpop.f32.mrb[0].mxu0
      %v2209 = vadd.f32 %v2096, %v2208
      %2210 = vmatprep.mubr.bf16.mxu0 0
      %2211 = vmatmul.mubr.bf16.gmra.mrb[0].mxu0 %v1153
      %v2212 = vpop.f32.mrb[0].mxu0
      %v2213 = vadd.f32 %v2100, %v2212
      %v2214 = vpop.f32.mrb[0].mxu0
      %v2215 = vadd.f32 %v2102, %v2214
      %v2216 = vpop.f32.mrb[0].mxu0
      %v2217 = vadd.f32 %v2104, %v2216
      %v2218 = vpop.f32.mrb[0].mxu0
      %v2219 = vadd.f32 %v2106, %v2218
      %2220 = vdwg.mxu0
      %v2269 = vunpack.c.l.b16 %v357
      %v2270 = vunpack.c.h.b16 %v357
      %v2271 = vunpack.c.l.b16 %v358
      %v2272 = vunpack.c.h.b16 %v358
      %v2273 = vunpack.c.l.b16 %v359
      %v2274 = vunpack.c.l.b16 %v360
      %v2275 = vunpack.c.h.b16 %v360
      %v2276 = vunpack.c.l.b16 %v361
      %v2277 = vunpack.c.h.b16 %v361
      %v2278 = vunpack.c.l.b16 %v362
      %v2279 = vunpack.c.l.b16 %v363
      %v2280 = vunpack.c.h.b16 %v363
      %v2281 = vunpack.c.l.b16 %v364
      %v2282 = vunpack.c.h.b16 %v364
      %v2283 = vunpack.c.l.b16 %v365
      %v2284 = vunpack.c.l.b16 %v366
      %v2285 = vunpack.c.h.b16 %v366
      %v2286 = vunpack.c.l.b16 %v367
      %v2287 = vunpack.c.h.b16 %v367
      %v2288 = vunpack.c.l.b16 %v368
      %v2289 = vunpack.c.l.b16 %v369
      %v2290 = vunpack.c.h.b16 %v369
      %v2291 = vunpack.c.l.b16 %v370
      %v2292 = vunpack.c.h.b16 %v370
      %v2293 = vunpack.c.l.b16 %v371
      %v2294 = vunpack.c.l.b16 %v372
      %v2295 = vunpack.c.h.b16 %v372
      %v2296 = vunpack.c.l.b16 %v373
      %v2297 = vunpack.c.h.b16 %v373
      %v2298 = vunpack.c.l.b16 %v374
      %v2299 = vunpack.c.l.b16 %v375
      %v2300 = vunpack.c.h.b16 %v375
      %v2301 = vunpack.c.l.b16 %v376
      %v2302 = vunpack.c.h.b16 %v376
      %v2303 = vunpack.c.l.b16 %v377
      %v2304 = vunpack.c.l.b16 %v378
      %v2305 = vunpack.c.h.b16 %v378
      %v2306 = vunpack.c.l.b16 %v379
      %v2307 = vunpack.c.h.b16 %v379
      %v2308 = vunpack.c.l.b16 %v380
      %v2309 = vunpack.c.l.b16 %v381
      %v2310 = vunpack.c.h.b16 %v381
      %v2311 = vunpack.c.l.b16 %v382
      %v2312 = vunpack.c.h.b16 %v382
      %v2313 = vunpack.c.l.b16 %v383
      %v2314 = vunpack.c.l.b16 %v384
      %v2315 = vunpack.c.h.b16 %v384
      %v2316 = vunpack.c.l.b16 %v385
      %v2317 = vunpack.c.h.b16 %v385
      %v2318 = vunpack.c.l.b16 %v386
      %v2319 = vunpack.c.l.b16 %v387
      %v2320 = vunpack.c.h.b16 %v387
      %v2321 = vunpack.c.l.b16 %v388
      %v2322 = vunpack.c.h.b16 %v388
      %v2323 = vunpack.c.l.b16 %v389
      %v2324 = vunpack.c.l.b16 %v390
      %v2325 = vunpack.c.h.b16 %v390
      %v2326 = vunpack.c.l.b16 %v391
      %v2327 = vunpack.c.h.b16 %v391
      %v2328 = vunpack.c.l.b16 %v392
      %v2329 = vunpack.c.l.b16 %v393
      %v2330 = vunpack.c.h.b16 %v393
      %v2331 = vunpack.c.l.b16 %v394
      %v2332 = vunpack.c.h.b16 %v394
      %v2333 = vunpack.c.l.b16 %v395
      %v2334 = vunpack.c.l.b16 %v396
      %v2335 = vunpack.c.h.b16 %v396
      %v2336 = vunpack.c.l.b16 %v397
      %v2337 = vunpack.c.h.b16 %v397
      %v2338 = vunpack.c.l.b16 %v398
      %v2339 = vunpack.c.l.b16 %v399
      %v2340 = vunpack.c.h.b16 %v399
      %v2341 = vunpack.c.l.b16 %v400
      %v2342 = vunpack.c.h.b16 %v400
      %v2343 = vunpack.c.l.b16 %v401
      %v2344 = vunpack.c.l.b16 %v402
      %v2345 = vunpack.c.h.b16 %v402
      %v2346 = vunpack.c.l.b16 %v403
      %v2347 = vunpack.c.h.b16 %v403
      %v2348 = vunpack.c.l.b16 %v404
      %v2349 = vpack.c.b16 %v2274, %v2269
      %v2350 = vpack.c.b16 %v2275, %v2270
      %v2351 = vpack.c.b16 %v2276, %v2271
      %v2352 = vpack.c.b16 %v2277, %v2272
      %v2353 = vpack.c.b16 %v2278, %v2273
      %v2354 = vpack.c.b16 %v2284, %v2279
      %v2355 = vpack.c.b16 %v2285, %v2280
      %v2356 = vpack.c.b16 %v2286, %v2281
      %v2357 = vpack.c.b16 %v2287, %v2282
      %v2358 = vpack.c.b16 %v2288, %v2283
      %v2359 = vpack.c.b16 %v2294, %v2289
      %v2360 = vpack.c.b16 %v2295, %v2290
      %v2361 = vpack.c.b16 %v2296, %v2291
      %v2362 = vpack.c.b16 %v2297, %v2292
      %v2363 = vpack.c.b16 %v2298, %v2293
      %v2364 = vpack.c.b16 %v2304, %v2299
      %v2365 = vpack.c.b16 %v2305, %v2300
      %v2366 = vpack.c.b16 %v2306, %v2301
      %v2367 = vpack.c.b16 %v2307, %v2302
      %v2368 = vpack.c.b16 %v2308, %v2303
      %v2369 = vpack.c.b16 %v2314, %v2309
      %v2370 = vpack.c.b16 %v2315, %v2310
      %v2371 = vpack.c.b16 %v2316, %v2311
      %v2372 = vpack.c.b16 %v2317, %v2312
      %v2373 = vpack.c.b16 %v2318, %v2313
      %v2374 = vpack.c.b16 %v2324, %v2319
      %v2375 = vpack.c.b16 %v2325, %v2320
      %v2376 = vpack.c.b16 %v2326, %v2321
      %v2377 = vpack.c.b16 %v2327, %v2322
      %v2378 = vpack.c.b16 %v2328, %v2323
      %v2379 = vpack.c.b16 %v2334, %v2329
      %v2380 = vpack.c.b16 %v2335, %v2330
      %v2381 = vpack.c.b16 %v2336, %v2331
      %v2382 = vpack.c.b16 %v2337, %v2332
      %v2383 = vpack.c.b16 %v2338, %v2333
      %v2384 = vpack.c.b16 %v2344, %v2339
      %v2385 = vpack.c.b16 %v2345, %v2340
      %v2386 = vpack.c.b16 %v2346, %v2341
      %v2387 = vpack.c.b16 %v2347, %v2342
      %v2388 = vpack.c.b16 %v2348, %v2343
      %v2422 = vsel %vm1130, %v2353, 0
      %v2425 = vsel %vm1130, %v2358, 0
      %v2428 = vsel %vm1130, %v2363, 0
      %v2431 = vsel %vm1130, %v2368, 0
      %v2434 = vsel %vm1130, %v2373, 0
      %v2437 = vsel %vm1130, %v2378, 0
      %v2440 = vsel %vm1130, %v2383, 0
      %v2443 = vsel %vm1130, %v2388, 0
      %2445 = vmatprep.subr.bf16.mxu0 %v981
      %2446 = vmatpush1.bf16.msra.mxu0 %v980
      %2447 = vmatprep.subr.bf16.mxu0 %v983
      %2448 = vmatpush1.bf16.msra.mxu0 %v982
      %2449 = vmatprep.subr.bf16.mxu0 %v985
      %2450 = vmatpush1.bf16.msra.mxu0 %v984
      %2451 = vmatprep.subr.bf16.mxu0 %v987
      %2452 = vmatpush1.bf16.msra.mxu0 %v986
      %2453 = vmatprep.subr.bf16.mxu0 %v989
      %2454 = vmatpush1.bf16.msra.mxu0 %v988
      %2455 = vmatprep.subr.bf16.mxu0 %v991
      %2456 = vmatpush1.bf16.msra.mxu0 %v990
      %2457 = vmatprep.subr.bf16.mxu0 %v993
      %2458 = vmatpush1.bf16.msra.mxu0 %v992
      %2459 = vmatprep.subr.bf16.mxu0 %v995
      %2460 = vmatpush1.bf16.msra.mxu0 %v994
      %2461 = vmatprep.subr.bf16.mxu0 %v997
      %2462 = vmatpush1.bf16.msra.mxu0 %v996
      %2463 = vmatprep.subr.bf16.mxu0 %v999
      %2464 = vmatpush1.bf16.msra.mxu0 %v998
      %2465 = vmatprep.subr.bf16.mxu0 %v1001
      %2466 = vmatpush1.bf16.msra.mxu0 %v1000
      %2467 = vmatprep.subr.bf16.mxu0 %v1003
      %2468 = vmatpush1.bf16.msra.mxu0 %v1002
      %2469 = vmatprep.subr.bf16.mxu0 %v1005
      %2470 = vmatpush1.bf16.msra.mxu0 %v1004
      %2471 = vmatprep.subr.bf16.mxu0 %v1007
      %2472 = vmatpush1.bf16.msra.mxu0 %v1006
      %2473 = vmatprep.subr.bf16.mxu0 %v1009
      %2474 = vmatpush1.bf16.msra.mxu0 %v1008
      %2475 = vmatprep.subr.bf16.mxu0 %v1011
      %2476 = vmatpush1.bf16.msra.mxu0 %v1010
      %2477 = vmatprep.mubr.bf16.mxu0 %v2350
      %2478 = vmatmul.mubr.bf16.gmra.mrb[0].mxu0 %v2349
      %v2479 = vpop.f32.mrb[0].mxu0
      %v2480 = vadd.f32 0.0, %v2479
      %v2481 = vpop.f32.mrb[0].mxu0
      %v2482 = vadd.f32 0.0, %v2481
      %v2483 = vpop.f32.mrb[0].mxu0
      %v2484 = vadd.f32 0.0, %v2483
      %v2485 = vpop.f32.mrb[0].mxu0
      %v2486 = vadd.f32 0.0, %v2485
      %2487 = vmatprep.mubr.bf16.mxu0 %v2355
      %2488 = vmatmul.mubr.bf16.gmra.mrb[0].mxu0 %v2354
      %v2489 = vpop.f32.mrb[0].mxu0
      %v2490 = vadd.f32 0.0, %v2489
      %v2491 = vpop.f32.mrb[0].mxu0
      %v2492 = vadd.f32 0.0, %v2491
      %v2493 = vpop.f32.mrb[0].mxu0
      %v2494 = vadd.f32 0.0, %v2493
      %v2495 = vpop.f32.mrb[0].mxu0
      %v2496 = vadd.f32 0.0, %v2495
      %2497 = vmatprep.mubr.bf16.mxu0 %v2360
      %2498 = vmatmul.mubr.bf16.gmra.mrb[0].mxu0 %v2359
      %v2499 = vpop.f32.mrb[0].mxu0
      %v2500 = vadd.f32 0.0, %v2499
      %v2501 = vpop.f32.mrb[0].mxu0
      %v2502 = vadd.f32 0.0, %v2501
      %v2503 = vpop.f32.mrb[0].mxu0
      %v2504 = vadd.f32 0.0, %v2503
      %v2505 = vpop.f32.mrb[0].mxu0
      %v2506 = vadd.f32 0.0, %v2505
      %2507 = vmatprep.mubr.bf16.mxu0 %v2365
      %2508 = vmatmul.mubr.bf16.gmra.mrb[0].mxu0 %v2364
      %v2509 = vpop.f32.mrb[0].mxu0
      %v2510 = vadd.f32 0.0, %v2509
      %v2511 = vpop.f32.mrb[0].mxu0
      %v2512 = vadd.f32 0.0, %v2511
      %v2513 = vpop.f32.mrb[0].mxu0
      %v2514 = vadd.f32 0.0, %v2513
      %v2515 = vpop.f32.mrb[0].mxu0
      %v2516 = vadd.f32 0.0, %v2515
      %2517 = vmatprep.mubr.bf16.mxu0 %v2370
      %2518 = vmatmul.mubr.bf16.gmra.mrb[0].mxu0 %v2369
      %v2519 = vpop.f32.mrb[0].mxu0
      %v2520 = vadd.f32 0.0, %v2519
      %v2521 = vpop.f32.mrb[0].mxu0
      %v2522 = vadd.f32 0.0, %v2521
      %v2523 = vpop.f32.mrb[0].mxu0
      %v2524 = vadd.f32 0.0, %v2523
      %v2525 = vpop.f32.mrb[0].mxu0
      %v2526 = vadd.f32 0.0, %v2525
      %2527 = vmatprep.mubr.bf16.mxu0 %v2375
      %2528 = vmatmul.mubr.bf16.gmra.mrb[0].mxu0 %v2374
      %v2529 = vpop.f32.mrb[0].mxu0
      %v2530 = vadd.f32 0.0, %v2529
      %v2531 = vpop.f32.mrb[0].mxu0
      %v2532 = vadd.f32 0.0, %v2531
      %v2533 = vpop.f32.mrb[0].mxu0
      %v2534 = vadd.f32 0.0, %v2533
      %v2535 = vpop.f32.mrb[0].mxu0
      %v2536 = vadd.f32 0.0, %v2535
      %2537 = vmatprep.mubr.bf16.mxu0 %v2380
      %2538 = vmatmul.mubr.bf16.gmra.mrb[0].mxu0 %v2379
      %v2539 = vpop.f32.mrb[0].mxu0
      %v2540 = vadd.f32 0.0, %v2539
      %v2541 = vpop.f32.mrb[0].mxu0
      %v2542 = vadd.f32 0.0, %v2541
      %v2543 = vpop.f32.mrb[0].mxu0
      %v2544 = vadd.f32 0.0, %v2543
      %v2545 = vpop.f32.mrb[0].mxu0
      %v2546 = vadd.f32 0.0, %v2545
      %2547 = vmatprep.mubr.bf16.mxu0 %v2385
      %2548 = vmatmul.mubr.bf16.gmra.mrb[0].mxu0 %v2384
      %v2549 = vpop.f32.mrb[0].mxu0
      %v2550 = vadd.f32 0.0, %v2549
      %v2551 = vpop.f32.mrb[0].mxu0
      %v2552 = vadd.f32 0.0, %v2551
      %v2553 = vpop.f32.mrb[0].mxu0
      %v2554 = vadd.f32 0.0, %v2553
      %v2555 = vpop.f32.mrb[0].mxu0
      %v2556 = vadd.f32 0.0, %v2555
      %2557 = vdwg.mxu0
      %2558 = vmatprep.subr.bf16.mxu0 %v1013
      %2559 = vmatpush1.bf16.msra.mxu0 %v1012
      %2560 = vmatprep.subr.bf16.mxu0 %v1015
      %2561 = vmatpush1.bf16.msra.mxu0 %v1014
      %2562 = vmatprep.subr.bf16.mxu0 %v1017
      %2563 = vmatpush1.bf16.msra.mxu0 %v1016
      %2564 = vmatprep.subr.bf16.mxu0 %v1019
      %2565 = vmatpush1.bf16.msra.mxu0 %v1018
      %2566 = vmatprep.subr.bf16.mxu0 %v1021
      %2567 = vmatpush1.bf16.msra.mxu0 %v1020
      %2568 = vmatprep.subr.bf16.mxu0 %v1023
      %2569 = vmatpush1.bf16.msra.mxu0 %v1022
      %2570 = vmatprep.subr.bf16.mxu0 %v1025
      %2571 = vmatpush1.bf16.msra.mxu0 %v1024
      %2572 = vmatprep.subr.bf16.mxu0 %v1027
      %2573 = vmatpush1.bf16.msra.mxu0 %v1026
      %2574 = vmatprep.subr.bf16.mxu0 %v1029
      %2575 = vmatpush1.bf16.msra.mxu0 %v1028
      %2576 = vmatprep.subr.bf16.mxu0 %v1031
      %2577 = vmatpush1.bf16.msra.mxu0 %v1030
      %2578 = vmatprep.subr.bf16.mxu0 %v1033
      %2579 = vmatpush1.bf16.msra.mxu0 %v1032
      %2580 = vmatprep.subr.bf16.mxu0 %v1035
      %2581 = vmatpush1.bf16.msra.mxu0 %v1034
      %2582 = vmatprep.subr.bf16.mxu0 %v1037
      %2583 = vmatpush1.bf16.msra.mxu0 %v1036
      %2584 = vmatprep.subr.bf16.mxu0 %v1039
      %2585 = vmatpush1.bf16.msra.mxu0 %v1038
      %2586 = vmatprep.subr.bf16.mxu0 %v1041
      %2587 = vmatpush1.bf16.msra.mxu0 %v1040
      %2588 = vmatprep.subr.bf16.mxu0 %v1043
      %2589 = vmatpush1.bf16.msra.mxu0 %v1042
      %2590 = vmatprep.mubr.bf16.mxu0 %v2352
      %2591 = vmatmul.mubr.bf16.gmra.mrb[0].mxu0 %v2351
      %v2592 = vpop.f32.mrb[0].mxu0
      %v2593 = vadd.f32 %v2480, %v2592
      %v2594 = vpop.f32.mrb[0].mxu0
      %v2595 = vadd.f32 %v2482, %v2594
      %v2596 = vpop.f32.mrb[0].mxu0
      %v2597 = vadd.f32 %v2484, %v2596
      %v2598 = vpop.f32.mrb[0].mxu0
      %v2599 = vadd.f32 %v2486, %v2598
      %2600 = vmatprep.mubr.bf16.mxu0 %v2357
      %2601 = vmatmul.mubr.bf16.gmra.mrb[0].mxu0 %v2356
      %v2602 = vpop.f32.mrb[0].mxu0
      %v2603 = vadd.f32 %v2490, %v2602
      %v2604 = vpop.f32.mrb[0].mxu0
      %v2605 = vadd.f32 %v2492, %v2604
      %v2606 = vpop.f32.mrb[0].mxu0
      %v2607 = vadd.f32 %v2494, %v2606
      %v2608 = vpop.f32.mrb[0].mxu0
      %v2609 = vadd.f32 %v2496, %v2608
      %2610 = vmatprep.mubr.bf16.mxu0 %v2362
      %2611 = vmatmul.mubr.bf16.gmra.mrb[0].mxu0 %v2361
      %v2612 = vpop.f32.mrb[0].mxu0
      %v2613 = vadd.f32 %v2500, %v2612
      %v2614 = vpop.f32.mrb[0].mxu0
      %v2615 = vadd.f32 %v2502, %v2614
      %v2616 = vpop.f32.mrb[0].mxu0
      %v2617 = vadd.f32 %v2504, %v2616
      %v2618 = vpop.f32.mrb[0].mxu0
      %v2619 = vadd.f32 %v2506, %v2618
      %2620 = vmatprep.mubr.bf16.mxu0 %v2367
      %2621 = vmatmul.mubr.bf16.gmra.mrb[0].mxu0 %v2366
      %v2622 = vpop.f32.mrb[0].mxu0
      %v2623 = vadd.f32 %v2510, %v2622
      %v2624 = vpop.f32.mrb[0].mxu0
      %v2625 = vadd.f32 %v2512, %v2624
      %v2626 = vpop.f32.mrb[0].mxu0
      %v2627 = vadd.f32 %v2514, %v2626
      %v2628 = vpop.f32.mrb[0].mxu0
      %v2629 = vadd.f32 %v2516, %v2628
      %2630 = vmatprep.mubr.bf16.mxu0 %v2372
      %2631 = vmatmul.mubr.bf16.gmra.mrb[0].mxu0 %v2371
      %v2632 = vpop.f32.mrb[0].mxu0
      %v2633 = vadd.f32 %v2520, %v2632
      %v2634 = vpop.f32.mrb[0].mxu0
      %v2635 = vadd.f32 %v2522, %v2634
      %v2636 = vpop.f32.mrb[0].mxu0
      %v2637 = vadd.f32 %v2524, %v2636
      %v2638 = vpop.f32.mrb[0].mxu0
      %v2639 = vadd.f32 %v2526, %v2638
      %2640 = vmatprep.mubr.bf16.mxu0 %v2377
      %2641 = vmatmul.mubr.bf16.gmra.mrb[0].mxu0 %v2376
      %v2642 = vpop.f32.mrb[0].mxu0
      %v2643 = vadd.f32 %v2530, %v2642
      %v2644 = vpop.f32.mrb[0].mxu0
      %v2645 = vadd.f32 %v2532, %v2644
      %v2646 = vpop.f32.mrb[0].mxu0
      %v2647 = vadd.f32 %v2534, %v2646
      %v2648 = vpop.f32.mrb[0].mxu0
      %v2649 = vadd.f32 %v2536, %v2648
      %2650 = vmatprep.mubr.bf16.mxu0 %v2382
      %2651 = vmatmul.mubr.bf16.gmra.mrb[0].mxu0 %v2381
      %v2652 = vpop.f32.mrb[0].mxu0
      %v2653 = vadd.f32 %v2540, %v2652
      %v2654 = vpop.f32.mrb[0].mxu0
      %v2655 = vadd.f32 %v2542, %v2654
      %v2656 = vpop.f32.mrb[0].mxu0
      %v2657 = vadd.f32 %v2544, %v2656
      %v2658 = vpop.f32.mrb[0].mxu0
      %v2659 = vadd.f32 %v2546, %v2658
      %2660 = vmatprep.mubr.bf16.mxu0 %v2387
      %2661 = vmatmul.mubr.bf16.gmra.mrb[0].mxu0 %v2386
      %v2662 = vpop.f32.mrb[0].mxu0
      %v2663 = vadd.f32 %v2550, %v2662
      %v2664 = vpop.f32.mrb[0].mxu0
      %v2665 = vadd.f32 %v2552, %v2664
      %v2666 = vpop.f32.mrb[0].mxu0
      %v2667 = vadd.f32 %v2554, %v2666
      %v2668 = vpop.f32.mrb[0].mxu0
      %v2669 = vadd.f32 %v2556, %v2668
      %2670 = vdwg.mxu0
      %2671 = vmatprep.subr.bf16.mxu0 %v1045
      %2672 = vmatpush1.bf16.msra.mxu0 %v1044
      %2673 = vmatprep.subr.bf16.mxu0 %v1047
      %2674 = vmatpush1.bf16.msra.mxu0 %v1046
      %2675 = vmatprep.subr.bf16.mxu0 %v1049
      %2676 = vmatpush1.bf16.msra.mxu0 %v1048
      %2677 = vmatprep.subr.bf16.mxu0 %v1051
      %2678 = vmatpush1.bf16.msra.mxu0 %v1050
      %2679 = vmatprep.subr.bf16.mxu0 %v1053
      %2680 = vmatpush1.bf16.msra.mxu0 %v1052
      %2681 = vmatprep.subr.bf16.mxu0 %v1160
      %2682 = vmatpush1.bf16.msra.mxu0 %v1157
      %2683 = vmatprep.subr.bf16.mxu0 0
      %2684 = vmatpush1.bf16.msra.mxu0 0
      %2685 = vmatprep.subr.bf16.mxu0 0
      %2686 = vmatpush1.bf16.msra.mxu0 0
      %2687 = vmatprep.subr.bf16.mxu0 0
      %2688 = vmatpush1.bf16.msra.mxu0 0
      %2689 = vmatprep.subr.bf16.mxu0 0
      %2690 = vmatpush1.bf16.msra.mxu0 0
      %2691 = vmatprep.subr.bf16.mxu0 0
      %2692 = vmatpush1.bf16.msra.mxu0 0
      %2693 = vmatprep.subr.bf16.mxu0 0
      %2694 = vmatpush1.bf16.msra.mxu0 0
      %2695 = vmatprep.subr.bf16.mxu0 0
      %2696 = vmatpush1.bf16.msra.mxu0 0
      %2697 = vmatprep.subr.bf16.mxu0 0
      %2698 = vmatpush1.bf16.msra.mxu0 0
      %2699 = vmatprep.subr.bf16.mxu0 0
      %2700 = vmatpush1.bf16.msra.mxu0 0
      %2701 = vmatprep.subr.bf16.mxu0 0
      %2702 = vmatpush1.bf16.msra.mxu0 0
      %2703 = vmatprep.mubr.bf16.mxu0 0
      %2704 = vmatmul.mubr.bf16.gmra.mrb[0].mxu0 %v2422
      %v2705 = vpop.f32.mrb[0].mxu0
      %v2706 = vadd.f32 %v2593, %v2705
      %v2707 = vpop.f32.mrb[0].mxu0
      %v2708 = vadd.f32 %v2595, %v2707
      %v2709 = vpop.f32.mrb[0].mxu0
      %v2710 = vadd.f32 %v2597, %v2709
      %v2711 = vpop.f32.mrb[0].mxu0
      %v2712 = vadd.f32 %v2599, %v2711
      %2713 = vmatprep.mubr.bf16.mxu0 0
      %2714 = vmatmul.mubr.bf16.gmra.mrb[0].mxu0 %v2425
      %v2715 = vpop.f32.mrb[0].mxu0
      %v2716 = vadd.f32 %v2603, %v2715
      %v2717 = vpop.f32.mrb[0].mxu0
      %v2718 = vadd.f32 %v2605, %v2717
      %v2719 = vpop.f32.mrb[0].mxu0
      %v2720 = vadd.f32 %v2607, %v2719
      %v2721 = vpop.f32.mrb[0].mxu0
      %v2722 = vadd.f32 %v2609, %v2721
      %2723 = vmatprep.mubr.bf16.mxu0 0
      %2724 = vmatmul.mubr.bf16.gmra.mrb[0].mxu0 %v2428
      %v2725 = vpop.f32.mrb[0].mxu0
      %v2726 = vadd.f32 %v2613, %v2725
      %v2727 = vpop.f32.mrb[0].mxu0
      %v2728 = vadd.f32 %v2615, %v2727
      %v2729 = vpop.f32.mrb[0].mxu0
      %v2730 = vadd.f32 %v2617, %v2729
      %v2731 = vpop.f32.mrb[0].mxu0
      %v2732 = vadd.f32 %v2619, %v2731
      %2733 = vmatprep.mubr.bf16.mxu0 0
      %2734 = vmatmul.mubr.bf16.gmra.mrb[0].mxu0 %v2431
      %v2735 = vpop.f32.mrb[0].mxu0
      %v2736 = vadd.f32 %v2623, %v2735
      %v2737 = vpop.f32.mrb[0].mxu0
      %v2738 = vadd.f32 %v2625, %v2737
      %v2739 = vpop.f32.mrb[0].mxu0
      %v2740 = vadd.f32 %v2627, %v2739
      %v2741 = vpop.f32.mrb[0].mxu0
      %v2742 = vadd.f32 %v2629, %v2741
      %2743 = vmatprep.mubr.bf16.mxu0 0
      %2744 = vmatmul.mubr.bf16.gmra.mrb[0].mxu0 %v2434
      %v2745 = vpop.f32.mrb[0].mxu0
      %v2746 = vadd.f32 %v2633, %v2745
      %v2747 = vpop.f32.mrb[0].mxu0
      %v2748 = vadd.f32 %v2635, %v2747
      %v2749 = vpop.f32.mrb[0].mxu0
      %v2750 = vadd.f32 %v2637, %v2749
      %v2751 = vpop.f32.mrb[0].mxu0
      %v2752 = vadd.f32 %v2639, %v2751
      %2753 = vmatprep.mubr.bf16.mxu0 0
      %2754 = vmatmul.mubr.bf16.gmra.mrb[0].mxu0 %v2437
      %v2755 = vpop.f32.mrb[0].mxu0
      %v2756 = vadd.f32 %v2643, %v2755
      %v2757 = vpop.f32.mrb[0].mxu0
      %v2758 = vadd.f32 %v2645, %v2757
      %v2759 = vpop.f32.mrb[0].mxu0
      %v2760 = vadd.f32 %v2647, %v2759
      %v2761 = vpop.f32.mrb[0].mxu0
      %v2762 = vadd.f32 %v2649, %v2761
      %2763 = vmatprep.mubr.bf16.mxu0 0
      %2764 = vmatmul.mubr.bf16.gmra.mrb[0].mxu0 %v2440
      %v2765 = vpop.f32.mrb[0].mxu0
      %v2766 = vadd.f32 %v2653, %v2765
      %v2767 = vpop.f32.mrb[0].mxu0
      %v2768 = vadd.f32 %v2655, %v2767
      %v2769 = vpop.f32.mrb[0].mxu0
      %v2770 = vadd.f32 %v2657, %v2769
      %v2771 = vpop.f32.mrb[0].mxu0
      %v2772 = vadd.f32 %v2659, %v2771
      %2773 = vmatprep.mubr.bf16.mxu0 0
      %2774 = vmatmul.mubr.bf16.gmra.mrb[0].mxu0 %v2443
      %v2775 = vpop.f32.mrb[0].mxu0
      %v2776 = vadd.f32 %v2663, %v2775
      %v2777 = vpop.f32.mrb[0].mxu0
      %v2778 = vadd.f32 %v2665, %v2777
      %v2779 = vpop.f32.mrb[0].mxu0
      %v2780 = vadd.f32 %v2667, %v2779
      %v2781 = vpop.f32.mrb[0].mxu0
      %v2782 = vadd.f32 %v2669, %v2781
      %2783 = vdwg.mxu0
      %2784 = vmatprep.subr.bf16.mxu0 %v1727
      %2785 = vmatpush1.bf16.msra.mxu0 %v1726
      %2786 = vmatprep.subr.bf16.mxu0 %v1729
      %2787 = vmatpush1.bf16.msra.mxu0 %v1728
      %2788 = vmatprep.subr.bf16.mxu0 %v1731
      %2789 = vmatpush1.bf16.msra.mxu0 %v1730
      %2790 = vmatprep.subr.bf16.mxu0 %v1733
      %2791 = vmatpush1.bf16.msra.mxu0 %v1732
      %2792 = vmatprep.subr.bf16.mxu0 %v1735
      %2793 = vmatpush1.bf16.msra.mxu0 %v1734
      %2794 = vmatprep.subr.bf16.mxu0 %v1737
      %2795 = vmatpush1.bf16.msra.mxu0 %v1736
      %2796 = vmatprep.subr.bf16.mxu0 %v1739
      %2797 = vmatpush1.bf16.msra.mxu0 %v1738
      %2798 = vmatprep.subr.bf16.mxu0 %v1741
      %2799 = vmatpush1.bf16.msra.mxu0 %v1740
      %2800 = vmatprep.subr.bf16.mxu0 %v1743
      %2801 = vmatpush1.bf16.msra.mxu0 %v1742
      %2802 = vmatprep.subr.bf16.mxu0 %v1745
      %2803 = vmatpush1.bf16.msra.mxu0 %v1744
      %2804 = vmatprep.subr.bf16.mxu0 %v1747
      %2805 = vmatpush1.bf16.msra.mxu0 %v1746
      %2806 = vmatprep.subr.bf16.mxu0 %v1749
      %2807 = vmatpush1.bf16.msra.mxu0 %v1748
      %2808 = vmatprep.subr.bf16.mxu0 %v1751
      %2809 = vmatpush1.bf16.msra.mxu0 %v1750
      %2810 = vmatprep.subr.bf16.mxu0 %v1753
      %2811 = vmatpush1.bf16.msra.mxu0 %v1752
      %2812 = vmatprep.subr.bf16.mxu0 %v1755
      %2813 = vmatpush1.bf16.msra.mxu0 %v1754
      %2814 = vmatprep.subr.bf16.mxu0 %v1757
      %2815 = vmatpush1.bf16.msra.mxu0 %v1756
      %2816 = vmatprep.mubr.bf16.mxu0 %v2350
      %2817 = vmatmul.mubr.bf16.gmra.mrb[0].mxu0 %v2349
      %v2818 = vpop.f32.mrb[0].mxu0
      %v2819 = vadd.f32 0.0, %v2818
      %v2820 = vpop.f32.mrb[0].mxu0
      %v2821 = vadd.f32 0.0, %v2820
      %v2822 = vpop.f32.mrb[0].mxu0
      %v2823 = vadd.f32 0.0, %v2822
      %v2824 = vpop.f32.mrb[0].mxu0
      %v2825 = vadd.f32 0.0, %v2824
      %2826 = vmatprep.mubr.bf16.mxu0 %v2355
      %2827 = vmatmul.mubr.bf16.gmra.mrb[0].mxu0 %v2354
      %v2828 = vpop.f32.mrb[0].mxu0
      %v2829 = vadd.f32 0.0, %v2828
      %v2830 = vpop.f32.mrb[0].mxu0
      %v2831 = vadd.f32 0.0, %v2830
      %v2832 = vpop.f32.mrb[0].mxu0
      %v2833 = vadd.f32 0.0, %v2832
      %v2834 = vpop.f32.mrb[0].mxu0
      %v2835 = vadd.f32 0.0, %v2834
      %2836 = vmatprep.mubr.bf16.mxu0 %v2360
      %2837 = vmatmul.mubr.bf16.gmra.mrb[0].mxu0 %v2359
      %v2838 = vpop.f32.mrb[0].mxu0
      %v2839 = vadd.f32 0.0, %v2838
      %v2840 = vpop.f32.mrb[0].mxu0
      %v2841 = vadd.f32 0.0, %v2840
      %v2842 = vpop.f32.mrb[0].mxu0
      %v2843 = vadd.f32 0.0, %v2842
      %v2844 = vpop.f32.mrb[0].mxu0
      %v2845 = vadd.f32 0.0, %v2844
      %2846 = vmatprep.mubr.bf16.mxu0 %v2365
      %2847 = vmatmul.mubr.bf16.gmra.mrb[0].mxu0 %v2364
      %v2848 = vpop.f32.mrb[0].mxu0
      %v2849 = vadd.f32 0.0, %v2848
      %v2850 = vpop.f32.mrb[0].mxu0
      %v2851 = vadd.f32 0.0, %v2850
      %v2852 = vpop.f32.mrb[0].mxu0
      %v2853 = vadd.f32 0.0, %v2852
      %v2854 = vpop.f32.mrb[0].mxu0
      %v2855 = vadd.f32 0.0, %v2854
      %2856 = vmatprep.mubr.bf16.mxu0 %v2370
      %2857 = vmatmul.mubr.bf16.gmra.mrb[0].mxu0 %v2369
      %v2858 = vpop.f32.mrb[0].mxu0
      %v2859 = vadd.f32 0.0, %v2858
      %v2860 = vpop.f32.mrb[0].mxu0
      %v2861 = vadd.f32 0.0, %v2860
      %v2862 = vpop.f32.mrb[0].mxu0
      %v2863 = vadd.f32 0.0, %v2862
      %v2864 = vpop.f32.mrb[0].mxu0
      %v2865 = vadd.f32 0.0, %v2864
      %2866 = vmatprep.mubr.bf16.mxu0 %v2375
      %2867 = vmatmul.mubr.bf16.gmra.mrb[0].mxu0 %v2374
      %v2868 = vpop.f32.mrb[0].mxu0
      %v2869 = vadd.f32 0.0, %v2868
      %v2870 = vpop.f32.mrb[0].mxu0
      %v2871 = vadd.f32 0.0, %v2870
      %v2872 = vpop.f32.mrb[0].mxu0
      %v2873 = vadd.f32 0.0, %v2872
      %v2874 = vpop.f32.mrb[0].mxu0
      %v2875 = vadd.f32 0.0, %v2874
      %2876 = vmatprep.mubr.bf16.mxu0 %v2380
      %2877 = vmatmul.mubr.bf16.gmra.mrb[0].mxu0 %v2379
      %v2878 = vpop.f32.mrb[0].mxu0
      %v2879 = vadd.f32 0.0, %v2878
      %v2880 = vpop.f32.mrb[0].mxu0
      %v2881 = vadd.f32 0.0, %v2880
      %v2882 = vpop.f32.mrb[0].mxu0
      %v2883 = vadd.f32 0.0, %v2882
      %v2884 = vpop.f32.mrb[0].mxu0
      %v2885 = vadd.f32 0.0, %v2884
      %2886 = vmatprep.mubr.bf16.mxu0 %v2385
      %2887 = vmatmul.mubr.bf16.gmra.mrb[0].mxu0 %v2384
      %v2888 = vpop.f32.mrb[0].mxu0
      %v2889 = vadd.f32 0.0, %v2888
      %v2890 = vpop.f32.mrb[0].mxu0
      %v2891 = vadd.f32 0.0, %v2890
      %v2892 = vpop.f32.mrb[0].mxu0
      %v2893 = vadd.f32 0.0, %v2892
      %v2894 = vpop.f32.mrb[0].mxu0
      %v2895 = vadd.f32 0.0, %v2894
      %2896 = vdwg.mxu0
      %2897 = vmatprep.subr.bf16.mxu0 %v1759
      %2898 = vmatpush1.bf16.msra.mxu0 %v1758
      %2899 = vmatprep.subr.bf16.mxu0 %v1761
      %2900 = vmatpush1.bf16.msra.mxu0 %v1760
      %2901 = vmatprep.subr.bf16.mxu0 %v1763
      %2902 = vmatpush1.bf16.msra.mxu0 %v1762
      %2903 = vmatprep.subr.bf16.mxu0 %v1765
      %2904 = vmatpush1.bf16.msra.mxu0 %v1764
      %2905 = vmatprep.subr.bf16.mxu0 %v1767
      %2906 = vmatpush1.bf16.msra.mxu0 %v1766
      %2907 = vmatprep.subr.bf16.mxu0 %v1769
      %2908 = vmatpush1.bf16.msra.mxu0 %v1768
      %2909 = vmatprep.subr.bf16.mxu0 %v1771
      %2910 = vmatpush1.bf16.msra.mxu0 %v1770
      %2911 = vmatprep.subr.bf16.mxu0 %v1773
      %2912 = vmatpush1.bf16.msra.mxu0 %v1772
      %2913 = vmatprep.subr.bf16.mxu0 %v1775
      %2914 = vmatpush1.bf16.msra.mxu0 %v1774
      %2915 = vmatprep.subr.bf16.mxu0 %v1777
      %2916 = vmatpush1.bf16.msra.mxu0 %v1776
      %2917 = vmatprep.subr.bf16.mxu0 %v1779
      %2918 = vmatpush1.bf16.msra.mxu0 %v1778
      %2919 = vmatprep.subr.bf16.mxu0 %v1781
      %2920 = vmatpush1.bf16.msra.mxu0 %v1780
      %2921 = vmatprep.subr.bf16.mxu0 %v1783
      %2922 = vmatpush1.bf16.msra.mxu0 %v1782
      %2923 = vmatprep.subr.bf16.mxu0 %v1785
      %2924 = vmatpush1.bf16.msra.mxu0 %v1784
      %2925 = vmatprep.subr.bf16.mxu0 %v1787
      %2926 = vmatpush1.bf16.msra.mxu0 %v1786
      %2927 = vmatprep.subr.bf16.mxu0 %v1789
      %2928 = vmatpush1.bf16.msra.mxu0 %v1788
      %2929 = vmatprep.mubr.bf16.mxu0 %v2352
      %2930 = vmatmul.mubr.bf16.gmra.mrb[0].mxu0 %v2351
      %v2931 = vpop.f32.mrb[0].mxu0
      %v2932 = vadd.f32 %v2819, %v2931
      %v2933 = vpop.f32.mrb[0].mxu0
      %v2934 = vadd.f32 %v2821, %v2933
      %v2935 = vpop.f32.mrb[0].mxu0
      %v2936 = vadd.f32 %v2823, %v2935
      %v2937 = vpop.f32.mrb[0].mxu0
      %v2938 = vadd.f32 %v2825, %v2937
      %2939 = vmatprep.mubr.bf16.mxu0 %v2357
      %2940 = vmatmul.mubr.bf16.gmra.mrb[0].mxu0 %v2356
      %v2941 = vpop.f32.mrb[0].mxu0
      %v2942 = vadd.f32 %v2829, %v2941
      %v2943 = vpop.f32.mrb[0].mxu0
      %v2944 = vadd.f32 %v2831, %v2943
      %v2945 = vpop.f32.mrb[0].mxu0
      %v2946 = vadd.f32 %v2833, %v2945
      %v2947 = vpop.f32.mrb[0].mxu0
      %v2948 = vadd.f32 %v2835, %v2947
      %2949 = vmatprep.mubr.bf16.mxu0 %v2362
      %2950 = vmatmul.mubr.bf16.gmra.mrb[0].mxu0 %v2361
      %v2951 = vpop.f32.mrb[0].mxu0
      %v2952 = vadd.f32 %v2839, %v2951
      %v2953 = vpop.f32.mrb[0].mxu0
      %v2954 = vadd.f32 %v2841, %v2953
      %v2955 = vpop.f32.mrb[0].mxu0
      %v2956 = vadd.f32 %v2843, %v2955
      %v2957 = vpop.f32.mrb[0].mxu0
      %v2958 = vadd.f32 %v2845, %v2957
      %2959 = vmatprep.mubr.bf16.mxu0 %v2367
      %2960 = vmatmul.mubr.bf16.gmra.mrb[0].mxu0 %v2366
      %v2961 = vpop.f32.mrb[0].mxu0
      %v2962 = vadd.f32 %v2849, %v2961
      %v2963 = vpop.f32.mrb[0].mxu0
      %v2964 = vadd.f32 %v2851, %v2963
      %v2965 = vpop.f32.mrb[0].mxu0
      %v2966 = vadd.f32 %v2853, %v2965
      %v2967 = vpop.f32.mrb[0].mxu0
      %v2968 = vadd.f32 %v2855, %v2967
      %2969 = vmatprep.mubr.bf16.mxu0 %v2372
      %2970 = vmatmul.mubr.bf16.gmra.mrb[0].mxu0 %v2371
      %v2971 = vpop.f32.mrb[0].mxu0
      %v2972 = vadd.f32 %v2859, %v2971
      %v2973 = vpop.f32.mrb[0].mxu0
      %v2974 = vadd.f32 %v2861, %v2973
      %v2975 = vpop.f32.mrb[0].mxu0
      %v2976 = vadd.f32 %v2863, %v2975
      %v2977 = vpop.f32.mrb[0].mxu0
      %v2978 = vadd.f32 %v2865, %v2977
      %2979 = vmatprep.mubr.bf16.mxu0 %v2377
      %2980 = vmatmul.mubr.bf16.gmra.mrb[0].mxu0 %v2376
      %v2981 = vpop.f32.mrb[0].mxu0
      %v2982 = vadd.f32 %v2869, %v2981
      %v2983 = vpop.f32.mrb[0].mxu0
      %v2984 = vadd.f32 %v2871, %v2983
      %v2985 = vpop.f32.mrb[0].mxu0
      %v2986 = vadd.f32 %v2873, %v2985
      %v2987 = vpop.f32.mrb[0].mxu0
      %v2988 = vadd.f32 %v2875, %v2987
      %2989 = vmatprep.mubr.bf16.mxu0 %v2382
      %2990 = vmatmul.mubr.bf16.gmra.mrb[0].mxu0 %v2381
      %v2991 = vpop.f32.mrb[0].mxu0
      %v2992 = vadd.f32 %v2879, %v2991
      %v2993 = vpop.f32.mrb[0].mxu0
      %v2994 = vadd.f32 %v2881, %v2993
      %v2995 = vpop.f32.mrb[0].mxu0
      %v2996 = vadd.f32 %v2883, %v2995
      %v2997 = vpop.f32.mrb[0].mxu0
      %v2998 = vadd.f32 %v2885, %v2997
      %2999 = vmatprep.mubr.bf16.mxu0 %v2387
      %3000 = vmatmul.mubr.bf16.gmra.mrb[0].mxu0 %v2386
      %v3001 = vpop.f32.mrb[0].mxu0
      %v3002 = vadd.f32 %v2889, %v3001
      %v3003 = vpop.f32.mrb[0].mxu0
      %v3004 = vadd.f32 %v2891, %v3003
      %v3005 = vpop.f32.mrb[0].mxu0
      %v3006 = vadd.f32 %v2893, %v3005
      %v3007 = vpop.f32.mrb[0].mxu0
      %v3008 = vadd.f32 %v2895, %v3007
      %3009 = vdwg.mxu0
      %3010 = vmatprep.subr.bf16.mxu0 %v1791
      %3011 = vmatpush1.bf16.msra.mxu0 %v1790
      %3012 = vmatprep.subr.bf16.mxu0 %v1793
      %3013 = vmatpush1.bf16.msra.mxu0 %v1792
      %3014 = vmatprep.subr.bf16.mxu0 %v1795
      %3015 = vmatpush1.bf16.msra.mxu0 %v1794
      %3016 = vmatprep.subr.bf16.mxu0 %v1797
      %3017 = vmatpush1.bf16.msra.mxu0 %v1796
      %3018 = vmatprep.subr.bf16.mxu0 %v1799
      %3019 = vmatpush1.bf16.msra.mxu0 %v1798
      %3020 = vmatprep.subr.bf16.mxu0 %v1880
      %3021 = vmatpush1.bf16.msra.mxu0 %v1877
      %3022 = vmatprep.subr.bf16.mxu0 0
      %3023 = vmatpush1.bf16.msra.mxu0 0
      %3024 = vmatprep.subr.bf16.mxu0 0
      %3025 = vmatpush1.bf16.msra.mxu0 0
      %3026 = vmatprep.subr.bf16.mxu0 0
      %3027 = vmatpush1.bf16.msra.mxu0 0
      %3028 = vmatprep.subr.bf16.mxu0 0
      %3029 = vmatpush1.bf16.msra.mxu0 0
      %3030 = vmatprep.subr.bf16.mxu0 0
      %3031 = vmatpush1.bf16.msra.mxu0 0
      %3032 = vmatprep.subr.bf16.mxu0 0
      %3033 = vmatpush1.bf16.msra.mxu0 0
      %3034 = vmatprep.subr.bf16.mxu0 0
      %3035 = vmatpush1.bf16.msra.mxu0 0
      %3036 = vmatprep.subr.bf16.mxu0 0
      %3037 = vmatpush1.bf16.msra.mxu0 0
      %3038 = vmatprep.subr.bf16.mxu0 0
      %3039 = vmatpush1.bf16.msra.mxu0 0
      %3040 = vmatprep.subr.bf16.mxu0 0
      %3041 = vmatpush1.bf16.msra.mxu0 0
      %3042 = vmatprep.mubr.bf16.mxu0 0
      %3043 = vmatmul.mubr.bf16.gmra.mrb[0].mxu0 %v2422
      %v3044 = vpop.f32.mrb[0].mxu0
      %v3045 = vadd.f32 %v2932, %v3044
      %v3046 = vpop.f32.mrb[0].mxu0
      %v3047 = vadd.f32 %v2934, %v3046
      %v3048 = vpop.f32.mrb[0].mxu0
      %v3049 = vadd.f32 %v2936, %v3048
      %v3050 = vpop.f32.mrb[0].mxu0
      %v3051 = vadd.f32 %v2938, %v3050
      %3052 = vmatprep.mubr.bf16.mxu0 0
      %3053 = vmatmul.mubr.bf16.gmra.mrb[0].mxu0 %v2425
      %v3054 = vpop.f32.mrb[0].mxu0
      %v3055 = vadd.f32 %v2942, %v3054
      %v3056 = vpop.f32.mrb[0].mxu0
      %v3057 = vadd.f32 %v2944, %v3056
      %v3058 = vpop.f32.mrb[0].mxu0
      %v3059 = vadd.f32 %v2946, %v3058
      %v3060 = vpop.f32.mrb[0].mxu0
      %v3061 = vadd.f32 %v2948, %v3060
      %3062 = vmatprep.mubr.bf16.mxu0 0
      %3063 = vmatmul.mubr.bf16.gmra.mrb[0].mxu0 %v2428
      %v3064 = vpop.f32.mrb[0].mxu0
      %v3065 = vadd.f32 %v2952, %v3064
      %v3066 = vpop.f32.mrb[0].mxu0
      %v3067 = vadd.f32 %v2954, %v3066
      %v3068 = vpop.f32.mrb[0].mxu0
      %v3069 = vadd.f32 %v2956, %v3068
      %v3070 = vpop.f32.mrb[0].mxu0
      %v3071 = vadd.f32 %v2958, %v3070
      %3072 = vmatprep.mubr.bf16.mxu0 0
      %3073 = vmatmul.mubr.bf16.gmra.mrb[0].mxu0 %v2431
      %v3074 = vpop.f32.mrb[0].mxu0
      %v3075 = vadd.f32 %v2962, %v3074
      %v3076 = vpop.f32.mrb[0].mxu0
      %v3077 = vadd.f32 %v2964, %v3076
      %v3078 = vpop.f32.mrb[0].mxu0
      %v3079 = vadd.f32 %v2966, %v3078
      %v3080 = vpop.f32.mrb[0].mxu0
      %v3081 = vadd.f32 %v2968, %v3080
      %3082 = vmatprep.mubr.bf16.mxu0 0
      %3083 = vmatmul.mubr.bf16.gmra.mrb[0].mxu0 %v2434
      %v3084 = vpop.f32.mrb[0].mxu0
      %v3085 = vadd.f32 %v2972, %v3084
      %v3086 = vpop.f32.mrb[0].mxu0
      %v3087 = vadd.f32 %v2974, %v3086
      %v3088 = vpop.f32.mrb[0].mxu0
      %v3089 = vadd.f32 %v2976, %v3088
      %v3090 = vpop.f32.mrb[0].mxu0
      %v3091 = vadd.f32 %v2978, %v3090
      %3092 = vmatprep.mubr.bf16.mxu0 0
      %3093 = vmatmul.mubr.bf16.gmra.mrb[0].mxu0 %v2437
      %v3094 = vpop.f32.mrb[0].mxu0
      %v3095 = vadd.f32 %v2982, %v3094
      %v3096 = vpop.f32.mrb[0].mxu0
      %v3097 = vadd.f32 %v2984, %v3096
      %v3098 = vpop.f32.mrb[0].mxu0
      %v3099 = vadd.f32 %v2986, %v3098
      %v3100 = vpop.f32.mrb[0].mxu0
      %v3101 = vadd.f32 %v2988, %v3100
      %3102 = vmatprep.mubr.bf16.mxu0 0
      %3103 = vmatmul.mubr.bf16.gmra.mrb[0].mxu0 %v2440
      %v3104 = vpop.f32.mrb[0].mxu0
      %v3105 = vadd.f32 %v2992, %v3104
      %v3106 = vpop.f32.mrb[0].mxu0
      %v3107 = vadd.f32 %v2994, %v3106
      %v3108 = vpop.f32.mrb[0].mxu0
      %v3109 = vadd.f32 %v2996, %v3108
      %v3110 = vpop.f32.mrb[0].mxu0
      %v3111 = vadd.f32 %v2998, %v3110
      %3112 = vmatprep.mubr.bf16.mxu0 0
      %3113 = vmatmul.mubr.bf16.gmra.mrb[0].mxu0 %v2443
      %v3114 = vpop.f32.mrb[0].mxu0
      %v3115 = vadd.f32 %v3002, %v3114
      %v3116 = vpop.f32.mrb[0].mxu0
      %v3117 = vadd.f32 %v3004, %v3116
      %v3118 = vpop.f32.mrb[0].mxu0
      %v3119 = vadd.f32 %v3006, %v3118
      %v3120 = vpop.f32.mrb[0].mxu0
      %v3121 = vadd.f32 %v3008, %v3120
      %3122 = vdwg.mxu0
      %v3123 = vmax.f32 %v1423, %v2143
      %v3124 = vmax.f32 %v1425, %v2145
      %v3125 = vmax.f32 %v1427, %v2147
      %v3126 = vmax.f32 %v1429, %v2149
      %v3127 = vmax.f32 %v1433, %v2153
      %v3128 = vmax.f32 %v1435, %v2155
      %v3129 = vmax.f32 %v1437, %v2157
      %v3130 = vmax.f32 %v1439, %v2159
      %v3131 = vmax.f32 %v1443, %v2163
      %v3132 = vmax.f32 %v1445, %v2165
      %v3133 = vmax.f32 %v1447, %v2167
      %v3134 = vmax.f32 %v1449, %v2169
      %v3135 = vmax.f32 %v1453, %v2173
      %v3136 = vmax.f32 %v1455, %v2175
      %v3137 = vmax.f32 %v1457, %v2177
      %v3138 = vmax.f32 %v1459, %v2179
      %v3139 = vmax.f32 %v1463, %v2183
      %v3140 = vmax.f32 %v1465, %v2185
      %v3141 = vmax.f32 %v1467, %v2187
      %v3142 = vmax.f32 %v1469, %v2189
      %v3143 = vmax.f32 %v1473, %v2193
      %v3144 = vmax.f32 %v1475, %v2195
      %v3145 = vmax.f32 %v1477, %v2197
      %v3146 = vmax.f32 %v1479, %v2199
      %v3147 = vmax.f32 %v1483, %v2203
      %v3148 = vmax.f32 %v1485, %v2205
      %v3149 = vmax.f32 %v1487, %v2207
      %v3150 = vmax.f32 %v1489, %v2209
      %v3151 = vmax.f32 %v1493, %v2213
      %v3152 = vmax.f32 %v1495, %v2215
      %v3153 = vmax.f32 %v1497, %v2217
      %v3154 = vmax.f32 %v1499, %v2219
      %v3155 = vmax.f32 %v2706, %v3045
      %v3156 = vmax.f32 %v2708, %v3047
      %v3157 = vmax.f32 %v2710, %v3049
      %v3158 = vmax.f32 %v2712, %v3051
      %v3159 = vmax.f32 %v2716, %v3055
      %v3160 = vmax.f32 %v2718, %v3057
      %v3161 = vmax.f32 %v2720, %v3059
      %v3162 = vmax.f32 %v2722, %v3061
      %v3163 = vmax.f32 %v2726, %v3065
      %v3164 = vmax.f32 %v2728, %v3067
      %v3165 = vmax.f32 %v2730, %v3069
      %v3166 = vmax.f32 %v2732, %v3071
      %v3167 = vmax.f32 %v2736, %v3075
      %v3168 = vmax.f32 %v2738, %v3077
      %v3169 = vmax.f32 %v2740, %v3079
      %v3170 = vmax.f32 %v2742, %v3081
      %v3171 = vmax.f32 %v2746, %v3085
      %v3172 = vmax.f32 %v2748, %v3087
      %v3173 = vmax.f32 %v2750, %v3089
      %v3174 = vmax.f32 %v2752, %v3091
      %v3175 = vmax.f32 %v2756, %v3095
      %v3176 = vmax.f32 %v2758, %v3097
      %v3177 = vmax.f32 %v2760, %v3099
      %v3178 = vmax.f32 %v2762, %v3101
      %v3179 = vmax.f32 %v2766, %v3105
      %v3180 = vmax.f32 %v2768, %v3107
      %v3181 = vmax.f32 %v2770, %v3109
      %v3182 = vmax.f32 %v2772, %v3111
      %v3183 = vmax.f32 %v2776, %v3115
      %v3184 = vmax.f32 %v2778, %v3117
      %v3185 = vmax.f32 %v2780, %v3119
      %v3186 = vmax.f32 %v2782, %v3121
      %v3187 = vmax.f32 %v3123, %v3155
      %v3188 = vmax.f32 %v3124, %v3156
      %v3189 = vmax.f32 %v3125, %v3157
      %v3190 = vmax.f32 %v3126, %v3158
      %v3191 = vmax.f32 %v3127, %v3159
      %v3192 = vmax.f32 %v3128, %v3160
      %v3193 = vmax.f32 %v3129, %v3161
      %v3194 = vmax.f32 %v3130, %v3162
      %v3195 = vmax.f32 %v3131, %v3163
      %v3196 = vmax.f32 %v3132, %v3164
      %v3197 = vmax.f32 %v3133, %v3165
      %v3198 = vmax.f32 %v3134, %v3166
      %v3199 = vmax.f32 %v3135, %v3167
      %v3200 = vmax.f32 %v3136, %v3168
      %v3201 = vmax.f32 %v3137, %v3169
      %v3202 = vmax.f32 %v3138, %v3170
      %v3203 = vmax.f32 %v3139, %v3171
      %v3204 = vmax.f32 %v3140, %v3172
      %v3205 = vmax.f32 %v3141, %v3173
      %v3206 = vmax.f32 %v3142, %v3174
      %v3207 = vmax.f32 %v3143, %v3175
      %v3208 = vmax.f32 %v3144, %v3176
      %v3209 = vmax.f32 %v3145, %v3177
      %v3210 = vmax.f32 %v3146, %v3178
      %v3211 = vmax.f32 %v3147, %v3179
      %v3212 = vmax.f32 %v3148, %v3180
      %v3213 = vmax.f32 %v3149, %v3181
      %v3214 = vmax.f32 %v3150, %v3182
      %v3215 = vmax.f32 %v3151, %v3183
      %v3216 = vmax.f32 %v3152, %v3184
      %v3217 = vmax.f32 %v3153, %v3185
      %v3218 = vmax.f32 %v3154, %v3186
      %v3219 = vld [vmem:[%s4] sm:$0x3]
      %v3221 = vlaneseq
      %v3222 = vshrl.u32 %v3221, 7
      %v3223 = vsub.s32 0, %v3222
      %v3224 = vrot.slane %v3219, %v3223
      %v3225 = vlaneseq
      %v3226 = vshrl.u32 %v3225, 7
      %v3227 = vsub.s32 1, %v3226
      %v3228 = vrot.slane %v3219, %v3227
      %v3231 = vadd.f32 %v3187, %v3224
      %v3232 = vadd.f32 %v3188, %v3228
      %v3233 = vadd.f32 %v3189, %v3224
      %v3234 = vadd.f32 %v3190, %v3228
      %v3235 = vadd.f32 %v3191, %v3224
      %v3236 = vadd.f32 %v3192, %v3228
      %v3237 = vadd.f32 %v3193, %v3224
      %v3238 = vadd.f32 %v3194, %v3228
      %v3239 = vadd.f32 %v3195, %v3224
      %v3240 = vadd.f32 %v3196, %v3228
      %v3241 = vadd.f32 %v3197, %v3224
      %v3242 = vadd.f32 %v3198, %v3228
      %v3243 = vadd.f32 %v3199, %v3224
      %v3244 = vadd.f32 %v3200, %v3228
      %v3245 = vadd.f32 %v3201, %v3224
      %v3246 = vadd.f32 %v3202, %v3228
      %v3247 = vadd.f32 %v3203, %v3224
      %v3248 = vadd.f32 %v3204, %v3228
      %v3249 = vadd.f32 %v3205, %v3224
      %v3250 = vadd.f32 %v3206, %v3228
      %v3251 = vadd.f32 %v3207, %v3224
      %v3252 = vadd.f32 %v3208, %v3228
      %v3253 = vadd.f32 %v3209, %v3224
      %v3254 = vadd.f32 %v3210, %v3228
      %v3255 = vadd.f32 %v3211, %v3224
      %v3256 = vadd.f32 %v3212, %v3228
      %v3257 = vadd.f32 %v3213, %v3224
      %v3258 = vadd.f32 %v3214, %v3228
      %v3259 = vadd.f32 %v3215, %v3224
      %v3260 = vadd.f32 %v3216, %v3228
      %v3261 = vadd.f32 %v3217, %v3224
      %v3262 = vadd.f32 %v3218, %v3228
      %v3263 = vmax.f32 %v3231, 0.0
      %v3264 = vmax.f32 %v3232, 0.0
      %v3265 = vmax.f32 %v3233, 0.0
      %v3266 = vmax.f32 %v3234, 0.0
      %v3267 = vmax.f32 %v3235, 0.0
      %v3268 = vmax.f32 %v3236, 0.0
      %v3269 = vmax.f32 %v3237, 0.0
      %v3270 = vmax.f32 %v3238, 0.0
      %v3271 = vmax.f32 %v3239, 0.0
      %v3272 = vmax.f32 %v3240, 0.0
      %v3273 = vmax.f32 %v3241, 0.0
      %v3274 = vmax.f32 %v3242, 0.0
      %v3275 = vmax.f32 %v3243, 0.0
      %v3276 = vmax.f32 %v3244, 0.0
      %v3277 = vmax.f32 %v3245, 0.0
      %v3278 = vmax.f32 %v3246, 0.0
      %v3279 = vmax.f32 %v3247, 0.0
      %v3280 = vmax.f32 %v3248, 0.0
      %v3281 = vmax.f32 %v3249, 0.0
      %v3282 = vmax.f32 %v3250, 0.0
      %v3283 = vmax.f32 %v3251, 0.0
      %v3284 = vmax.f32 %v3252, 0.0
      %v3285 = vmax.f32 %v3253, 0.0
      %v3286 = vmax.f32 %v3254, 0.0
      %v3287 = vmax.f32 %v3255, 0.0
      %v3288 = vmax.f32 %v3256, 0.0
      %v3289 = vmax.f32 %v3257, 0.0
      %v3290 = vmax.f32 %v3258, 0.0
      %v3291 = vmax.f32 %v3259, 0.0
      %v3292 = vmax.f32 %v3260, 0.0
      %v3293 = vmax.f32 %v3261, 0.0
      %v3294 = vmax.f32 %v3262, 0.0
      %v3295 = vpack.c.bf16 %v3265, %v3263
      %v3296 = vpack.c.bf16 %v3266, %v3264
      %v3297 = vpack.c.bf16 %v3269, %v3267
      %v3298 = vpack.c.bf16 %v3270, %v3268
      %v3299 = vpack.c.bf16 %v3273, %v3271
      %v3300 = vpack.c.bf16 %v3274, %v3272
      %v3301 = vpack.c.bf16 %v3277, %v3275
      %v3302 = vpack.c.bf16 %v3278, %v3276
      %v3303 = vpack.c.bf16 %v3281, %v3279
      %v3304 = vpack.c.bf16 %v3282, %v3280
      %v3305 = vpack.c.bf16 %v3285, %v3283
      %v3306 = vpack.c.bf16 %v3286, %v3284
      %v3307 = vpack.c.bf16 %v3289, %v3287
      %v3308 = vpack.c.bf16 %v3290, %v3288
      %v3309 = vpack.c.bf16 %v3293, %v3291
      %v3310 = vpack.c.bf16 %v3294, %v3292
      %v3327 = vunpack.c.l.b16 %v3295
      %v3328 = vunpack.c.l.b16 %v3296
      %v3329 = vunpack.c.h.b16 %v3295
      %v3330 = vunpack.c.h.b16 %v3296
      %v3331 = vunpack.c.l.b16 %v3297
      %v3332 = vunpack.c.l.b16 %v3298
      %v3333 = vunpack.c.h.b16 %v3297
      %v3334 = vunpack.c.h.b16 %v3298
      %v3335 = vunpack.c.l.b16 %v3299
      %v3336 = vunpack.c.l.b16 %v3300
      %v3337 = vunpack.c.h.b16 %v3299
      %v3338 = vunpack.c.h.b16 %v3300
      %v3339 = vunpack.c.l.b16 %v3301
      %v3340 = vunpack.c.l.b16 %v3302
      %v3341 = vunpack.c.h.b16 %v3301
      %v3342 = vunpack.c.h.b16 %v3302
      %v3343 = vunpack.c.l.b16 %v3303
      %v3344 = vunpack.c.l.b16 %v3304
      %v3345 = vunpack.c.h.b16 %v3303
      %v3346 = vunpack.c.h.b16 %v3304
      %v3347 = vunpack.c.l.b16 %v3305
      %v3348 = vunpack.c.l.b16 %v3306
      %v3349 = vunpack.c.h.b16 %v3305
      %v3350 = vunpack.c.h.b16 %v3306
      %v3351 = vunpack.c.l.b16 %v3307
      %v3352 = vunpack.c.l.b16 %v3308
      %v3353 = vunpack.c.h.b16 %v3307
      %v3354 = vunpack.c.h.b16 %v3308
      %v3355 = vunpack.c.l.b16 %v3309
      %v3356 = vunpack.c.l.b16 %v3310
      %v3357 = vunpack.c.h.b16 %v3309
      %v3358 = vunpack.c.h.b16 %v3310
      %v3359 = vpack.c.b16 %v3328, %v3327
      %v3360 = vpack.c.b16 %v3330, %v3329
      %v3361 = vpack.c.b16 %v3332, %v3331
      %v3362 = vpack.c.b16 %v3334, %v3333
      %v3363 = vpack.c.b16 %v3336, %v3335
      %v3364 = vpack.c.b16 %v3338, %v3337
      %v3365 = vpack.c.b16 %v3340, %v3339
      %v3366 = vpack.c.b16 %v3342, %v3341
      %v3367 = vpack.c.b16 %v3344, %v3343
      %v3368 = vpack.c.b16 %v3346, %v3345
      %v3369 = vpack.c.b16 %v3348, %v3347
      %v3370 = vpack.c.b16 %v3350, %v3349
      %v3371 = vpack.c.b16 %v3352, %v3351
      %v3372 = vpack.c.b16 %v3354, %v3353
      %v3373 = vpack.c.b16 %v3356, %v3355
      %v3374 = vpack.c.b16 %v3358, %v3357
      %vm3391 = vcmask 261124
      %vm3392 = vmor %vm3391, %vm1155
      %3393 = vst.msk [vmem:[%s306] sm:$0xff] %vm3392, %v3359
      %3394 = vst.msk [vmem:[%s306 + $0x8] sm:$0xff] %vm3392, %v3360
      %3395 = vst.msk [vmem:[%s306 + $0x10] sm:$0xff] %vm3392, %v3361
      %3396 = vst.msk [vmem:[%s306 + $0x18] sm:$0xff] %vm3392, %v3362
      %3397 = vst.msk [vmem:[%s306 + $0x20] sm:$0xff] %vm3392, %v3363
      %3398 = vst.msk [vmem:[%s306 + $0x28] sm:$0xff] %vm3392, %v3364
      %3399 = vst.msk [vmem:[%s306 + $0x30] sm:$0xff] %vm3392, %v3365
      %3400 = vst.msk [vmem:[%s306 + $0x38] sm:$0xff] %vm3392, %v3366
      %3401 = vst.msk [vmem:[%s306 + $0x40] sm:$0xff] %vm3392, %v3367
      %3402 = vst.msk [vmem:[%s306 + $0x48] sm:$0xff] %vm3392, %v3368
      %3403 = vst.msk [vmem:[%s306 + $0x50] sm:$0xff] %vm3392, %v3369
      %3404 = vst.msk [vmem:[%s306 + $0x58] sm:$0xff] %vm3392, %v3370
      %3405 = vst.msk [vmem:[%s306 + $0x60] sm:$0xff] %vm3392, %v3371
      %3406 = vst.msk [vmem:[%s306 + $0x68] sm:$0xff] %vm3392, %v3372
      %3407 = vst.msk [vmem:[%s306 + $0x70] sm:$0xff] %vm3392, %v3373
      %3408 = vst.msk [vmem:[%s306 + $0x78] sm:$0xff] %vm3392, %v3374
      %s3409 = smul.u32 16, %s21
      %p3410 = scmp.lt.s32.totalorder %s20, 1
      %s3411 = scalar_select %p3410, %s20, 1
      %p3412 = scmp.lt.s32.totalorder %s3409, 31
      %s3413 = scalar_select %p3412, %s3409, 31
      %s3414 = smul.addr %s3413, 2
      %s3415 = smul.addr %s3411, 64
      %s3416 = sadd.s32 %s3414, %s3415
      %s3417 = smul.addr %s3416, 4
      %s3418 = scalar_lea.vmem %s5, %s3417
      // Predicated region
      $region41: #{cnn_forward.3} parent=39 // pred_check
        %p3419 = pneg %p167
      $region42: #{cnn_forward.3} parent=39 // pred_check_branch
        %3421 = sbr.rel (%p3419) target = $region44
      $region43: #{cnn_forward.3} parent=39 // pred_region
        %s3422 = smul.u32 16, %s21
      $region44: #{cnn_forward.3} parent=39 // pred_fallthru
        _
    $region40: #{cnn_forward.3} parent=5 // pred_fallthru
      _
    %p3423 = scmp.le.s32.totalorder 2, %s11
    // Predicated region
    $region45: #{cnn_forward.3} parent=5 // pred_check
      %p3424 = pneg %p3423
    $region46: #{cnn_forward.3} parent=5 // pred_check_branch
      %3426 = sbr.rel (%p3424) target = $region48
    $region47: #{cnn_forward.3} parent=5 // pred_region
      %s3427 = ssub.s32 %s11, 2
      // Predicated region
      $region49: #{cnn_forward.3} parent=47 // pred_check
        %p3428 = pneg %p173
      $region50: #{cnn_forward.3} parent=47 // pred_check_branch
        %3430 = sbr.rel (%p3428) target = $region52
      $region51: #{cnn_forward.3} parent=47 // pred_region
        %s3431 = smul.u32 16, %s23
        %p3432 = scmp.lt.s32.totalorder %s22, 1
        %s3433 = scalar_select %p3432, %s22, 1
        %p3434 = scmp.lt.s32.totalorder %s3431, 31
        %s3435 = scalar_select %p3434, %s3431, 31
        %s3436 = smul.addr %s3435, 2
        %s3437 = smul.addr %s3433, 64
        %s3438 = sadd.s32 %s3436, %s3437
        %s3439 = smul.addr %s3438, 4
        %s3440 = scalar_lea.vmem %s5, %s3439
      $region52: #{cnn_forward.3} parent=47 // pred_fallthru
        _
    $region48: #{cnn_forward.3} parent=5 // pred_fallthru
      _
  $region6: #{cnn_forward.3} parent=0 // loop_footer
    %s15 = sadd.s32 1, %s11
  $region7: #{cnn_forward.3} parent=0 // loop_footer_branch
    %10 = sbr.rel target = $region3
  $region8: #{cnn_forward.3} parent=0 // loop_exit
    _

// kernel: cnn_forward.4
$region0: #{cnn_forward.4}
  #allocation0 [shape = 'u32[]', space=smem, size = 0x4, offset = 0x4, fixed_abs, tag = 'smem constant byte address 0x4 - core index']
  #allocation1 [shape = 'u32[144,128]{1,0:T(1,128)}', space=vmem, size = 0x12000, scoped, tag = 'internal scratch']
  %s0 = inlined_call_operand.vmem [shape: bf16[2,128,1120], index: 0, kind: input, shape index: {}]
  %s1 = inlined_call_operand.vmem [shape: bf16[2,128,1120], index: 1, kind: input, shape index: {}]
  %s2 = inlined_call_operand.vmem [shape: bf16[1120,160], index: 2, kind: input, shape index: {}]
  %s3 = inlined_call_operand.vmem [shape: bf16[1120,160], index: 3, kind: input, shape index: {}]
  %s4 = inlined_call_operand.vmem [shape: f32[1,160], index: 4, kind: input, shape index: {}]
  %s5 = inlined_call_operand.vmem [shape: bf16[2,128,160], index: 5, kind: output, shape index: {}]
  %s6 = sld [smem:[#allocation0]]
  $region53: #{cnn_forward.4} parent=0
    _
  %s8 = ssub.s32 1, %s6
  %s9 = scalar_select 0, %s8, %s6
  loop: start=0, step=1, limit=6
  $region2: #{cnn_forward.4} parent=0 // loop_pre_header
    _
  $region3: #{cnn_forward.4} parent=0 // loop_header
    %s11 = sphi 0, %s15
    %p12 = scmp.ge.s32.totalorder %s11, 6
    %s18 = sphi 0, %s30
    %s19 = sphi 0, %s26
    %s20 = sphi 0, %s18
    %s21 = sphi 0, %s19
    %s22 = sphi 0, %s20
    %s23 = sphi 0, %s21
    %s35 = sphi 0, %s37
    %s38 = sphi 0, %s35
    %s39 = sphi 0, %s38
    %s55 = sphi 0, %s39
    %s63 = sphi 0, %s65
    %s66 = sphi 0, %s63
    %s67 = sphi 0, %s66
    %s83 = sphi 0, %s67
    %s87 = sphi 0, %s87
    %s89 = sphi 0, %s87
    %s90 = sphi 0, %s89
    %s104 = sphi 0, %s90
    %s108 = sphi 0, %s108
    %s110 = sphi 0, %s108
    %s111 = sphi 0, %s110
    %s125 = sphi 0, %s111
    %s129 = sphi 0, %s129
    %s131 = sphi 0, %s129
    %s132 = sphi 0, %s131
    %s146 = sphi 0, %s132
    %s154 = sphi 0, %s156
    %s157 = sphi 0, %s154
    %s158 = sphi 0, %s157
    %s174 = sphi 0, %s158
  $region4: #{cnn_forward.4} parent=0 // loop_header_branch
    %14 = sbr.rel (%p12) target = $region8
  $region5: #{cnn_forward.4} parent=0 // loop_body
    %s16 = ssub.s32 %s11, 1
    %s17 = ssub.s32 %s11, 2
    %s24 = sadd.s32 1, %s19
    %p25 = scmp.ge.s32.totalorder %s24, 2
    %s26 = scalar_select %p25, 0, %s24
    %s27 = sadd.s32 1, %s18
    %s28 = scalar_select %p25, %s27, %s18
    %p29 = scmp.ge.s32.totalorder %s28, 2
    %s30 = scalar_select %p29, 0, %s28
    %s31 = ssub.s32 %s18, %s30
    %s32 = ssub.s32 %s19, %s26
    %s33 = sor.u32 %s31, %s32
    %p34 = scmp.eq.s32.totalorder %s33, 0
    %s36 = sadd.s32 %s35, 1
    %s37 = scalar_select %p34, %s35, %s36
    %p40 = pneg %p34
    %p41 = scmp.eq.s32.totalorder %s11, 3
    %p42 = por %p40, %p41
    %p43 = scmp.ne.s32.totalorder %s35, %s38
    %p44 = scmp.eq.s32.totalorder %s11, 0
    %p45 = por %p43, %p44
    %p46 = scmp.ne.s32.totalorder %s35, %s38
    %p47 = scmp.eq.s32.totalorder %s16, 3
    %p48 = por %p46, %p47
    %p49 = scmp.ne.s32.totalorder %s38, %s39
    %p50 = scmp.eq.s32.totalorder %s16, 0
    %p51 = por %p49, %p50
    %p52 = scmp.ne.s32.totalorder %s38, %s39
    %p53 = scmp.eq.s32.totalorder %s17, 3
    %p54 = por %p52, %p53
    %p56 = scmp.ne.s32.totalorder %s39, %s55
    %p57 = scmp.eq.s32.totalorder %s17, 0
    %p58 = por %p56, %p57
    %s59 = ssub.s32 %s18, %s30
    %s60 = ssub.s32 %s19, %s26
    %s61 = sor.u32 %s59, %s60
    %p62 = scmp.eq.s32.totalorder %s61, 0
    %s64 = sadd.s32 %s63, 1
    %s65 = scalar_select %p62, %s63, %s64
    %p68 = pneg %p62
    %p69 = scmp.eq.s32.totalorder %s11, 3
    %p70 = por %p68, %p69
    %p71 = scmp.ne.s32.totalorder %s63, %s66
    %p72 = scmp.eq.s32.totalorder %s11, 0
    %p73 = por %p71, %p72
    %p74 = scmp.ne.s32.totalorder %s63, %s66
    %p75 = scmp.eq.s32.totalorder %s16, 3
    %p76 = por %p74, %p75
    %p77 = scmp.ne.s32.totalorder %s66, %s67
    %p78 = scmp.eq.s32.totalorder %s16, 0
    %p79 = por %p77, %p78
    %p80 = scmp.ne.s32.totalorder %s66, %s67
    %p81 = scmp.eq.s32.totalorder %s17, 3
    %p82 = por %p80, %p81
    %p84 = scmp.ne.s32.totalorder %s67, %s83
    %p85 = scmp.eq.s32.totalorder %s17, 0
    %p86 = por %p84, %p85
    %s88 = sadd.s32 %s87, 1
    %p91 = scmp.eq.s32.totalorder %s11, 3
    %p92 = scmp.ne.s32.totalorder %s87, %s89
    %p93 = scmp.eq.s32.totalorder %s11, 0
    %p94 = por %p92, %p93
    %p95 = scmp.ne.s32.totalorder %s87, %s89
    %p96 = scmp.eq.s32.totalorder %s16, 3
    %p97 = por %p95, %p96
    %p98 = scmp.ne.s32.totalorder %s89, %s90
    %p99 = scmp.eq.s32.totalorder %s16, 0
    %p100 = por %p98, %p99
    %p101 = scmp.ne.s32.totalorder %s89, %s90
    %p102 = scmp.eq.s32.totalorder %s17, 3
    %p103 = por %p101, %p102
    %p105 = scmp.ne.s32.totalorder %s90, %s104
    %p106 = scmp.eq.s32.totalorder %s17, 0
    %p107 = por %p105, %p106
    %s109 = sadd.s32 %s108, 1
    %p112 = scmp.eq.s32.totalorder %s11, 3
    %p113 = scmp.ne.s32.totalorder %s108, %s110
    %p114 = scmp.eq.s32.totalorder %s11, 0
    %p115 = por %p113, %p114
    %p116 = scmp.ne.s32.totalorder %s108, %s110
    %p117 = scmp.eq.s32.totalorder %s16, 3
    %p118 = por %p116, %p117
    %p119 = scmp.ne.s32.totalorder %s110, %s111
    %p120 = scmp.eq.s32.totalorder %s16, 0
    %p121 = por %p119, %p120
    %p122 = scmp.ne.s32.totalorder %s110, %s111
    %p123 = scmp.eq.s32.totalorder %s17, 3
    %p124 = por %p122, %p123
    %p126 = scmp.ne.s32.totalorder %s111, %s125
    %p127 = scmp.eq.s32.totalorder %s17, 0
    %p128 = por %p126, %p127
    %s130 = sadd.s32 %s129, 1
    %p133 = scmp.eq.s32.totalorder %s11, 3
    %p134 = scmp.ne.s32.totalorder %s129, %s131
    %p135 = scmp.eq.s32.totalorder %s11, 0
    %p136 = por %p134, %p135
    %p137 = scmp.ne.s32.totalorder %s129, %s131
    %p138 = scmp.eq.s32.totalorder %s16, 3
    %p139 = por %p137, %p138
    %p140 = scmp.ne.s32.totalorder %s131, %s132
    %p141 = scmp.eq.s32.totalorder %s16, 0
    %p142 = por %p140, %p141
    %p143 = scmp.ne.s32.totalorder %s131, %s132
    %p144 = scmp.eq.s32.totalorder %s17, 3
    %p145 = por %p143, %p144
    %p147 = scmp.ne.s32.totalorder %s132, %s146
    %p148 = scmp.eq.s32.totalorder %s17, 0
    %p149 = por %p147, %p148
    %s150 = ssub.s32 %s18, %s30
    %s151 = ssub.s32 %s19, %s26
    %s152 = sor.u32 %s150, %s151
    %p153 = scmp.eq.s32.totalorder %s152, 0
    %s155 = sadd.s32 %s154, 1
    %s156 = scalar_select %p153, %s154, %s155
    %p159 = pneg %p153
    %p160 = scmp.eq.s32.totalorder %s11, 3
    %p161 = por %p159, %p160
    %p162 = scmp.ne.s32.totalorder %s154, %s157
    %p163 = scmp.eq.s32.totalorder %s11, 0
    %p164 = por %p162, %p163
    %p165 = scmp.ne.s32.totalorder %s154, %s157
    %p166 = scmp.eq.s32.totalorder %s16, 3
    %p167 = por %p165, %p166
    %p168 = scmp.ne.s32.totalorder %s157, %s158
    %p169 = scmp.eq.s32.totalorder %s16, 0
    %p170 = por %p168, %p169
    %p171 = scmp.ne.s32.totalorder %s157, %s158
    %p172 = scmp.eq.s32.totalorder %s17, 3
    %p173 = por %p171, %p172
    %p175 = scmp.ne.s32.totalorder %s158, %s174
    %p176 = scmp.eq.s32.totalorder %s17, 0
    %p177 = por %p175, %p176
    %p178 = scmp.le.s32.totalorder 1, %s11
    %p179 = scmp.lt.s32.totalorder %s11, 5
    %p180 = pnand %p178, %p179
    %p181 = pneg %p180
    // Predicated region
    $region9: #{cnn_forward.4} parent=5 // pred_check
      _
    $region10: #{cnn_forward.4} parent=5 // pred_check_branch
      %183 = sbr.rel (%p180) target = $region12
    $region11: #{cnn_forward.4} parent=5 // pred_region
      %s184 = ssub.s32 %s11, 1
      // Predicated region
      $region13: #{cnn_forward.4} parent=11 // pred_check
        %p185 = pneg %p100
      $region14: #{cnn_forward.4} parent=11 // pred_check_branch
        %187 = sbr.rel (%p185) target = $region16
      $region15: #{cnn_forward.4} parent=11 // pred_region
        _
      $region16: #{cnn_forward.4} parent=11 // pred_fallthru
        _
      // Predicated region
      $region17: #{cnn_forward.4} parent=11 // pred_check
        %p188 = pneg %p121
      $region18: #{cnn_forward.4} parent=11 // pred_check_branch
        %190 = sbr.rel (%p188) target = $region20
      $region19: #{cnn_forward.4} parent=11 // pred_region
        _
      $region20: #{cnn_forward.4} parent=11 // pred_fallthru
        _
      // Predicated region
      $region21: #{cnn_forward.4} parent=11 // pred_check
        %p191 = pneg %p142
      $region22: #{cnn_forward.4} parent=11 // pred_check_branch
        %193 = sbr.rel (%p191) target = $region24
      $region23: #{cnn_forward.4} parent=11 // pred_region
        _
      $region24: #{cnn_forward.4} parent=11 // pred_fallthru
        _
    $region12: #{cnn_forward.4} parent=5 // pred_fallthru
      _
    %p194 = scmp.lt.s32.totalorder %s11, 4
    // Predicated region
    $region25: #{cnn_forward.4} parent=5 // pred_check
      %p195 = pneg %p194
    $region26: #{cnn_forward.4} parent=5 // pred_check_branch
      %197 = sbr.rel (%p195) target = $region28
    $region27: #{cnn_forward.4} parent=5 // pred_region
      // Predicated region
      $region29: #{cnn_forward.4} parent=27 // pred_check
        %p198 = pneg %p45
      $region30: #{cnn_forward.4} parent=27 // pred_check_branch
        %200 = sbr.rel (%p198) target = $region32
      $region31: #{cnn_forward.4} parent=27 // pred_region
        %s201 = smul.u32 8, %s19
        %p202 = scmp.lt.s32.totalorder %s18, 1
        %s203 = scalar_select %p202, %s18, 1
        %p204 = scmp.lt.s32.totalorder %s201, 15
        %s205 = scalar_select %p204, %s201, 15
        %s206 = smul.addr %s205, 9
        %s207 = smul.addr %s203, 144
        %s208 = sadd.s32 %s206, %s207
        %s209 = smul.addr %s208, 4
        %s210 = scalar_lea.vmem %s0, %s209
        %s211 = smul.u32 8, %s19
      $region32: #{cnn_forward.4} parent=27 // pred_fallthru
        _
      // Predicated region
      $region33: #{cnn_forward.4} parent=27 // pred_check
        %p212 = pneg %p73
      $region34: #{cnn_forward.4} parent=27 // pred_check_branch
        %214 = sbr.rel (%p212) target = $region36
      $region35: #{cnn_forward.4} parent=27 // pred_region
        %s215 = smul.u32 8, %s19
        %p216 = scmp.lt.s32.totalorder %s18, 1
        %s217 = scalar_select %p216, %s18, 1
        %p218 = scmp.lt.s32.totalorder %s215, 15
        %s219 = scalar_select %p218, %s215, 15
        %s220 = smul.addr %s219, 9
        %s221 = smul.addr %s217, 144
        %s222 = sadd.s32 %s220, %s221
        %s223 = smul.addr %s222, 4
        %s224 = scalar_lea.vmem %s1, %s223
        %s225 = smul.u32 8, %s19
      $region36: #{cnn_forward.4} parent=27 // pred_fallthru
        _
    $region28: #{cnn_forward.4} parent=5 // pred_fallthru
      _
    %p226 = scmp.le.s32.totalorder 1, %s11
    %p227 = scmp.lt.s32.totalorder %s11, 5
    %p228 = pnand %p226, %p227
    %p229 = pneg %p228
    // Predicated region
    $region37: #{cnn_forward.4} parent=5 // pred_check
      _
    $region38: #{cnn_forward.4} parent=5 // pred_check_branch
      %231 = sbr.rel (%p228) target = $region40
    $region39: #{cnn_forward.4} parent=5 // pred_region
      %s232 = ssub.s32 %s11, 1
      %s233 = smul.u32 8, %s21
      %p234 = scmp.lt.s32.totalorder %s20, 1
      %s235 = scalar_select %p234, %s20, 1
      %p236 = scmp.lt.s32.totalorder %s233, 15
      %s237 = scalar_select %p236, %s233, 15
      %s238 = smul.addr %s237, 9
      %s239 = smul.addr %s235, 144
      %s240 = sadd.s32 %s238, %s239
      %s241 = smul.addr %s240, 4
      %s242 = scalar_lea.vmem %s0, %s241
      %p243 = pneg %p51
      %p244 = pneg %p48
      %s245 = smul.u32 8, %s21
      %p246 = scmp.lt.s32.totalorder %s20, 1
      %s247 = scalar_select %p246, %s20, 1
      %p248 = scmp.lt.s32.totalorder %s245, 15
      %s249 = scalar_select %p248, %s245, 15
      %s250 = smul.addr %s249, 9
      %s251 = smul.addr %s247, 144
      %s252 = sadd.s32 %s250, %s251
      %s253 = smul.addr %s252, 4
      %s254 = scalar_lea.vmem %s1, %s253
      %p255 = pneg %p79
      %p256 = pneg %p76
      %p257 = pneg %p100
      %p258 = pneg %p97
      %p259 = pneg %p121
      %p260 = pneg %p118
      %p261 = pneg %p142
      %p262 = pneg %p139
      %p263 = pneg %p170
      %p264 = pneg %p167
      %s265 = smul.u32 8, %s21
      %p266 = scmp.lt.s32.totalorder %s20, 1
      %s267 = scalar_select %p266, %s20, 1
      %p268 = scmp.lt.s32.totalorder %s265, 15
      %s269 = scalar_select %p268, %s265, 15
      %s270 = smul.addr %s269, 2
      %s271 = smul.addr %s267, 32
      %s272 = sadd.s32 %s270, %s271
      %s273 = smul.addr %s272, 4
      %s274 = scalar_lea.vmem %s5, %s273
      %s275 = smul.u32 8, %s21
      %p276 = scmp.lt.s32.totalorder %s20, 1
      %s277 = scalar_select %p276, %s20, 1
      %p278 = scmp.lt.s32.totalorder %s275, 15
      %s279 = scalar_select %p278, %s275, 15
      %s280 = smul.addr %s279, 9
      %s281 = smul.addr %s277, 144
      %s282 = sadd.s32 %s280, %s281
      %s283 = smul.addr %s282, 4
      %s284 = scalar_lea.vmem %s0, %s283
      %s285 = smul.u32 8, %s21
      %s286 = smul.u32 8, %s21
      %p287 = scmp.lt.s32.totalorder %s20, 1
      %s288 = scalar_select %p287, %s20, 1
      %p289 = scmp.lt.s32.totalorder %s286, 15
      %s290 = scalar_select %p289, %s286, 15
      %s291 = smul.addr %s290, 9
      %s292 = smul.addr %s288, 144
      %s293 = sadd.s32 %s291, %s292
      %s294 = smul.addr %s293, 4
      %s295 = scalar_lea.vmem %s1, %s294
      %s296 = smul.u32 8, %s21
      %s297 = smul.u32 8, %s21
      %p298 = scmp.lt.s32.totalorder %s20, 1
      %s299 = scalar_select %p298, %s20, 1
      %p300 = scmp.lt.s32.totalorder %s297, 15
      %s301 = scalar_select %p300, %s297, 15
      %s302 = smul.addr %s301, 2
      %s303 = smul.addr %s299, 32
      %s304 = sadd.s32 %s302, %s303
      %s305 = smul.addr %s304, 4
      %s306 = scalar_lea.vmem %s5, %s305
      %s307 = smul.u32 8, %s21
      %v309 = vld [vmem:[%s284] sm:$0xff]
      %v310 = vld [vmem:[%s284 + $0x8] sm:$0xff]
      %v311 = vld [vmem:[%s284 + $0x10] sm:$0xff]
      %v312 = vld [vmem:[%s284 + $0x18] sm:$0xff]
      %v313 = vld [vmem:[%s284 + $0x20] sm:$0xf]
      %v314 = vld [vmem:[%s284 + $0x24] sm:$0xff]
      %v315 = vld [vmem:[%s284 + $0x2c] sm:$0xff]
      %v316 = vld [vmem:[%s284 + $0x34] sm:$0xff]
      %v317 = vld [vmem:[%s284 + $0x3c] sm:$0xff]
      %v318 = vld [vmem:[%s284 + $0x44] sm:$0xf]
      %v319 = vld [vmem:[%s284 + $0x48] sm:$0xff]
      %v320 = vld [vmem:[%s284 + $0x50] sm:$0xff]
      %v321 = vld [vmem:[%s284 + $0x58] sm:$0xff]
      %v322 = vld [vmem:[%s284 + $0x60] sm:$0xff]
      %v323 = vld [vmem:[%s284 + $0x68] sm:$0xf]
      %v324 = vld [vmem:[%s284 + $0x6c] sm:$0xff]
      %v325 = vld [vmem:[%s284 + $0x74] sm:$0xff]
      %v326 = vld [vmem:[%s284 + $0x7c] sm:$0xff]
      %v327 = vld [vmem:[%s284 + $0x84] sm:$0xff]
      %v328 = vld [vmem:[%s284 + $0x8c] sm:$0xf]
      %v329 = vld [vmem:[%s284 + $0x90] sm:$0xff]
      %v330 = vld [vmem:[%s284 + $0x98] sm:$0xff]
      %v331 = vld [vmem:[%s284 + $0xa0] sm:$0xff]
      %v332 = vld [vmem:[%s284 + $0xa8] sm:$0xff]
      %v333 = vld [vmem:[%s284 + $0xb0] sm:$0xf]
      %v334 = vld [vmem:[%s284 + $0xb4] sm:$0xff]
      %v335 = vld [vmem:[%s284 + $0xbc] sm:$0xff]
      %v336 = vld [vmem:[%s284 + $0xc4] sm:$0xff]
      %v337 = vld [vmem:[%s284 + $0xcc] sm:$0xff]
      %v338 = vld [vmem:[%s284 + $0xd4] sm:$0xf]
      %v339 = vld [vmem:[%s284 + $0xd8] sm:$0xff]
      %v340 = vld [vmem:[%s284 + $0xe0] sm:$0xff]
      %v341 = vld [vmem:[%s284 + $0xe8] sm:$0xff]
      %v342 = vld [vmem:[%s284 + $0xf0] sm:$0xff]
      %v343 = vld [vmem:[%s284 + $0xf8] sm:$0xf]
      %v344 = vld [vmem:[%s284 + $0xfc] sm:$0xff]
      %v345 = vld [vmem:[%s284 + $0x104] sm:$0xff]
      %v346 = vld [vmem:[%s284 + $0x10c] sm:$0xff]
      %v347 = vld [vmem:[%s284 + $0x114] sm:$0xff]
      %v348 = vld [vmem:[%s284 + $0x11c] sm:$0xf]
      %v349 = vld [vmem:[%s295] sm:$0xff]
      %v350 = vld [vmem:[%s295 + $0x8] sm:$0xff]
      %v351 = vld [vmem:[%s295 + $0x10] sm:$0xff]
      %v352 = vld [vmem:[%s295 + $0x18] sm:$0xff]
      %v353 = vld [vmem:[%s295 + $0x20] sm:$0xf]
      %v354 = vld [vmem:[%s295 + $0x24] sm:$0xff]
      %v355 = vld [vmem:[%s295 + $0x2c] sm:$0xff]
      %v356 = vld [vmem:[%s295 + $0x34] sm:$0xff]
      %v357 = vld [vmem:[%s295 + $0x3c] sm:$0xff]
      %v358 = vld [vmem:[%s295 + $0x44] sm:$0xf]
      %v359 = vld [vmem:[%s295 + $0x48] sm:$0xff]
      %v360 = vld [vmem:[%s295 + $0x50] sm:$0xff]
      %v361 = vld [vmem:[%s295 + $0x58] sm:$0xff]
      %v362 = vld [vmem:[%s295 + $0x60] sm:$0xff]
      %v363 = vld [vmem:[%s295 + $0x68] sm:$0xf]
      %v364 = vld [vmem:[%s295 + $0x6c] sm:$0xff]
      %v365 = vld [vmem:[%s295 + $0x74] sm:$0xff]
      %v366 = vld [vmem:[%s295 + $0x7c] sm:$0xff]
      %v367 = vld [vmem:[%s295 + $0x84] sm:$0xff]
      %v368 = vld [vmem:[%s295 + $0x8c] sm:$0xf]
      %v369 = vld [vmem:[%s295 + $0x90] sm:$0xff]
      %v370 = vld [vmem:[%s295 + $0x98] sm:$0xff]
      %v371 = vld [vmem:[%s295 + $0xa0] sm:$0xff]
      %v372 = vld [vmem:[%s295 + $0xa8] sm:$0xff]
      %v373 = vld [vmem:[%s295 + $0xb0] sm:$0xf]
      %v374 = vld [vmem:[%s295 + $0xb4] sm:$0xff]
      %v375 = vld [vmem:[%s295 + $0xbc] sm:$0xff]
      %v376 = vld [vmem:[%s295 + $0xc4] sm:$0xff]
      %v377 = vld [vmem:[%s295 + $0xcc] sm:$0xff]
      %v378 = vld [vmem:[%s295 + $0xd4] sm:$0xf]
      %v379 = vld [vmem:[%s295 + $0xd8] sm:$0xff]
      %v380 = vld [vmem:[%s295 + $0xe0] sm:$0xff]
      %v381 = vld [vmem:[%s295 + $0xe8] sm:$0xff]
      %v382 = vld [vmem:[%s295 + $0xf0] sm:$0xff]
      %v383 = vld [vmem:[%s295 + $0xf8] sm:$0xf]
      %v384 = vld [vmem:[%s295 + $0xfc] sm:$0xff]
      %v385 = vld [vmem:[%s295 + $0x104] sm:$0xff]
      %v386 = vld [vmem:[%s295 + $0x10c] sm:$0xff]
      %v387 = vld [vmem:[%s295 + $0x114] sm:$0xff]
      %v388 = vld [vmem:[%s295 + $0x11c] sm:$0xf]
      %v389 = vld [vmem:[%s2] sm:$0xff]
      %v390 = vld [vmem:[%s2 + $0x8] sm:$0xff]
      %v391 = vld [vmem:[%s2 + $0x10] sm:$0xff]
      %v392 = vld [vmem:[%s2 + $0x18] sm:$0xff]
      %v393 = vld [vmem:[%s2 + $0x20] sm:$0xff]
      %v394 = vld [vmem:[%s2 + $0x28] sm:$0xff]
      %v395 = vld [vmem:[%s2 + $0x30] sm:$0xff]
      %v396 = vld [vmem:[%s2 + $0x38] sm:$0xff]
      %v397 = vld [vmem:[%s2 + $0x40] sm:$0xff]
      %v398 = vld [vmem:[%s2 + $0x48] sm:$0xff]
      %v399 = vld [vmem:[%s2 + $0x50] sm:$0xff]
      %v400 = vld [vmem:[%s2 + $0x58] sm:$0xff]
      %v401 = vld [vmem:[%s2 + $0x60] sm:$0xff]
      %v402 = vld [vmem:[%s2 + $0x68] sm:$0xff]
      %v403 = vld [vmem:[%s2 + $0x70] sm:$0xff]
      %v404 = vld [vmem:[%s2 + $0x78] sm:$0xff]
      %v405 = vld [vmem:[%s2 + $0x80] sm:$0xff]
      %v406 = vld [vmem:[%s2 + $0x88] sm:$0xff]
      %v407 = vld [vmem:[%s2 + $0x90] sm:$0xff]
      %v408 = vld [vmem:[%s2 + $0x98] sm:$0xff]
      %v409 = vld [vmem:[%s2 + $0xa0] sm:$0xff]
      %v410 = vld [vmem:[%s2 + $0xa8] sm:$0xff]
      %v411 = vld [vmem:[%s2 + $0xb0] sm:$0xff]
      %v412 = vld [vmem:[%s2 + $0xb8] sm:$0xff]
      %v413 = vld [vmem:[%s2 + $0xc0] sm:$0xff]
      %v414 = vld [vmem:[%s2 + $0xc8] sm:$0xff]
      %v415 = vld [vmem:[%s2 + $0xd0] sm:$0xff]
      %v416 = vld [vmem:[%s2 + $0xd8] sm:$0xff]
      %v417 = vld [vmem:[%s2 + $0xe0] sm:$0xff]
      %v418 = vld [vmem:[%s2 + $0xe8] sm:$0xff]
      %v419 = vld [vmem:[%s2 + $0xf0] sm:$0xff]
      %v420 = vld [vmem:[%s2 + $0xf8] sm:$0xff]
      %v421 = vld [vmem:[%s2 + $0x100] sm:$0xff]
      %v422 = vld [vmem:[%s2 + $0x108] sm:$0xff]
      %v423 = vld [vmem:[%s2 + $0x110] sm:$0xff]
      %v424 = vld [vmem:[%s2 + $0x118] sm:$0xff]
      %v425 = vld [vmem:[%s2 + $0x120] sm:$0xff]
      %v426 = vld [vmem:[%s2 + $0x128] sm:$0xff]
      %v427 = vld [vmem:[%s2 + $0x130] sm:$0xff]
      %v428 = vld [vmem:[%s2 + $0x138] sm:$0xff]
      %v429 = vld [vmem:[%s2 + $0x140] sm:$0xff]
      %v430 = vld [vmem:[%s2 + $0x148] sm:$0xff]
      %v431 = vld [vmem:[%s2 + $0x150] sm:$0xff]
      %v432 = vld [vmem:[%s2 + $0x158] sm:$0xff]
      %v433 = vld [vmem:[%s2 + $0x160] sm:$0xff]
      %v434 = vld [vmem:[%s2 + $0x168] sm:$0xff]
      %v435 = vld [vmem:[%s2 + $0x170] sm:$0xff]
      %v436 = vld [vmem:[%s2 + $0x178] sm:$0xff]
      %v437 = vld [vmem:[%s2 + $0x180] sm:$0xff]
      %v438 = vld [vmem:[%s2 + $0x188] sm:$0xff]
      %v439 = vld [vmem:[%s2 + $0x190] sm:$0xff]
      %v440 = vld [vmem:[%s2 + $0x198] sm:$0xff]
      %v441 = vld [vmem:[%s2 + $0x1a0] sm:$0xff]
      %v442 = vld [vmem:[%s2 + $0x1a8] sm:$0xff]
      %v443 = vld [vmem:[%s2 + $0x1b0] sm:$0xff]
      %v444 = vld [vmem:[%s2 + $0x1b8] sm:$0xff]
      %v445 = vld [vmem:[%s2 + $0x1c0] sm:$0xff]
      %v446 = vld [vmem:[%s2 + $0x1c8] sm:$0xff]
      %v447 = vld [vmem:[%s2 + $0x1d0] sm:$0xff]
      %v448 = vld [vmem:[%s2 + $0x1d8] sm:$0xff]
      %v449 = vld [vmem:[%s2 + $0x1e0] sm:$0xff]
      %v450 = vld [vmem:[%s2 + $0x1e8] sm:$0xff]
      %v451 = vld [vmem:[%s2 + $0x1f0] sm:$0xff]
      %v452 = vld [vmem:[%s2 + $0x1f8] sm:$0xff]
      %v453 = vld [vmem:[%s2 + $0x200] sm:$0xff]
      %v454 = vld [vmem:[%s2 + $0x208] sm:$0xff]
      %v455 = vld [vmem:[%s2 + $0x210] sm:$0xff]
      %v456 = vld [vmem:[%s2 + $0x218] sm:$0xff]
      %v457 = vld [vmem:[%s2 + $0x220] sm:$0xff]
      %v458 = vld [vmem:[%s2 + $0x228] sm:$0xff]
      %v459 = vld [vmem:[%s2 + $0x230] sm:$0xff]
      %v460 = vld [vmem:[%s2 + $0x238] sm:$0xff]
      %v461 = vld [vmem:[%s2 + $0x240] sm:$0xff]
      %v462 = vld [vmem:[%s2 + $0x248] sm:$0xff]
      %v463 = vld [vmem:[%s2 + $0x250] sm:$0xff]
      %v464 = vld [vmem:[%s2 + $0x258] sm:$0xff]
      %v465 = vld [vmem:[%s2 + $0x260] sm:$0xff]
      %v466 = vld [vmem:[%s2 + $0x268] sm:$0xff]
      %v467 = vld [vmem:[%s2 + $0x270] sm:$0xff]
      %v468 = vld [vmem:[%s2 + $0x278] sm:$0xff]
      %v469 = vld [vmem:[%s2 + $0x280] sm:$0xff]
      %v470 = vld [vmem:[%s2 + $0x288] sm:$0xff]
      %v471 = vld [vmem:[%s2 + $0x290] sm:$0xff]
      %v472 = vld [vmem:[%s2 + $0x298] sm:$0xff]
      %v473 = vld [vmem:[%s2 + $0x2a0] sm:$0xff]
      %v474 = vld [vmem:[%s2 + $0x2a8] sm:$0xff]
      %v475 = vld [vmem:[%s2 + $0x2b0] sm:$0xff]
      %v476 = vld [vmem:[%s2 + $0x2b8] sm:$0xff]
      %v477 = vld [vmem:[%s2 + $0x2c0] sm:$0xff]
      %v478 = vld [vmem:[%s2 + $0x2c8] sm:$0xff]
      %v479 = vld [vmem:[%s2 + $0x2d0] sm:$0xff]
      %v480 = vld [vmem:[%s2 + $0x2d8] sm:$0xff]
      %v481 = vld [vmem:[%s2 + $0x2e0] sm:$0xff]
      %v482 = vld [vmem:[%s2 + $0x2e8] sm:$0xff]
      %v483 = vld [vmem:[%s2 + $0x2f0] sm:$0xff]
      %v484 = vld [vmem:[%s2 + $0x2f8] sm:$0xff]
      %v485 = vld [vmem:[%s2 + $0x300] sm:$0xff]
      %v486 = vld [vmem:[%s2 + $0x308] sm:$0xff]
      %v487 = vld [vmem:[%s2 + $0x310] sm:$0xff]
      %v488 = vld [vmem:[%s2 + $0x318] sm:$0xff]
      %v489 = vld [vmem:[%s2 + $0x320] sm:$0xff]
      %v490 = vld [vmem:[%s2 + $0x328] sm:$0xff]
      %v491 = vld [vmem:[%s2 + $0x330] sm:$0xff]
      %v492 = vld [vmem:[%s2 + $0x338] sm:$0xff]
      %v493 = vld [vmem:[%s2 + $0x340] sm:$0xff]
      %v494 = vld [vmem:[%s2 + $0x348] sm:$0xff]
      %v495 = vld [vmem:[%s2 + $0x350] sm:$0xff]
      %v496 = vld [vmem:[%s2 + $0x358] sm:$0xff]
      %v497 = vld [vmem:[%s2 + $0x360] sm:$0xff]
      %v498 = vld [vmem:[%s2 + $0x368] sm:$0xff]
      %v499 = vld [vmem:[%s2 + $0x370] sm:$0xff]
      %v500 = vld [vmem:[%s2 + $0x378] sm:$0xff]
      %v501 = vld [vmem:[%s2 + $0x380] sm:$0xff]
      %v502 = vld [vmem:[%s2 + $0x388] sm:$0xff]
      %v503 = vld [vmem:[%s2 + $0x390] sm:$0xff]
      %v504 = vld [vmem:[%s2 + $0x398] sm:$0xff]
      %v505 = vld [vmem:[%s2 + $0x3a0] sm:$0xff]
      %v506 = vld [vmem:[%s2 + $0x3a8] sm:$0xff]
      %v507 = vld [vmem:[%s2 + $0x3b0] sm:$0xff]
      %v508 = vld [vmem:[%s2 + $0x3b8] sm:$0xff]
      %v509 = vld [vmem:[%s2 + $0x3c0] sm:$0xff]
      %v510 = vld [vmem:[%s2 + $0x3c8] sm:$0xff]
      %v511 = vld [vmem:[%s2 + $0x3d0] sm:$0xff]
      %v512 = vld [vmem:[%s2 + $0x3d8] sm:$0xff]
      %v513 = vld [vmem:[%s2 + $0x3e0] sm:$0xff]
      %v514 = vld [vmem:[%s2 + $0x3e8] sm:$0xff]
      %v515 = vld [vmem:[%s2 + $0x3f0] sm:$0xff]
      %v516 = vld [vmem:[%s2 + $0x3f8] sm:$0xff]
      %v517 = vld [vmem:[%s2 + $0x400] sm:$0xff]
      %v518 = vld [vmem:[%s2 + $0x408] sm:$0xff]
      %v519 = vld [vmem:[%s2 + $0x410] sm:$0xff]
      %v520 = vld [vmem:[%s2 + $0x418] sm:$0xff]
      %v521 = vld [vmem:[%s2 + $0x420] sm:$0xff]
      %v522 = vld [vmem:[%s2 + $0x428] sm:$0xff]
      %v523 = vld [vmem:[%s2 + $0x430] sm:$0xff]
      %v524 = vld [vmem:[%s2 + $0x438] sm:$0xff]
      %v525 = vld [vmem:[%s2 + $0x440] sm:$0xff]
      %v526 = vld [vmem:[%s2 + $0x448] sm:$0xff]
      %v527 = vld [vmem:[%s2 + $0x450] sm:$0xff]
      %v528 = vld [vmem:[%s2 + $0x458] sm:$0xff]
      %v529 = vld [vmem:[%s3] sm:$0xff]
      %v530 = vld [vmem:[%s3 + $0x8] sm:$0xff]
      %v531 = vld [vmem:[%s3 + $0x10] sm:$0xff]
      %v532 = vld [vmem:[%s3 + $0x18] sm:$0xff]
      %v533 = vld [vmem:[%s3 + $0x20] sm:$0xff]
      %v534 = vld [vmem:[%s3 + $0x28] sm:$0xff]
      %v535 = vld [vmem:[%s3 + $0x30] sm:$0xff]
      %v536 = vld [vmem:[%s3 + $0x38] sm:$0xff]
      %v537 = vld [vmem:[%s3 + $0x40] sm:$0xff]
      %v538 = vld [vmem:[%s3 + $0x48] sm:$0xff]
      %v539 = vld [vmem:[%s3 + $0x50] sm:$0xff]
      %v540 = vld [vmem:[%s3 + $0x58] sm:$0xff]
      %v541 = vld [vmem:[%s3 + $0x60] sm:$0xff]
      %v542 = vld [vmem:[%s3 + $0x68] sm:$0xff]
      %v543 = vld [vmem:[%s3 + $0x70] sm:$0xff]
      %v544 = vld [vmem:[%s3 + $0x78] sm:$0xff]
      %v545 = vld [vmem:[%s3 + $0x80] sm:$0xff]
      %v546 = vld [vmem:[%s3 + $0x88] sm:$0xff]
      %v547 = vld [vmem:[%s3 + $0x90] sm:$0xff]
      %v548 = vld [vmem:[%s3 + $0x98] sm:$0xff]
      %v549 = vld [vmem:[%s3 + $0xa0] sm:$0xff]
      %v550 = vld [vmem:[%s3 + $0xa8] sm:$0xff]
      %v551 = vld [vmem:[%s3 + $0xb0] sm:$0xff]
      %v552 = vld [vmem:[%s3 + $0xb8] sm:$0xff]
      %v553 = vld [vmem:[%s3 + $0xc0] sm:$0xff]
      %v554 = vld [vmem:[%s3 + $0xc8] sm:$0xff]
      %v555 = vld [vmem:[%s3 + $0xd0] sm:$0xff]
      %v556 = vld [vmem:[%s3 + $0xd8] sm:$0xff]
      %v557 = vld [vmem:[%s3 + $0xe0] sm:$0xff]
      %v558 = vld [vmem:[%s3 + $0xe8] sm:$0xff]
      %v559 = vld [vmem:[%s3 + $0xf0] sm:$0xff]
      %v560 = vld [vmem:[%s3 + $0xf8] sm:$0xff]
      %v561 = vld [vmem:[%s3 + $0x100] sm:$0xff]
      %v562 = vld [vmem:[%s3 + $0x108] sm:$0xff]
      %v563 = vld [vmem:[%s3 + $0x110] sm:$0xff]
      %v564 = vld [vmem:[%s3 + $0x118] sm:$0xff]
      %v565 = vld [vmem:[%s3 + $0x120] sm:$0xff]
      %v566 = vld [vmem:[%s3 + $0x128] sm:$0xff]
      %v567 = vld [vmem:[%s3 + $0x130] sm:$0xff]
      %v568 = vld [vmem:[%s3 + $0x138] sm:$0xff]
      %v569 = vld [vmem:[%s3 + $0x140] sm:$0xff]
      %v570 = vld [vmem:[%s3 + $0x148] sm:$0xff]
      %v571 = vld [vmem:[%s3 + $0x150] sm:$0xff]
      %v572 = vld [vmem:[%s3 + $0x158] sm:$0xff]
      %v573 = vld [vmem:[%s3 + $0x160] sm:$0xff]
      %v574 = vld [vmem:[%s3 + $0x168] sm:$0xff]
      %v575 = vld [vmem:[%s3 + $0x170] sm:$0xff]
      %v576 = vld [vmem:[%s3 + $0x178] sm:$0xff]
      %v577 = vld [vmem:[%s3 + $0x180] sm:$0xff]
      %v578 = vld [vmem:[%s3 + $0x188] sm:$0xff]
      %v579 = vld [vmem:[%s3 + $0x190] sm:$0xff]
      %v580 = vld [vmem:[%s3 + $0x198] sm:$0xff]
      %v581 = vld [vmem:[%s3 + $0x1a0] sm:$0xff]
      %v582 = vld [vmem:[%s3 + $0x1a8] sm:$0xff]
      %v583 = vld [vmem:[%s3 + $0x1b0] sm:$0xff]
      %v584 = vld [vmem:[%s3 + $0x1b8] sm:$0xff]
      %v585 = vld [vmem:[%s3 + $0x1c0] sm:$0xff]
      %v586 = vld [vmem:[%s3 + $0x1c8] sm:$0xff]
      %v587 = vld [vmem:[%s3 + $0x1d0] sm:$0xff]
      %v588 = vld [vmem:[%s3 + $0x1d8] sm:$0xff]
      %v589 = vld [vmem:[%s3 + $0x1e0] sm:$0xff]
      %v590 = vld [vmem:[%s3 + $0x1e8] sm:$0xff]
      %v591 = vld [vmem:[%s3 + $0x1f0] sm:$0xff]
      %v592 = vld [vmem:[%s3 + $0x1f8] sm:$0xff]
      %v593 = vld [vmem:[%s3 + $0x200] sm:$0xff]
      %v594 = vld [vmem:[%s3 + $0x208] sm:$0xff]
      %v595 = vld [vmem:[%s3 + $0x210] sm:$0xff]
      %v596 = vld [vmem:[%s3 + $0x218] sm:$0xff]
      %v597 = vld [vmem:[%s3 + $0x220] sm:$0xff]
      %v598 = vld [vmem:[%s3 + $0x228] sm:$0xff]
      %v599 = vld [vmem:[%s3 + $0x230] sm:$0xff]
      %v600 = vld [vmem:[%s3 + $0x238] sm:$0xff]
      %v601 = vld [vmem:[%s3 + $0x240] sm:$0xff]
      %v602 = vld [vmem:[%s3 + $0x248] sm:$0xff]
      %v603 = vld [vmem:[%s3 + $0x250] sm:$0xff]
      %v604 = vld [vmem:[%s3 + $0x258] sm:$0xff]
      %v605 = vld [vmem:[%s3 + $0x260] sm:$0xff]
      %v606 = vld [vmem:[%s3 + $0x268] sm:$0xff]
      %v607 = vld [vmem:[%s3 + $0x270] sm:$0xff]
      %v608 = vld [vmem:[%s3 + $0x278] sm:$0xff]
      %v609 = vld [vmem:[%s3 + $0x280] sm:$0xff]
      %v610 = vld [vmem:[%s3 + $0x288] sm:$0xff]
      %v611 = vld [vmem:[%s3 + $0x290] sm:$0xff]
      %v612 = vld [vmem:[%s3 + $0x298] sm:$0xff]
      %v613 = vld [vmem:[%s3 + $0x2a0] sm:$0xff]
      %v614 = vld [vmem:[%s3 + $0x2a8] sm:$0xff]
      %v615 = vld [vmem:[%s3 + $0x2b0] sm:$0xff]
      %v616 = vld [vmem:[%s3 + $0x2b8] sm:$0xff]
      %v617 = vld [vmem:[%s3 + $0x2c0] sm:$0xff]
      %v618 = vld [vmem:[%s3 + $0x2c8] sm:$0xff]
      %v619 = vld [vmem:[%s3 + $0x2d0] sm:$0xff]
      %v620 = vld [vmem:[%s3 + $0x2d8] sm:$0xff]
      %v621 = vld [vmem:[%s3 + $0x2e0] sm:$0xff]
      %v622 = vld [vmem:[%s3 + $0x2e8] sm:$0xff]
      %v623 = vld [vmem:[%s3 + $0x2f0] sm:$0xff]
      %v624 = vld [vmem:[%s3 + $0x2f8] sm:$0xff]
      %v625 = vld [vmem:[%s3 + $0x300] sm:$0xff]
      %v626 = vld [vmem:[%s3 + $0x308] sm:$0xff]
      %v627 = vld [vmem:[%s3 + $0x310] sm:$0xff]
      %v628 = vld [vmem:[%s3 + $0x318] sm:$0xff]
      %v629 = vld [vmem:[%s3 + $0x320] sm:$0xff]
      %v630 = vld [vmem:[%s3 + $0x328] sm:$0xff]
      %v631 = vld [vmem:[%s3 + $0x330] sm:$0xff]
      %v632 = vld [vmem:[%s3 + $0x338] sm:$0xff]
      %v633 = vld [vmem:[%s3 + $0x340] sm:$0xff]
      %v634 = vld [vmem:[%s3 + $0x348] sm:$0xff]
      %v635 = vld [vmem:[%s3 + $0x350] sm:$0xff]
      %v636 = vld [vmem:[%s3 + $0x358] sm:$0xff]
      %v637 = vld [vmem:[%s3 + $0x360] sm:$0xff]
      %v638 = vld [vmem:[%s3 + $0x368] sm:$0xff]
      %v639 = vld [vmem:[%s3 + $0x370] sm:$0xff]
      %v640 = vld [vmem:[%s3 + $0x378] sm:$0xff]
      %v641 = vld [vmem:[%s3 + $0x380] sm:$0xff]
      %v642 = vld [vmem:[%s3 + $0x388] sm:$0xff]
      %v643 = vld [vmem:[%s3 + $0x390] sm:$0xff]
      %v644 = vld [vmem:[%s3 + $0x398] sm:$0xff]
      %v645 = vld [vmem:[%s3 + $0x3a0] sm:$0xff]
      %v646 = vld [vmem:[%s3 + $0x3a8] sm:$0xff]
      %v647 = vld [vmem:[%s3 + $0x3b0] sm:$0xff]
      %v648 = vld [vmem:[%s3 + $0x3b8] sm:$0xff]
      %v649 = vld [vmem:[%s3 + $0x3c0] sm:$0xff]
      %v650 = vld [vmem:[%s3 + $0x3c8] sm:$0xff]
      %v651 = vld [vmem:[%s3 + $0x3d0] sm:$0xff]
      %v652 = vld [vmem:[%s3 + $0x3d8] sm:$0xff]
      %v653 = vld [vmem:[%s3 + $0x3e0] sm:$0xff]
      %v654 = vld [vmem:[%s3 + $0x3e8] sm:$0xff]
      %v655 = vld [vmem:[%s3 + $0x3f0] sm:$0xff]
      %v656 = vld [vmem:[%s3 + $0x3f8] sm:$0xff]
      %v657 = vld [vmem:[%s3 + $0x400] sm:$0xff]
      %v658 = vld [vmem:[%s3 + $0x408] sm:$0xff]
      %v659 = vld [vmem:[%s3 + $0x410] sm:$0xff]
      %v660 = vld [vmem:[%s3 + $0x418] sm:$0xff]
      %v661 = vld [vmem:[%s3 + $0x420] sm:$0xff]
      %v662 = vld [vmem:[%s3 + $0x428] sm:$0xff]
      %v663 = vld [vmem:[%s3 + $0x430] sm:$0xff]
      %v664 = vld [vmem:[%s3 + $0x438] sm:$0xff]
      %v665 = vld [vmem:[%s3 + $0x440] sm:$0xff]
      %v666 = vld [vmem:[%s3 + $0x448] sm:$0xff]
      %v667 = vld [vmem:[%s3 + $0x450] sm:$0xff]
      %v668 = vld [vmem:[%s3 + $0x458] sm:$0xff]
      %v709 = vunpack.c.l.b16 %v309
      %v710 = vunpack.c.h.b16 %v309
      %v711 = vunpack.c.l.b16 %v310
      %v712 = vunpack.c.h.b16 %v310
      %v713 = vunpack.c.l.b16 %v311
      %v714 = vunpack.c.h.b16 %v311
      %v715 = vunpack.c.l.b16 %v312
      %v716 = vunpack.c.h.b16 %v312
      %v717 = vunpack.c.l.b16 %v313
      %v718 = vunpack.c.l.b16 %v314
      %v719 = vunpack.c.h.b16 %v314
      %v720 = vunpack.c.l.b16 %v315
      %v721 = vunpack.c.h.b16 %v315
      %v722 = vunpack.c.l.b16 %v316
      %v723 = vunpack.c.h.b16 %v316
      %v724 = vunpack.c.l.b16 %v317
      %v725 = vunpack.c.h.b16 %v317
      %v726 = vunpack.c.l.b16 %v318
      %v727 = vunpack.c.l.b16 %v319
      %v728 = vunpack.c.h.b16 %v319
      %v729 = vunpack.c.l.b16 %v320
      %v730 = vunpack.c.h.b16 %v320
      %v731 = vunpack.c.l.b16 %v321
      %v732 = vunpack.c.h.b16 %v321
      %v733 = vunpack.c.l.b16 %v322
      %v734 = vunpack.c.h.b16 %v322
      %v735 = vunpack.c.l.b16 %v323
      %v736 = vunpack.c.l.b16 %v324
      %v737 = vunpack.c.h.b16 %v324
      %v738 = vunpack.c.l.b16 %v325
      %v739 = vunpack.c.h.b16 %v325
      %v740 = vunpack.c.l.b16 %v326
      %v741 = vunpack.c.h.b16 %v326
      %v742 = vunpack.c.l.b16 %v327
      %v743 = vunpack.c.h.b16 %v327
      %v744 = vunpack.c.l.b16 %v328
      %v745 = vunpack.c.l.b16 %v329
      %v746 = vunpack.c.h.b16 %v329
      %v747 = vunpack.c.l.b16 %v330
      %v748 = vunpack.c.h.b16 %v330
      %v749 = vunpack.c.l.b16 %v331
      %v750 = vunpack.c.h.b16 %v331
      %v751 = vunpack.c.l.b16 %v332
      %v752 = vunpack.c.h.b16 %v332
      %v753 = vunpack.c.l.b16 %v333
      %v754 = vunpack.c.l.b16 %v334
      %v755 = vunpack.c.h.b16 %v334
      %v756 = vunpack.c.l.b16 %v335
      %v757 = vunpack.c.h.b16 %v335
      %v758 = vunpack.c.l.b16 %v336
      %v759 = vunpack.c.h.b16 %v336
      %v760 = vunpack.c.l.b16 %v337
      %v761 = vunpack.c.h.b16 %v337
      %v762 = vunpack.c.l.b16 %v338
      %v763 = vunpack.c.l.b16 %v339
      %v764 = vunpack.c.h.b16 %v339
      %v765 = vunpack.c.l.b16 %v340
      %v766 = vunpack.c.h.b16 %v340
      %v767 = vunpack.c.l.b16 %v341
      %v768 = vunpack.c.h.b16 %v341
      %v769 = vunpack.c.l.b16 %v342
      %v770 = vunpack.c.h.b16 %v342
      %v771 = vunpack.c.l.b16 %v343
      %v772 = vunpack.c.l.b16 %v344
      %v773 = vunpack.c.h.b16 %v344
      %v774 = vunpack.c.l.b16 %v345
      %v775 = vunpack.c.h.b16 %v345
      %v776 = vunpack.c.l.b16 %v346
      %v777 = vunpack.c.h.b16 %v346
      %v778 = vunpack.c.l.b16 %v347
      %v779 = vunpack.c.h.b16 %v347
      %v780 = vunpack.c.l.b16 %v348
      %v781 = vpack.c.b16 %v718, %v709
      %v782 = vpack.c.b16 %v719, %v710
      %v783 = vpack.c.b16 %v720, %v711
      %v784 = vpack.c.b16 %v721, %v712
      %v785 = vpack.c.b16 %v722, %v713
      %v786 = vpack.c.b16 %v723, %v714
      %v787 = vpack.c.b16 %v724, %v715
      %v788 = vpack.c.b16 %v725, %v716
      %v789 = vpack.c.b16 %v726, %v717
      %v790 = vpack.c.b16 %v736, %v727
      %v791 = vpack.c.b16 %v737, %v728
      %v792 = vpack.c.b16 %v738, %v729
      %v793 = vpack.c.b16 %v739, %v730
      %v794 = vpack.c.b16 %v740, %v731
      %v795 = vpack.c.b16 %v741, %v732
      %v796 = vpack.c.b16 %v742, %v733
      %v797 = vpack.c.b16 %v743, %v734
      %v798 = vpack.c.b16 %v744, %v735
      %v799 = vpack.c.b16 %v754, %v745
      %v800 = vpack.c.b16 %v755, %v746
      %v801 = vpack.c.b16 %v756, %v747
      %v802 = vpack.c.b16 %v757, %v748
      %v803 = vpack.c.b16 %v758, %v749
      %v804 = vpack.c.b16 %v759, %v750
      %v805 = vpack.c.b16 %v760, %v751
      %v806 = vpack.c.b16 %v761, %v752
      %v807 = vpack.c.b16 %v762, %v753
      %v808 = vpack.c.b16 %v772, %v763
      %v809 = vpack.c.b16 %v773, %v764
      %v810 = vpack.c.b16 %v774, %v765
      %v811 = vpack.c.b16 %v775, %v766
      %v812 = vpack.c.b16 %v776, %v767
      %v813 = vpack.c.b16 %v777, %v768
      %v814 = vpack.c.b16 %v778, %v769
      %v815 = vpack.c.b16 %v779, %v770
      %v816 = vpack.c.b16 %v780, %v771
      %v989 = vunpack.c.l.b16 %v389
      %v990 = vunpack.c.h.b16 %v389
      %v991 = vunpack.c.l.b16 %v390
      %v992 = vunpack.c.h.b16 %v390
      %v993 = vunpack.c.l.b16 %v391
      %v994 = vunpack.c.h.b16 %v391
      %v995 = vunpack.c.l.b16 %v392
      %v996 = vunpack.c.h.b16 %v392
      %v997 = vunpack.c.l.b16 %v393
      %v998 = vunpack.c.h.b16 %v393
      %v999 = vunpack.c.l.b16 %v394
      %v1000 = vunpack.c.h.b16 %v394
      %v1001 = vunpack.c.l.b16 %v395
      %v1002 = vunpack.c.h.b16 %v395
      %v1003 = vunpack.c.l.b16 %v396
      %v1004 = vunpack.c.h.b16 %v396
      %v1005 = vunpack.c.l.b16 %v397
      %v1006 = vunpack.c.h.b16 %v397
      %v1007 = vunpack.c.l.b16 %v398
      %v1008 = vunpack.c.h.b16 %v398
      %v1009 = vunpack.c.l.b16 %v399
      %v1010 = vunpack.c.h.b16 %v399
      %v1011 = vunpack.c.l.b16 %v400
      %v1012 = vunpack.c.h.b16 %v400
      %v1013 = vunpack.c.l.b16 %v401
      %v1014 = vunpack.c.h.b16 %v401
      %v1015 = vunpack.c.l.b16 %v402
      %v1016 = vunpack.c.h.b16 %v402
      %v1017 = vunpack.c.l.b16 %v403
      %v1018 = vunpack.c.h.b16 %v403
      %v1019 = vunpack.c.l.b16 %v404
      %v1020 = vunpack.c.h.b16 %v404
      %v1021 = vunpack.c.l.b16 %v405
      %v1022 = vunpack.c.h.b16 %v405
      %v1023 = vunpack.c.l.b16 %v406
      %v1024 = vunpack.c.h.b16 %v406
      %v1025 = vunpack.c.l.b16 %v407
      %v1026 = vunpack.c.h.b16 %v407
      %v1027 = vunpack.c.l.b16 %v408
      %v1028 = vunpack.c.h.b16 %v408
      %v1029 = vunpack.c.l.b16 %v409
      %v1030 = vunpack.c.h.b16 %v409
      %v1031 = vunpack.c.l.b16 %v410
      %v1032 = vunpack.c.h.b16 %v410
      %v1033 = vunpack.c.l.b16 %v411
      %v1034 = vunpack.c.h.b16 %v411
      %v1035 = vunpack.c.l.b16 %v412
      %v1036 = vunpack.c.h.b16 %v412
      %v1037 = vunpack.c.l.b16 %v413
      %v1038 = vunpack.c.h.b16 %v413
      %v1039 = vunpack.c.l.b16 %v414
      %v1040 = vunpack.c.h.b16 %v414
      %v1041 = vunpack.c.l.b16 %v415
      %v1042 = vunpack.c.h.b16 %v415
      %v1043 = vunpack.c.l.b16 %v416
      %v1044 = vunpack.c.h.b16 %v416
      %v1045 = vunpack.c.l.b16 %v417
      %v1046 = vunpack.c.h.b16 %v417
      %v1047 = vunpack.c.l.b16 %v418
      %v1048 = vunpack.c.h.b16 %v418
      %v1049 = vunpack.c.l.b16 %v419
      %v1050 = vunpack.c.h.b16 %v419
      %v1051 = vunpack.c.l.b16 %v420
      %v1052 = vunpack.c.h.b16 %v420
      %v1053 = vunpack.c.l.b16 %v421
      %v1054 = vunpack.c.h.b16 %v421
      %v1055 = vunpack.c.l.b16 %v422
      %v1056 = vunpack.c.h.b16 %v422
      %v1057 = vunpack.c.l.b16 %v423
      %v1058 = vunpack.c.h.b16 %v423
      %v1059 = vunpack.c.l.b16 %v424
      %v1060 = vunpack.c.h.b16 %v424
      %v1061 = vunpack.c.l.b16 %v425
      %v1062 = vunpack.c.h.b16 %v425
      %v1063 = vunpack.c.l.b16 %v426
      %v1064 = vunpack.c.h.b16 %v426
      %v1065 = vunpack.c.l.b16 %v427
      %v1066 = vunpack.c.h.b16 %v427
      %v1067 = vunpack.c.l.b16 %v428
      %v1068 = vunpack.c.h.b16 %v428
      %v1069 = vunpack.c.l.b16 %v429
      %v1070 = vunpack.c.h.b16 %v429
      %v1071 = vunpack.c.l.b16 %v430
      %v1072 = vunpack.c.h.b16 %v430
      %v1073 = vunpack.c.l.b16 %v431
      %v1074 = vunpack.c.h.b16 %v431
      %v1075 = vunpack.c.l.b16 %v432
      %v1076 = vunpack.c.h.b16 %v432
      %v1077 = vunpack.c.l.b16 %v433
      %v1078 = vunpack.c.h.b16 %v433
      %v1079 = vunpack.c.l.b16 %v434
      %v1080 = vunpack.c.h.b16 %v434
      %v1081 = vunpack.c.l.b16 %v435
      %v1082 = vunpack.c.h.b16 %v435
      %v1083 = vunpack.c.l.b16 %v436
      %v1084 = vunpack.c.h.b16 %v436
      %v1085 = vunpack.c.l.b16 %v437
      %v1086 = vunpack.c.h.b16 %v437
      %v1087 = vunpack.c.l.b16 %v438
      %v1088 = vunpack.c.h.b16 %v438
      %v1089 = vunpack.c.l.b16 %v439
      %v1090 = vunpack.c.h.b16 %v439
      %v1091 = vunpack.c.l.b16 %v440
      %v1092 = vunpack.c.h.b16 %v440
      %v1093 = vunpack.c.l.b16 %v441
      %v1094 = vunpack.c.h.b16 %v441
      %v1095 = vunpack.c.l.b16 %v442
      %v1096 = vunpack.c.h.b16 %v442
      %v1097 = vunpack.c.l.b16 %v443
      %v1098 = vunpack.c.h.b16 %v443
      %v1099 = vunpack.c.l.b16 %v444
      %v1100 = vunpack.c.h.b16 %v444
      %v1101 = vunpack.c.l.b16 %v445
      %v1102 = vunpack.c.h.b16 %v445
      %v1103 = vunpack.c.l.b16 %v446
      %v1104 = vunpack.c.h.b16 %v446
      %v1105 = vunpack.c.l.b16 %v447
      %v1106 = vunpack.c.h.b16 %v447
      %v1107 = vunpack.c.l.b16 %v448
      %v1108 = vunpack.c.h.b16 %v448
      %v1109 = vunpack.c.l.b16 %v449
      %v1110 = vunpack.c.h.b16 %v449
      %v1111 = vunpack.c.l.b16 %v450
      %v1112 = vunpack.c.h.b16 %v450
      %v1113 = vunpack.c.l.b16 %v451
      %v1114 = vunpack.c.h.b16 %v451
      %v1115 = vunpack.c.l.b16 %v452
      %v1116 = vunpack.c.h.b16 %v452
      %v1117 = vunpack.c.l.b16 %v453
      %v1118 = vunpack.c.h.b16 %v453
      %v1119 = vunpack.c.l.b16 %v454
      %v1120 = vunpack.c.h.b16 %v454
      %v1121 = vunpack.c.l.b16 %v455
      %v1122 = vunpack.c.h.b16 %v455
      %v1123 = vunpack.c.l.b16 %v456
      %v1124 = vunpack.c.h.b16 %v456
      %v1125 = vunpack.c.l.b16 %v457
      %v1126 = vunpack.c.h.b16 %v457
      %v1127 = vunpack.c.l.b16 %v458
      %v1128 = vunpack.c.h.b16 %v458
      %v1129 = vunpack.c.l.b16 %v459
      %v1130 = vunpack.c.h.b16 %v459
      %v1131 = vunpack.c.l.b16 %v460
      %v1132 = vunpack.c.h.b16 %v460
      %v1133 = vunpack.c.l.b16 %v461
      %v1134 = vunpack.c.h.b16 %v461
      %v1135 = vunpack.c.l.b16 %v462
      %v1136 = vunpack.c.h.b16 %v462
      %v1137 = vunpack.c.l.b16 %v463
      %v1138 = vunpack.c.h.b16 %v463
      %v1139 = vunpack.c.l.b16 %v464
      %v1140 = vunpack.c.h.b16 %v464
      %v1141 = vunpack.c.l.b16 %v465
      %v1142 = vunpack.c.h.b16 %v465
      %v1143 = vunpack.c.l.b16 %v466
      %v1144 = vunpack.c.h.b16 %v466
      %v1145 = vunpack.c.l.b16 %v467
      %v1146 = vunpack.c.h.b16 %v467
      %v1147 = vunpack.c.l.b16 %v468
      %v1148 = vunpack.c.h.b16 %v468
      %v1149 = vunpack.c.l.b16 %v469
      %v1150 = vunpack.c.h.b16 %v469
      %v1151 = vunpack.c.l.b16 %v470
      %v1152 = vunpack.c.h.b16 %v470
      %v1153 = vunpack.c.l.b16 %v471
      %v1154 = vunpack.c.h.b16 %v471
      %v1155 = vunpack.c.l.b16 %v472
      %v1156 = vunpack.c.h.b16 %v472
      %v1157 = vunpack.c.l.b16 %v473
      %v1158 = vunpack.c.h.b16 %v473
      %v1159 = vunpack.c.l.b16 %v474
      %v1160 = vunpack.c.h.b16 %v474
      %v1161 = vunpack.c.l.b16 %v475
      %v1162 = vunpack.c.h.b16 %v475
      %v1163 = vunpack.c.l.b16 %v476
      %v1164 = vunpack.c.h.b16 %v476
      %v1165 = vunpack.c.l.b16 %v477
      %v1166 = vunpack.c.h.b16 %v477
      %v1167 = vunpack.c.l.b16 %v478
      %v1168 = vunpack.c.h.b16 %v478
      %v1169 = vunpack.c.l.b16 %v479
      %v1170 = vunpack.c.h.b16 %v479
      %v1171 = vunpack.c.l.b16 %v480
      %v1172 = vunpack.c.h.b16 %v480
      %v1173 = vunpack.c.l.b16 %v481
      %v1174 = vunpack.c.h.b16 %v481
      %v1175 = vunpack.c.l.b16 %v482
      %v1176 = vunpack.c.h.b16 %v482
      %v1177 = vunpack.c.l.b16 %v483
      %v1178 = vunpack.c.h.b16 %v483
      %v1179 = vunpack.c.l.b16 %v484
      %v1180 = vunpack.c.h.b16 %v484
      %v1181 = vunpack.c.l.b16 %v485
      %v1182 = vunpack.c.h.b16 %v485
      %v1183 = vunpack.c.l.b16 %v486
      %v1184 = vunpack.c.h.b16 %v486
      %v1185 = vunpack.c.l.b16 %v487
      %v1186 = vunpack.c.h.b16 %v487
      %v1187 = vunpack.c.l.b16 %v488
      %v1188 = vunpack.c.h.b16 %v488
      %v1189 = vunpack.c.l.b16 %v489
      %v1190 = vunpack.c.h.b16 %v489
      %v1191 = vunpack.c.l.b16 %v490
      %v1192 = vunpack.c.h.b16 %v490
      %v1193 = vunpack.c.l.b16 %v491
      %v1194 = vunpack.c.h.b16 %v491
      %v1195 = vunpack.c.l.b16 %v492
      %v1196 = vunpack.c.h.b16 %v492
      %v1197 = vunpack.c.l.b16 %v493
      %v1198 = vunpack.c.h.b16 %v493
      %v1199 = vunpack.c.l.b16 %v494
      %v1200 = vunpack.c.h.b16 %v494
      %v1201 = vunpack.c.l.b16 %v495
      %v1202 = vunpack.c.h.b16 %v495
      %v1203 = vunpack.c.l.b16 %v496
      %v1204 = vunpack.c.h.b16 %v496
      %v1205 = vunpack.c.l.b16 %v497
      %v1206 = vunpack.c.h.b16 %v497
      %v1207 = vunpack.c.l.b16 %v498
      %v1208 = vunpack.c.h.b16 %v498
      %v1209 = vunpack.c.l.b16 %v499
      %v1210 = vunpack.c.h.b16 %v499
      %v1211 = vunpack.c.l.b16 %v500
      %v1212 = vunpack.c.h.b16 %v500
      %v1213 = vunpack.c.l.b16 %v501
      %v1214 = vunpack.c.h.b16 %v501
      %v1215 = vunpack.c.l.b16 %v502
      %v1216 = vunpack.c.h.b16 %v502
      %v1217 = vunpack.c.l.b16 %v503
      %v1218 = vunpack.c.h.b16 %v503
      %v1219 = vunpack.c.l.b16 %v504
      %v1220 = vunpack.c.h.b16 %v504
      %v1221 = vunpack.c.l.b16 %v505
      %v1222 = vunpack.c.h.b16 %v505
      %v1223 = vunpack.c.l.b16 %v506
      %v1224 = vunpack.c.h.b16 %v506
      %v1225 = vunpack.c.l.b16 %v507
      %v1226 = vunpack.c.h.b16 %v507
      %v1227 = vunpack.c.l.b16 %v508
      %v1228 = vunpack.c.h.b16 %v508
      %v1229 = vunpack.c.l.b16 %v509
      %v1230 = vunpack.c.h.b16 %v509
      %v1231 = vunpack.c.l.b16 %v510
      %v1232 = vunpack.c.h.b16 %v510
      %v1233 = vunpack.c.l.b16 %v511
      %v1234 = vunpack.c.h.b16 %v511
      %v1235 = vunpack.c.l.b16 %v512
      %v1236 = vunpack.c.h.b16 %v512
      %v1237 = vunpack.c.l.b16 %v513
      %v1238 = vunpack.c.h.b16 %v513
      %v1239 = vunpack.c.l.b16 %v514
      %v1240 = vunpack.c.h.b16 %v514
      %v1241 = vunpack.c.l.b16 %v515
      %v1242 = vunpack.c.h.b16 %v515
      %v1243 = vunpack.c.l.b16 %v516
      %v1244 = vunpack.c.h.b16 %v516
      %v1245 = vunpack.c.l.b16 %v517
      %v1246 = vunpack.c.h.b16 %v517
      %v1247 = vunpack.c.l.b16 %v518
      %v1248 = vunpack.c.h.b16 %v518
      %v1249 = vunpack.c.l.b16 %v519
      %v1250 = vunpack.c.h.b16 %v519
      %v1251 = vunpack.c.l.b16 %v520
      %v1252 = vunpack.c.h.b16 %v520
      %v1253 = vunpack.c.l.b16 %v521
      %v1254 = vunpack.c.h.b16 %v521
      %v1255 = vunpack.c.l.b16 %v522
      %v1256 = vunpack.c.h.b16 %v522
      %v1257 = vunpack.c.l.b16 %v523
      %v1258 = vunpack.c.h.b16 %v523
      %v1259 = vunpack.c.l.b16 %v524
      %v1260 = vunpack.c.h.b16 %v524
      %v1261 = vunpack.c.l.b16 %v525
      %v1262 = vunpack.c.h.b16 %v525
      %v1263 = vunpack.c.l.b16 %v526
      %v1264 = vunpack.c.h.b16 %v526
      %v1265 = vunpack.c.l.b16 %v527
      %v1266 = vunpack.c.h.b16 %v527
      %v1267 = vunpack.c.l.b16 %v528
      %v1268 = vunpack.c.h.b16 %v528
      %v1269 = vpack.c.b16 %v991, %v989
      %v1270 = vpack.c.b16 %v992, %v990
      %v1271 = vpack.c.b16 %v995, %v993
      %v1272 = vpack.c.b16 %v996, %v994
      %v1273 = vpack.c.b16 %v999, %v997
      %v1274 = vpack.c.b16 %v1000, %v998
      %v1275 = vpack.c.b16 %v1003, %v1001
      %v1276 = vpack.c.b16 %v1004, %v1002
      %v1277 = vpack.c.b16 %v1007, %v1005
      %v1278 = vpack.c.b16 %v1008, %v1006
      %v1279 = vpack.c.b16 %v1011, %v1009
      %v1280 = vpack.c.b16 %v1012, %v1010
      %v1281 = vpack.c.b16 %v1015, %v1013
      %v1282 = vpack.c.b16 %v1016, %v1014
      %v1283 = vpack.c.b16 %v1019, %v1017
      %v1284 = vpack.c.b16 %v1020, %v1018
      %v1285 = vpack.c.b16 %v1023, %v1021
      %v1286 = vpack.c.b16 %v1024, %v1022
      %v1287 = vpack.c.b16 %v1027, %v1025
      %v1288 = vpack.c.b16 %v1028, %v1026
      %v1289 = vpack.c.b16 %v1031, %v1029
      %v1290 = vpack.c.b16 %v1032, %v1030
      %v1291 = vpack.c.b16 %v1035, %v1033
      %v1292 = vpack.c.b16 %v1036, %v1034
      %v1293 = vpack.c.b16 %v1039, %v1037
      %v1294 = vpack.c.b16 %v1040, %v1038
      %v1295 = vpack.c.b16 %v1043, %v1041
      %v1296 = vpack.c.b16 %v1044, %v1042
      %v1297 = vpack.c.b16 %v1047, %v1045
      %v1298 = vpack.c.b16 %v1048, %v1046
      %v1299 = vpack.c.b16 %v1051, %v1049
      %v1300 = vpack.c.b16 %v1052, %v1050
      %v1301 = vpack.c.b16 %v1055, %v1053
      %v1302 = vpack.c.b16 %v1056, %v1054
      %v1303 = vpack.c.b16 %v1059, %v1057
      %v1304 = vpack.c.b16 %v1060, %v1058
      %v1305 = vpack.c.b16 %v1063, %v1061
      %v1306 = vpack.c.b16 %v1064, %v1062
      %v1307 = vpack.c.b16 %v1067, %v1065
      %v1308 = vpack.c.b16 %v1068, %v1066
      %v1309 = vpack.c.b16 %v1071, %v1069
      %v1310 = vpack.c.b16 %v1072, %v1070
      %v1311 = vpack.c.b16 %v1075, %v1073
      %v1312 = vpack.c.b16 %v1076, %v1074
      %v1313 = vpack.c.b16 %v1079, %v1077
      %v1314 = vpack.c.b16 %v1080, %v1078
      %v1315 = vpack.c.b16 %v1083, %v1081
      %v1316 = vpack.c.b16 %v1084, %v1082
      %v1317 = vpack.c.b16 %v1087, %v1085
      %v1318 = vpack.c.b16 %v1088, %v1086
      %v1319 = vpack.c.b16 %v1091, %v1089
      %v1320 = vpack.c.b16 %v1092, %v1090
      %v1321 = vpack.c.b16 %v1095, %v1093
      %v1322 = vpack.c.b16 %v1096, %v1094
      %v1323 = vpack.c.b16 %v1099, %v1097
      %v1324 = vpack.c.b16 %v1100, %v1098
      %v1325 = vpack.c.b16 %v1103, %v1101
      %v1326 = vpack.c.b16 %v1104, %v1102
      %v1327 = vpack.c.b16 %v1107, %v1105
      %v1328 = vpack.c.b16 %v1108, %v1106
      %v1329 = vpack.c.b16 %v1111, %v1109
      %v1330 = vpack.c.b16 %v1112, %v1110
      %v1331 = vpack.c.b16 %v1115, %v1113
      %v1332 = vpack.c.b16 %v1116, %v1114
      %v1333 = vpack.c.b16 %v1119, %v1117
      %v1334 = vpack.c.b16 %v1120, %v1118
      %v1335 = vpack.c.b16 %v1123, %v1121
      %v1336 = vpack.c.b16 %v1124, %v1122
      %v1337 = vpack.c.b16 %v1127, %v1125
      %v1338 = vpack.c.b16 %v1128, %v1126
      %v1339 = vpack.c.b16 %v1131, %v1129
      %v1340 = vpack.c.b16 %v1132, %v1130
      %v1341 = vpack.c.b16 %v1135, %v1133
      %v1342 = vpack.c.b16 %v1136, %v1134
      %v1343 = vpack.c.b16 %v1139, %v1137
      %v1344 = vpack.c.b16 %v1140, %v1138
      %v1345 = vpack.c.b16 %v1143, %v1141
      %v1346 = vpack.c.b16 %v1144, %v1142
      %v1347 = vpack.c.b16 %v1147, %v1145
      %v1348 = vpack.c.b16 %v1148, %v1146
      %v1349 = vpack.c.b16 %v1151, %v1149
      %v1350 = vpack.c.b16 %v1152, %v1150
      %v1351 = vpack.c.b16 %v1155, %v1153
      %v1352 = vpack.c.b16 %v1156, %v1154
      %v1353 = vpack.c.b16 %v1159, %v1157
      %v1354 = vpack.c.b16 %v1160, %v1158
      %v1355 = vpack.c.b16 %v1163, %v1161
      %v1356 = vpack.c.b16 %v1164, %v1162
      %v1357 = vpack.c.b16 %v1167, %v1165
      %v1358 = vpack.c.b16 %v1168, %v1166
      %v1359 = vpack.c.b16 %v1171, %v1169
      %v1360 = vpack.c.b16 %v1172, %v1170
      %v1361 = vpack.c.b16 %v1175, %v1173
      %v1362 = vpack.c.b16 %v1176, %v1174
      %v1363 = vpack.c.b16 %v1179, %v1177
      %v1364 = vpack.c.b16 %v1180, %v1178
      %v1365 = vpack.c.b16 %v1183, %v1181
      %v1366 = vpack.c.b16 %v1184, %v1182
      %v1367 = vpack.c.b16 %v1187, %v1185
      %v1368 = vpack.c.b16 %v1188, %v1186
      %v1369 = vpack.c.b16 %v1191, %v1189
      %v1370 = vpack.c.b16 %v1192, %v1190
      %v1371 = vpack.c.b16 %v1195, %v1193
      %v1372 = vpack.c.b16 %v1196, %v1194
      %v1373 = vpack.c.b16 %v1199, %v1197
      %v1374 = vpack.c.b16 %v1200, %v1198
      %v1375 = vpack.c.b16 %v1203, %v1201
      %v1376 = vpack.c.b16 %v1204, %v1202
      %v1377 = vpack.c.b16 %v1207, %v1205
      %v1378 = vpack.c.b16 %v1208, %v1206
      %v1379 = vpack.c.b16 %v1211, %v1209
      %v1380 = vpack.c.b16 %v1212, %v1210
      %v1381 = vpack.c.b16 %v1215, %v1213
      %v1382 = vpack.c.b16 %v1216, %v1214
      %v1383 = vpack.c.b16 %v1219, %v1217
      %v1384 = vpack.c.b16 %v1220, %v1218
      %v1385 = vpack.c.b16 %v1223, %v1221
      %v1386 = vpack.c.b16 %v1224, %v1222
      %v1387 = vpack.c.b16 %v1227, %v1225
      %v1388 = vpack.c.b16 %v1228, %v1226
      %v1389 = vpack.c.b16 %v1231, %v1229
      %v1390 = vpack.c.b16 %v1232, %v1230
      %v1391 = vpack.c.b16 %v1235, %v1233
      %v1392 = vpack.c.b16 %v1236, %v1234
      %v1393 = vpack.c.b16 %v1239, %v1237
      %v1394 = vpack.c.b16 %v1240, %v1238
      %v1395 = vpack.c.b16 %v1243, %v1241
      %v1396 = vpack.c.b16 %v1244, %v1242
      %v1397 = vpack.c.b16 %v1247, %v1245
      %v1398 = vpack.c.b16 %v1248, %v1246
      %v1399 = vpack.c.b16 %v1251, %v1249
      %v1400 = vpack.c.b16 %v1252, %v1250
      %v1401 = vpack.c.b16 %v1255, %v1253
      %v1402 = vpack.c.b16 %v1256, %v1254
      %v1403 = vpack.c.b16 %v1259, %v1257
      %v1404 = vpack.c.b16 %v1260, %v1258
      %v1405 = vpack.c.b16 %v1263, %v1261
      %v1406 = vpack.c.b16 %v1264, %v1262
      %v1407 = vpack.c.b16 %v1267, %v1265
      %v1408 = vpack.c.b16 %v1268, %v1266
      %vm1549 = vcmask 785408
      %v1551 = vsel %vm1549, %v789, 0
      %v1554 = vsel %vm1549, %v798, 0
      %v1557 = vsel %vm1549, %v807, 0
      %v1560 = vsel %vm1549, %v816, 0
      %1562 = vmatprep.subr.bf16.mxu0 %v1270
      %1563 = vmatpush1.bf16.msra.mxu0 %v1269
      %1564 = vmatprep.subr.bf16.mxu0 %v1272
      %1565 = vmatpush1.bf16.msra.mxu0 %v1271
      %1566 = vmatprep.subr.bf16.mxu0 %v1274
      %1567 = vmatpush1.bf16.msra.mxu0 %v1273
      %1568 = vmatprep.subr.bf16.mxu0 %v1276
      %1569 = vmatpush1.bf16.msra.mxu0 %v1275
      %1570 = vmatprep.subr.bf16.mxu0 %v1278
      %1571 = vmatpush1.bf16.msra.mxu0 %v1277
      %1572 = vmatprep.subr.bf16.mxu0 %v1280
      %1573 = vmatpush1.bf16.msra.mxu0 %v1279
      %1574 = vmatprep.subr.bf16.mxu0 %v1282
      %1575 = vmatpush1.bf16.msra.mxu0 %v1281
      %1576 = vmatprep.subr.bf16.mxu0 %v1284
      %1577 = vmatpush1.bf16.msra.mxu0 %v1283
      %1578 = vmatprep.subr.bf16.mxu0 %v1286
      %1579 = vmatpush1.bf16.msra.mxu0 %v1285
      %1580 = vmatprep.subr.bf16.mxu0 %v1288
      %1581 = vmatpush1.bf16.msra.mxu0 %v1287
      %1582 = vmatprep.subr.bf16.mxu0 %v1290
      %1583 = vmatpush1.bf16.msra.mxu0 %v1289
      %1584 = vmatprep.subr.bf16.mxu0 %v1292
      %1585 = vmatpush1.bf16.msra.mxu0 %v1291
      %1586 = vmatprep.subr.bf16.mxu0 %v1294
      %1587 = vmatpush1.bf16.msra.mxu0 %v1293
      %1588 = vmatprep.subr.bf16.mxu0 %v1296
      %1589 = vmatpush1.bf16.msra.mxu0 %v1295
      %1590 = vmatprep.subr.bf16.mxu0 %v1298
      %1591 = vmatpush1.bf16.msra.mxu0 %v1297
      %1592 = vmatprep.subr.bf16.mxu0 %v1300
      %1593 = vmatpush1.bf16.msra.mxu0 %v1299
      %1594 = vmatprep.mubr.bf16.mxu0 %v782
      %1595 = vmatmul.mubr.bf16.gmra.mrb[0].mxu0 %v781
      %v1596 = vpop.f32.mrb[0].mxu0
      %v1597 = vadd.f32 0.0, %v1596
      %v1598 = vpop.f32.mrb[0].mxu0
      %v1599 = vadd.f32 0.0, %v1598
      %v1600 = vpop.f32.mrb[0].mxu0
      %v1601 = vadd.f32 0.0, %v1600
      %v1602 = vpop.f32.mrb[0].mxu0
      %v1603 = vadd.f32 0.0, %v1602
      %1604 = vmatprep.mubr.bf16.mxu0 %v791
      %1605 = vmatmul.mubr.bf16.gmra.mrb[0].mxu0 %v790
      %v1606 = vpop.f32.mrb[0].mxu0
      %v1607 = vadd.f32 0.0, %v1606
      %v1608 = vpop.f32.mrb[0].mxu0
      %v1609 = vadd.f32 0.0, %v1608
      %v1610 = vpop.f32.mrb[0].mxu0
      %v1611 = vadd.f32 0.0, %v1610
      %v1612 = vpop.f32.mrb[0].mxu0
      %v1613 = vadd.f32 0.0, %v1612
      %1614 = vmatprep.mubr.bf16.mxu0 %v800
      %1615 = vmatmul.mubr.bf16.gmra.mrb[0].mxu0 %v799
      %v1616 = vpop.f32.mrb[0].mxu0
      %v1617 = vadd.f32 0.0, %v1616
      %v1618 = vpop.f32.mrb[0].mxu0
      %v1619 = vadd.f32 0.0, %v1618
      %v1620 = vpop.f32.mrb[0].mxu0
      %v1621 = vadd.f32 0.0, %v1620
      %v1622 = vpop.f32.mrb[0].mxu0
      %v1623 = vadd.f32 0.0, %v1622
      %1624 = vmatprep.mubr.bf16.mxu0 %v809
      %1625 = vmatmul.mubr.bf16.gmra.mrb[0].mxu0 %v808
      %v1626 = vpop.f32.mrb[0].mxu0
      %v1627 = vadd.f32 0.0, %v1626
      %v1628 = vpop.f32.mrb[0].mxu0
      %v1629 = vadd.f32 0.0, %v1628
      %v1630 = vpop.f32.mrb[0].mxu0
      %v1631 = vadd.f32 0.0, %v1630
      %v1632 = vpop.f32.mrb[0].mxu0
      %v1633 = vadd.f32 0.0, %v1632
      %1634 = vdwg.mxu0
      %1635 = vmatprep.subr.bf16.mxu0 %v1302
      %1636 = vmatpush1.bf16.msra.mxu0 %v1301
      %1637 = vmatprep.subr.bf16.mxu0 %v1304
      %1638 = vmatpush1.bf16.msra.mxu0 %v1303
      %1639 = vmatprep.subr.bf16.mxu0 %v1306
      %1640 = vmatpush1.bf16.msra.mxu0 %v1305
      %1641 = vmatprep.subr.bf16.mxu0 %v1308
      %1642 = vmatpush1.bf16.msra.mxu0 %v1307
      %1643 = vmatprep.subr.bf16.mxu0 %v1310
      %1644 = vmatpush1.bf16.msra.mxu0 %v1309
      %1645 = vmatprep.subr.bf16.mxu0 %v1312
      %1646 = vmatpush1.bf16.msra.mxu0 %v1311
      %1647 = vmatprep.subr.bf16.mxu0 %v1314
      %1648 = vmatpush1.bf16.msra.mxu0 %v1313
      %1649 = vmatprep.subr.bf16.mxu0 %v1316
      %1650 = vmatpush1.bf16.msra.mxu0 %v1315
      %1651 = vmatprep.subr.bf16.mxu0 %v1318
      %1652 = vmatpush1.bf16.msra.mxu0 %v1317
      %1653 = vmatprep.subr.bf16.mxu0 %v1320
      %1654 = vmatpush1.bf16.msra.mxu0 %v1319
      %1655 = vmatprep.subr.bf16.mxu0 %v1322
      %1656 = vmatpush1.bf16.msra.mxu0 %v1321
      %1657 = vmatprep.subr.bf16.mxu0 %v1324
      %1658 = vmatpush1.bf16.msra.mxu0 %v1323
      %1659 = vmatprep.subr.bf16.mxu0 %v1326
      %1660 = vmatpush1.bf16.msra.mxu0 %v1325
      %1661 = vmatprep.subr.bf16.mxu0 %v1328
      %1662 = vmatpush1.bf16.msra.mxu0 %v1327
      %1663 = vmatprep.subr.bf16.mxu0 %v1330
      %1664 = vmatpush1.bf16.msra.mxu0 %v1329
      %1665 = vmatprep.subr.bf16.mxu0 %v1332
      %1666 = vmatpush1.bf16.msra.mxu0 %v1331
      %1667 = vmatprep.mubr.bf16.mxu0 %v784
      %1668 = vmatmul.mubr.bf16.gmra.mrb[0].mxu0 %v783
      %v1669 = vpop.f32.mrb[0].mxu0
      %v1670 = vadd.f32 %v1597, %v1669
      %v1671 = vpop.f32.mrb[0].mxu0
      %v1672 = vadd.f32 %v1599, %v1671
      %v1673 = vpop.f32.mrb[0].mxu0
      %v1674 = vadd.f32 %v1601, %v1673
      %v1675 = vpop.f32.mrb[0].mxu0
      %v1676 = vadd.f32 %v1603, %v1675
      %1677 = vmatprep.mubr.bf16.mxu0 %v793
      %1678 = vmatmul.mubr.bf16.gmra.mrb[0].mxu0 %v792
      %v1679 = vpop.f32.mrb[0].mxu0
      %v1680 = vadd.f32 %v1607, %v1679
      %v1681 = vpop.f32.mrb[0].mxu0
      %v1682 = vadd.f32 %v1609, %v1681
      %v1683 = vpop.f32.mrb[0].mxu0
      %v1684 = vadd.f32 %v1611, %v1683
      %v1685 = vpop.f32.mrb[0].mxu0
      %v1686 = vadd.f32 %v1613, %v1685
      %1687 = vmatprep.mubr.bf16.mxu0 %v802
      %1688 = vmatmul.mubr.bf16.gmra.mrb[0].mxu0 %v801
      %v1689 = vpop.f32.mrb[0].mxu0
      %v1690 = vadd.f32 %v1617, %v1689
      %v1691 = vpop.f32.mrb[0].mxu0
      %v1692 = vadd.f32 %v1619, %v1691
      %v1693 = vpop.f32.mrb[0].mxu0
      %v1694 = vadd.f32 %v1621, %v1693
      %v1695 = vpop.f32.mrb[0].mxu0
      %v1696 = vadd.f32 %v1623, %v1695
      %1697 = vmatprep.mubr.bf16.mxu0 %v811
      %1698 = vmatmul.mubr.bf16.gmra.mrb[0].mxu0 %v810
      %v1699 = vpop.f32.mrb[0].mxu0
      %v1700 = vadd.f32 %v1627, %v1699
      %v1701 = vpop.f32.mrb[0].mxu0
      %v1702 = vadd.f32 %v1629, %v1701
      %v1703 = vpop.f32.mrb[0].mxu0
      %v1704 = vadd.f32 %v1631, %v1703
      %v1705 = vpop.f32.mrb[0].mxu0
      %v1706 = vadd.f32 %v1633, %v1705
      %1707 = vdwg.mxu0
      %1708 = vmatprep.subr.bf16.mxu0 %v1334
      %1709 = vmatpush1.bf16.msra.mxu0 %v1333
      %1710 = vmatprep.subr.bf16.mxu0 %v1336
      %1711 = vmatpush1.bf16.msra.mxu0 %v1335
      %1712 = vmatprep.subr.bf16.mxu0 %v1338
      %1713 = vmatpush1.bf16.msra.mxu0 %v1337
      %1714 = vmatprep.subr.bf16.mxu0 %v1340
      %1715 = vmatpush1.bf16.msra.mxu0 %v1339
      %1716 = vmatprep.subr.bf16.mxu0 %v1342
      %1717 = vmatpush1.bf16.msra.mxu0 %v1341
      %1718 = vmatprep.subr.bf16.mxu0 %v1344
      %1719 = vmatpush1.bf16.msra.mxu0 %v1343
      %1720 = vmatprep.subr.bf16.mxu0 %v1346
      %1721 = vmatpush1.bf16.msra.mxu0 %v1345
      %1722 = vmatprep.subr.bf16.mxu0 %v1348
      %1723 = vmatpush1.bf16.msra.mxu0 %v1347
      %1724 = vmatprep.subr.bf16.mxu0 %v1350
      %1725 = vmatpush1.bf16.msra.mxu0 %v1349
      %1726 = vmatprep.subr.bf16.mxu0 %v1352
      %1727 = vmatpush1.bf16.msra.mxu0 %v1351
      %1728 = vmatprep.subr.bf16.mxu0 %v1354
      %1729 = vmatpush1.bf16.msra.mxu0 %v1353
      %1730 = vmatprep.subr.bf16.mxu0 %v1356
      %1731 = vmatpush1.bf16.msra.mxu0 %v1355
      %1732 = vmatprep.subr.bf16.mxu0 %v1358
      %1733 = vmatpush1.bf16.msra.mxu0 %v1357
      %1734 = vmatprep.subr.bf16.mxu0 %v1360
      %1735 = vmatpush1.bf16.msra.mxu0 %v1359
      %1736 = vmatprep.subr.bf16.mxu0 %v1362
      %1737 = vmatpush1.bf16.msra.mxu0 %v1361
      %1738 = vmatprep.subr.bf16.mxu0 %v1364
      %1739 = vmatpush1.bf16.msra.mxu0 %v1363
      %1740 = vmatprep.mubr.bf16.mxu0 %v786
      %1741 = vmatmul.mubr.bf16.gmra.mrb[0].mxu0 %v785
      %v1742 = vpop.f32.mrb[0].mxu0
      %v1743 = vadd.f32 %v1670, %v1742
      %v1744 = vpop.f32.mrb[0].mxu0
      %v1745 = vadd.f32 %v1672, %v1744
      %v1746 = vpop.f32.mrb[0].mxu0
      %v1747 = vadd.f32 %v1674, %v1746
      %v1748 = vpop.f32.mrb[0].mxu0
      %v1749 = vadd.f32 %v1676, %v1748
      %1750 = vmatprep.mubr.bf16.mxu0 %v795
      %1751 = vmatmul.mubr.bf16.gmra.mrb[0].mxu0 %v794
      %v1752 = vpop.f32.mrb[0].mxu0
      %v1753 = vadd.f32 %v1680, %v1752
      %v1754 = vpop.f32.mrb[0].mxu0
      %v1755 = vadd.f32 %v1682, %v1754
      %v1756 = vpop.f32.mrb[0].mxu0
      %v1757 = vadd.f32 %v1684, %v1756
      %v1758 = vpop.f32.mrb[0].mxu0
      %v1759 = vadd.f32 %v1686, %v1758
      %1760 = vmatprep.mubr.bf16.mxu0 %v804
      %1761 = vmatmul.mubr.bf16.gmra.mrb[0].mxu0 %v803
      %v1762 = vpop.f32.mrb[0].mxu0
      %v1763 = vadd.f32 %v1690, %v1762
      %v1764 = vpop.f32.mrb[0].mxu0
      %v1765 = vadd.f32 %v1692, %v1764
      %v1766 = vpop.f32.mrb[0].mxu0
      %v1767 = vadd.f32 %v1694, %v1766
      %v1768 = vpop.f32.mrb[0].mxu0
      %v1769 = vadd.f32 %v1696, %v1768
      %1770 = vmatprep.mubr.bf16.mxu0 %v813
      %1771 = vmatmul.mubr.bf16.gmra.mrb[0].mxu0 %v812
      %v1772 = vpop.f32.mrb[0].mxu0
      %v1773 = vadd.f32 %v1700, %v1772
      %v1774 = vpop.f32.mrb[0].mxu0
      %v1775 = vadd.f32 %v1702, %v1774
      %v1776 = vpop.f32.mrb[0].mxu0
      %v1777 = vadd.f32 %v1704, %v1776
      %v1778 = vpop.f32.mrb[0].mxu0
      %v1779 = vadd.f32 %v1706, %v1778
      %1780 = vdwg.mxu0
      %1781 = vmatprep.subr.bf16.mxu0 %v1366
      %1782 = vmatpush1.bf16.msra.mxu0 %v1365
      %1783 = vmatprep.subr.bf16.mxu0 %v1368
      %1784 = vmatpush1.bf16.msra.mxu0 %v1367
      %1785 = vmatprep.subr.bf16.mxu0 %v1370
      %1786 = vmatpush1.bf16.msra.mxu0 %v1369
      %1787 = vmatprep.subr.bf16.mxu0 %v1372
      %1788 = vmatpush1.bf16.msra.mxu0 %v1371
      %1789 = vmatprep.subr.bf16.mxu0 %v1374
      %1790 = vmatpush1.bf16.msra.mxu0 %v1373
      %1791 = vmatprep.subr.bf16.mxu0 %v1376
      %1792 = vmatpush1.bf16.msra.mxu0 %v1375
      %1793 = vmatprep.subr.bf16.mxu0 %v1378
      %1794 = vmatpush1.bf16.msra.mxu0 %v1377
      %1795 = vmatprep.subr.bf16.mxu0 %v1380
      %1796 = vmatpush1.bf16.msra.mxu0 %v1379
      %1797 = vmatprep.subr.bf16.mxu0 %v1382
      %1798 = vmatpush1.bf16.msra.mxu0 %v1381
      %1799 = vmatprep.subr.bf16.mxu0 %v1384
      %1800 = vmatpush1.bf16.msra.mxu0 %v1383
      %1801 = vmatprep.subr.bf16.mxu0 %v1386
      %1802 = vmatpush1.bf16.msra.mxu0 %v1385
      %1803 = vmatprep.subr.bf16.mxu0 %v1388
      %1804 = vmatpush1.bf16.msra.mxu0 %v1387
      %1805 = vmatprep.subr.bf16.mxu0 %v1390
      %1806 = vmatpush1.bf16.msra.mxu0 %v1389
      %1807 = vmatprep.subr.bf16.mxu0 %v1392
      %1808 = vmatpush1.bf16.msra.mxu0 %v1391
      %1809 = vmatprep.subr.bf16.mxu0 %v1394
      %1810 = vmatpush1.bf16.msra.mxu0 %v1393
      %1811 = vmatprep.subr.bf16.mxu0 %v1396
      %1812 = vmatpush1.bf16.msra.mxu0 %v1395
      %1813 = vmatprep.mubr.bf16.mxu0 %v788
      %1814 = vmatmul.mubr.bf16.gmra.mrb[0].mxu0 %v787
      %v1815 = vpop.f32.mrb[0].mxu0
      %v1816 = vadd.f32 %v1743, %v1815
      %v1817 = vpop.f32.mrb[0].mxu0
      %v1818 = vadd.f32 %v1745, %v1817
      %v1819 = vpop.f32.mrb[0].mxu0
      %v1820 = vadd.f32 %v1747, %v1819
      %v1821 = vpop.f32.mrb[0].mxu0
      %v1822 = vadd.f32 %v1749, %v1821
      %1823 = vmatprep.mubr.bf16.mxu0 %v797
      %1824 = vmatmul.mubr.bf16.gmra.mrb[0].mxu0 %v796
      %v1825 = vpop.f32.mrb[0].mxu0
      %v1826 = vadd.f32 %v1753, %v1825
      %v1827 = vpop.f32.mrb[0].mxu0
      %v1828 = vadd.f32 %v1755, %v1827
      %v1829 = vpop.f32.mrb[0].mxu0
      %v1830 = vadd.f32 %v1757, %v1829
      %v1831 = vpop.f32.mrb[0].mxu0
      %v1832 = vadd.f32 %v1759, %v1831
      %1833 = vmatprep.mubr.bf16.mxu0 %v806
      %1834 = vmatmul.mubr.bf16.gmra.mrb[0].mxu0 %v805
      %v1835 = vpop.f32.mrb[0].mxu0
      %v1836 = vadd.f32 %v1763, %v1835
      %v1837 = vpop.f32.mrb[0].mxu0
      %v1838 = vadd.f32 %v1765, %v1837
      %v1839 = vpop.f32.mrb[0].mxu0
      %v1840 = vadd.f32 %v1767, %v1839
      %v1841 = vpop.f32.mrb[0].mxu0
      %v1842 = vadd.f32 %v1769, %v1841
      %1843 = vmatprep.mubr.bf16.mxu0 %v815
      %1844 = vmatmul.mubr.bf16.gmra.mrb[0].mxu0 %v814
      %v1845 = vpop.f32.mrb[0].mxu0
      %v1846 = vadd.f32 %v1773, %v1845
      %v1847 = vpop.f32.mrb[0].mxu0
      %v1848 = vadd.f32 %v1775, %v1847
      %v1849 = vpop.f32.mrb[0].mxu0
      %v1850 = vadd.f32 %v1777, %v1849
      %v1851 = vpop.f32.mrb[0].mxu0
      %v1852 = vadd.f32 %v1779, %v1851
      %1853 = vdwg.mxu0
      %1854 = vmatprep.subr.bf16.mxu0 %v1398
      %1855 = vmatpush1.bf16.msra.mxu0 %v1397
      %1856 = vmatprep.subr.bf16.mxu0 %v1400
      %1857 = vmatpush1.bf16.msra.mxu0 %v1399
      %1858 = vmatprep.subr.bf16.mxu0 %v1402
      %1859 = vmatpush1.bf16.msra.mxu0 %v1401
      %1860 = vmatprep.subr.bf16.mxu0 %v1404
      %1861 = vmatpush1.bf16.msra.mxu0 %v1403
      %1862 = vmatprep.subr.bf16.mxu0 %v1406
      %1863 = vmatpush1.bf16.msra.mxu0 %v1405
      %1864 = vmatprep.subr.bf16.mxu0 %v1408
      %1865 = vmatpush1.bf16.msra.mxu0 %v1407
      %1866 = vmatprep.subr.bf16.mxu0 0
      %1867 = vmatpush1.bf16.msra.mxu0 0
      %1868 = vmatprep.subr.bf16.mxu0 0
      %1869 = vmatpush1.bf16.msra.mxu0 0
      %1870 = vmatprep.subr.bf16.mxu0 0
      %1871 = vmatpush1.bf16.msra.mxu0 0
      %1872 = vmatprep.subr.bf16.mxu0 0
      %1873 = vmatpush1.bf16.msra.mxu0 0
      %1874 = vmatprep.subr.bf16.mxu0 0
      %1875 = vmatpush1.bf16.msra.mxu0 0
      %1876 = vmatprep.subr.bf16.mxu0 0
      %1877 = vmatpush1.bf16.msra.mxu0 0
      %1878 = vmatprep.subr.bf16.mxu0 0
      %1879 = vmatpush1.bf16.msra.mxu0 0
      %1880 = vmatprep.subr.bf16.mxu0 0
      %1881 = vmatpush1.bf16.msra.mxu0 0
      %1882 = vmatprep.subr.bf16.mxu0 0
      %1883 = vmatpush1.bf16.msra.mxu0 0
      %1884 = vmatprep.subr.bf16.mxu0 0
      %1885 = vmatpush1.bf16.msra.mxu0 0
      %1886 = vmatprep.mubr.bf16.mxu0 0
      %1887 = vmatmul.mubr.bf16.gmra.mrb[0].mxu0 %v1551
      %v1888 = vpop.f32.mrb[0].mxu0
      %v1889 = vadd.f32 %v1816, %v1888
      %v1890 = vpop.f32.mrb[0].mxu0
      %v1891 = vadd.f32 %v1818, %v1890
      %v1892 = vpop.f32.mrb[0].mxu0
      %v1893 = vadd.f32 %v1820, %v1892
      %v1894 = vpop.f32.mrb[0].mxu0
      %v1895 = vadd.f32 %v1822, %v1894
      %1896 = vmatprep.mubr.bf16.mxu0 0
      %1897 = vmatmul.mubr.bf16.gmra.mrb[0].mxu0 %v1554
      %v1898 = vpop.f32.mrb[0].mxu0
      %v1899 = vadd.f32 %v1826, %v1898
      %v1900 = vpop.f32.mrb[0].mxu0
      %v1901 = vadd.f32 %v1828, %v1900
      %v1902 = vpop.f32.mrb[0].mxu0
      %v1903 = vadd.f32 %v1830, %v1902
      %v1904 = vpop.f32.mrb[0].mxu0
      %v1905 = vadd.f32 %v1832, %v1904
      %1906 = vmatprep.mubr.bf16.mxu0 0
      %1907 = vmatmul.mubr.bf16.gmra.mrb[0].mxu0 %v1557
      %v1908 = vpop.f32.mrb[0].mxu0
      %v1909 = vadd.f32 %v1836, %v1908
      %v1910 = vpop.f32.mrb[0].mxu0
      %v1911 = vadd.f32 %v1838, %v1910
      %v1912 = vpop.f32.mrb[0].mxu0
      %v1913 = vadd.f32 %v1840, %v1912
      %v1914 = vpop.f32.mrb[0].mxu0
      %v1915 = vadd.f32 %v1842, %v1914
      %1916 = vmatprep.mubr.bf16.mxu0 0
      %1917 = vmatmul.mubr.bf16.gmra.mrb[0].mxu0 %v1560
      %v1918 = vpop.f32.mrb[0].mxu0
      %v1919 = vadd.f32 %v1846, %v1918
      %v1920 = vpop.f32.mrb[0].mxu0
      %v1921 = vadd.f32 %v1848, %v1920
      %v1922 = vpop.f32.mrb[0].mxu0
      %v1923 = vadd.f32 %v1850, %v1922
      %v1924 = vpop.f32.mrb[0].mxu0
      %v1925 = vadd.f32 %v1852, %v1924
      %1926 = vdwg.mxu0
      %v2067 = vunpack.c.l.b16 %v529
      %v2068 = vunpack.c.h.b16 %v529
      %v2069 = vunpack.c.l.b16 %v530
      %v2070 = vunpack.c.h.b16 %v530
      %v2071 = vunpack.c.l.b16 %v531
      %v2072 = vunpack.c.h.b16 %v531
      %v2073 = vunpack.c.l.b16 %v532
      %v2074 = vunpack.c.h.b16 %v532
      %v2075 = vunpack.c.l.b16 %v533
      %v2076 = vunpack.c.h.b16 %v533
      %v2077 = vunpack.c.l.b16 %v534
      %v2078 = vunpack.c.h.b16 %v534
      %v2079 = vunpack.c.l.b16 %v535
      %v2080 = vunpack.c.h.b16 %v535
      %v2081 = vunpack.c.l.b16 %v536
      %v2082 = vunpack.c.h.b16 %v536
      %v2083 = vunpack.c.l.b16 %v537
      %v2084 = vunpack.c.h.b16 %v537
      %v2085 = vunpack.c.l.b16 %v538
      %v2086 = vunpack.c.h.b16 %v538
      %v2087 = vunpack.c.l.b16 %v539
      %v2088 = vunpack.c.h.b16 %v539
      %v2089 = vunpack.c.l.b16 %v540
      %v2090 = vunpack.c.h.b16 %v540
      %v2091 = vunpack.c.l.b16 %v541
      %v2092 = vunpack.c.h.b16 %v541
      %v2093 = vunpack.c.l.b16 %v542
      %v2094 = vunpack.c.h.b16 %v542
      %v2095 = vunpack.c.l.b16 %v543
      %v2096 = vunpack.c.h.b16 %v543
      %v2097 = vunpack.c.l.b16 %v544
      %v2098 = vunpack.c.h.b16 %v544
      %v2099 = vunpack.c.l.b16 %v545
      %v2100 = vunpack.c.h.b16 %v545
      %v2101 = vunpack.c.l.b16 %v546
      %v2102 = vunpack.c.h.b16 %v546
      %v2103 = vunpack.c.l.b16 %v547
      %v2104 = vunpack.c.h.b16 %v547
      %v2105 = vunpack.c.l.b16 %v548
      %v2106 = vunpack.c.h.b16 %v548
      %v2107 = vunpack.c.l.b16 %v549
      %v2108 = vunpack.c.h.b16 %v549
      %v2109 = vunpack.c.l.b16 %v550
      %v2110 = vunpack.c.h.b16 %v550
      %v2111 = vunpack.c.l.b16 %v551
      %v2112 = vunpack.c.h.b16 %v551
      %v2113 = vunpack.c.l.b16 %v552
      %v2114 = vunpack.c.h.b16 %v552
      %v2115 = vunpack.c.l.b16 %v553
      %v2116 = vunpack.c.h.b16 %v553
      %v2117 = vunpack.c.l.b16 %v554
      %v2118 = vunpack.c.h.b16 %v554
      %v2119 = vunpack.c.l.b16 %v555
      %v2120 = vunpack.c.h.b16 %v555
      %v2121 = vunpack.c.l.b16 %v556
      %v2122 = vunpack.c.h.b16 %v556
      %v2123 = vunpack.c.l.b16 %v557
      %v2124 = vunpack.c.h.b16 %v557
      %v2125 = vunpack.c.l.b16 %v558
      %v2126 = vunpack.c.h.b16 %v558
      %v2127 = vunpack.c.l.b16 %v559
      %v2128 = vunpack.c.h.b16 %v559
      %v2129 = vunpack.c.l.b16 %v560
      %v2130 = vunpack.c.h.b16 %v560
      %v2131 = vunpack.c.l.b16 %v561
      %v2132 = vunpack.c.h.b16 %v561
      %v2133 = vunpack.c.l.b16 %v562
      %v2134 = vunpack.c.h.b16 %v562
      %v2135 = vunpack.c.l.b16 %v563
      %v2136 = vunpack.c.h.b16 %v563
      %v2137 = vunpack.c.l.b16 %v564
      %v2138 = vunpack.c.h.b16 %v564
      %v2139 = vunpack.c.l.b16 %v565
      %v2140 = vunpack.c.h.b16 %v565
      %v2141 = vunpack.c.l.b16 %v566
      %v2142 = vunpack.c.h.b16 %v566
      %v2143 = vunpack.c.l.b16 %v567
      %v2144 = vunpack.c.h.b16 %v567
      %v2145 = vunpack.c.l.b16 %v568
      %v2146 = vunpack.c.h.b16 %v568
      %v2147 = vunpack.c.l.b16 %v569
      %v2148 = vunpack.c.h.b16 %v569
      %v2149 = vunpack.c.l.b16 %v570
      %v2150 = vunpack.c.h.b16 %v570
      %v2151 = vunpack.c.l.b16 %v571
      %v2152 = vunpack.c.h.b16 %v571
      %v2153 = vunpack.c.l.b16 %v572
      %v2154 = vunpack.c.h.b16 %v572
      %v2155 = vunpack.c.l.b16 %v573
      %v2156 = vunpack.c.h.b16 %v573
      %v2157 = vunpack.c.l.b16 %v574
      %v2158 = vunpack.c.h.b16 %v574
      %v2159 = vunpack.c.l.b16 %v575
      %v2160 = vunpack.c.h.b16 %v575
      %v2161 = vunpack.c.l.b16 %v576
      %v2162 = vunpack.c.h.b16 %v576
      %v2163 = vunpack.c.l.b16 %v577
      %v2164 = vunpack.c.h.b16 %v577
      %v2165 = vunpack.c.l.b16 %v578
      %v2166 = vunpack.c.h.b16 %v578
      %v2167 = vunpack.c.l.b16 %v579
      %v2168 = vunpack.c.h.b16 %v579
      %v2169 = vunpack.c.l.b16 %v580
      %v2170 = vunpack.c.h.b16 %v580
      %v2171 = vunpack.c.l.b16 %v581
      %v2172 = vunpack.c.h.b16 %v581
      %v2173 = vunpack.c.l.b16 %v582
      %v2174 = vunpack.c.h.b16 %v582
      %v2175 = vunpack.c.l.b16 %v583
      %v2176 = vunpack.c.h.b16 %v583
      %v2177 = vunpack.c.l.b16 %v584
      %v2178 = vunpack.c.h.b16 %v584
      %v2179 = vunpack.c.l.b16 %v585
      %v2180 = vunpack.c.h.b16 %v585
      %v2181 = vunpack.c.l.b16 %v586
      %v2182 = vunpack.c.h.b16 %v586
      %v2183 = vunpack.c.l.b16 %v587
      %v2184 = vunpack.c.h.b16 %v587
      %v2185 = vunpack.c.l.b16 %v588
      %v2186 = vunpack.c.h.b16 %v588
      %v2187 = vunpack.c.l.b16 %v589
      %v2188 = vunpack.c.h.b16 %v589
      %v2189 = vunpack.c.l.b16 %v590
      %v2190 = vunpack.c.h.b16 %v590
      %v2191 = vunpack.c.l.b16 %v591
      %v2192 = vunpack.c.h.b16 %v591
      %v2193 = vunpack.c.l.b16 %v592
      %v2194 = vunpack.c.h.b16 %v592
      %v2195 = vunpack.c.l.b16 %v593
      %v2196 = vunpack.c.h.b16 %v593
      %v2197 = vunpack.c.l.b16 %v594
      %v2198 = vunpack.c.h.b16 %v594
      %v2199 = vunpack.c.l.b16 %v595
      %v2200 = vunpack.c.h.b16 %v595
      %v2201 = vunpack.c.l.b16 %v596
      %v2202 = vunpack.c.h.b16 %v596
      %v2203 = vunpack.c.l.b16 %v597
      %v2204 = vunpack.c.h.b16 %v597
      %v2205 = vunpack.c.l.b16 %v598
      %v2206 = vunpack.c.h.b16 %v598
      %v2207 = vunpack.c.l.b16 %v599
      %v2208 = vunpack.c.h.b16 %v599
      %v2209 = vunpack.c.l.b16 %v600
      %v2210 = vunpack.c.h.b16 %v600
      %v2211 = vunpack.c.l.b16 %v601
      %v2212 = vunpack.c.h.b16 %v601
      %v2213 = vunpack.c.l.b16 %v602
      %v2214 = vunpack.c.h.b16 %v602
      %v2215 = vunpack.c.l.b16 %v603
      %v2216 = vunpack.c.h.b16 %v603
      %v2217 = vunpack.c.l.b16 %v604
      %v2218 = vunpack.c.h.b16 %v604
      %v2219 = vunpack.c.l.b16 %v605
      %v2220 = vunpack.c.h.b16 %v605
      %v2221 = vunpack.c.l.b16 %v606
      %v2222 = vunpack.c.h.b16 %v606
      %v2223 = vunpack.c.l.b16 %v607
      %v2224 = vunpack.c.h.b16 %v607
      %v2225 = vunpack.c.l.b16 %v608
      %v2226 = vunpack.c.h.b16 %v608
      %v2227 = vunpack.c.l.b16 %v609
      %v2228 = vunpack.c.h.b16 %v609
      %v2229 = vunpack.c.l.b16 %v610
      %v2230 = vunpack.c.h.b16 %v610
      %v2231 = vunpack.c.l.b16 %v611
      %v2232 = vunpack.c.h.b16 %v611
      %v2233 = vunpack.c.l.b16 %v612
      %v2234 = vunpack.c.h.b16 %v612
      %v2235 = vunpack.c.l.b16 %v613
      %v2236 = vunpack.c.h.b16 %v613
      %v2237 = vunpack.c.l.b16 %v614
      %v2238 = vunpack.c.h.b16 %v614
      %v2239 = vunpack.c.l.b16 %v615
      %v2240 = vunpack.c.h.b16 %v615
      %v2241 = vunpack.c.l.b16 %v616
      %v2242 = vunpack.c.h.b16 %v616
      %v2243 = vunpack.c.l.b16 %v617
      %v2244 = vunpack.c.h.b16 %v617
      %v2245 = vunpack.c.l.b16 %v618
      %v2246 = vunpack.c.h.b16 %v618
      %v2247 = vunpack.c.l.b16 %v619
      %v2248 = vunpack.c.h.b16 %v619
      %v2249 = vunpack.c.l.b16 %v620
      %v2250 = vunpack.c.h.b16 %v620
      %v2251 = vunpack.c.l.b16 %v621
      %v2252 = vunpack.c.h.b16 %v621
      %v2253 = vunpack.c.l.b16 %v622
      %v2254 = vunpack.c.h.b16 %v622
      %v2255 = vunpack.c.l.b16 %v623
      %v2256 = vunpack.c.h.b16 %v623
      %v2257 = vunpack.c.l.b16 %v624
      %v2258 = vunpack.c.h.b16 %v624
      %v2259 = vunpack.c.l.b16 %v625
      %v2260 = vunpack.c.h.b16 %v625
      %v2261 = vunpack.c.l.b16 %v626
      %v2262 = vunpack.c.h.b16 %v626
      %v2263 = vunpack.c.l.b16 %v627
      %v2264 = vunpack.c.h.b16 %v627
      %v2265 = vunpack.c.l.b16 %v628
      %v2266 = vunpack.c.h.b16 %v628
      %v2267 = vunpack.c.l.b16 %v629
      %v2268 = vunpack.c.h.b16 %v629
      %v2269 = vunpack.c.l.b16 %v630
      %v2270 = vunpack.c.h.b16 %v630
      %v2271 = vunpack.c.l.b16 %v631
      %v2272 = vunpack.c.h.b16 %v631
      %v2273 = vunpack.c.l.b16 %v632
      %v2274 = vunpack.c.h.b16 %v632
      %v2275 = vunpack.c.l.b16 %v633
      %v2276 = vunpack.c.h.b16 %v633
      %v2277 = vunpack.c.l.b16 %v634
      %v2278 = vunpack.c.h.b16 %v634
      %v2279 = vunpack.c.l.b16 %v635
      %v2280 = vunpack.c.h.b16 %v635
      %v2281 = vunpack.c.l.b16 %v636
      %v2282 = vunpack.c.h.b16 %v636
      %v2283 = vunpack.c.l.b16 %v637
      %v2284 = vunpack.c.h.b16 %v637
      %v2285 = vunpack.c.l.b16 %v638
      %v2286 = vunpack.c.h.b16 %v638
      %v2287 = vunpack.c.l.b16 %v639
      %v2288 = vunpack.c.h.b16 %v639
      %v2289 = vunpack.c.l.b16 %v640
      %v2290 = vunpack.c.h.b16 %v640
      %v2291 = vunpack.c.l.b16 %v641
      %v2292 = vunpack.c.h.b16 %v641
      %v2293 = vunpack.c.l.b16 %v642
      %v2294 = vunpack.c.h.b16 %v642
      %v2295 = vunpack.c.l.b16 %v643
      %v2296 = vunpack.c.h.b16 %v643
      %v2297 = vunpack.c.l.b16 %v644
      %v2298 = vunpack.c.h.b16 %v644
      %v2299 = vunpack.c.l.b16 %v645
      %v2300 = vunpack.c.h.b16 %v645
      %v2301 = vunpack.c.l.b16 %v646
      %v2302 = vunpack.c.h.b16 %v646
      %v2303 = vunpack.c.l.b16 %v647
      %v2304 = vunpack.c.h.b16 %v647
      %v2305 = vunpack.c.l.b16 %v648
      %v2306 = vunpack.c.h.b16 %v648
      %v2307 = vunpack.c.l.b16 %v649
      %v2308 = vunpack.c.h.b16 %v649
      %v2309 = vunpack.c.l.b16 %v650
      %v2310 = vunpack.c.h.b16 %v650
      %v2311 = vunpack.c.l.b16 %v651
      %v2312 = vunpack.c.h.b16 %v651
      %v2313 = vunpack.c.l.b16 %v652
      %v2314 = vunpack.c.h.b16 %v652
      %v2315 = vunpack.c.l.b16 %v653
      %v2316 = vunpack.c.h.b16 %v653
      %v2317 = vunpack.c.l.b16 %v654
      %v2318 = vunpack.c.h.b16 %v654
      %v2319 = vunpack.c.l.b16 %v655
      %v2320 = vunpack.c.h.b16 %v655
      %v2321 = vunpack.c.l.b16 %v656
      %v2322 = vunpack.c.h.b16 %v656
      %v2323 = vunpack.c.l.b16 %v657
      %v2324 = vunpack.c.h.b16 %v657
      %v2325 = vunpack.c.l.b16 %v658
      %v2326 = vunpack.c.h.b16 %v658
      %v2327 = vunpack.c.l.b16 %v659
      %v2328 = vunpack.c.h.b16 %v659
      %v2329 = vunpack.c.l.b16 %v660
      %v2330 = vunpack.c.h.b16 %v660
      %v2331 = vunpack.c.l.b16 %v661
      %v2332 = vunpack.c.h.b16 %v661
      %v2333 = vunpack.c.l.b16 %v662
      %v2334 = vunpack.c.h.b16 %v662
      %v2335 = vunpack.c.l.b16 %v663
      %v2336 = vunpack.c.h.b16 %v663
      %v2337 = vunpack.c.l.b16 %v664
      %v2338 = vunpack.c.h.b16 %v664
      %v2339 = vunpack.c.l.b16 %v665
      %v2340 = vunpack.c.h.b16 %v665
      %v2341 = vunpack.c.l.b16 %v666
      %v2342 = vunpack.c.h.b16 %v666
      %v2343 = vunpack.c.l.b16 %v667
      %v2344 = vunpack.c.h.b16 %v667
      %v2345 = vunpack.c.l.b16 %v668
      %v2346 = vunpack.c.h.b16 %v668
      %v2347 = vpack.c.b16 %v2069, %v2067
      %v2348 = vpack.c.b16 %v2070, %v2068
      %v2349 = vpack.c.b16 %v2073, %v2071
      %v2350 = vpack.c.b16 %v2074, %v2072
      %v2351 = vpack.c.b16 %v2077, %v2075
      %v2352 = vpack.c.b16 %v2078, %v2076
      %v2353 = vpack.c.b16 %v2081, %v2079
      %v2354 = vpack.c.b16 %v2082, %v2080
      %v2355 = vpack.c.b16 %v2085, %v2083
      %v2356 = vpack.c.b16 %v2086, %v2084
      %v2357 = vpack.c.b16 %v2089, %v2087
      %v2358 = vpack.c.b16 %v2090, %v2088
      %v2359 = vpack.c.b16 %v2093, %v2091
      %v2360 = vpack.c.b16 %v2094, %v2092
      %v2361 = vpack.c.b16 %v2097, %v2095
      %v2362 = vpack.c.b16 %v2098, %v2096
      %v2363 = vpack.c.b16 %v2101, %v2099
      %v2364 = vpack.c.b16 %v2102, %v2100
      %v2365 = vpack.c.b16 %v2105, %v2103
      %v2366 = vpack.c.b16 %v2106, %v2104
      %v2367 = vpack.c.b16 %v2109, %v2107
      %v2368 = vpack.c.b16 %v2110, %v2108
      %v2369 = vpack.c.b16 %v2113, %v2111
      %v2370 = vpack.c.b16 %v2114, %v2112
      %v2371 = vpack.c.b16 %v2117, %v2115
      %v2372 = vpack.c.b16 %v2118, %v2116
      %v2373 = vpack.c.b16 %v2121, %v2119
      %v2374 = vpack.c.b16 %v2122, %v2120
      %v2375 = vpack.c.b16 %v2125, %v2123
      %v2376 = vpack.c.b16 %v2126, %v2124
      %v2377 = vpack.c.b16 %v2129, %v2127
      %v2378 = vpack.c.b16 %v2130, %v2128
      %v2379 = vpack.c.b16 %v2133, %v2131
      %v2380 = vpack.c.b16 %v2134, %v2132
      %v2381 = vpack.c.b16 %v2137, %v2135
      %v2382 = vpack.c.b16 %v2138, %v2136
      %v2383 = vpack.c.b16 %v2141, %v2139
      %v2384 = vpack.c.b16 %v2142, %v2140
      %v2385 = vpack.c.b16 %v2145, %v2143
      %v2386 = vpack.c.b16 %v2146, %v2144
      %v2387 = vpack.c.b16 %v2149, %v2147
      %v2388 = vpack.c.b16 %v2150, %v2148
      %v2389 = vpack.c.b16 %v2153, %v2151
      %v2390 = vpack.c.b16 %v2154, %v2152
      %v2391 = vpack.c.b16 %v2157, %v2155
      %v2392 = vpack.c.b16 %v2158, %v2156
      %v2393 = vpack.c.b16 %v2161, %v2159
      %v2394 = vpack.c.b16 %v2162, %v2160
      %v2395 = vpack.c.b16 %v2165, %v2163
      %v2396 = vpack.c.b16 %v2166, %v2164
      %v2397 = vpack.c.b16 %v2169, %v2167
      %v2398 = vpack.c.b16 %v2170, %v2168
      %v2399 = vpack.c.b16 %v2173, %v2171
      %v2400 = vpack.c.b16 %v2174, %v2172
      %v2401 = vpack.c.b16 %v2177, %v2175
      %v2402 = vpack.c.b16 %v2178, %v2176
      %v2403 = vpack.c.b16 %v2181, %v2179
      %v2404 = vpack.c.b16 %v2182, %v2180
      %v2405 = vpack.c.b16 %v2185, %v2183
      %v2406 = vpack.c.b16 %v2186, %v2184
      %v2407 = vpack.c.b16 %v2189, %v2187
      %v2408 = vpack.c.b16 %v2190, %v2188
      %v2409 = vpack.c.b16 %v2193, %v2191
      %v2410 = vpack.c.b16 %v2194, %v2192
      %v2411 = vpack.c.b16 %v2197, %v2195
      %v2412 = vpack.c.b16 %v2198, %v2196
      %v2413 = vpack.c.b16 %v2201, %v2199
      %v2414 = vpack.c.b16 %v2202, %v2200
      %v2415 = vpack.c.b16 %v2205, %v2203
      %v2416 = vpack.c.b16 %v2206, %v2204
      %v2417 = vpack.c.b16 %v2209, %v2207
      %v2418 = vpack.c.b16 %v2210, %v2208
      %v2419 = vpack.c.b16 %v2213, %v2211
      %v2420 = vpack.c.b16 %v2214, %v2212
      %v2421 = vpack.c.b16 %v2217, %v2215
      %v2422 = vpack.c.b16 %v2218, %v2216
      %v2423 = vpack.c.b16 %v2221, %v2219
      %v2424 = vpack.c.b16 %v2222, %v2220
      %v2425 = vpack.c.b16 %v2225, %v2223
      %v2426 = vpack.c.b16 %v2226, %v2224
      %v2427 = vpack.c.b16 %v2229, %v2227
      %v2428 = vpack.c.b16 %v2230, %v2228
      %v2429 = vpack.c.b16 %v2233, %v2231
      %v2430 = vpack.c.b16 %v2234, %v2232
      %v2431 = vpack.c.b16 %v2237, %v2235
      %v2432 = vpack.c.b16 %v2238, %v2236
      %v2433 = vpack.c.b16 %v2241, %v2239
      %v2434 = vpack.c.b16 %v2242, %v2240
      %v2435 = vpack.c.b16 %v2245, %v2243
      %v2436 = vpack.c.b16 %v2246, %v2244
      %v2437 = vpack.c.b16 %v2249, %v2247
      %v2438 = vpack.c.b16 %v2250, %v2248
      %v2439 = vpack.c.b16 %v2253, %v2251
      %v2440 = vpack.c.b16 %v2254, %v2252
      %v2441 = vpack.c.b16 %v2257, %v2255
      %v2442 = vpack.c.b16 %v2258, %v2256
      %v2443 = vpack.c.b16 %v2261, %v2259
      %v2444 = vpack.c.b16 %v2262, %v2260
      %v2445 = vpack.c.b16 %v2265, %v2263
      %v2446 = vpack.c.b16 %v2266, %v2264
      %v2447 = vpack.c.b16 %v2269, %v2267
      %v2448 = vpack.c.b16 %v2270, %v2268
      %v2449 = vpack.c.b16 %v2273, %v2271
      %v2450 = vpack.c.b16 %v2274, %v2272
      %v2451 = vpack.c.b16 %v2277, %v2275
      %v2452 = vpack.c.b16 %v2278, %v2276
      %v2453 = vpack.c.b16 %v2281, %v2279
      %v2454 = vpack.c.b16 %v2282, %v2280
      %v2455 = vpack.c.b16 %v2285, %v2283
      %v2456 = vpack.c.b16 %v2286, %v2284
      %v2457 = vpack.c.b16 %v2289, %v2287
      %v2458 = vpack.c.b16 %v2290, %v2288
      %v2459 = vpack.c.b16 %v2293, %v2291
      %v2460 = vpack.c.b16 %v2294, %v2292
      %v2461 = vpack.c.b16 %v2297, %v2295
      %v2462 = vpack.c.b16 %v2298, %v2296
      %v2463 = vpack.c.b16 %v2301, %v2299
      %v2464 = vpack.c.b16 %v2302, %v2300
      %v2465 = vpack.c.b16 %v2305, %v2303
      %v2466 = vpack.c.b16 %v2306, %v2304
      %v2467 = vpack.c.b16 %v2309, %v2307
      %v2468 = vpack.c.b16 %v2310, %v2308
      %v2469 = vpack.c.b16 %v2313, %v2311
      %v2470 = vpack.c.b16 %v2314, %v2312
      %v2471 = vpack.c.b16 %v2317, %v2315
      %v2472 = vpack.c.b16 %v2318, %v2316
      %v2473 = vpack.c.b16 %v2321, %v2319
      %v2474 = vpack.c.b16 %v2322, %v2320
      %v2475 = vpack.c.b16 %v2325, %v2323
      %v2476 = vpack.c.b16 %v2326, %v2324
      %v2477 = vpack.c.b16 %v2329, %v2327
      %v2478 = vpack.c.b16 %v2330, %v2328
      %v2479 = vpack.c.b16 %v2333, %v2331
      %v2480 = vpack.c.b16 %v2334, %v2332
      %v2481 = vpack.c.b16 %v2337, %v2335
      %v2482 = vpack.c.b16 %v2338, %v2336
      %v2483 = vpack.c.b16 %v2341, %v2339
      %v2484 = vpack.c.b16 %v2342, %v2340
      %v2485 = vpack.c.b16 %v2345, %v2343
      %v2486 = vpack.c.b16 %v2346, %v2344
      %2627 = vmatprep.subr.bf16.mxu0 %v2348
      %2628 = vmatpush1.bf16.msra.mxu0 %v2347
      %2629 = vmatprep.subr.bf16.mxu0 %v2350
      %2630 = vmatpush1.bf16.msra.mxu0 %v2349
      %2631 = vmatprep.subr.bf16.mxu0 %v2352
      %2632 = vmatpush1.bf16.msra.mxu0 %v2351
      %2633 = vmatprep.subr.bf16.mxu0 %v2354
      %2634 = vmatpush1.bf16.msra.mxu0 %v2353
      %2635 = vmatprep.subr.bf16.mxu0 %v2356
      %2636 = vmatpush1.bf16.msra.mxu0 %v2355
      %2637 = vmatprep.subr.bf16.mxu0 %v2358
      %2638 = vmatpush1.bf16.msra.mxu0 %v2357
      %2639 = vmatprep.subr.bf16.mxu0 %v2360
      %2640 = vmatpush1.bf16.msra.mxu0 %v2359
      %2641 = vmatprep.subr.bf16.mxu0 %v2362
      %2642 = vmatpush1.bf16.msra.mxu0 %v2361
      %2643 = vmatprep.subr.bf16.mxu0 %v2364
      %2644 = vmatpush1.bf16.msra.mxu0 %v2363
      %2645 = vmatprep.subr.bf16.mxu0 %v2366
      %2646 = vmatpush1.bf16.msra.mxu0 %v2365
      %2647 = vmatprep.subr.bf16.mxu0 %v2368
      %2648 = vmatpush1.bf16.msra.mxu0 %v2367
      %2649 = vmatprep.subr.bf16.mxu0 %v2370
      %2650 = vmatpush1.bf16.msra.mxu0 %v2369
      %2651 = vmatprep.subr.bf16.mxu0 %v2372
      %2652 = vmatpush1.bf16.msra.mxu0 %v2371
      %2653 = vmatprep.subr.bf16.mxu0 %v2374
      %2654 = vmatpush1.bf16.msra.mxu0 %v2373
      %2655 = vmatprep.subr.bf16.mxu0 %v2376
      %2656 = vmatpush1.bf16.msra.mxu0 %v2375
      %2657 = vmatprep.subr.bf16.mxu0 %v2378
      %2658 = vmatpush1.bf16.msra.mxu0 %v2377
      %2659 = vmatprep.mubr.bf16.mxu0 %v782
      %2660 = vmatmul.mubr.bf16.gmra.mrb[0].mxu0 %v781
      %v2661 = vpop.f32.mrb[0].mxu0
      %v2662 = vadd.f32 0.0, %v2661
      %v2663 = vpop.f32.mrb[0].mxu0
      %v2664 = vadd.f32 0.0, %v2663
      %v2665 = vpop.f32.mrb[0].mxu0
      %v2666 = vadd.f32 0.0, %v2665
      %v2667 = vpop.f32.mrb[0].mxu0
      %v2668 = vadd.f32 0.0, %v2667
      %2669 = vmatprep.mubr.bf16.mxu0 %v791
      %2670 = vmatmul.mubr.bf16.gmra.mrb[0].mxu0 %v790
      %v2671 = vpop.f32.mrb[0].mxu0
      %v2672 = vadd.f32 0.0, %v2671
      %v2673 = vpop.f32.mrb[0].mxu0
      %v2674 = vadd.f32 0.0, %v2673
      %v2675 = vpop.f32.mrb[0].mxu0
      %v2676 = vadd.f32 0.0, %v2675
      %v2677 = vpop.f32.mrb[0].mxu0
      %v2678 = vadd.f32 0.0, %v2677
      %2679 = vmatprep.mubr.bf16.mxu0 %v800
      %2680 = vmatmul.mubr.bf16.gmra.mrb[0].mxu0 %v799
      %v2681 = vpop.f32.mrb[0].mxu0
      %v2682 = vadd.f32 0.0, %v2681
      %v2683 = vpop.f32.mrb[0].mxu0
      %v2684 = vadd.f32 0.0, %v2683
      %v2685 = vpop.f32.mrb[0].mxu0
      %v2686 = vadd.f32 0.0, %v2685
      %v2687 = vpop.f32.mrb[0].mxu0
      %v2688 = vadd.f32 0.0, %v2687
      %2689 = vmatprep.mubr.bf16.mxu0 %v809
      %2690 = vmatmul.mubr.bf16.gmra.mrb[0].mxu0 %v808
      %v2691 = vpop.f32.mrb[0].mxu0
      %v2692 = vadd.f32 0.0, %v2691
      %v2693 = vpop.f32.mrb[0].mxu0
      %v2694 = vadd.f32 0.0, %v2693
      %v2695 = vpop.f32.mrb[0].mxu0
      %v2696 = vadd.f32 0.0, %v2695
      %v2697 = vpop.f32.mrb[0].mxu0
      %v2698 = vadd.f32 0.0, %v2697
      %2699 = vdwg.mxu0
      %2700 = vmatprep.subr.bf16.mxu0 %v2380
      %2701 = vmatpush1.bf16.msra.mxu0 %v2379
      %2702 = vmatprep.subr.bf16.mxu0 %v2382
      %2703 = vmatpush1.bf16.msra.mxu0 %v2381
      %2704 = vmatprep.subr.bf16.mxu0 %v2384
      %2705 = vmatpush1.bf16.msra.mxu0 %v2383
      %2706 = vmatprep.subr.bf16.mxu0 %v2386
      %2707 = vmatpush1.bf16.msra.mxu0 %v2385
      %2708 = vmatprep.subr.bf16.mxu0 %v2388
      %2709 = vmatpush1.bf16.msra.mxu0 %v2387
      %2710 = vmatprep.subr.bf16.mxu0 %v2390
      %2711 = vmatpush1.bf16.msra.mxu0 %v2389
      %2712 = vmatprep.subr.bf16.mxu0 %v2392
      %2713 = vmatpush1.bf16.msra.mxu0 %v2391
      %2714 = vmatprep.subr.bf16.mxu0 %v2394
      %2715 = vmatpush1.bf16.msra.mxu0 %v2393
      %2716 = vmatprep.subr.bf16.mxu0 %v2396
      %2717 = vmatpush1.bf16.msra.mxu0 %v2395
      %2718 = vmatprep.subr.bf16.mxu0 %v2398
      %2719 = vmatpush1.bf16.msra.mxu0 %v2397
      %2720 = vmatprep.subr.bf16.mxu0 %v2400
      %2721 = vmatpush1.bf16.msra.mxu0 %v2399
      %2722 = vmatprep.subr.bf16.mxu0 %v2402
      %2723 = vmatpush1.bf16.msra.mxu0 %v2401
      %2724 = vmatprep.subr.bf16.mxu0 %v2404
      %2725 = vmatpush1.bf16.msra.mxu0 %v2403
      %2726 = vmatprep.subr.bf16.mxu0 %v2406
      %2727 = vmatpush1.bf16.msra.mxu0 %v2405
      %2728 = vmatprep.subr.bf16.mxu0 %v2408
      %2729 = vmatpush1.bf16.msra.mxu0 %v2407
      %2730 = vmatprep.subr.bf16.mxu0 %v2410
      %2731 = vmatpush1.bf16.msra.mxu0 %v2409
      %2732 = vmatprep.mubr.bf16.mxu0 %v784
      %2733 = vmatmul.mubr.bf16.gmra.mrb[0].mxu0 %v783
      %v2734 = vpop.f32.mrb[0].mxu0
      %v2735 = vadd.f32 %v2662, %v2734
      %v2736 = vpop.f32.mrb[0].mxu0
      %v2737 = vadd.f32 %v2664, %v2736
      %v2738 = vpop.f32.mrb[0].mxu0
      %v2739 = vadd.f32 %v2666, %v2738
      %v2740 = vpop.f32.mrb[0].mxu0
      %v2741 = vadd.f32 %v2668, %v2740
      %2742 = vmatprep.mubr.bf16.mxu0 %v793
      %2743 = vmatmul.mubr.bf16.gmra.mrb[0].mxu0 %v792
      %v2744 = vpop.f32.mrb[0].mxu0
      %v2745 = vadd.f32 %v2672, %v2744
      %v2746 = vpop.f32.mrb[0].mxu0
      %v2747 = vadd.f32 %v2674, %v2746
      %v2748 = vpop.f32.mrb[0].mxu0
      %v2749 = vadd.f32 %v2676, %v2748
      %v2750 = vpop.f32.mrb[0].mxu0
      %v2751 = vadd.f32 %v2678, %v2750
      %2752 = vmatprep.mubr.bf16.mxu0 %v802
      %2753 = vmatmul.mubr.bf16.gmra.mrb[0].mxu0 %v801
      %v2754 = vpop.f32.mrb[0].mxu0
      %v2755 = vadd.f32 %v2682, %v2754
      %v2756 = vpop.f32.mrb[0].mxu0
      %v2757 = vadd.f32 %v2684, %v2756
      %v2758 = vpop.f32.mrb[0].mxu0
      %v2759 = vadd.f32 %v2686, %v2758
      %v2760 = vpop.f32.mrb[0].mxu0
      %v2761 = vadd.f32 %v2688, %v2760
      %2762 = vmatprep.mubr.bf16.mxu0 %v811
      %2763 = vmatmul.mubr.bf16.gmra.mrb[0].mxu0 %v810
      %v2764 = vpop.f32.mrb[0].mxu0
      %v2765 = vadd.f32 %v2692, %v2764
      %v2766 = vpop.f32.mrb[0].mxu0
      %v2767 = vadd.f32 %v2694, %v2766
      %v2768 = vpop.f32.mrb[0].mxu0
      %v2769 = vadd.f32 %v2696, %v2768
      %v2770 = vpop.f32.mrb[0].mxu0
      %v2771 = vadd.f32 %v2698, %v2770
      %2772 = vdwg.mxu0
      %2773 = vmatprep.subr.bf16.mxu0 %v2412
      %2774 = vmatpush1.bf16.msra.mxu0 %v2411
      %2775 = vmatprep.subr.bf16.mxu0 %v2414
      %2776 = vmatpush1.bf16.msra.mxu0 %v2413
      %2777 = vmatprep.subr.bf16.mxu0 %v2416
      %2778 = vmatpush1.bf16.msra.mxu0 %v2415
      %2779 = vmatprep.subr.bf16.mxu0 %v2418
      %2780 = vmatpush1.bf16.msra.mxu0 %v2417
      %2781 = vmatprep.subr.bf16.mxu0 %v2420
      %2782 = vmatpush1.bf16.msra.mxu0 %v2419
      %2783 = vmatprep.subr.bf16.mxu0 %v2422
      %2784 = vmatpush1.bf16.msra.mxu0 %v2421
      %2785 = vmatprep.subr.bf16.mxu0 %v2424
      %2786 = vmatpush1.bf16.msra.mxu0 %v2423
      %2787 = vmatprep.subr.bf16.mxu0 %v2426
      %2788 = vmatpush1.bf16.msra.mxu0 %v2425
      %2789 = vmatprep.subr.bf16.mxu0 %v2428
      %2790 = vmatpush1.bf16.msra.mxu0 %v2427
      %2791 = vmatprep.subr.bf16.mxu0 %v2430
      %2792 = vmatpush1.bf16.msra.mxu0 %v2429
      %2793 = vmatprep.subr.bf16.mxu0 %v2432
      %2794 = vmatpush1.bf16.msra.mxu0 %v2431
      %2795 = vmatprep.subr.bf16.mxu0 %v2434
      %2796 = vmatpush1.bf16.msra.mxu0 %v2433
      %2797 = vmatprep.subr.bf16.mxu0 %v2436
      %2798 = vmatpush1.bf16.msra.mxu0 %v2435
      %2799 = vmatprep.subr.bf16.mxu0 %v2438
      %2800 = vmatpush1.bf16.msra.mxu0 %v2437
      %2801 = vmatprep.subr.bf16.mxu0 %v2440
      %2802 = vmatpush1.bf16.msra.mxu0 %v2439
      %2803 = vmatprep.subr.bf16.mxu0 %v2442
      %2804 = vmatpush1.bf16.msra.mxu0 %v2441
      %2805 = vmatprep.mubr.bf16.mxu0 %v786
      %2806 = vmatmul.mubr.bf16.gmra.mrb[0].mxu0 %v785
      %v2807 = vpop.f32.mrb[0].mxu0
      %v2808 = vadd.f32 %v2735, %v2807
      %v2809 = vpop.f32.mrb[0].mxu0
      %v2810 = vadd.f32 %v2737, %v2809
      %v2811 = vpop.f32.mrb[0].mxu0
      %v2812 = vadd.f32 %v2739, %v2811
      %v2813 = vpop.f32.mrb[0].mxu0
      %v2814 = vadd.f32 %v2741, %v2813
      %2815 = vmatprep.mubr.bf16.mxu0 %v795
      %2816 = vmatmul.mubr.bf16.gmra.mrb[0].mxu0 %v794
      %v2817 = vpop.f32.mrb[0].mxu0
      %v2818 = vadd.f32 %v2745, %v2817
      %v2819 = vpop.f32.mrb[0].mxu0
      %v2820 = vadd.f32 %v2747, %v2819
      %v2821 = vpop.f32.mrb[0].mxu0
      %v2822 = vadd.f32 %v2749, %v2821
      %v2823 = vpop.f32.mrb[0].mxu0
      %v2824 = vadd.f32 %v2751, %v2823
      %2825 = vmatprep.mubr.bf16.mxu0 %v804
      %2826 = vmatmul.mubr.bf16.gmra.mrb[0].mxu0 %v803
      %v2827 = vpop.f32.mrb[0].mxu0
      %v2828 = vadd.f32 %v2755, %v2827
      %v2829 = vpop.f32.mrb[0].mxu0
      %v2830 = vadd.f32 %v2757, %v2829
      %v2831 = vpop.f32.mrb[0].mxu0
      %v2832 = vadd.f32 %v2759, %v2831
      %v2833 = vpop.f32.mrb[0].mxu0
      %v2834 = vadd.f32 %v2761, %v2833
      %2835 = vmatprep.mubr.bf16.mxu0 %v813
      %2836 = vmatmul.mubr.bf16.gmra.mrb[0].mxu0 %v812
      %v2837 = vpop.f32.mrb[0].mxu0
      %v2838 = vadd.f32 %v2765, %v2837
      %v2839 = vpop.f32.mrb[0].mxu0
      %v2840 = vadd.f32 %v2767, %v2839
      %v2841 = vpop.f32.mrb[0].mxu0
      %v2842 = vadd.f32 %v2769, %v2841
      %v2843 = vpop.f32.mrb[0].mxu0
      %v2844 = vadd.f32 %v2771, %v2843
      %2845 = vdwg.mxu0
      %2846 = vmatprep.subr.bf16.mxu0 %v2444
      %2847 = vmatpush1.bf16.msra.mxu0 %v2443
      %2848 = vmatprep.subr.bf16.mxu0 %v2446
      %2849 = vmatpush1.bf16.msra.mxu0 %v2445
      %2850 = vmatprep.subr.bf16.mxu0 %v2448
      %2851 = vmatpush1.bf16.msra.mxu0 %v2447
      %2852 = vmatprep.subr.bf16.mxu0 %v2450
      %2853 = vmatpush1.bf16.msra.mxu0 %v2449
      %2854 = vmatprep.subr.bf16.mxu0 %v2452
      %2855 = vmatpush1.bf16.msra.mxu0 %v2451
      %2856 = vmatprep.subr.bf16.mxu0 %v2454
      %2857 = vmatpush1.bf16.msra.mxu0 %v2453
      %2858 = vmatprep.subr.bf16.mxu0 %v2456
      %2859 = vmatpush1.bf16.msra.mxu0 %v2455
      %2860 = vmatprep.subr.bf16.mxu0 %v2458
      %2861 = vmatpush1.bf16.msra.mxu0 %v2457
      %2862 = vmatprep.subr.bf16.mxu0 %v2460
      %2863 = vmatpush1.bf16.msra.mxu0 %v2459
      %2864 = vmatprep.subr.bf16.mxu0 %v2462
      %2865 = vmatpush1.bf16.msra.mxu0 %v2461
      %2866 = vmatprep.subr.bf16.mxu0 %v2464
      %2867 = vmatpush1.bf16.msra.mxu0 %v2463
      %2868 = vmatprep.subr.bf16.mxu0 %v2466
      %2869 = vmatpush1.bf16.msra.mxu0 %v2465
      %2870 = vmatprep.subr.bf16.mxu0 %v2468
      %2871 = vmatpush1.bf16.msra.mxu0 %v2467
      %2872 = vmatprep.subr.bf16.mxu0 %v2470
      %2873 = vmatpush1.bf16.msra.mxu0 %v2469
      %2874 = vmatprep.subr.bf16.mxu0 %v2472
      %2875 = vmatpush1.bf16.msra.mxu0 %v2471
      %2876 = vmatprep.subr.bf16.mxu0 %v2474
      %2877 = vmatpush1.bf16.msra.mxu0 %v2473
      %2878 = vmatprep.mubr.bf16.mxu0 %v788
      %2879 = vmatmul.mubr.bf16.gmra.mrb[0].mxu0 %v787
      %v2880 = vpop.f32.mrb[0].mxu0
      %v2881 = vadd.f32 %v2808, %v2880
      %v2882 = vpop.f32.mrb[0].mxu0
      %v2883 = vadd.f32 %v2810, %v2882
      %v2884 = vpop.f32.mrb[0].mxu0
      %v2885 = vadd.f32 %v2812, %v2884
      %v2886 = vpop.f32.mrb[0].mxu0
      %v2887 = vadd.f32 %v2814, %v2886
      %2888 = vmatprep.mubr.bf16.mxu0 %v797
      %2889 = vmatmul.mubr.bf16.gmra.mrb[0].mxu0 %v796
      %v2890 = vpop.f32.mrb[0].mxu0
      %v2891 = vadd.f32 %v2818, %v2890
      %v2892 = vpop.f32.mrb[0].mxu0
      %v2893 = vadd.f32 %v2820, %v2892
      %v2894 = vpop.f32.mrb[0].mxu0
      %v2895 = vadd.f32 %v2822, %v2894
      %v2896 = vpop.f32.mrb[0].mxu0
      %v2897 = vadd.f32 %v2824, %v2896
      %2898 = vmatprep.mubr.bf16.mxu0 %v806
      %2899 = vmatmul.mubr.bf16.gmra.mrb[0].mxu0 %v805
      %v2900 = vpop.f32.mrb[0].mxu0
      %v2901 = vadd.f32 %v2828, %v2900
      %v2902 = vpop.f32.mrb[0].mxu0
      %v2903 = vadd.f32 %v2830, %v2902
      %v2904 = vpop.f32.mrb[0].mxu0
      %v2905 = vadd.f32 %v2832, %v2904
      %v2906 = vpop.f32.mrb[0].mxu0
      %v2907 = vadd.f32 %v2834, %v2906
      %2908 = vmatprep.mubr.bf16.mxu0 %v815
      %2909 = vmatmul.mubr.bf16.gmra.mrb[0].mxu0 %v814
      %v2910 = vpop.f32.mrb[0].mxu0
      %v2911 = vadd.f32 %v2838, %v2910
      %v2912 = vpop.f32.mrb[0].mxu0
      %v2913 = vadd.f32 %v2840, %v2912
      %v2914 = vpop.f32.mrb[0].mxu0
      %v2915 = vadd.f32 %v2842, %v2914
      %v2916 = vpop.f32.mrb[0].mxu0
      %v2917 = vadd.f32 %v2844, %v2916
      %2918 = vdwg.mxu0
      %2919 = vmatprep.subr.bf16.mxu0 %v2476
      %2920 = vmatpush1.bf16.msra.mxu0 %v2475
      %2921 = vmatprep.subr.bf16.mxu0 %v2478
      %2922 = vmatpush1.bf16.msra.mxu0 %v2477
      %2923 = vmatprep.subr.bf16.mxu0 %v2480
      %2924 = vmatpush1.bf16.msra.mxu0 %v2479
      %2925 = vmatprep.subr.bf16.mxu0 %v2482
      %2926 = vmatpush1.bf16.msra.mxu0 %v2481
      %2927 = vmatprep.subr.bf16.mxu0 %v2484
      %2928 = vmatpush1.bf16.msra.mxu0 %v2483
      %2929 = vmatprep.subr.bf16.mxu0 %v2486
      %2930 = vmatpush1.bf16.msra.mxu0 %v2485
      %2931 = vmatprep.subr.bf16.mxu0 0
      %2932 = vmatpush1.bf16.msra.mxu0 0
      %2933 = vmatprep.subr.bf16.mxu0 0
      %2934 = vmatpush1.bf16.msra.mxu0 0
      %2935 = vmatprep.subr.bf16.mxu0 0
      %2936 = vmatpush1.bf16.msra.mxu0 0
      %2937 = vmatprep.subr.bf16.mxu0 0
      %2938 = vmatpush1.bf16.msra.mxu0 0
      %2939 = vmatprep.subr.bf16.mxu0 0
      %2940 = vmatpush1.bf16.msra.mxu0 0
      %2941 = vmatprep.subr.bf16.mxu0 0
      %2942 = vmatpush1.bf16.msra.mxu0 0
      %2943 = vmatprep.subr.bf16.mxu0 0
      %2944 = vmatpush1.bf16.msra.mxu0 0
      %2945 = vmatprep.subr.bf16.mxu0 0
      %2946 = vmatpush1.bf16.msra.mxu0 0
      %2947 = vmatprep.subr.bf16.mxu0 0
      %2948 = vmatpush1.bf16.msra.mxu0 0
      %2949 = vmatprep.subr.bf16.mxu0 0
      %2950 = vmatpush1.bf16.msra.mxu0 0
      %2951 = vmatprep.mubr.bf16.mxu0 0
      %2952 = vmatmul.mubr.bf16.gmra.mrb[0].mxu0 %v1551
      %v2953 = vpop.f32.mrb[0].mxu0
      %v2954 = vadd.f32 %v2881, %v2953
      %v2955 = vpop.f32.mrb[0].mxu0
      %v2956 = vadd.f32 %v2883, %v2955
      %v2957 = vpop.f32.mrb[0].mxu0
      %v2958 = vadd.f32 %v2885, %v2957
      %v2959 = vpop.f32.mrb[0].mxu0
      %v2960 = vadd.f32 %v2887, %v2959
      %2961 = vmatprep.mubr.bf16.mxu0 0
      %2962 = vmatmul.mubr.bf16.gmra.mrb[0].mxu0 %v1554
      %v2963 = vpop.f32.mrb[0].mxu0
      %v2964 = vadd.f32 %v2891, %v2963
      %v2965 = vpop.f32.mrb[0].mxu0
      %v2966 = vadd.f32 %v2893, %v2965
      %v2967 = vpop.f32.mrb[0].mxu0
      %v2968 = vadd.f32 %v2895, %v2967
      %v2969 = vpop.f32.mrb[0].mxu0
      %v2970 = vadd.f32 %v2897, %v2969
      %2971 = vmatprep.mubr.bf16.mxu0 0
      %2972 = vmatmul.mubr.bf16.gmra.mrb[0].mxu0 %v1557
      %v2973 = vpop.f32.mrb[0].mxu0
      %v2974 = vadd.f32 %v2901, %v2973
      %v2975 = vpop.f32.mrb[0].mxu0
      %v2976 = vadd.f32 %v2903, %v2975
      %v2977 = vpop.f32.mrb[0].mxu0
      %v2978 = vadd.f32 %v2905, %v2977
      %v2979 = vpop.f32.mrb[0].mxu0
      %v2980 = vadd.f32 %v2907, %v2979
      %2981 = vmatprep.mubr.bf16.mxu0 0
      %2982 = vmatmul.mubr.bf16.gmra.mrb[0].mxu0 %v1560
      %v2983 = vpop.f32.mrb[0].mxu0
      %v2984 = vadd.f32 %v2911, %v2983
      %v2985 = vpop.f32.mrb[0].mxu0
      %v2986 = vadd.f32 %v2913, %v2985
      %v2987 = vpop.f32.mrb[0].mxu0
      %v2988 = vadd.f32 %v2915, %v2987
      %v2989 = vpop.f32.mrb[0].mxu0
      %v2990 = vadd.f32 %v2917, %v2989
      %2991 = vdwg.mxu0
      %v3032 = vunpack.c.l.b16 %v349
      %v3033 = vunpack.c.h.b16 %v349
      %v3034 = vunpack.c.l.b16 %v350
      %v3035 = vunpack.c.h.b16 %v350
      %v3036 = vunpack.c.l.b16 %v351
      %v3037 = vunpack.c.h.b16 %v351
      %v3038 = vunpack.c.l.b16 %v352
      %v3039 = vunpack.c.h.b16 %v352
      %v3040 = vunpack.c.l.b16 %v353
      %v3041 = vunpack.c.l.b16 %v354
      %v3042 = vunpack.c.h.b16 %v354
      %v3043 = vunpack.c.l.b16 %v355
      %v3044 = vunpack.c.h.b16 %v355
      %v3045 = vunpack.c.l.b16 %v356
      %v3046 = vunpack.c.h.b16 %v356
      %v3047 = vunpack.c.l.b16 %v357
      %v3048 = vunpack.c.h.b16 %v357
      %v3049 = vunpack.c.l.b16 %v358
      %v3050 = vunpack.c.l.b16 %v359
      %v3051 = vunpack.c.h.b16 %v359
      %v3052 = vunpack.c.l.b16 %v360
      %v3053 = vunpack.c.h.b16 %v360
      %v3054 = vunpack.c.l.b16 %v361
      %v3055 = vunpack.c.h.b16 %v361
      %v3056 = vunpack.c.l.b16 %v362
      %v3057 = vunpack.c.h.b16 %v362
      %v3058 = vunpack.c.l.b16 %v363
      %v3059 = vunpack.c.l.b16 %v364
      %v3060 = vunpack.c.h.b16 %v364
      %v3061 = vunpack.c.l.b16 %v365
      %v3062 = vunpack.c.h.b16 %v365
      %v3063 = vunpack.c.l.b16 %v366
      %v3064 = vunpack.c.h.b16 %v366
      %v3065 = vunpack.c.l.b16 %v367
      %v3066 = vunpack.c.h.b16 %v367
      %v3067 = vunpack.c.l.b16 %v368
      %v3068 = vunpack.c.l.b16 %v369
      %v3069 = vunpack.c.h.b16 %v369
      %v3070 = vunpack.c.l.b16 %v370
      %v3071 = vunpack.c.h.b16 %v370
      %v3072 = vunpack.c.l.b16 %v371
      %v3073 = vunpack.c.h.b16 %v371
      %v3074 = vunpack.c.l.b16 %v372
      %v3075 = vunpack.c.h.b16 %v372
      %v3076 = vunpack.c.l.b16 %v373
      %v3077 = vunpack.c.l.b16 %v374
      %v3078 = vunpack.c.h.b16 %v374
      %v3079 = vunpack.c.l.b16 %v375
      %v3080 = vunpack.c.h.b16 %v375
      %v3081 = vunpack.c.l.b16 %v376
      %v3082 = vunpack.c.h.b16 %v376
      %v3083 = vunpack.c.l.b16 %v377
      %v3084 = vunpack.c.h.b16 %v377
      %v3085 = vunpack.c.l.b16 %v378
      %v3086 = vunpack.c.l.b16 %v379
      %v3087 = vunpack.c.h.b16 %v379
      %v3088 = vunpack.c.l.b16 %v380
      %v3089 = vunpack.c.h.b16 %v380
      %v3090 = vunpack.c.l.b16 %v381
      %v3091 = vunpack.c.h.b16 %v381
      %v3092 = vunpack.c.l.b16 %v382
      %v3093 = vunpack.c.h.b16 %v382
      %v3094 = vunpack.c.l.b16 %v383
      %v3095 = vunpack.c.l.b16 %v384
      %v3096 = vunpack.c.h.b16 %v384
      %v3097 = vunpack.c.l.b16 %v385
      %v3098 = vunpack.c.h.b16 %v385
      %v3099 = vunpack.c.l.b16 %v386
      %v3100 = vunpack.c.h.b16 %v386
      %v3101 = vunpack.c.l.b16 %v387
      %v3102 = vunpack.c.h.b16 %v387
      %v3103 = vunpack.c.l.b16 %v388
      %v3104 = vpack.c.b16 %v3041, %v3032
      %v3105 = vpack.c.b16 %v3042, %v3033
      %v3106 = vpack.c.b16 %v3043, %v3034
      %v3107 = vpack.c.b16 %v3044, %v3035
      %v3108 = vpack.c.b16 %v3045, %v3036
      %v3109 = vpack.c.b16 %v3046, %v3037
      %v3110 = vpack.c.b16 %v3047, %v3038
      %v3111 = vpack.c.b16 %v3048, %v3039
      %v3112 = vpack.c.b16 %v3049, %v3040
      %v3113 = vpack.c.b16 %v3059, %v3050
      %v3114 = vpack.c.b16 %v3060, %v3051
      %v3115 = vpack.c.b16 %v3061, %v3052
      %v3116 = vpack.c.b16 %v3062, %v3053
      %v3117 = vpack.c.b16 %v3063, %v3054
      %v3118 = vpack.c.b16 %v3064, %v3055
      %v3119 = vpack.c.b16 %v3065, %v3056
      %v3120 = vpack.c.b16 %v3066, %v3057
      %v3121 = vpack.c.b16 %v3067, %v3058
      %v3122 = vpack.c.b16 %v3077, %v3068
      %v3123 = vpack.c.b16 %v3078, %v3069
      %v3124 = vpack.c.b16 %v3079, %v3070
      %v3125 = vpack.c.b16 %v3080, %v3071
      %v3126 = vpack.c.b16 %v3081, %v3072
      %v3127 = vpack.c.b16 %v3082, %v3073
      %v3128 = vpack.c.b16 %v3083, %v3074
      %v3129 = vpack.c.b16 %v3084, %v3075
      %v3130 = vpack.c.b16 %v3085, %v3076
      %v3131 = vpack.c.b16 %v3095, %v3086
      %v3132 = vpack.c.b16 %v3096, %v3087
      %v3133 = vpack.c.b16 %v3097, %v3088
      %v3134 = vpack.c.b16 %v3098, %v3089
      %v3135 = vpack.c.b16 %v3099, %v3090
      %v3136 = vpack.c.b16 %v3100, %v3091
      %v3137 = vpack.c.b16 %v3101, %v3092
      %v3138 = vpack.c.b16 %v3102, %v3093
      %v3139 = vpack.c.b16 %v3103, %v3094
      %v3173 = vsel %vm1549, %v3112, 0
      %v3176 = vsel %vm1549, %v3121, 0
      %v3179 = vsel %vm1549, %v3130, 0
      %v3182 = vsel %vm1549, %v3139, 0
      %3184 = vmatprep.subr.bf16.mxu0 %v1270
      %3185 = vmatpush1.bf16.msra.mxu0 %v1269
      %3186 = vmatprep.subr.bf16.mxu0 %v1272
      %3187 = vmatpush1.bf16.msra.mxu0 %v1271
      %3188 = vmatprep.subr.bf16.mxu0 %v1274
      %3189 = vmatpush1.bf16.msra.mxu0 %v1273
      %3190 = vmatprep.subr.bf16.mxu0 %v1276
      %3191 = vmatpush1.bf16.msra.mxu0 %v1275
      %3192 = vmatprep.subr.bf16.mxu0 %v1278
      %3193 = vmatpush1.bf16.msra.mxu0 %v1277
      %3194 = vmatprep.subr.bf16.mxu0 %v1280
      %3195 = vmatpush1.bf16.msra.mxu0 %v1279
      %3196 = vmatprep.subr.bf16.mxu0 %v1282
      %3197 = vmatpush1.bf16.msra.mxu0 %v1281
      %3198 = vmatprep.subr.bf16.mxu0 %v1284
      %3199 = vmatpush1.bf16.msra.mxu0 %v1283
      %3200 = vmatprep.subr.bf16.mxu0 %v1286
      %3201 = vmatpush1.bf16.msra.mxu0 %v1285
      %3202 = vmatprep.subr.bf16.mxu0 %v1288
      %3203 = vmatpush1.bf16.msra.mxu0 %v1287
      %3204 = vmatprep.subr.bf16.mxu0 %v1290
      %3205 = vmatpush1.bf16.msra.mxu0 %v1289
      %3206 = vmatprep.subr.bf16.mxu0 %v1292
      %3207 = vmatpush1.bf16.msra.mxu0 %v1291
      %3208 = vmatprep.subr.bf16.mxu0 %v1294
      %3209 = vmatpush1.bf16.msra.mxu0 %v1293
      %3210 = vmatprep.subr.bf16.mxu0 %v1296
      %3211 = vmatpush1.bf16.msra.mxu0 %v1295
      %3212 = vmatprep.subr.bf16.mxu0 %v1298
      %3213 = vmatpush1.bf16.msra.mxu0 %v1297
      %3214 = vmatprep.subr.bf16.mxu0 %v1300
      %3215 = vmatpush1.bf16.msra.mxu0 %v1299
      %3216 = vmatprep.mubr.bf16.mxu0 %v3105
      %3217 = vmatmul.mubr.bf16.gmra.mrb[0].mxu0 %v3104
      %v3218 = vpop.f32.mrb[0].mxu0
      %v3219 = vadd.f32 0.0, %v3218
      %v3220 = vpop.f32.mrb[0].mxu0
      %v3221 = vadd.f32 0.0, %v3220
      %v3222 = vpop.f32.mrb[0].mxu0
      %v3223 = vadd.f32 0.0, %v3222
      %v3224 = vpop.f32.mrb[0].mxu0
      %v3225 = vadd.f32 0.0, %v3224
      %3226 = vmatprep.mubr.bf16.mxu0 %v3114
      %3227 = vmatmul.mubr.bf16.gmra.mrb[0].mxu0 %v3113
      %v3228 = vpop.f32.mrb[0].mxu0
      %v3229 = vadd.f32 0.0, %v3228
      %v3230 = vpop.f32.mrb[0].mxu0
      %v3231 = vadd.f32 0.0, %v3230
      %v3232 = vpop.f32.mrb[0].mxu0
      %v3233 = vadd.f32 0.0, %v3232
      %v3234 = vpop.f32.mrb[0].mxu0
      %v3235 = vadd.f32 0.0, %v3234
      %3236 = vmatprep.mubr.bf16.mxu0 %v3123
      %3237 = vmatmul.mubr.bf16.gmra.mrb[0].mxu0 %v3122
      %v3238 = vpop.f32.mrb[0].mxu0
      %v3239 = vadd.f32 0.0, %v3238
      %v3240 = vpop.f32.mrb[0].mxu0
      %v3241 = vadd.f32 0.0, %v3240
      %v3242 = vpop.f32.mrb[0].mxu0
      %v3243 = vadd.f32 0.0, %v3242
      %v3244 = vpop.f32.mrb[0].mxu0
      %v3245 = vadd.f32 0.0, %v3244
      %3246 = vmatprep.mubr.bf16.mxu0 %v3132
      %3247 = vmatmul.mubr.bf16.gmra.mrb[0].mxu0 %v3131
      %v3248 = vpop.f32.mrb[0].mxu0
      %v3249 = vadd.f32 0.0, %v3248
      %v3250 = vpop.f32.mrb[0].mxu0
      %v3251 = vadd.f32 0.0, %v3250
      %v3252 = vpop.f32.mrb[0].mxu0
      %v3253 = vadd.f32 0.0, %v3252
      %v3254 = vpop.f32.mrb[0].mxu0
      %v3255 = vadd.f32 0.0, %v3254
      %3256 = vdwg.mxu0
      %3257 = vmatprep.subr.bf16.mxu0 %v1302
      %3258 = vmatpush1.bf16.msra.mxu0 %v1301
      %3259 = vmatprep.subr.bf16.mxu0 %v1304
      %3260 = vmatpush1.bf16.msra.mxu0 %v1303
      %3261 = vmatprep.subr.bf16.mxu0 %v1306
      %3262 = vmatpush1.bf16.msra.mxu0 %v1305
      %3263 = vmatprep.subr.bf16.mxu0 %v1308
      %3264 = vmatpush1.bf16.msra.mxu0 %v1307
      %3265 = vmatprep.subr.bf16.mxu0 %v1310
      %3266 = vmatpush1.bf16.msra.mxu0 %v1309
      %3267 = vmatprep.subr.bf16.mxu0 %v1312
      %3268 = vmatpush1.bf16.msra.mxu0 %v1311
      %3269 = vmatprep.subr.bf16.mxu0 %v1314
      %3270 = vmatpush1.bf16.msra.mxu0 %v1313
      %3271 = vmatprep.subr.bf16.mxu0 %v1316
      %3272 = vmatpush1.bf16.msra.mxu0 %v1315
      %3273 = vmatprep.subr.bf16.mxu0 %v1318
      %3274 = vmatpush1.bf16.msra.mxu0 %v1317
      %3275 = vmatprep.subr.bf16.mxu0 %v1320
      %3276 = vmatpush1.bf16.msra.mxu0 %v1319
      %3277 = vmatprep.subr.bf16.mxu0 %v1322
      %3278 = vmatpush1.bf16.msra.mxu0 %v1321
      %3279 = vmatprep.subr.bf16.mxu0 %v1324
      %3280 = vmatpush1.bf16.msra.mxu0 %v1323
      %3281 = vmatprep.subr.bf16.mxu0 %v1326
      %3282 = vmatpush1.bf16.msra.mxu0 %v1325
      %3283 = vmatprep.subr.bf16.mxu0 %v1328
      %3284 = vmatpush1.bf16.msra.mxu0 %v1327
      %3285 = vmatprep.subr.bf16.mxu0 %v1330
      %3286 = vmatpush1.bf16.msra.mxu0 %v1329
      %3287 = vmatprep.subr.bf16.mxu0 %v1332
      %3288 = vmatpush1.bf16.msra.mxu0 %v1331
      %3289 = vmatprep.mubr.bf16.mxu0 %v3107
      %3290 = vmatmul.mubr.bf16.gmra.mrb[0].mxu0 %v3106
      %v3291 = vpop.f32.mrb[0].mxu0
      %v3292 = vadd.f32 %v3219, %v3291
      %v3293 = vpop.f32.mrb[0].mxu0
      %v3294 = vadd.f32 %v3221, %v3293
      %v3295 = vpop.f32.mrb[0].mxu0
      %v3296 = vadd.f32 %v3223, %v3295
      %v3297 = vpop.f32.mrb[0].mxu0
      %v3298 = vadd.f32 %v3225, %v3297
      %3299 = vmatprep.mubr.bf16.mxu0 %v3116
      %3300 = vmatmul.mubr.bf16.gmra.mrb[0].mxu0 %v3115
      %v3301 = vpop.f32.mrb[0].mxu0
      %v3302 = vadd.f32 %v3229, %v3301
      %v3303 = vpop.f32.mrb[0].mxu0
      %v3304 = vadd.f32 %v3231, %v3303
      %v3305 = vpop.f32.mrb[0].mxu0
      %v3306 = vadd.f32 %v3233, %v3305
      %v3307 = vpop.f32.mrb[0].mxu0
      %v3308 = vadd.f32 %v3235, %v3307
      %3309 = vmatprep.mubr.bf16.mxu0 %v3125
      %3310 = vmatmul.mubr.bf16.gmra.mrb[0].mxu0 %v3124
      %v3311 = vpop.f32.mrb[0].mxu0
      %v3312 = vadd.f32 %v3239, %v3311
      %v3313 = vpop.f32.mrb[0].mxu0
      %v3314 = vadd.f32 %v3241, %v3313
      %v3315 = vpop.f32.mrb[0].mxu0
      %v3316 = vadd.f32 %v3243, %v3315
      %v3317 = vpop.f32.mrb[0].mxu0
      %v3318 = vadd.f32 %v3245, %v3317
      %3319 = vmatprep.mubr.bf16.mxu0 %v3134
      %3320 = vmatmul.mubr.bf16.gmra.mrb[0].mxu0 %v3133
      %v3321 = vpop.f32.mrb[0].mxu0
      %v3322 = vadd.f32 %v3249, %v3321
      %v3323 = vpop.f32.mrb[0].mxu0
      %v3324 = vadd.f32 %v3251, %v3323
      %v3325 = vpop.f32.mrb[0].mxu0
      %v3326 = vadd.f32 %v3253, %v3325
      %v3327 = vpop.f32.mrb[0].mxu0
      %v3328 = vadd.f32 %v3255, %v3327
      %3329 = vdwg.mxu0
      %3330 = vmatprep.subr.bf16.mxu0 %v1334
      %3331 = vmatpush1.bf16.msra.mxu0 %v1333
      %3332 = vmatprep.subr.bf16.mxu0 %v1336
      %3333 = vmatpush1.bf16.msra.mxu0 %v1335
      %3334 = vmatprep.subr.bf16.mxu0 %v1338
      %3335 = vmatpush1.bf16.msra.mxu0 %v1337
      %3336 = vmatprep.subr.bf16.mxu0 %v1340
      %3337 = vmatpush1.bf16.msra.mxu0 %v1339
      %3338 = vmatprep.subr.bf16.mxu0 %v1342
      %3339 = vmatpush1.bf16.msra.mxu0 %v1341
      %3340 = vmatprep.subr.bf16.mxu0 %v1344
      %3341 = vmatpush1.bf16.msra.mxu0 %v1343
      %3342 = vmatprep.subr.bf16.mxu0 %v1346
      %3343 = vmatpush1.bf16.msra.mxu0 %v1345
      %3344 = vmatprep.subr.bf16.mxu0 %v1348
      %3345 = vmatpush1.bf16.msra.mxu0 %v1347
      %3346 = vmatprep.subr.bf16.mxu0 %v1350
      %3347 = vmatpush1.bf16.msra.mxu0 %v1349
      %3348 = vmatprep.subr.bf16.mxu0 %v1352
      %3349 = vmatpush1.bf16.msra.mxu0 %v1351
      %3350 = vmatprep.subr.bf16.mxu0 %v1354
      %3351 = vmatpush1.bf16.msra.mxu0 %v1353
      %3352 = vmatprep.subr.bf16.mxu0 %v1356
      %3353 = vmatpush1.bf16.msra.mxu0 %v1355
      %3354 = vmatprep.subr.bf16.mxu0 %v1358
      %3355 = vmatpush1.bf16.msra.mxu0 %v1357
      %3356 = vmatprep.subr.bf16.mxu0 %v1360
      %3357 = vmatpush1.bf16.msra.mxu0 %v1359
      %3358 = vmatprep.subr.bf16.mxu0 %v1362
      %3359 = vmatpush1.bf16.msra.mxu0 %v1361
      %3360 = vmatprep.subr.bf16.mxu0 %v1364
      %3361 = vmatpush1.bf16.msra.mxu0 %v1363
      %3362 = vmatprep.mubr.bf16.mxu0 %v3109
      %3363 = vmatmul.mubr.bf16.gmra.mrb[0].mxu0 %v3108
      %v3364 = vpop.f32.mrb[0].mxu0
      %v3365 = vadd.f32 %v3292, %v3364
      %v3366 = vpop.f32.mrb[0].mxu0
      %v3367 = vadd.f32 %v3294, %v3366
      %v3368 = vpop.f32.mrb[0].mxu0
      %v3369 = vadd.f32 %v3296, %v3368
      %v3370 = vpop.f32.mrb[0].mxu0
      %v3371 = vadd.f32 %v3298, %v3370
      %3372 = vmatprep.mubr.bf16.mxu0 %v3118
      %3373 = vmatmul.mubr.bf16.gmra.mrb[0].mxu0 %v3117
      %v3374 = vpop.f32.mrb[0].mxu0
      %v3375 = vadd.f32 %v3302, %v3374
      %v3376 = vpop.f32.mrb[0].mxu0
      %v3377 = vadd.f32 %v3304, %v3376
      %v3378 = vpop.f32.mrb[0].mxu0
      %v3379 = vadd.f32 %v3306, %v3378
      %v3380 = vpop.f32.mrb[0].mxu0
      %v3381 = vadd.f32 %v3308, %v3380
      %3382 = vmatprep.mubr.bf16.mxu0 %v3127
      %3383 = vmatmul.mubr.bf16.gmra.mrb[0].mxu0 %v3126
      %v3384 = vpop.f32.mrb[0].mxu0
      %v3385 = vadd.f32 %v3312, %v3384
      %v3386 = vpop.f32.mrb[0].mxu0
      %v3387 = vadd.f32 %v3314, %v3386
      %v3388 = vpop.f32.mrb[0].mxu0
      %v3389 = vadd.f32 %v3316, %v3388
      %v3390 = vpop.f32.mrb[0].mxu0
      %v3391 = vadd.f32 %v3318, %v3390
      %3392 = vmatprep.mubr.bf16.mxu0 %v3136
      %3393 = vmatmul.mubr.bf16.gmra.mrb[0].mxu0 %v3135
      %v3394 = vpop.f32.mrb[0].mxu0
      %v3395 = vadd.f32 %v3322, %v3394
      %v3396 = vpop.f32.mrb[0].mxu0
      %v3397 = vadd.f32 %v3324, %v3396
      %v3398 = vpop.f32.mrb[0].mxu0
      %v3399 = vadd.f32 %v3326, %v3398
      %v3400 = vpop.f32.mrb[0].mxu0
      %v3401 = vadd.f32 %v3328, %v3400
      %3402 = vdwg.mxu0
      %3403 = vmatprep.subr.bf16.mxu0 %v1366
      %3404 = vmatpush1.bf16.msra.mxu0 %v1365
      %3405 = vmatprep.subr.bf16.mxu0 %v1368
      %3406 = vmatpush1.bf16.msra.mxu0 %v1367
      %3407 = vmatprep.subr.bf16.mxu0 %v1370
      %3408 = vmatpush1.bf16.msra.mxu0 %v1369
      %3409 = vmatprep.subr.bf16.mxu0 %v1372
      %3410 = vmatpush1.bf16.msra.mxu0 %v1371
      %3411 = vmatprep.subr.bf16.mxu0 %v1374
      %3412 = vmatpush1.bf16.msra.mxu0 %v1373
      %3413 = vmatprep.subr.bf16.mxu0 %v1376
      %3414 = vmatpush1.bf16.msra.mxu0 %v1375
      %3415 = vmatprep.subr.bf16.mxu0 %v1378
      %3416 = vmatpush1.bf16.msra.mxu0 %v1377
      %3417 = vmatprep.subr.bf16.mxu0 %v1380
      %3418 = vmatpush1.bf16.msra.mxu0 %v1379
      %3419 = vmatprep.subr.bf16.mxu0 %v1382
      %3420 = vmatpush1.bf16.msra.mxu0 %v1381
      %3421 = vmatprep.subr.bf16.mxu0 %v1384
      %3422 = vmatpush1.bf16.msra.mxu0 %v1383
      %3423 = vmatprep.subr.bf16.mxu0 %v1386
      %3424 = vmatpush1.bf16.msra.mxu0 %v1385
      %3425 = vmatprep.subr.bf16.mxu0 %v1388
      %3426 = vmatpush1.bf16.msra.mxu0 %v1387
      %3427 = vmatprep.subr.bf16.mxu0 %v1390
      %3428 = vmatpush1.bf16.msra.mxu0 %v1389
      %3429 = vmatprep.subr.bf16.mxu0 %v1392
      %3430 = vmatpush1.bf16.msra.mxu0 %v1391
      %3431 = vmatprep.subr.bf16.mxu0 %v1394
      %3432 = vmatpush1.bf16.msra.mxu0 %v1393
      %3433 = vmatprep.subr.bf16.mxu0 %v1396
      %3434 = vmatpush1.bf16.msra.mxu0 %v1395
      %3435 = vmatprep.mubr.bf16.mxu0 %v3111
      %3436 = vmatmul.mubr.bf16.gmra.mrb[0].mxu0 %v3110
      %v3437 = vpop.f32.mrb[0].mxu0
      %v3438 = vadd.f32 %v3365, %v3437
      %v3439 = vpop.f32.mrb[0].mxu0
      %v3440 = vadd.f32 %v3367, %v3439
      %v3441 = vpop.f32.mrb[0].mxu0
      %v3442 = vadd.f32 %v3369, %v3441
      %v3443 = vpop.f32.mrb[0].mxu0
      %v3444 = vadd.f32 %v3371, %v3443
      %3445 = vmatprep.mubr.bf16.mxu0 %v3120
      %3446 = vmatmul.mubr.bf16.gmra.mrb[0].mxu0 %v3119
      %v3447 = vpop.f32.mrb[0].mxu0
      %v3448 = vadd.f32 %v3375, %v3447
      %v3449 = vpop.f32.mrb[0].mxu0
      %v3450 = vadd.f32 %v3377, %v3449
      %v3451 = vpop.f32.mrb[0].mxu0
      %v3452 = vadd.f32 %v3379, %v3451
      %v3453 = vpop.f32.mrb[0].mxu0
      %v3454 = vadd.f32 %v3381, %v3453
      %3455 = vmatprep.mubr.bf16.mxu0 %v3129
      %3456 = vmatmul.mubr.bf16.gmra.mrb[0].mxu0 %v3128
      %v3457 = vpop.f32.mrb[0].mxu0
      %v3458 = vadd.f32 %v3385, %v3457
      %v3459 = vpop.f32.mrb[0].mxu0
      %v3460 = vadd.f32 %v3387, %v3459
      %v3461 = vpop.f32.mrb[0].mxu0
      %v3462 = vadd.f32 %v3389, %v3461
      %v3463 = vpop.f32.mrb[0].mxu0
      %v3464 = vadd.f32 %v3391, %v3463
      %3465 = vmatprep.mubr.bf16.mxu0 %v3138
      %3466 = vmatmul.mubr.bf16.gmra.mrb[0].mxu0 %v3137
      %v3467 = vpop.f32.mrb[0].mxu0
      %v3468 = vadd.f32 %v3395, %v3467
      %v3469 = vpop.f32.mrb[0].mxu0
      %v3470 = vadd.f32 %v3397, %v3469
      %v3471 = vpop.f32.mrb[0].mxu0
      %v3472 = vadd.f32 %v3399, %v3471
      %v3473 = vpop.f32.mrb[0].mxu0
      %v3474 = vadd.f32 %v3401, %v3473
      %3475 = vdwg.mxu0
      %3476 = vmatprep.subr.bf16.mxu0 %v1398
      %3477 = vmatpush1.bf16.msra.mxu0 %v1397
      %3478 = vmatprep.subr.bf16.mxu0 %v1400
      %3479 = vmatpush1.bf16.msra.mxu0 %v1399
      %3480 = vmatprep.subr.bf16.mxu0 %v1402
      %3481 = vmatpush1.bf16.msra.mxu0 %v1401
      %3482 = vmatprep.subr.bf16.mxu0 %v1404
      %3483 = vmatpush1.bf16.msra.mxu0 %v1403
      %3484 = vmatprep.subr.bf16.mxu0 %v1406
      %3485 = vmatpush1.bf16.msra.mxu0 %v1405
      %3486 = vmatprep.subr.bf16.mxu0 %v1408
      %3487 = vmatpush1.bf16.msra.mxu0 %v1407
      %3488 = vmatprep.subr.bf16.mxu0 0
      %3489 = vmatpush1.bf16.msra.mxu0 0
      %3490 = vmatprep.subr.bf16.mxu0 0
      %3491 = vmatpush1.bf16.msra.mxu0 0
      %3492 = vmatprep.subr.bf16.mxu0 0
      %3493 = vmatpush1.bf16.msra.mxu0 0
      %3494 = vmatprep.subr.bf16.mxu0 0
      %3495 = vmatpush1.bf16.msra.mxu0 0
      %3496 = vmatprep.subr.bf16.mxu0 0
      %3497 = vmatpush1.bf16.msra.mxu0 0
      %3498 = vmatprep.subr.bf16.mxu0 0
      %3499 = vmatpush1.bf16.msra.mxu0 0
      %3500 = vmatprep.subr.bf16.mxu0 0
      %3501 = vmatpush1.bf16.msra.mxu0 0
      %3502 = vmatprep.subr.bf16.mxu0 0
      %3503 = vmatpush1.bf16.msra.mxu0 0
      %3504 = vmatprep.subr.bf16.mxu0 0
      %3505 = vmatpush1.bf16.msra.mxu0 0
      %3506 = vmatprep.subr.bf16.mxu0 0
      %3507 = vmatpush1.bf16.msra.mxu0 0
      %3508 = vmatprep.mubr.bf16.mxu0 0
      %3509 = vmatmul.mubr.bf16.gmra.mrb[0].mxu0 %v3173
      %v3510 = vpop.f32.mrb[0].mxu0
      %v3511 = vadd.f32 %v3438, %v3510
      %v3512 = vpop.f32.mrb[0].mxu0
      %v3513 = vadd.f32 %v3440, %v3512
      %v3514 = vpop.f32.mrb[0].mxu0
      %v3515 = vadd.f32 %v3442, %v3514
      %v3516 = vpop.f32.mrb[0].mxu0
      %v3517 = vadd.f32 %v3444, %v3516
      %3518 = vmatprep.mubr.bf16.mxu0 0
      %3519 = vmatmul.mubr.bf16.gmra.mrb[0].mxu0 %v3176
      %v3520 = vpop.f32.mrb[0].mxu0
      %v3521 = vadd.f32 %v3448, %v3520
      %v3522 = vpop.f32.mrb[0].mxu0
      %v3523 = vadd.f32 %v3450, %v3522
      %v3524 = vpop.f32.mrb[0].mxu0
      %v3525 = vadd.f32 %v3452, %v3524
      %v3526 = vpop.f32.mrb[0].mxu0
      %v3527 = vadd.f32 %v3454, %v3526
      %3528 = vmatprep.mubr.bf16.mxu0 0
      %3529 = vmatmul.mubr.bf16.gmra.mrb[0].mxu0 %v3179
      %v3530 = vpop.f32.mrb[0].mxu0
      %v3531 = vadd.f32 %v3458, %v3530
      %v3532 = vpop.f32.mrb[0].mxu0
      %v3533 = vadd.f32 %v3460, %v3532
      %v3534 = vpop.f32.mrb[0].mxu0
      %v3535 = vadd.f32 %v3462, %v3534
      %v3536 = vpop.f32.mrb[0].mxu0
      %v3537 = vadd.f32 %v3464, %v3536
      %3538 = vmatprep.mubr.bf16.mxu0 0
      %3539 = vmatmul.mubr.bf16.gmra.mrb[0].mxu0 %v3182
      %v3540 = vpop.f32.mrb[0].mxu0
      %v3541 = vadd.f32 %v3468, %v3540
      %v3542 = vpop.f32.mrb[0].mxu0
      %v3543 = vadd.f32 %v3470, %v3542
      %v3544 = vpop.f32.mrb[0].mxu0
      %v3545 = vadd.f32 %v3472, %v3544
      %v3546 = vpop.f32.mrb[0].mxu0
      %v3547 = vadd.f32 %v3474, %v3546
      %3548 = vdwg.mxu0
      %3549 = vmatprep.subr.bf16.mxu0 %v2348
      %3550 = vmatpush1.bf16.msra.mxu0 %v2347
      %3551 = vmatprep.subr.bf16.mxu0 %v2350
      %3552 = vmatpush1.bf16.msra.mxu0 %v2349
      %3553 = vmatprep.subr.bf16.mxu0 %v2352
      %3554 = vmatpush1.bf16.msra.mxu0 %v2351
      %3555 = vmatprep.subr.bf16.mxu0 %v2354
      %3556 = vmatpush1.bf16.msra.mxu0 %v2353
      %3557 = vmatprep.subr.bf16.mxu0 %v2356
      %3558 = vmatpush1.bf16.msra.mxu0 %v2355
      %3559 = vmatprep.subr.bf16.mxu0 %v2358
      %3560 = vmatpush1.bf16.msra.mxu0 %v2357
      %3561 = vmatprep.subr.bf16.mxu0 %v2360
      %3562 = vmatpush1.bf16.msra.mxu0 %v2359
      %3563 = vmatprep.subr.bf16.mxu0 %v2362
      %3564 = vmatpush1.bf16.msra.mxu0 %v2361
      %3565 = vmatprep.subr.bf16.mxu0 %v2364
      %3566 = vmatpush1.bf16.msra.mxu0 %v2363
      %3567 = vmatprep.subr.bf16.mxu0 %v2366
      %3568 = vmatpush1.bf16.msra.mxu0 %v2365
      %3569 = vmatprep.subr.bf16.mxu0 %v2368
      %3570 = vmatpush1.bf16.msra.mxu0 %v2367
      %3571 = vmatprep.subr.bf16.mxu0 %v2370
      %3572 = vmatpush1.bf16.msra.mxu0 %v2369
      %3573 = vmatprep.subr.bf16.mxu0 %v2372
      %3574 = vmatpush1.bf16.msra.mxu0 %v2371
      %3575 = vmatprep.subr.bf16.mxu0 %v2374
      %3576 = vmatpush1.bf16.msra.mxu0 %v2373
      %3577 = vmatprep.subr.bf16.mxu0 %v2376
      %3578 = vmatpush1.bf16.msra.mxu0 %v2375
      %3579 = vmatprep.subr.bf16.mxu0 %v2378
      %3580 = vmatpush1.bf16.msra.mxu0 %v2377
      %3581 = vmatprep.mubr.bf16.mxu0 %v3105
      %3582 = vmatmul.mubr.bf16.gmra.mrb[0].mxu0 %v3104
      %v3583 = vpop.f32.mrb[0].mxu0
      %v3584 = vadd.f32 0.0, %v3583
      %v3585 = vpop.f32.mrb[0].mxu0
      %v3586 = vadd.f32 0.0, %v3585
      %v3587 = vpop.f32.mrb[0].mxu0
      %v3588 = vadd.f32 0.0, %v3587
      %v3589 = vpop.f32.mrb[0].mxu0
      %v3590 = vadd.f32 0.0, %v3589
      %3591 = vmatprep.mubr.bf16.mxu0 %v3114
      %3592 = vmatmul.mubr.bf16.gmra.mrb[0].mxu0 %v3113
      %v3593 = vpop.f32.mrb[0].mxu0
      %v3594 = vadd.f32 0.0, %v3593
      %v3595 = vpop.f32.mrb[0].mxu0
      %v3596 = vadd.f32 0.0, %v3595
      %v3597 = vpop.f32.mrb[0].mxu0
      %v3598 = vadd.f32 0.0, %v3597
      %v3599 = vpop.f32.mrb[0].mxu0
      %v3600 = vadd.f32 0.0, %v3599
      %3601 = vmatprep.mubr.bf16.mxu0 %v3123
      %3602 = vmatmul.mubr.bf16.gmra.mrb[0].mxu0 %v3122
      %v3603 = vpop.f32.mrb[0].mxu0
      %v3604 = vadd.f32 0.0, %v3603
      %v3605 = vpop.f32.mrb[0].mxu0
      %v3606 = vadd.f32 0.0, %v3605
      %v3607 = vpop.f32.mrb[0].mxu0
      %v3608 = vadd.f32 0.0, %v3607
      %v3609 = vpop.f32.mrb[0].mxu0
      %v3610 = vadd.f32 0.0, %v3609
      %3611 = vmatprep.mubr.bf16.mxu0 %v3132
      %3612 = vmatmul.mubr.bf16.gmra.mrb[0].mxu0 %v3131
      %v3613 = vpop.f32.mrb[0].mxu0
      %v3614 = vadd.f32 0.0, %v3613
      %v3615 = vpop.f32.mrb[0].mxu0
      %v3616 = vadd.f32 0.0, %v3615
      %v3617 = vpop.f32.mrb[0].mxu0
      %v3618 = vadd.f32 0.0, %v3617
      %v3619 = vpop.f32.mrb[0].mxu0
      %v3620 = vadd.f32 0.0, %v3619
      %3621 = vdwg.mxu0
      %3622 = vmatprep.subr.bf16.mxu0 %v2380
      %3623 = vmatpush1.bf16.msra.mxu0 %v2379
      %3624 = vmatprep.subr.bf16.mxu0 %v2382
      %3625 = vmatpush1.bf16.msra.mxu0 %v2381
      %3626 = vmatprep.subr.bf16.mxu0 %v2384
      %3627 = vmatpush1.bf16.msra.mxu0 %v2383
      %3628 = vmatprep.subr.bf16.mxu0 %v2386
      %3629 = vmatpush1.bf16.msra.mxu0 %v2385
      %3630 = vmatprep.subr.bf16.mxu0 %v2388
      %3631 = vmatpush1.bf16.msra.mxu0 %v2387
      %3632 = vmatprep.subr.bf16.mxu0 %v2390
      %3633 = vmatpush1.bf16.msra.mxu0 %v2389
      %3634 = vmatprep.subr.bf16.mxu0 %v2392
      %3635 = vmatpush1.bf16.msra.mxu0 %v2391
      %3636 = vmatprep.subr.bf16.mxu0 %v2394
      %3637 = vmatpush1.bf16.msra.mxu0 %v2393
      %3638 = vmatprep.subr.bf16.mxu0 %v2396
      %3639 = vmatpush1.bf16.msra.mxu0 %v2395
      %3640 = vmatprep.subr.bf16.mxu0 %v2398
      %3641 = vmatpush1.bf16.msra.mxu0 %v2397
      %3642 = vmatprep.subr.bf16.mxu0 %v2400
      %3643 = vmatpush1.bf16.msra.mxu0 %v2399
      %3644 = vmatprep.subr.bf16.mxu0 %v2402
      %3645 = vmatpush1.bf16.msra.mxu0 %v2401
      %3646 = vmatprep.subr.bf16.mxu0 %v2404
      %3647 = vmatpush1.bf16.msra.mxu0 %v2403
      %3648 = vmatprep.subr.bf16.mxu0 %v2406
      %3649 = vmatpush1.bf16.msra.mxu0 %v2405
      %3650 = vmatprep.subr.bf16.mxu0 %v2408
      %3651 = vmatpush1.bf16.msra.mxu0 %v2407
      %3652 = vmatprep.subr.bf16.mxu0 %v2410
      %3653 = vmatpush1.bf16.msra.mxu0 %v2409
      %3654 = vmatprep.mubr.bf16.mxu0 %v3107
      %3655 = vmatmul.mubr.bf16.gmra.mrb[0].mxu0 %v3106
      %v3656 = vpop.f32.mrb[0].mxu0
      %v3657 = vadd.f32 %v3584, %v3656
      %v3658 = vpop.f32.mrb[0].mxu0
      %v3659 = vadd.f32 %v3586, %v3658
      %v3660 = vpop.f32.mrb[0].mxu0
      %v3661 = vadd.f32 %v3588, %v3660
      %v3662 = vpop.f32.mrb[0].mxu0
      %v3663 = vadd.f32 %v3590, %v3662
      %3664 = vmatprep.mubr.bf16.mxu0 %v3116
      %3665 = vmatmul.mubr.bf16.gmra.mrb[0].mxu0 %v3115
      %v3666 = vpop.f32.mrb[0].mxu0
      %v3667 = vadd.f32 %v3594, %v3666
      %v3668 = vpop.f32.mrb[0].mxu0
      %v3669 = vadd.f32 %v3596, %v3668
      %v3670 = vpop.f32.mrb[0].mxu0
      %v3671 = vadd.f32 %v3598, %v3670
      %v3672 = vpop.f32.mrb[0].mxu0
      %v3673 = vadd.f32 %v3600, %v3672
      %3674 = vmatprep.mubr.bf16.mxu0 %v3125
      %3675 = vmatmul.mubr.bf16.gmra.mrb[0].mxu0 %v3124
      %v3676 = vpop.f32.mrb[0].mxu0
      %v3677 = vadd.f32 %v3604, %v3676
      %v3678 = vpop.f32.mrb[0].mxu0
      %v3679 = vadd.f32 %v3606, %v3678
      %v3680 = vpop.f32.mrb[0].mxu0
      %v3681 = vadd.f32 %v3608, %v3680
      %v3682 = vpop.f32.mrb[0].mxu0
      %v3683 = vadd.f32 %v3610, %v3682
      %3684 = vmatprep.mubr.bf16.mxu0 %v3134
      %3685 = vmatmul.mubr.bf16.gmra.mrb[0].mxu0 %v3133
      %v3686 = vpop.f32.mrb[0].mxu0
      %v3687 = vadd.f32 %v3614, %v3686
      %v3688 = vpop.f32.mrb[0].mxu0
      %v3689 = vadd.f32 %v3616, %v3688
      %v3690 = vpop.f32.mrb[0].mxu0
      %v3691 = vadd.f32 %v3618, %v3690
      %v3692 = vpop.f32.mrb[0].mxu0
      %v3693 = vadd.f32 %v3620, %v3692
      %3694 = vdwg.mxu0
      %3695 = vmatprep.subr.bf16.mxu0 %v2412
      %3696 = vmatpush1.bf16.msra.mxu0 %v2411
      %3697 = vmatprep.subr.bf16.mxu0 %v2414
      %3698 = vmatpush1.bf16.msra.mxu0 %v2413
      %3699 = vmatprep.subr.bf16.mxu0 %v2416
      %3700 = vmatpush1.bf16.msra.mxu0 %v2415
      %3701 = vmatprep.subr.bf16.mxu0 %v2418
      %3702 = vmatpush1.bf16.msra.mxu0 %v2417
      %3703 = vmatprep.subr.bf16.mxu0 %v2420
      %3704 = vmatpush1.bf16.msra.mxu0 %v2419
      %3705 = vmatprep.subr.bf16.mxu0 %v2422
      %3706 = vmatpush1.bf16.msra.mxu0 %v2421
      %3707 = vmatprep.subr.bf16.mxu0 %v2424
      %3708 = vmatpush1.bf16.msra.mxu0 %v2423
      %3709 = vmatprep.subr.bf16.mxu0 %v2426
      %3710 = vmatpush1.bf16.msra.mxu0 %v2425
      %3711 = vmatprep.subr.bf16.mxu0 %v2428
      %3712 = vmatpush1.bf16.msra.mxu0 %v2427
      %3713 = vmatprep.subr.bf16.mxu0 %v2430
      %3714 = vmatpush1.bf16.msra.mxu0 %v2429
      %3715 = vmatprep.subr.bf16.mxu0 %v2432
      %3716 = vmatpush1.bf16.msra.mxu0 %v2431
      %3717 = vmatprep.subr.bf16.mxu0 %v2434
      %3718 = vmatpush1.bf16.msra.mxu0 %v2433
      %3719 = vmatprep.subr.bf16.mxu0 %v2436
      %3720 = vmatpush1.bf16.msra.mxu0 %v2435
      %3721 = vmatprep.subr.bf16.mxu0 %v2438
      %3722 = vmatpush1.bf16.msra.mxu0 %v2437
      %3723 = vmatprep.subr.bf16.mxu0 %v2440
      %3724 = vmatpush1.bf16.msra.mxu0 %v2439
      %3725 = vmatprep.subr.bf16.mxu0 %v2442
      %3726 = vmatpush1.bf16.msra.mxu0 %v2441
      %3727 = vmatprep.mubr.bf16.mxu0 %v3109
      %3728 = vmatmul.mubr.bf16.gmra.mrb[0].mxu0 %v3108
      %v3729 = vpop.f32.mrb[0].mxu0
      %v3730 = vadd.f32 %v3657, %v3729
      %v3731 = vpop.f32.mrb[0].mxu0
      %v3732 = vadd.f32 %v3659, %v3731
      %v3733 = vpop.f32.mrb[0].mxu0
      %v3734 = vadd.f32 %v3661, %v3733
      %v3735 = vpop.f32.mrb[0].mxu0
      %v3736 = vadd.f32 %v3663, %v3735
      %3737 = vmatprep.mubr.bf16.mxu0 %v3118
      %3738 = vmatmul.mubr.bf16.gmra.mrb[0].mxu0 %v3117
      %v3739 = vpop.f32.mrb[0].mxu0
      %v3740 = vadd.f32 %v3667, %v3739
      %v3741 = vpop.f32.mrb[0].mxu0
      %v3742 = vadd.f32 %v3669, %v3741
      %v3743 = vpop.f32.mrb[0].mxu0
      %v3744 = vadd.f32 %v3671, %v3743
      %v3745 = vpop.f32.mrb[0].mxu0
      %v3746 = vadd.f32 %v3673, %v3745
      %3747 = vmatprep.mubr.bf16.mxu0 %v3127
      %3748 = vmatmul.mubr.bf16.gmra.mrb[0].mxu0 %v3126
      %v3749 = vpop.f32.mrb[0].mxu0
      %v3750 = vadd.f32 %v3677, %v3749
      %v3751 = vpop.f32.mrb[0].mxu0
      %v3752 = vadd.f32 %v3679, %v3751
      %v3753 = vpop.f32.mrb[0].mxu0
      %v3754 = vadd.f32 %v3681, %v3753
      %v3755 = vpop.f32.mrb[0].mxu0
      %v3756 = vadd.f32 %v3683, %v3755
      %3757 = vmatprep.mubr.bf16.mxu0 %v3136
      %3758 = vmatmul.mubr.bf16.gmra.mrb[0].mxu0 %v3135
      %v3759 = vpop.f32.mrb[0].mxu0
      %v3760 = vadd.f32 %v3687, %v3759
      %v3761 = vpop.f32.mrb[0].mxu0
      %v3762 = vadd.f32 %v3689, %v3761
      %v3763 = vpop.f32.mrb[0].mxu0
      %v3764 = vadd.f32 %v3691, %v3763
      %v3765 = vpop.f32.mrb[0].mxu0
      %v3766 = vadd.f32 %v3693, %v3765
      %3767 = vdwg.mxu0
      %3768 = vmatprep.subr.bf16.mxu0 %v2444
      %3769 = vmatpush1.bf16.msra.mxu0 %v2443
      %3770 = vmatprep.subr.bf16.mxu0 %v2446
      %3771 = vmatpush1.bf16.msra.mxu0 %v2445
      %3772 = vmatprep.subr.bf16.mxu0 %v2448
      %3773 = vmatpush1.bf16.msra.mxu0 %v2447
      %3774 = vmatprep.subr.bf16.mxu0 %v2450
      %3775 = vmatpush1.bf16.msra.mxu0 %v2449
      %3776 = vmatprep.subr.bf16.mxu0 %v2452
      %3777 = vmatpush1.bf16.msra.mxu0 %v2451
      %3778 = vmatprep.subr.bf16.mxu0 %v2454
      %3779 = vmatpush1.bf16.msra.mxu0 %v2453
      %3780 = vmatprep.subr.bf16.mxu0 %v2456
      %3781 = vmatpush1.bf16.msra.mxu0 %v2455
      %3782 = vmatprep.subr.bf16.mxu0 %v2458
      %3783 = vmatpush1.bf16.msra.mxu0 %v2457
      %3784 = vmatprep.subr.bf16.mxu0 %v2460
      %3785 = vmatpush1.bf16.msra.mxu0 %v2459
      %3786 = vmatprep.subr.bf16.mxu0 %v2462
      %3787 = vmatpush1.bf16.msra.mxu0 %v2461
      %3788 = vmatprep.subr.bf16.mxu0 %v2464
      %3789 = vmatpush1.bf16.msra.mxu0 %v2463
      %3790 = vmatprep.subr.bf16.mxu0 %v2466
      %3791 = vmatpush1.bf16.msra.mxu0 %v2465
      %3792 = vmatprep.subr.bf16.mxu0 %v2468
      %3793 = vmatpush1.bf16.msra.mxu0 %v2467
      %3794 = vmatprep.subr.bf16.mxu0 %v2470
      %3795 = vmatpush1.bf16.msra.mxu0 %v2469
      %3796 = vmatprep.subr.bf16.mxu0 %v2472
      %3797 = vmatpush1.bf16.msra.mxu0 %v2471
      %3798 = vmatprep.subr.bf16.mxu0 %v2474
      %3799 = vmatpush1.bf16.msra.mxu0 %v2473
      %3800 = vmatprep.mubr.bf16.mxu0 %v3111
      %3801 = vmatmul.mubr.bf16.gmra.mrb[0].mxu0 %v3110
      %v3802 = vpop.f32.mrb[0].mxu0
      %v3803 = vadd.f32 %v3730, %v3802
      %v3804 = vpop.f32.mrb[0].mxu0
      %v3805 = vadd.f32 %v3732, %v3804
      %v3806 = vpop.f32.mrb[0].mxu0
      %v3807 = vadd.f32 %v3734, %v3806
      %v3808 = vpop.f32.mrb[0].mxu0
      %v3809 = vadd.f32 %v3736, %v3808
      %3810 = vmatprep.mubr.bf16.mxu0 %v3120
      %3811 = vmatmul.mubr.bf16.gmra.mrb[0].mxu0 %v3119
      %v3812 = vpop.f32.mrb[0].mxu0
      %v3813 = vadd.f32 %v3740, %v3812
      %v3814 = vpop.f32.mrb[0].mxu0
      %v3815 = vadd.f32 %v3742, %v3814
      %v3816 = vpop.f32.mrb[0].mxu0
      %v3817 = vadd.f32 %v3744, %v3816
      %v3818 = vpop.f32.mrb[0].mxu0
      %v3819 = vadd.f32 %v3746, %v3818
      %3820 = vmatprep.mubr.bf16.mxu0 %v3129
      %3821 = vmatmul.mubr.bf16.gmra.mrb[0].mxu0 %v3128
      %v3822 = vpop.f32.mrb[0].mxu0
      %v3823 = vadd.f32 %v3750, %v3822
      %v3824 = vpop.f32.mrb[0].mxu0
      %v3825 = vadd.f32 %v3752, %v3824
      %v3826 = vpop.f32.mrb[0].mxu0
      %v3827 = vadd.f32 %v3754, %v3826
      %v3828 = vpop.f32.mrb[0].mxu0
      %v3829 = vadd.f32 %v3756, %v3828
      %3830 = vmatprep.mubr.bf16.mxu0 %v3138
      %3831 = vmatmul.mubr.bf16.gmra.mrb[0].mxu0 %v3137
      %v3832 = vpop.f32.mrb[0].mxu0
      %v3833 = vadd.f32 %v3760, %v3832
      %v3834 = vpop.f32.mrb[0].mxu0
      %v3835 = vadd.f32 %v3762, %v3834
      %v3836 = vpop.f32.mrb[0].mxu0
      %v3837 = vadd.f32 %v3764, %v3836
      %v3838 = vpop.f32.mrb[0].mxu0
      %v3839 = vadd.f32 %v3766, %v3838
      %3840 = vdwg.mxu0
      %3841 = vmatprep.subr.bf16.mxu0 %v2476
      %3842 = vmatpush1.bf16.msra.mxu0 %v2475
      %3843 = vmatprep.subr.bf16.mxu0 %v2478
      %3844 = vmatpush1.bf16.msra.mxu0 %v2477
      %3845 = vmatprep.subr.bf16.mxu0 %v2480
      %3846 = vmatpush1.bf16.msra.mxu0 %v2479
      %3847 = vmatprep.subr.bf16.mxu0 %v2482
      %3848 = vmatpush1.bf16.msra.mxu0 %v2481
      %3849 = vmatprep.subr.bf16.mxu0 %v2484
      %3850 = vmatpush1.bf16.msra.mxu0 %v2483
      %3851 = vmatprep.subr.bf16.mxu0 %v2486
      %3852 = vmatpush1.bf16.msra.mxu0 %v2485
      %3853 = vmatprep.subr.bf16.mxu0 0
      %3854 = vmatpush1.bf16.msra.mxu0 0
      %3855 = vmatprep.subr.bf16.mxu0 0
      %3856 = vmatpush1.bf16.msra.mxu0 0
      %3857 = vmatprep.subr.bf16.mxu0 0
      %3858 = vmatpush1.bf16.msra.mxu0 0
      %3859 = vmatprep.subr.bf16.mxu0 0
      %3860 = vmatpush1.bf16.msra.mxu0 0
      %3861 = vmatprep.subr.bf16.mxu0 0
      %3862 = vmatpush1.bf16.msra.mxu0 0
      %3863 = vmatprep.subr.bf16.mxu0 0
      %3864 = vmatpush1.bf16.msra.mxu0 0
      %3865 = vmatprep.subr.bf16.mxu0 0
      %3866 = vmatpush1.bf16.msra.mxu0 0
      %3867 = vmatprep.subr.bf16.mxu0 0
      %3868 = vmatpush1.bf16.msra.mxu0 0
      %3869 = vmatprep.subr.bf16.mxu0 0
      %3870 = vmatpush1.bf16.msra.mxu0 0
      %3871 = vmatprep.subr.bf16.mxu0 0
      %3872 = vmatpush1.bf16.msra.mxu0 0
      %3873 = vmatprep.mubr.bf16.mxu0 0
      %3874 = vmatmul.mubr.bf16.gmra.mrb[0].mxu0 %v3173
      %v3875 = vpop.f32.mrb[0].mxu0
      %v3876 = vadd.f32 %v3803, %v3875
      %v3877 = vpop.f32.mrb[0].mxu0
      %v3878 = vadd.f32 %v3805, %v3877
      %v3879 = vpop.f32.mrb[0].mxu0
      %v3880 = vadd.f32 %v3807, %v3879
      %v3881 = vpop.f32.mrb[0].mxu0
      %v3882 = vadd.f32 %v3809, %v3881
      %3883 = vmatprep.mubr.bf16.mxu0 0
      %3884 = vmatmul.mubr.bf16.gmra.mrb[0].mxu0 %v3176
      %v3885 = vpop.f32.mrb[0].mxu0
      %v3886 = vadd.f32 %v3813, %v3885
      %v3887 = vpop.f32.mrb[0].mxu0
      %v3888 = vadd.f32 %v3815, %v3887
      %v3889 = vpop.f32.mrb[0].mxu0
      %v3890 = vadd.f32 %v3817, %v3889
      %v3891 = vpop.f32.mrb[0].mxu0
      %v3892 = vadd.f32 %v3819, %v3891
      %3893 = vmatprep.mubr.bf16.mxu0 0
      %3894 = vmatmul.mubr.bf16.gmra.mrb[0].mxu0 %v3179
      %v3895 = vpop.f32.mrb[0].mxu0
      %v3896 = vadd.f32 %v3823, %v3895
      %v3897 = vpop.f32.mrb[0].mxu0
      %v3898 = vadd.f32 %v3825, %v3897
      %v3899 = vpop.f32.mrb[0].mxu0
      %v3900 = vadd.f32 %v3827, %v3899
      %v3901 = vpop.f32.mrb[0].mxu0
      %v3902 = vadd.f32 %v3829, %v3901
      %3903 = vmatprep.mubr.bf16.mxu0 0
      %3904 = vmatmul.mubr.bf16.gmra.mrb[0].mxu0 %v3182
      %v3905 = vpop.f32.mrb[0].mxu0
      %v3906 = vadd.f32 %v3833, %v3905
      %v3907 = vpop.f32.mrb[0].mxu0
      %v3908 = vadd.f32 %v3835, %v3907
      %v3909 = vpop.f32.mrb[0].mxu0
      %v3910 = vadd.f32 %v3837, %v3909
      %v3911 = vpop.f32.mrb[0].mxu0
      %v3912 = vadd.f32 %v3839, %v3911
      %3913 = vdwg.mxu0
      %v3914 = vmax.f32 %v1889, %v2954
      %v3915 = vmax.f32 %v1891, %v2956
      %v3916 = vmax.f32 %v1893, %v2958
      %v3917 = vmax.f32 %v1895, %v2960
      %v3918 = vmax.f32 %v1899, %v2964
      %v3919 = vmax.f32 %v1901, %v2966
      %v3920 = vmax.f32 %v1903, %v2968
      %v3921 = vmax.f32 %v1905, %v2970
      %v3922 = vmax.f32 %v1909, %v2974
      %v3923 = vmax.f32 %v1911, %v2976
      %v3924 = vmax.f32 %v1913, %v2978
      %v3925 = vmax.f32 %v1915, %v2980
      %v3926 = vmax.f32 %v1919, %v2984
      %v3927 = vmax.f32 %v1921, %v2986
      %v3928 = vmax.f32 %v1923, %v2988
      %v3929 = vmax.f32 %v1925, %v2990
      %v3930 = vmax.f32 %v3511, %v3876
      %v3931 = vmax.f32 %v3513, %v3878
      %v3932 = vmax.f32 %v3515, %v3880
      %v3933 = vmax.f32 %v3517, %v3882
      %v3934 = vmax.f32 %v3521, %v3886
      %v3935 = vmax.f32 %v3523, %v3888
      %v3936 = vmax.f32 %v3525, %v3890
      %v3937 = vmax.f32 %v3527, %v3892
      %v3938 = vmax.f32 %v3531, %v3896
      %v3939 = vmax.f32 %v3533, %v3898
      %v3940 = vmax.f32 %v3535, %v3900
      %v3941 = vmax.f32 %v3537, %v3902
      %v3942 = vmax.f32 %v3541, %v3906
      %v3943 = vmax.f32 %v3543, %v3908
      %v3944 = vmax.f32 %v3545, %v3910
      %v3945 = vmax.f32 %v3547, %v3912
      %v3946 = vmax.f32 %v3914, %v3930
      %v3947 = vmax.f32 %v3915, %v3931
      %v3948 = vmax.f32 %v3916, %v3932
      %v3949 = vmax.f32 %v3917, %v3933
      %v3950 = vmax.f32 %v3918, %v3934
      %v3951 = vmax.f32 %v3919, %v3935
      %v3952 = vmax.f32 %v3920, %v3936
      %v3953 = vmax.f32 %v3921, %v3937
      %v3954 = vmax.f32 %v3922, %v3938
      %v3955 = vmax.f32 %v3923, %v3939
      %v3956 = vmax.f32 %v3924, %v3940
      %v3957 = vmax.f32 %v3925, %v3941
      %v3958 = vmax.f32 %v3926, %v3942
      %v3959 = vmax.f32 %v3927, %v3943
      %v3960 = vmax.f32 %v3928, %v3944
      %v3961 = vmax.f32 %v3929, %v3945
      %v3962 = vld [vmem:[%s4] sm:$0x3]
      %v3964 = vlaneseq
      %v3965 = vshrl.u32 %v3964, 7
      %v3966 = vsub.s32 0, %v3965
      %v3967 = vrot.slane %v3962, %v3966
      %v3968 = vlaneseq
      %v3969 = vshrl.u32 %v3968, 7
      %v3970 = vsub.s32 1, %v3969
      %v3971 = vrot.slane %v3962, %v3970
      %v3974 = vadd.f32 %v3946, %v3967
      %v3975 = vadd.f32 %v3947, %v3971
      %v3976 = vadd.f32 %v3948, %v3967
      %v3977 = vadd.f32 %v3949, %v3971
      %v3978 = vadd.f32 %v3950, %v3967
      %v3979 = vadd.f32 %v3951, %v3971
      %v3980 = vadd.f32 %v3952, %v3967
      %v3981 = vadd.f32 %v3953, %v3971
      %v3982 = vadd.f32 %v3954, %v3967
      %v3983 = vadd.f32 %v3955, %v3971
      %v3984 = vadd.f32 %v3956, %v3967
      %v3985 = vadd.f32 %v3957, %v3971
      %v3986 = vadd.f32 %v3958, %v3967
      %v3987 = vadd.f32 %v3959, %v3971
      %v3988 = vadd.f32 %v3960, %v3967
      %v3989 = vadd.f32 %v3961, %v3971
      %v3990 = vmax.f32 %v3974, 0.0
      %v3991 = vmax.f32 %v3975, 0.0
      %v3992 = vmax.f32 %v3976, 0.0
      %v3993 = vmax.f32 %v3977, 0.0
      %v3994 = vmax.f32 %v3978, 0.0
      %v3995 = vmax.f32 %v3979, 0.0
      %v3996 = vmax.f32 %v3980, 0.0
      %v3997 = vmax.f32 %v3981, 0.0
      %v3998 = vmax.f32 %v3982, 0.0
      %v3999 = vmax.f32 %v3983, 0.0
      %v4000 = vmax.f32 %v3984, 0.0
      %v4001 = vmax.f32 %v3985, 0.0
      %v4002 = vmax.f32 %v3986, 0.0
      %v4003 = vmax.f32 %v3987, 0.0
      %v4004 = vmax.f32 %v3988, 0.0
      %v4005 = vmax.f32 %v3989, 0.0
      %v4006 = vpack.c.bf16 %v3992, %v3990
      %v4007 = vpack.c.bf16 %v3993, %v3991
      %v4008 = vpack.c.bf16 %v3996, %v3994
      %v4009 = vpack.c.bf16 %v3997, %v3995
      %v4010 = vpack.c.bf16 %v4000, %v3998
      %v4011 = vpack.c.bf16 %v4001, %v3999
      %v4012 = vpack.c.bf16 %v4004, %v4002
      %v4013 = vpack.c.bf16 %v4005, %v4003
      %v4022 = vunpack.c.l.b16 %v4006
      %v4023 = vunpack.c.l.b16 %v4007
      %v4024 = vunpack.c.h.b16 %v4006
      %v4025 = vunpack.c.h.b16 %v4007
      %v4026 = vunpack.c.l.b16 %v4008
      %v4027 = vunpack.c.l.b16 %v4009
      %v4028 = vunpack.c.h.b16 %v4008
      %v4029 = vunpack.c.h.b16 %v4009
      %v4030 = vunpack.c.l.b16 %v4010
      %v4031 = vunpack.c.l.b16 %v4011
      %v4032 = vunpack.c.h.b16 %v4010
      %v4033 = vunpack.c.h.b16 %v4011
      %v4034 = vunpack.c.l.b16 %v4012
      %v4035 = vunpack.c.l.b16 %v4013
      %v4036 = vunpack.c.h.b16 %v4012
      %v4037 = vunpack.c.h.b16 %v4013
      %v4038 = vpack.c.b16 %v4023, %v4022
      %v4039 = vpack.c.b16 %v4025, %v4024
      %v4040 = vpack.c.b16 %v4027, %v4026
      %v4041 = vpack.c.b16 %v4029, %v4028
      %v4042 = vpack.c.b16 %v4031, %v4030
      %v4043 = vpack.c.b16 %v4033, %v4032
      %v4044 = vpack.c.b16 %v4035, %v4034
      %v4045 = vpack.c.b16 %v4037, %v4036
      %vm4054 = vcmask 1043456
      %vm4055 = vcmask 261124
      %vm4056 = vmor %vm4055, %vm4054
      %4057 = vst.msk [vmem:[%s306] sm:$0xff] %vm4056, %v4038
      %4058 = vst.msk [vmem:[%s306 + $0x8] sm:$0xff] %vm4056, %v4039
      %4059 = vst.msk [vmem:[%s306 + $0x10] sm:$0xff] %vm4056, %v4040
      %4060 = vst.msk [vmem:[%s306 + $0x18] sm:$0xff] %vm4056, %v4041
      %4061 = vst.msk [vmem:[%s306 + $0x20] sm:$0xff] %vm4056, %v4042
      %4062 = vst.msk [vmem:[%s306 + $0x28] sm:$0xff] %vm4056, %v4043
      %4063 = vst.msk [vmem:[%s306 + $0x30] sm:$0xff] %vm4056, %v4044
      %4064 = vst.msk [vmem:[%s306 + $0x38] sm:$0xff] %vm4056, %v4045
      %s4065 = smul.u32 8, %s21
      %p4066 = scmp.lt.s32.totalorder %s20, 1
      %s4067 = scalar_select %p4066, %s20, 1
      %p4068 = scmp.lt.s32.totalorder %s4065, 15
      %s4069 = scalar_select %p4068, %s4065, 15
      %s4070 = smul.addr %s4069, 2
      %s4071 = smul.addr %s4067, 32
      %s4072 = sadd.s32 %s4070, %s4071
      %s4073 = smul.addr %s4072, 4
      %s4074 = scalar_lea.vmem %s5, %s4073
      // Predicated region
      $region41: #{cnn_forward.4} parent=39 // pred_check
        %p4075 = pneg %p167
      $region42: #{cnn_forward.4} parent=39 // pred_check_branch
        %4077 = sbr.rel (%p4075) target = $region44
      $region43: #{cnn_forward.4} parent=39 // pred_region
        %s4078 = smul.u32 8, %s21
      $region44: #{cnn_forward.4} parent=39 // pred_fallthru
        _
    $region40: #{cnn_forward.4} parent=5 // pred_fallthru
      _
    %p4079 = scmp.le.s32.totalorder 2, %s11
    // Predicated region
    $region45: #{cnn_forward.4} parent=5 // pred_check
      %p4080 = pneg %p4079
    $region46: #{cnn_forward.4} parent=5 // pred_check_branch
      %4082 = sbr.rel (%p4080) target = $region48
    $region47: #{cnn_forward.4} parent=5 // pred_region
      %s4083 = ssub.s32 %s11, 2
      // Predicated region
      $region49: #{cnn_forward.4} parent=47 // pred_check
        %p4084 = pneg %p173
      $region50: #{cnn_forward.4} parent=47 // pred_check_branch
        %4086 = sbr.rel (%p4084) target = $region52
      $region51: #{cnn_forward.4} parent=47 // pred_region
        %s4087 = smul.u32 8, %s23
        %p4088 = scmp.lt.s32.totalorder %s22, 1
        %s4089 = scalar_select %p4088, %s22, 1
        %p4090 = scmp.lt.s32.totalorder %s4087, 15
        %s4091 = scalar_select %p4090, %s4087, 15
        %s4092 = smul.addr %s4091, 2
        %s4093 = smul.addr %s4089, 32
        %s4094 = sadd.s32 %s4092, %s4093
        %s4095 = smul.addr %s4094, 4
        %s4096 = scalar_lea.vmem %s5, %s4095
      $region52: #{cnn_forward.4} parent=47 // pred_fallthru
        _
    $region48: #{cnn_forward.4} parent=5 // pred_fallthru
      _
  $region6: #{cnn_forward.4} parent=0 // loop_footer
    %s15 = sadd.s32 1, %s11
  $region7: #{cnn_forward.4} parent=0 // loop_footer_branch
    %10 = sbr.rel target = $region3
  $region8: #{cnn_forward.4} parent=0 // loop_exit
    _

// kernel: cnn_forward.5
$region0: #{cnn_forward.5}
  #allocation0 [shape = 'u32[]', space=smem, size = 0x4, offset = 0x4, fixed_abs, tag = 'smem constant byte address 0x4 - core index']
  #allocation1 [shape = 'u32[144,128]{1,0:T(1,128)}', space=vmem, size = 0x12000, scoped, tag = 'internal scratch']
  %s0 = inlined_call_operand.vmem [shape: bf16[2,20320], index: 0, kind: input, shape index: {}]
  %s1 = inlined_call_operand.vmem [shape: bf16[10,20320], index: 1, kind: input, shape index: {}]
  %s2 = inlined_call_operand.vmem [shape: f32[1,10], index: 2, kind: input, shape index: {}]
  %s3 = inlined_call_operand.hbm [shape: f32[2,10], index: 3, kind: output, shape index: {}]
  %s4 = sld [smem:[#allocation0]]
  $region22: #{cnn_forward.5} parent=0
    _
  %s6 = ssub.s32 1, %s4
  %s7 = scalar_select 0, %s6, %s4
  $region1: #{cnn_forward.5} parent=0
    #allocation2 [shape = 'u8[1024]{0}', space=vmem, size = 0x400, scoped, tag = 'output window, operand 0, single buffered']
    #allocation3 [shape = 's32[1]{0}', space=sflag, size = 0x4, scoped, tag = 'scoped memory for cnn_forward.5']
    %8 = vsyncpa [#allocation3], 0
    // Predicated region
    $region2: #{cnn_forward.5} parent=1 // pred_check
      _
    $region3: #{cnn_forward.5} parent=1 // pred_check_branch
      %10 = sbr.rel (0) target = $region5
    $region4: #{cnn_forward.5} parent=1 // pred_region
      _
    $region5: #{cnn_forward.5} parent=1 // pred_fallthru
      _
    // Predicated region
    $region6: #{cnn_forward.5} parent=1 // pred_check
      _
    $region7: #{cnn_forward.5} parent=1 // pred_check_branch
      %12 = sbr.rel (0) target = $region9
    $region8: #{cnn_forward.5} parent=1 // pred_region
      _
    $region9: #{cnn_forward.5} parent=1 // pred_fallthru
      _
    // Predicated region
    $region10: #{cnn_forward.5} parent=1 // pred_check
      _
    $region11: #{cnn_forward.5} parent=1 // pred_check_branch
      %14 = sbr.rel (0) target = $region13
    $region12: #{cnn_forward.5} parent=1 // pred_region
      _
    $region13: #{cnn_forward.5} parent=1 // pred_fallthru
      _
    %v16 = vld [vmem:[%s0] sm:$0xff]
    %v17 = vld [vmem:[%s0 + $0x8] sm:$0xff]
    %v18 = vld [vmem:[%s0 + $0x10] sm:$0xff]
    %v19 = vld [vmem:[%s0 + $0x18] sm:$0xff]
    %v20 = vld [vmem:[%s0 + $0x20] sm:$0xff]
    %v21 = vld [vmem:[%s0 + $0x28] sm:$0xff]
    %v22 = vld [vmem:[%s0 + $0x30] sm:$0xff]
    %v23 = vld [vmem:[%s0 + $0x38] sm:$0xff]
    %v24 = vld [vmem:[%s0 + $0x40] sm:$0xff]
    %v25 = vld [vmem:[%s0 + $0x48] sm:$0xff]
    %v26 = vld [vmem:[%s0 + $0x50] sm:$0xff]
    %v27 = vld [vmem:[%s0 + $0x58] sm:$0xff]
    %v28 = vld [vmem:[%s0 + $0x60] sm:$0xff]
    %v29 = vld [vmem:[%s0 + $0x68] sm:$0xff]
    %v30 = vld [vmem:[%s0 + $0x70] sm:$0xff]
    %v31 = vld [vmem:[%s0 + $0x78] sm:$0xff]
    %v32 = vld [vmem:[%s0 + $0x80] sm:$0xff]
    %v33 = vld [vmem:[%s0 + $0x88] sm:$0xff]
    %v34 = vld [vmem:[%s0 + $0x90] sm:$0xff]
    %v35 = vld [vmem:[%s0 + $0x98] sm:$0x7f]
    %v36 = vld [vmem:[%s1] sm:$0xff]
    %v37 = vld [vmem:[%s1 + $0x8] sm:$0xff]
    %v38 = vld [vmem:[%s1 + $0x10] sm:$0xff]
    %v39 = vld [vmem:[%s1 + $0x18] sm:$0xff]
    %v40 = vld [vmem:[%s1 + $0x20] sm:$0xff]
    %v41 = vld [vmem:[%s1 + $0x28] sm:$0xff]
    %v42 = vld [vmem:[%s1 + $0x30] sm:$0xff]
    %v43 = vld [vmem:[%s1 + $0x38] sm:$0xff]
    %v44 = vld [vmem:[%s1 + $0x40] sm:$0xff]
    %v45 = vld [vmem:[%s1 + $0x48] sm:$0xff]
    %v46 = vld [vmem:[%s1 + $0x50] sm:$0xff]
    %v47 = vld [vmem:[%s1 + $0x58] sm:$0xff]
    %v48 = vld [vmem:[%s1 + $0x60] sm:$0xff]
    %v49 = vld [vmem:[%s1 + $0x68] sm:$0xff]
    %v50 = vld [vmem:[%s1 + $0x70] sm:$0xff]
    %v51 = vld [vmem:[%s1 + $0x78] sm:$0xff]
    %v52 = vld [vmem:[%s1 + $0x80] sm:$0xff]
    %v53 = vld [vmem:[%s1 + $0x88] sm:$0xff]
    %v54 = vld [vmem:[%s1 + $0x90] sm:$0xff]
    %v55 = vld [vmem:[%s1 + $0x98] sm:$0xff]
    %v56 = vld [vmem:[%s1 + $0xa0] sm:$0xff]
    %v57 = vld [vmem:[%s1 + $0xa8] sm:$0xff]
    %v58 = vld [vmem:[%s1 + $0xb0] sm:$0xff]
    %v59 = vld [vmem:[%s1 + $0xb8] sm:$0xff]
    %v60 = vld [vmem:[%s1 + $0xc0] sm:$0xff]
    %v61 = vld [vmem:[%s1 + $0xc8] sm:$0xff]
    %v62 = vld [vmem:[%s1 + $0xd0] sm:$0xff]
    %v63 = vld [vmem:[%s1 + $0xd8] sm:$0xff]
    %v64 = vld [vmem:[%s1 + $0xe0] sm:$0xff]
    %v65 = vld [vmem:[%s1 + $0xe8] sm:$0xff]
    %v66 = vld [vmem:[%s1 + $0xf0] sm:$0xff]
    %v67 = vld [vmem:[%s1 + $0xf8] sm:$0xff]
    %v68 = vld [vmem:[%s1 + $0x100] sm:$0xff]
    %v69 = vld [vmem:[%s1 + $0x108] sm:$0xff]
    %v70 = vld [vmem:[%s1 + $0x110] sm:$0xff]
    %v71 = vld [vmem:[%s1 + $0x118] sm:$0xff]
    %v72 = vld [vmem:[%s1 + $0x120] sm:$0xff]
    %v73 = vld [vmem:[%s1 + $0x128] sm:$0xff]
    %v74 = vld [vmem:[%s1 + $0x130] sm:$0xff]
    %v75 = vld [vmem:[%s1 + $0x138] sm:$0xff]
    %v76 = vld [vmem:[%s1 + $0x140] sm:$0xff]
    %v77 = vld [vmem:[%s1 + $0x148] sm:$0xff]
    %v78 = vld [vmem:[%s1 + $0x150] sm:$0xff]
    %v79 = vld [vmem:[%s1 + $0x158] sm:$0xff]
    %v80 = vld [vmem:[%s1 + $0x160] sm:$0xff]
    %v81 = vld [vmem:[%s1 + $0x168] sm:$0xff]
    %v82 = vld [vmem:[%s1 + $0x170] sm:$0xff]
    %v83 = vld [vmem:[%s1 + $0x178] sm:$0xff]
    %v84 = vld [vmem:[%s1 + $0x180] sm:$0xff]
    %v85 = vld [vmem:[%s1 + $0x188] sm:$0xff]
    %v86 = vld [vmem:[%s1 + $0x190] sm:$0xff]
    %v87 = vld [vmem:[%s1 + $0x198] sm:$0xff]
    %v88 = vld [vmem:[%s1 + $0x1a0] sm:$0xff]
    %v89 = vld [vmem:[%s1 + $0x1a8] sm:$0xff]
    %v90 = vld [vmem:[%s1 + $0x1b0] sm:$0xff]
    %v91 = vld [vmem:[%s1 + $0x1b8] sm:$0xff]
    %v92 = vld [vmem:[%s1 + $0x1c0] sm:$0xff]
    %v93 = vld [vmem:[%s1 + $0x1c8] sm:$0xff]
    %v94 = vld [vmem:[%s1 + $0x1d0] sm:$0xff]
    %v95 = vld [vmem:[%s1 + $0x1d8] sm:$0xff]
    %v96 = vld [vmem:[%s1 + $0x1e0] sm:$0xff]
    %v97 = vld [vmem:[%s1 + $0x1e8] sm:$0xff]
    %v98 = vld [vmem:[%s1 + $0x1f0] sm:$0xff]
    %v99 = vld [vmem:[%s1 + $0x1f8] sm:$0xff]
    %v100 = vld [vmem:[%s1 + $0x200] sm:$0xff]
    %v101 = vld [vmem:[%s1 + $0x208] sm:$0xff]
    %v102 = vld [vmem:[%s1 + $0x210] sm:$0xff]
    %v103 = vld [vmem:[%s1 + $0x218] sm:$0xff]
    %v104 = vld [vmem:[%s1 + $0x220] sm:$0xff]
    %v105 = vld [vmem:[%s1 + $0x228] sm:$0xff]
    %v106 = vld [vmem:[%s1 + $0x230] sm:$0xff]
    %v107 = vld [vmem:[%s1 + $0x238] sm:$0xff]
    %v108 = vld [vmem:[%s1 + $0x240] sm:$0xff]
    %v109 = vld [vmem:[%s1 + $0x248] sm:$0xff]
    %v110 = vld [vmem:[%s1 + $0x250] sm:$0xff]
    %v111 = vld [vmem:[%s1 + $0x258] sm:$0xff]
    %v112 = vld [vmem:[%s1 + $0x260] sm:$0xff]
    %v113 = vld [vmem:[%s1 + $0x268] sm:$0xff]
    %v114 = vld [vmem:[%s1 + $0x270] sm:$0xff]
    %v115 = vld [vmem:[%s1 + $0x278] sm:$0xf]
    %v116 = vld [vmem:[%s1 + $0x27c] sm:$0x11]
    %v117 = vld [vmem:[%s1 + $0x284] sm:$0x11]
    %v118 = vld [vmem:[%s1 + $0x28c] sm:$0x11]
    %v119 = vld [vmem:[%s1 + $0x294] sm:$0x11]
    %v120 = vld [vmem:[%s1 + $0x29c] sm:$0x11]
    %v121 = vld [vmem:[%s1 + $0x2a4] sm:$0x11]
    %v122 = vld [vmem:[%s1 + $0x2ac] sm:$0x11]
    %v123 = vld [vmem:[%s1 + $0x2b4] sm:$0x11]
    %v124 = vld [vmem:[%s1 + $0x2bc] sm:$0x11]
    %v125 = vld [vmem:[%s1 + $0x2c4] sm:$0x11]
    %v126 = vld [vmem:[%s1 + $0x2cc] sm:$0x11]
    %v127 = vld [vmem:[%s1 + $0x2d4] sm:$0x11]
    %v128 = vld [vmem:[%s1 + $0x2dc] sm:$0x11]
    %v129 = vld [vmem:[%s1 + $0x2e4] sm:$0x11]
    %v130 = vld [vmem:[%s1 + $0x2ec] sm:$0x11]
    %v131 = vld [vmem:[%s1 + $0x2f4] sm:$0x11]
    %v132 = vld [vmem:[%s1 + $0x2fc] sm:$0x11]
    %v133 = vld [vmem:[%s1 + $0x304] sm:$0x11]
    %v134 = vld [vmem:[%s1 + $0x30c] sm:$0x11]
    %v135 = vld [vmem:[%s1 + $0x314] sm:$0x11]
    %v136 = vld [vmem:[%s1 + $0x31c] sm:$0x11]
    %v137 = vld [vmem:[%s1 + $0x324] sm:$0x11]
    %v138 = vld [vmem:[%s1 + $0x32c] sm:$0x11]
    %v139 = vld [vmem:[%s1 + $0x334] sm:$0x11]
    %v140 = vld [vmem:[%s1 + $0x33c] sm:$0x11]
    %v141 = vld [vmem:[%s1 + $0x344] sm:$0x11]
    %v142 = vld [vmem:[%s1 + $0x34c] sm:$0x11]
    %v143 = vld [vmem:[%s1 + $0x354] sm:$0x11]
    %v144 = vld [vmem:[%s1 + $0x35c] sm:$0x11]
    %v145 = vld [vmem:[%s1 + $0x364] sm:$0x11]
    %v146 = vld [vmem:[%s1 + $0x36c] sm:$0x11]
    %v147 = vld [vmem:[%s1 + $0x374] sm:$0x11]
    %v148 = vld [vmem:[%s1 + $0x37c] sm:$0x11]
    %v149 = vld [vmem:[%s1 + $0x384] sm:$0x11]
    %v150 = vld [vmem:[%s1 + $0x38c] sm:$0x11]
    %v151 = vld [vmem:[%s1 + $0x394] sm:$0x11]
    %v152 = vld [vmem:[%s1 + $0x39c] sm:$0x11]
    %v153 = vld [vmem:[%s1 + $0x3a4] sm:$0x11]
    %v154 = vld [vmem:[%s1 + $0x3ac] sm:$0x11]
    %v155 = vld [vmem:[%s1 + $0x3b4] sm:$0x11]
    %v156 = vld [vmem:[%s1 + $0x3bc] sm:$0x11]
    %v157 = vld [vmem:[%s1 + $0x3c4] sm:$0x11]
    %v158 = vld [vmem:[%s1 + $0x3cc] sm:$0x11]
    %v159 = vld [vmem:[%s1 + $0x3d4] sm:$0x11]
    %v160 = vld [vmem:[%s1 + $0x3dc] sm:$0x11]
    %v161 = vld [vmem:[%s1 + $0x3e4] sm:$0x11]
    %v162 = vld [vmem:[%s1 + $0x3ec] sm:$0x11]
    %v163 = vld [vmem:[%s1 + $0x3f4] sm:$0x11]
    %v164 = vld [vmem:[%s1 + $0x3fc] sm:$0x11]
    %v165 = vld [vmem:[%s1 + $0x404] sm:$0x11]
    %v166 = vld [vmem:[%s1 + $0x40c] sm:$0x11]
    %v167 = vld [vmem:[%s1 + $0x414] sm:$0x11]
    %v168 = vld [vmem:[%s1 + $0x41c] sm:$0x11]
    %v169 = vld [vmem:[%s1 + $0x424] sm:$0x11]
    %v170 = vld [vmem:[%s1 + $0x42c] sm:$0x11]
    %v171 = vld [vmem:[%s1 + $0x434] sm:$0x11]
    %v172 = vld [vmem:[%s1 + $0x43c] sm:$0x11]
    %v173 = vld [vmem:[%s1 + $0x444] sm:$0x11]
    %v174 = vld [vmem:[%s1 + $0x44c] sm:$0x11]
    %v175 = vld [vmem:[%s1 + $0x454] sm:$0x11]
    %v176 = vld [vmem:[%s1 + $0x45c] sm:$0x11]
    %v177 = vld [vmem:[%s1 + $0x464] sm:$0x11]
    %v178 = vld [vmem:[%s1 + $0x46c] sm:$0x11]
    %v179 = vld [vmem:[%s1 + $0x474] sm:$0x11]
    %v180 = vld [vmem:[%s1 + $0x47c] sm:$0x11]
    %v181 = vld [vmem:[%s1 + $0x484] sm:$0x11]
    %v182 = vld [vmem:[%s1 + $0x48c] sm:$0x11]
    %v183 = vld [vmem:[%s1 + $0x494] sm:$0x11]
    %v184 = vld [vmem:[%s1 + $0x49c] sm:$0x11]
    %v185 = vld [vmem:[%s1 + $0x4a4] sm:$0x11]
    %v186 = vld [vmem:[%s1 + $0x4ac] sm:$0x11]
    %v187 = vld [vmem:[%s1 + $0x4b4] sm:$0x11]
    %v188 = vld [vmem:[%s1 + $0x4bc] sm:$0x11]
    %v189 = vld [vmem:[%s1 + $0x4c4] sm:$0x11]
    %v190 = vld [vmem:[%s1 + $0x4cc] sm:$0x11]
    %v191 = vld [vmem:[%s1 + $0x4d4] sm:$0x11]
    %v192 = vld [vmem:[%s1 + $0x4dc] sm:$0x11]
    %v193 = vld [vmem:[%s1 + $0x4e4] sm:$0x11]
    %v194 = vld [vmem:[%s1 + $0x4ec] sm:$0x11]
    %v195 = vld [vmem:[%s1 + $0x4f4] sm:$0x1]
    %v196 = vld [vmem:[%s2] sm:$0x1]
    %v198 = vlaneseq
    %v199 = vshrl.u32 %v198, 7
    %v200 = vsub.s32 0, %v199
    %v201 = vrot.slane %v196, %v200
    %v223 = vcombine.high %v16, %v16
    %v225 = vunpack.c.l.s4 1966171168
    %v226 = vunpack.c.0.s8 %v225
    %v227 = vlaneseq
    %v228 = vshrl.u32 %v227, 7
    %v229 = vsub.s32 %v226, %v228
    %v230 = vrot.slane %v16, %v229
    %v232 = vunpack.c.l.s4 1966171168
    %v233 = vunpack.c.0.s8 %v232
    %v234 = vlaneseq
    %v235 = vshrl.u32 %v234, 7
    %v236 = vsub.s32 %v233, %v235
    %v237 = vrot.slane %v223, %v236
    %v238 = vcombine.high %v230, %v230
    %v239 = vcombine.high %v237, %v237
    %v241 = vunpack.c.l.s4 1966171168
    %v242 = vunpack.c.0.s8 %v241
    %v243 = vlaneseq
    %v244 = vshrl.u32 %v243, 7
    %v245 = vsub.s32 %v242, %v244
    %v246 = vrot.slane %v230, %v245
    %v248 = vunpack.c.l.s4 1966171168
    %v249 = vunpack.c.0.s8 %v248
    %v250 = vlaneseq
    %v251 = vshrl.u32 %v250, 7
    %v252 = vsub.s32 %v249, %v251
    %v253 = vrot.slane %v237, %v252
    %v255 = vunpack.c.l.s4 1966171168
    %v256 = vunpack.c.0.s8 %v255
    %v257 = vlaneseq
    %v258 = vshrl.u32 %v257, 7
    %v259 = vsub.s32 %v256, %v258
    %v260 = vrot.slane %v238, %v259
    %v262 = vunpack.c.l.s4 1966171168
    %v263 = vunpack.c.0.s8 %v262
    %v264 = vlaneseq
    %v265 = vshrl.u32 %v264, 7
    %v266 = vsub.s32 %v263, %v265
    %v267 = vrot.slane %v239, %v266
    %v268 = vcombine.high %v246, %v246
    %v269 = vcombine.high %v253, %v253
    %v270 = vcombine.high %v260, %v260
    %v271 = vcombine.high %v267, %v267
    %v272 = vcombine.high %v17, %v17
    %v274 = vunpack.c.l.s4 1966171168
    %v275 = vunpack.c.0.s8 %v274
    %v276 = vlaneseq
    %v277 = vshrl.u32 %v276, 7
    %v278 = vsub.s32 %v275, %v277
    %v279 = vrot.slane %v17, %v278
    %v281 = vunpack.c.l.s4 1966171168
    %v282 = vunpack.c.0.s8 %v281
    %v283 = vlaneseq
    %v284 = vshrl.u32 %v283, 7
    %v285 = vsub.s32 %v282, %v284
    %v286 = vrot.slane %v272, %v285
    %v287 = vcombine.high %v279, %v279
    %v288 = vcombine.high %v286, %v286
    %v290 = vunpack.c.l.s4 1966171168
    %v291 = vunpack.c.0.s8 %v290
    %v292 = vlaneseq
    %v293 = vshrl.u32 %v292, 7
    %v294 = vsub.s32 %v291, %v293
    %v295 = vrot.slane %v279, %v294
    %v297 = vunpack.c.l.s4 1966171168
    %v298 = vunpack.c.0.s8 %v297
    %v299 = vlaneseq
    %v300 = vshrl.u32 %v299, 7
    %v301 = vsub.s32 %v298, %v300
    %v302 = vrot.slane %v286, %v301
    %v304 = vunpack.c.l.s4 1966171168
    %v305 = vunpack.c.0.s8 %v304
    %v306 = vlaneseq
    %v307 = vshrl.u32 %v306, 7
    %v308 = vsub.s32 %v305, %v307
    %v309 = vrot.slane %v287, %v308
    %v311 = vunpack.c.l.s4 1966171168
    %v312 = vunpack.c.0.s8 %v311
    %v313 = vlaneseq
    %v314 = vshrl.u32 %v313, 7
    %v315 = vsub.s32 %v312, %v314
    %v316 = vrot.slane %v288, %v315
    %v317 = vcombine.high %v295, %v295
    %v318 = vcombine.high %v302, %v302
    %v319 = vcombine.high %v309, %v309
    %v320 = vcombine.high %v316, %v316
    %v321 = vcombine.high %v18, %v18
    %v323 = vunpack.c.l.s4 1966171168
    %v324 = vunpack.c.0.s8 %v323
    %v325 = vlaneseq
    %v326 = vshrl.u32 %v325, 7
    %v327 = vsub.s32 %v324, %v326
    %v328 = vrot.slane %v18, %v327
    %v330 = vunpack.c.l.s4 1966171168
    %v331 = vunpack.c.0.s8 %v330
    %v332 = vlaneseq
    %v333 = vshrl.u32 %v332, 7
    %v334 = vsub.s32 %v331, %v333
    %v335 = vrot.slane %v321, %v334
    %v336 = vcombine.high %v328, %v328
    %v337 = vcombine.high %v335, %v335
    %v339 = vunpack.c.l.s4 1966171168
    %v340 = vunpack.c.0.s8 %v339
    %v341 = vlaneseq
    %v342 = vshrl.u32 %v341, 7
    %v343 = vsub.s32 %v340, %v342
    %v344 = vrot.slane %v328, %v343
    %v346 = vunpack.c.l.s4 1966171168
    %v347 = vunpack.c.0.s8 %v346
    %v348 = vlaneseq
    %v349 = vshrl.u32 %v348, 7
    %v350 = vsub.s32 %v347, %v349
    %v351 = vrot.slane %v335, %v350
    %v353 = vunpack.c.l.s4 1966171168
    %v354 = vunpack.c.0.s8 %v353
    %v355 = vlaneseq
    %v356 = vshrl.u32 %v355, 7
    %v357 = vsub.s32 %v354, %v356
    %v358 = vrot.slane %v336, %v357
    %v360 = vunpack.c.l.s4 1966171168
    %v361 = vunpack.c.0.s8 %v360
    %v362 = vlaneseq
    %v363 = vshrl.u32 %v362, 7
    %v364 = vsub.s32 %v361, %v363
    %v365 = vrot.slane %v337, %v364
    %v366 = vcombine.high %v344, %v344
    %v367 = vcombine.high %v351, %v351
    %v368 = vcombine.high %v358, %v358
    %v369 = vcombine.high %v365, %v365
    %v370 = vcombine.high %v19, %v19
    %v372 = vunpack.c.l.s4 1966171168
    %v373 = vunpack.c.0.s8 %v372
    %v374 = vlaneseq
    %v375 = vshrl.u32 %v374, 7
    %v376 = vsub.s32 %v373, %v375
    %v377 = vrot.slane %v19, %v376
    %v379 = vunpack.c.l.s4 1966171168
    %v380 = vunpack.c.0.s8 %v379
    %v381 = vlaneseq
    %v382 = vshrl.u32 %v381, 7
    %v383 = vsub.s32 %v380, %v382
    %v384 = vrot.slane %v370, %v383
    %v385 = vcombine.high %v377, %v377
    %v386 = vcombine.high %v384, %v384
    %v388 = vunpack.c.l.s4 1966171168
    %v389 = vunpack.c.0.s8 %v388
    %v390 = vlaneseq
    %v391 = vshrl.u32 %v390, 7
    %v392 = vsub.s32 %v389, %v391
    %v393 = vrot.slane %v377, %v392
    %v395 = vunpack.c.l.s4 1966171168
    %v396 = vunpack.c.0.s8 %v395
    %v397 = vlaneseq
    %v398 = vshrl.u32 %v397, 7
    %v399 = vsub.s32 %v396, %v398
    %v400 = vrot.slane %v384, %v399
    %v402 = vunpack.c.l.s4 1966171168
    %v403 = vunpack.c.0.s8 %v402
    %v404 = vlaneseq
    %v405 = vshrl.u32 %v404, 7
    %v406 = vsub.s32 %v403, %v405
    %v407 = vrot.slane %v385, %v406
    %v409 = vunpack.c.l.s4 1966171168
    %v410 = vunpack.c.0.s8 %v409
    %v411 = vlaneseq
    %v412 = vshrl.u32 %v411, 7
    %v413 = vsub.s32 %v410, %v412
    %v414 = vrot.slane %v386, %v413
    %v415 = vcombine.high %v393, %v393
    %v416 = vcombine.high %v400, %v400
    %v417 = vcombine.high %v407, %v407
    %v418 = vcombine.high %v414, %v414
    %v419 = vcombine.high %v20, %v20
    %v421 = vunpack.c.l.s4 1966171168
    %v422 = vunpack.c.0.s8 %v421
    %v423 = vlaneseq
    %v424 = vshrl.u32 %v423, 7
    %v425 = vsub.s32 %v422, %v424
    %v426 = vrot.slane %v20, %v425
    %v428 = vunpack.c.l.s4 1966171168
    %v429 = vunpack.c.0.s8 %v428
    %v430 = vlaneseq
    %v431 = vshrl.u32 %v430, 7
    %v432 = vsub.s32 %v429, %v431
    %v433 = vrot.slane %v419, %v432
    %v434 = vcombine.high %v426, %v426
    %v435 = vcombine.high %v433, %v433
    %v437 = vunpack.c.l.s4 1966171168
    %v438 = vunpack.c.0.s8 %v437
    %v439 = vlaneseq
    %v440 = vshrl.u32 %v439, 7
    %v441 = vsub.s32 %v438, %v440
    %v442 = vrot.slane %v426, %v441
    %v444 = vunpack.c.l.s4 1966171168
    %v445 = vunpack.c.0.s8 %v444
    %v446 = vlaneseq
    %v447 = vshrl.u32 %v446, 7
    %v448 = vsub.s32 %v445, %v447
    %v449 = vrot.slane %v433, %v448
    %v451 = vunpack.c.l.s4 1966171168
    %v452 = vunpack.c.0.s8 %v451
    %v453 = vlaneseq
    %v454 = vshrl.u32 %v453, 7
    %v455 = vsub.s32 %v452, %v454
    %v456 = vrot.slane %v434, %v455
    %v458 = vunpack.c.l.s4 1966171168
    %v459 = vunpack.c.0.s8 %v458
    %v460 = vlaneseq
    %v461 = vshrl.u32 %v460, 7
    %v462 = vsub.s32 %v459, %v461
    %v463 = vrot.slane %v435, %v462
    %v464 = vcombine.high %v442, %v442
    %v465 = vcombine.high %v449, %v449
    %v466 = vcombine.high %v456, %v456
    %v467 = vcombine.high %v463, %v463
    %v468 = vcombine.high %v21, %v21
    %v470 = vunpack.c.l.s4 1966171168
    %v471 = vunpack.c.0.s8 %v470
    %v472 = vlaneseq
    %v473 = vshrl.u32 %v472, 7
    %v474 = vsub.s32 %v471, %v473
    %v475 = vrot.slane %v21, %v474
    %v477 = vunpack.c.l.s4 1966171168
    %v478 = vunpack.c.0.s8 %v477
    %v479 = vlaneseq
    %v480 = vshrl.u32 %v479, 7
    %v481 = vsub.s32 %v478, %v480
    %v482 = vrot.slane %v468, %v481
    %v483 = vcombine.high %v475, %v475
    %v484 = vcombine.high %v482, %v482
    %v486 = vunpack.c.l.s4 1966171168
    %v487 = vunpack.c.0.s8 %v486
    %v488 = vlaneseq
    %v489 = vshrl.u32 %v488, 7
    %v490 = vsub.s32 %v487, %v489
    %v491 = vrot.slane %v475, %v490
    %v493 = vunpack.c.l.s4 1966171168
    %v494 = vunpack.c.0.s8 %v493
    %v495 = vlaneseq
    %v496 = vshrl.u32 %v495, 7
    %v497 = vsub.s32 %v494, %v496
    %v498 = vrot.slane %v482, %v497
    %v500 = vunpack.c.l.s4 1966171168
    %v501 = vunpack.c.0.s8 %v500
    %v502 = vlaneseq
    %v503 = vshrl.u32 %v502, 7
    %v504 = vsub.s32 %v501, %v503
    %v505 = vrot.slane %v483, %v504
    %v507 = vunpack.c.l.s4 1966171168
    %v508 = vunpack.c.0.s8 %v507
    %v509 = vlaneseq
    %v510 = vshrl.u32 %v509, 7
    %v511 = vsub.s32 %v508, %v510
    %v512 = vrot.slane %v484, %v511
    %v513 = vcombine.high %v491, %v491
    %v514 = vcombine.high %v498, %v498
    %v515 = vcombine.high %v505, %v505
    %v516 = vcombine.high %v512, %v512
    %v517 = vcombine.high %v22, %v22
    %v519 = vunpack.c.l.s4 1966171168
    %v520 = vunpack.c.0.s8 %v519
    %v521 = vlaneseq
    %v522 = vshrl.u32 %v521, 7
    %v523 = vsub.s32 %v520, %v522
    %v524 = vrot.slane %v22, %v523
    %v526 = vunpack.c.l.s4 1966171168
    %v527 = vunpack.c.0.s8 %v526
    %v528 = vlaneseq
    %v529 = vshrl.u32 %v528, 7
    %v530 = vsub.s32 %v527, %v529
    %v531 = vrot.slane %v517, %v530
    %v532 = vcombine.high %v524, %v524
    %v533 = vcombine.high %v531, %v531
    %v535 = vunpack.c.l.s4 1966171168
    %v536 = vunpack.c.0.s8 %v535
    %v537 = vlaneseq
    %v538 = vshrl.u32 %v537, 7
    %v539 = vsub.s32 %v536, %v538
    %v540 = vrot.slane %v524, %v539
    %v542 = vunpack.c.l.s4 1966171168
    %v543 = vunpack.c.0.s8 %v542
    %v544 = vlaneseq
    %v545 = vshrl.u32 %v544, 7
    %v546 = vsub.s32 %v543, %v545
    %v547 = vrot.slane %v531, %v546
    %v549 = vunpack.c.l.s4 1966171168
    %v550 = vunpack.c.0.s8 %v549
    %v551 = vlaneseq
    %v552 = vshrl.u32 %v551, 7
    %v553 = vsub.s32 %v550, %v552
    %v554 = vrot.slane %v532, %v553
    %v556 = vunpack.c.l.s4 1966171168
    %v557 = vunpack.c.0.s8 %v556
    %v558 = vlaneseq
    %v559 = vshrl.u32 %v558, 7
    %v560 = vsub.s32 %v557, %v559
    %v561 = vrot.slane %v533, %v560
    %v562 = vcombine.high %v540, %v540
    %v563 = vcombine.high %v547, %v547
    %v564 = vcombine.high %v554, %v554
    %v565 = vcombine.high %v561, %v561
    %v566 = vcombine.high %v23, %v23
    %v568 = vunpack.c.l.s4 1966171168
    %v569 = vunpack.c.0.s8 %v568
    %v570 = vlaneseq
    %v571 = vshrl.u32 %v570, 7
    %v572 = vsub.s32 %v569, %v571
    %v573 = vrot.slane %v23, %v572
    %v575 = vunpack.c.l.s4 1966171168
    %v576 = vunpack.c.0.s8 %v575
    %v577 = vlaneseq
    %v578 = vshrl.u32 %v577, 7
    %v579 = vsub.s32 %v576, %v578
    %v580 = vrot.slane %v566, %v579
    %v581 = vcombine.high %v573, %v573
    %v582 = vcombine.high %v580, %v580
    %v584 = vunpack.c.l.s4 1966171168
    %v585 = vunpack.c.0.s8 %v584
    %v586 = vlaneseq
    %v587 = vshrl.u32 %v586, 7
    %v588 = vsub.s32 %v585, %v587
    %v589 = vrot.slane %v573, %v588
    %v591 = vunpack.c.l.s4 1966171168
    %v592 = vunpack.c.0.s8 %v591
    %v593 = vlaneseq
    %v594 = vshrl.u32 %v593, 7
    %v595 = vsub.s32 %v592, %v594
    %v596 = vrot.slane %v580, %v595
    %v598 = vunpack.c.l.s4 1966171168
    %v599 = vunpack.c.0.s8 %v598
    %v600 = vlaneseq
    %v601 = vshrl.u32 %v600, 7
    %v602 = vsub.s32 %v599, %v601
    %v603 = vrot.slane %v581, %v602
    %v605 = vunpack.c.l.s4 1966171168
    %v606 = vunpack.c.0.s8 %v605
    %v607 = vlaneseq
    %v608 = vshrl.u32 %v607, 7
    %v609 = vsub.s32 %v606, %v608
    %v610 = vrot.slane %v582, %v609
    %v611 = vcombine.high %v589, %v589
    %v612 = vcombine.high %v596, %v596
    %v613 = vcombine.high %v603, %v603
    %v614 = vcombine.high %v610, %v610
    %v615 = vcombine.high %v24, %v24
    %v617 = vunpack.c.l.s4 1966171168
    %v618 = vunpack.c.0.s8 %v617
    %v619 = vlaneseq
    %v620 = vshrl.u32 %v619, 7
    %v621 = vsub.s32 %v618, %v620
    %v622 = vrot.slane %v24, %v621
    %v624 = vunpack.c.l.s4 1966171168
    %v625 = vunpack.c.0.s8 %v624
    %v626 = vlaneseq
    %v627 = vshrl.u32 %v626, 7
    %v628 = vsub.s32 %v625, %v627
    %v629 = vrot.slane %v615, %v628
    %v630 = vcombine.high %v622, %v622
    %v631 = vcombine.high %v629, %v629
    %v633 = vunpack.c.l.s4 1966171168
    %v634 = vunpack.c.0.s8 %v633
    %v635 = vlaneseq
    %v636 = vshrl.u32 %v635, 7
    %v637 = vsub.s32 %v634, %v636
    %v638 = vrot.slane %v622, %v637
    %v640 = vunpack.c.l.s4 1966171168
    %v641 = vunpack.c.0.s8 %v640
    %v642 = vlaneseq
    %v643 = vshrl.u32 %v642, 7
    %v644 = vsub.s32 %v641, %v643
    %v645 = vrot.slane %v629, %v644
    %v647 = vunpack.c.l.s4 1966171168
    %v648 = vunpack.c.0.s8 %v647
    %v649 = vlaneseq
    %v650 = vshrl.u32 %v649, 7
    %v651 = vsub.s32 %v648, %v650
    %v652 = vrot.slane %v630, %v651
    %v654 = vunpack.c.l.s4 1966171168
    %v655 = vunpack.c.0.s8 %v654
    %v656 = vlaneseq
    %v657 = vshrl.u32 %v656, 7
    %v658 = vsub.s32 %v655, %v657
    %v659 = vrot.slane %v631, %v658
    %v660 = vcombine.high %v638, %v638
    %v661 = vcombine.high %v645, %v645
    %v662 = vcombine.high %v652, %v652
    %v663 = vcombine.high %v659, %v659
    %v664 = vcombine.high %v25, %v25
    %v666 = vunpack.c.l.s4 1966171168
    %v667 = vunpack.c.0.s8 %v666
    %v668 = vlaneseq
    %v669 = vshrl.u32 %v668, 7
    %v670 = vsub.s32 %v667, %v669
    %v671 = vrot.slane %v25, %v670
    %v673 = vunpack.c.l.s4 1966171168
    %v674 = vunpack.c.0.s8 %v673
    %v675 = vlaneseq
    %v676 = vshrl.u32 %v675, 7
    %v677 = vsub.s32 %v674, %v676
    %v678 = vrot.slane %v664, %v677
    %v679 = vcombine.high %v671, %v671
    %v680 = vcombine.high %v678, %v678
    %v682 = vunpack.c.l.s4 1966171168
    %v683 = vunpack.c.0.s8 %v682
    %v684 = vlaneseq
    %v685 = vshrl.u32 %v684, 7
    %v686 = vsub.s32 %v683, %v685
    %v687 = vrot.slane %v671, %v686
    %v689 = vunpack.c.l.s4 1966171168
    %v690 = vunpack.c.0.s8 %v689
    %v691 = vlaneseq
    %v692 = vshrl.u32 %v691, 7
    %v693 = vsub.s32 %v690, %v692
    %v694 = vrot.slane %v678, %v693
    %v696 = vunpack.c.l.s4 1966171168
    %v697 = vunpack.c.0.s8 %v696
    %v698 = vlaneseq
    %v699 = vshrl.u32 %v698, 7
    %v700 = vsub.s32 %v697, %v699
    %v701 = vrot.slane %v679, %v700
    %v703 = vunpack.c.l.s4 1966171168
    %v704 = vunpack.c.0.s8 %v703
    %v705 = vlaneseq
    %v706 = vshrl.u32 %v705, 7
    %v707 = vsub.s32 %v704, %v706
    %v708 = vrot.slane %v680, %v707
    %v709 = vcombine.high %v687, %v687
    %v710 = vcombine.high %v694, %v694
    %v711 = vcombine.high %v701, %v701
    %v712 = vcombine.high %v708, %v708
    %v713 = vcombine.high %v26, %v26
    %v715 = vunpack.c.l.s4 1966171168
    %v716 = vunpack.c.0.s8 %v715
    %v717 = vlaneseq
    %v718 = vshrl.u32 %v717, 7
    %v719 = vsub.s32 %v716, %v718
    %v720 = vrot.slane %v26, %v719
    %v722 = vunpack.c.l.s4 1966171168
    %v723 = vunpack.c.0.s8 %v722
    %v724 = vlaneseq
    %v725 = vshrl.u32 %v724, 7
    %v726 = vsub.s32 %v723, %v725
    %v727 = vrot.slane %v713, %v726
    %v728 = vcombine.high %v720, %v720
    %v729 = vcombine.high %v727, %v727
    %v731 = vunpack.c.l.s4 1966171168
    %v732 = vunpack.c.0.s8 %v731
    %v733 = vlaneseq
    %v734 = vshrl.u32 %v733, 7
    %v735 = vsub.s32 %v732, %v734
    %v736 = vrot.slane %v720, %v735
    %v738 = vunpack.c.l.s4 1966171168
    %v739 = vunpack.c.0.s8 %v738
    %v740 = vlaneseq
    %v741 = vshrl.u32 %v740, 7
    %v742 = vsub.s32 %v739, %v741
    %v743 = vrot.slane %v727, %v742
    %v745 = vunpack.c.l.s4 1966171168
    %v746 = vunpack.c.0.s8 %v745
    %v747 = vlaneseq
    %v748 = vshrl.u32 %v747, 7
    %v749 = vsub.s32 %v746, %v748
    %v750 = vrot.slane %v728, %v749
    %v752 = vunpack.c.l.s4 1966171168
    %v753 = vunpack.c.0.s8 %v752
    %v754 = vlaneseq
    %v755 = vshrl.u32 %v754, 7
    %v756 = vsub.s32 %v753, %v755
    %v757 = vrot.slane %v729, %v756
    %v758 = vcombine.high %v736, %v736
    %v759 = vcombine.high %v743, %v743
    %v760 = vcombine.high %v750, %v750
    %v761 = vcombine.high %v757, %v757
    %v762 = vcombine.high %v27, %v27
    %v764 = vunpack.c.l.s4 1966171168
    %v765 = vunpack.c.0.s8 %v764
    %v766 = vlaneseq
    %v767 = vshrl.u32 %v766, 7
    %v768 = vsub.s32 %v765, %v767
    %v769 = vrot.slane %v27, %v768
    %v771 = vunpack.c.l.s4 1966171168
    %v772 = vunpack.c.0.s8 %v771
    %v773 = vlaneseq
    %v774 = vshrl.u32 %v773, 7
    %v775 = vsub.s32 %v772, %v774
    %v776 = vrot.slane %v762, %v775
    %v777 = vcombine.high %v769, %v769
    %v778 = vcombine.high %v776, %v776
    %v780 = vunpack.c.l.s4 1966171168
    %v781 = vunpack.c.0.s8 %v780
    %v782 = vlaneseq
    %v783 = vshrl.u32 %v782, 7
    %v784 = vsub.s32 %v781, %v783
    %v785 = vrot.slane %v769, %v784
    %v787 = vunpack.c.l.s4 1966171168
    %v788 = vunpack.c.0.s8 %v787
    %v789 = vlaneseq
    %v790 = vshrl.u32 %v789, 7
    %v791 = vsub.s32 %v788, %v790
    %v792 = vrot.slane %v776, %v791
    %v794 = vunpack.c.l.s4 1966171168
    %v795 = vunpack.c.0.s8 %v794
    %v796 = vlaneseq
    %v797 = vshrl.u32 %v796, 7
    %v798 = vsub.s32 %v795, %v797
    %v799 = vrot.slane %v777, %v798
    %v801 = vunpack.c.l.s4 1966171168
    %v802 = vunpack.c.0.s8 %v801
    %v803 = vlaneseq
    %v804 = vshrl.u32 %v803, 7
    %v805 = vsub.s32 %v802, %v804
    %v806 = vrot.slane %v778, %v805
    %v807 = vcombine.high %v785, %v785
    %v808 = vcombine.high %v792, %v792
    %v809 = vcombine.high %v799, %v799
    %v810 = vcombine.high %v806, %v806
    %v811 = vcombine.high %v28, %v28
    %v813 = vunpack.c.l.s4 1966171168
    %v814 = vunpack.c.0.s8 %v813
    %v815 = vlaneseq
    %v816 = vshrl.u32 %v815, 7
    %v817 = vsub.s32 %v814, %v816
    %v818 = vrot.slane %v28, %v817
    %v820 = vunpack.c.l.s4 1966171168
    %v821 = vunpack.c.0.s8 %v820
    %v822 = vlaneseq
    %v823 = vshrl.u32 %v822, 7
    %v824 = vsub.s32 %v821, %v823
    %v825 = vrot.slane %v811, %v824
    %v826 = vcombine.high %v818, %v818
    %v827 = vcombine.high %v825, %v825
    %v829 = vunpack.c.l.s4 1966171168
    %v830 = vunpack.c.0.s8 %v829
    %v831 = vlaneseq
    %v832 = vshrl.u32 %v831, 7
    %v833 = vsub.s32 %v830, %v832
    %v834 = vrot.slane %v818, %v833
    %v836 = vunpack.c.l.s4 1966171168
    %v837 = vunpack.c.0.s8 %v836
    %v838 = vlaneseq
    %v839 = vshrl.u32 %v838, 7
    %v840 = vsub.s32 %v837, %v839
    %v841 = vrot.slane %v825, %v840
    %v843 = vunpack.c.l.s4 1966171168
    %v844 = vunpack.c.0.s8 %v843
    %v845 = vlaneseq
    %v846 = vshrl.u32 %v845, 7
    %v847 = vsub.s32 %v844, %v846
    %v848 = vrot.slane %v826, %v847
    %v850 = vunpack.c.l.s4 1966171168
    %v851 = vunpack.c.0.s8 %v850
    %v852 = vlaneseq
    %v853 = vshrl.u32 %v852, 7
    %v854 = vsub.s32 %v851, %v853
    %v855 = vrot.slane %v827, %v854
    %v856 = vcombine.high %v834, %v834
    %v857 = vcombine.high %v841, %v841
    %v858 = vcombine.high %v848, %v848
    %v859 = vcombine.high %v855, %v855
    %v860 = vcombine.high %v29, %v29
    %v862 = vunpack.c.l.s4 1966171168
    %v863 = vunpack.c.0.s8 %v862
    %v864 = vlaneseq
    %v865 = vshrl.u32 %v864, 7
    %v866 = vsub.s32 %v863, %v865
    %v867 = vrot.slane %v29, %v866
    %v869 = vunpack.c.l.s4 1966171168
    %v870 = vunpack.c.0.s8 %v869
    %v871 = vlaneseq
    %v872 = vshrl.u32 %v871, 7
    %v873 = vsub.s32 %v870, %v872
    %v874 = vrot.slane %v860, %v873
    %v875 = vcombine.high %v867, %v867
    %v876 = vcombine.high %v874, %v874
    %v878 = vunpack.c.l.s4 1966171168
    %v879 = vunpack.c.0.s8 %v878
    %v880 = vlaneseq
    %v881 = vshrl.u32 %v880, 7
    %v882 = vsub.s32 %v879, %v881
    %v883 = vrot.slane %v867, %v882
    %v885 = vunpack.c.l.s4 1966171168
    %v886 = vunpack.c.0.s8 %v885
    %v887 = vlaneseq
    %v888 = vshrl.u32 %v887, 7
    %v889 = vsub.s32 %v886, %v888
    %v890 = vrot.slane %v874, %v889
    %v892 = vunpack.c.l.s4 1966171168
    %v893 = vunpack.c.0.s8 %v892
    %v894 = vlaneseq
    %v895 = vshrl.u32 %v894, 7
    %v896 = vsub.s32 %v893, %v895
    %v897 = vrot.slane %v875, %v896
    %v899 = vunpack.c.l.s4 1966171168
    %v900 = vunpack.c.0.s8 %v899
    %v901 = vlaneseq
    %v902 = vshrl.u32 %v901, 7
    %v903 = vsub.s32 %v900, %v902
    %v904 = vrot.slane %v876, %v903
    %v905 = vcombine.high %v883, %v883
    %v906 = vcombine.high %v890, %v890
    %v907 = vcombine.high %v897, %v897
    %v908 = vcombine.high %v904, %v904
    %v909 = vcombine.high %v30, %v30
    %v911 = vunpack.c.l.s4 1966171168
    %v912 = vunpack.c.0.s8 %v911
    %v913 = vlaneseq
    %v914 = vshrl.u32 %v913, 7
    %v915 = vsub.s32 %v912, %v914
    %v916 = vrot.slane %v30, %v915
    %v918 = vunpack.c.l.s4 1966171168
    %v919 = vunpack.c.0.s8 %v918
    %v920 = vlaneseq
    %v921 = vshrl.u32 %v920, 7
    %v922 = vsub.s32 %v919, %v921
    %v923 = vrot.slane %v909, %v922
    %v924 = vcombine.high %v916, %v916
    %v925 = vcombine.high %v923, %v923
    %v927 = vunpack.c.l.s4 1966171168
    %v928 = vunpack.c.0.s8 %v927
    %v929 = vlaneseq
    %v930 = vshrl.u32 %v929, 7
    %v931 = vsub.s32 %v928, %v930
    %v932 = vrot.slane %v916, %v931
    %v934 = vunpack.c.l.s4 1966171168
    %v935 = vunpack.c.0.s8 %v934
    %v936 = vlaneseq
    %v937 = vshrl.u32 %v936, 7
    %v938 = vsub.s32 %v935, %v937
    %v939 = vrot.slane %v923, %v938
    %v941 = vunpack.c.l.s4 1966171168
    %v942 = vunpack.c.0.s8 %v941
    %v943 = vlaneseq
    %v944 = vshrl.u32 %v943, 7
    %v945 = vsub.s32 %v942, %v944
    %v946 = vrot.slane %v924, %v945
    %v948 = vunpack.c.l.s4 1966171168
    %v949 = vunpack.c.0.s8 %v948
    %v950 = vlaneseq
    %v951 = vshrl.u32 %v950, 7
    %v952 = vsub.s32 %v949, %v951
    %v953 = vrot.slane %v925, %v952
    %v954 = vcombine.high %v932, %v932
    %v955 = vcombine.high %v939, %v939
    %v956 = vcombine.high %v946, %v946
    %v957 = vcombine.high %v953, %v953
    %v958 = vcombine.high %v31, %v31
    %v960 = vunpack.c.l.s4 1966171168
    %v961 = vunpack.c.0.s8 %v960
    %v962 = vlaneseq
    %v963 = vshrl.u32 %v962, 7
    %v964 = vsub.s32 %v961, %v963
    %v965 = vrot.slane %v31, %v964
    %v967 = vunpack.c.l.s4 1966171168
    %v968 = vunpack.c.0.s8 %v967
    %v969 = vlaneseq
    %v970 = vshrl.u32 %v969, 7
    %v971 = vsub.s32 %v968, %v970
    %v972 = vrot.slane %v958, %v971
    %v973 = vcombine.high %v965, %v965
    %v974 = vcombine.high %v972, %v972
    %v976 = vunpack.c.l.s4 1966171168
    %v977 = vunpack.c.0.s8 %v976
    %v978 = vlaneseq
    %v979 = vshrl.u32 %v978, 7
    %v980 = vsub.s32 %v977, %v979
    %v981 = vrot.slane %v965, %v980
    %v983 = vunpack.c.l.s4 1966171168
    %v984 = vunpack.c.0.s8 %v983
    %v985 = vlaneseq
    %v986 = vshrl.u32 %v985, 7
    %v987 = vsub.s32 %v984, %v986
    %v988 = vrot.slane %v972, %v987
    %v990 = vunpack.c.l.s4 1966171168
    %v991 = vunpack.c.0.s8 %v990
    %v992 = vlaneseq
    %v993 = vshrl.u32 %v992, 7
    %v994 = vsub.s32 %v991, %v993
    %v995 = vrot.slane %v973, %v994
    %v997 = vunpack.c.l.s4 1966171168
    %v998 = vunpack.c.0.s8 %v997
    %v999 = vlaneseq
    %v1000 = vshrl.u32 %v999, 7
    %v1001 = vsub.s32 %v998, %v1000
    %v1002 = vrot.slane %v974, %v1001
    %v1003 = vcombine.high %v981, %v981
    %v1004 = vcombine.high %v988, %v988
    %v1005 = vcombine.high %v995, %v995
    %v1006 = vcombine.high %v1002, %v1002
    %v1007 = vcombine.high %v32, %v32
    %v1009 = vunpack.c.l.s4 1966171168
    %v1010 = vunpack.c.0.s8 %v1009
    %v1011 = vlaneseq
    %v1012 = vshrl.u32 %v1011, 7
    %v1013 = vsub.s32 %v1010, %v1012
    %v1014 = vrot.slane %v32, %v1013
    %v1016 = vunpack.c.l.s4 1966171168
    %v1017 = vunpack.c.0.s8 %v1016
    %v1018 = vlaneseq
    %v1019 = vshrl.u32 %v1018, 7
    %v1020 = vsub.s32 %v1017, %v1019
    %v1021 = vrot.slane %v1007, %v1020
    %v1022 = vcombine.high %v1014, %v1014
    %v1023 = vcombine.high %v1021, %v1021
    %v1025 = vunpack.c.l.s4 1966171168
    %v1026 = vunpack.c.0.s8 %v1025
    %v1027 = vlaneseq
    %v1028 = vshrl.u32 %v1027, 7
    %v1029 = vsub.s32 %v1026, %v1028
    %v1030 = vrot.slane %v1014, %v1029
    %v1032 = vunpack.c.l.s4 1966171168
    %v1033 = vunpack.c.0.s8 %v1032
    %v1034 = vlaneseq
    %v1035 = vshrl.u32 %v1034, 7
    %v1036 = vsub.s32 %v1033, %v1035
    %v1037 = vrot.slane %v1021, %v1036
    %v1039 = vunpack.c.l.s4 1966171168
    %v1040 = vunpack.c.0.s8 %v1039
    %v1041 = vlaneseq
    %v1042 = vshrl.u32 %v1041, 7
    %v1043 = vsub.s32 %v1040, %v1042
    %v1044 = vrot.slane %v1022, %v1043
    %v1046 = vunpack.c.l.s4 1966171168
    %v1047 = vunpack.c.0.s8 %v1046
    %v1048 = vlaneseq
    %v1049 = vshrl.u32 %v1048, 7
    %v1050 = vsub.s32 %v1047, %v1049
    %v1051 = vrot.slane %v1023, %v1050
    %v1052 = vcombine.high %v1030, %v1030
    %v1053 = vcombine.high %v1037, %v1037
    %v1054 = vcombine.high %v1044, %v1044
    %v1055 = vcombine.high %v1051, %v1051
    %v1056 = vcombine.high %v33, %v33
    %v1058 = vunpack.c.l.s4 1966171168
    %v1059 = vunpack.c.0.s8 %v1058
    %v1060 = vlaneseq
    %v1061 = vshrl.u32 %v1060, 7
    %v1062 = vsub.s32 %v1059, %v1061
    %v1063 = vrot.slane %v33, %v1062
    %v1065 = vunpack.c.l.s4 1966171168
    %v1066 = vunpack.c.0.s8 %v1065
    %v1067 = vlaneseq
    %v1068 = vshrl.u32 %v1067, 7
    %v1069 = vsub.s32 %v1066, %v1068
    %v1070 = vrot.slane %v1056, %v1069
    %v1071 = vcombine.high %v1063, %v1063
    %v1072 = vcombine.high %v1070, %v1070
    %v1074 = vunpack.c.l.s4 1966171168
    %v1075 = vunpack.c.0.s8 %v1074
    %v1076 = vlaneseq
    %v1077 = vshrl.u32 %v1076, 7
    %v1078 = vsub.s32 %v1075, %v1077
    %v1079 = vrot.slane %v1063, %v1078
    %v1081 = vunpack.c.l.s4 1966171168
    %v1082 = vunpack.c.0.s8 %v1081
    %v1083 = vlaneseq
    %v1084 = vshrl.u32 %v1083, 7
    %v1085 = vsub.s32 %v1082, %v1084
    %v1086 = vrot.slane %v1070, %v1085
    %v1088 = vunpack.c.l.s4 1966171168
    %v1089 = vunpack.c.0.s8 %v1088
    %v1090 = vlaneseq
    %v1091 = vshrl.u32 %v1090, 7
    %v1092 = vsub.s32 %v1089, %v1091
    %v1093 = vrot.slane %v1071, %v1092
    %v1095 = vunpack.c.l.s4 1966171168
    %v1096 = vunpack.c.0.s8 %v1095
    %v1097 = vlaneseq
    %v1098 = vshrl.u32 %v1097, 7
    %v1099 = vsub.s32 %v1096, %v1098
    %v1100 = vrot.slane %v1072, %v1099
    %v1101 = vcombine.high %v1079, %v1079
    %v1102 = vcombine.high %v1086, %v1086
    %v1103 = vcombine.high %v1093, %v1093
    %v1104 = vcombine.high %v1100, %v1100
    %v1105 = vcombine.high %v34, %v34
    %v1107 = vunpack.c.l.s4 1966171168
    %v1108 = vunpack.c.0.s8 %v1107
    %v1109 = vlaneseq
    %v1110 = vshrl.u32 %v1109, 7
    %v1111 = vsub.s32 %v1108, %v1110
    %v1112 = vrot.slane %v34, %v1111
    %v1114 = vunpack.c.l.s4 1966171168
    %v1115 = vunpack.c.0.s8 %v1114
    %v1116 = vlaneseq
    %v1117 = vshrl.u32 %v1116, 7
    %v1118 = vsub.s32 %v1115, %v1117
    %v1119 = vrot.slane %v1105, %v1118
    %v1120 = vcombine.high %v1112, %v1112
    %v1121 = vcombine.high %v1119, %v1119
    %v1123 = vunpack.c.l.s4 1966171168
    %v1124 = vunpack.c.0.s8 %v1123
    %v1125 = vlaneseq
    %v1126 = vshrl.u32 %v1125, 7
    %v1127 = vsub.s32 %v1124, %v1126
    %v1128 = vrot.slane %v1112, %v1127
    %v1130 = vunpack.c.l.s4 1966171168
    %v1131 = vunpack.c.0.s8 %v1130
    %v1132 = vlaneseq
    %v1133 = vshrl.u32 %v1132, 7
    %v1134 = vsub.s32 %v1131, %v1133
    %v1135 = vrot.slane %v1119, %v1134
    %v1137 = vunpack.c.l.s4 1966171168
    %v1138 = vunpack.c.0.s8 %v1137
    %v1139 = vlaneseq
    %v1140 = vshrl.u32 %v1139, 7
    %v1141 = vsub.s32 %v1138, %v1140
    %v1142 = vrot.slane %v1120, %v1141
    %v1144 = vunpack.c.l.s4 1966171168
    %v1145 = vunpack.c.0.s8 %v1144
    %v1146 = vlaneseq
    %v1147 = vshrl.u32 %v1146, 7
    %v1148 = vsub.s32 %v1145, %v1147
    %v1149 = vrot.slane %v1121, %v1148
    %v1150 = vcombine.high %v1128, %v1128
    %v1151 = vcombine.high %v1135, %v1135
    %v1152 = vcombine.high %v1142, %v1142
    %v1153 = vcombine.high %v1149, %v1149
    %v1154 = vcombine.high %v35, %v35
    %v1156 = vunpack.c.l.s4 1966171168
    %v1157 = vunpack.c.0.s8 %v1156
    %v1158 = vlaneseq
    %v1159 = vshrl.u32 %v1158, 7
    %v1160 = vsub.s32 %v1157, %v1159
    %v1161 = vrot.slane %v35, %v1160
    %v1163 = vunpack.c.l.s4 1966171168
    %v1164 = vunpack.c.0.s8 %v1163
    %v1165 = vlaneseq
    %v1166 = vshrl.u32 %v1165, 7
    %v1167 = vsub.s32 %v1164, %v1166
    %v1168 = vrot.slane %v1154, %v1167
    %v1169 = vcombine.high %v1161, %v1161
    %v1170 = vcombine.high %v1168, %v1168
    %v1172 = vunpack.c.l.s4 1966171168
    %v1173 = vunpack.c.0.s8 %v1172
    %v1174 = vlaneseq
    %v1175 = vshrl.u32 %v1174, 7
    %v1176 = vsub.s32 %v1173, %v1175
    %v1177 = vrot.slane %v1161, %v1176
    %v1179 = vunpack.c.l.s4 1966171168
    %v1180 = vunpack.c.0.s8 %v1179
    %v1181 = vlaneseq
    %v1182 = vshrl.u32 %v1181, 7
    %v1183 = vsub.s32 %v1180, %v1182
    %v1184 = vrot.slane %v1168, %v1183
    %v1186 = vunpack.c.l.s4 1966171168
    %v1187 = vunpack.c.0.s8 %v1186
    %v1188 = vlaneseq
    %v1189 = vshrl.u32 %v1188, 7
    %v1190 = vsub.s32 %v1187, %v1189
    %v1191 = vrot.slane %v1169, %v1190
    %v1193 = vunpack.c.l.s4 1966171168
    %v1194 = vunpack.c.0.s8 %v1193
    %v1195 = vlaneseq
    %v1196 = vshrl.u32 %v1195, 7
    %v1197 = vsub.s32 %v1194, %v1196
    %v1198 = vrot.slane %v1170, %v1197
    %v1199 = vcombine.high %v1177, %v1177
    %v1200 = vcombine.high %v1184, %v1184
    %v1201 = vcombine.high %v1191, %v1191
    %v1520 = vunpack.c.l.b16 %v36
    %v1521 = vunpack.c.h.b16 %v36
    %v1522 = vunpack.c.l.b16 %v37
    %v1523 = vunpack.c.h.b16 %v37
    %v1524 = vunpack.c.l.b16 %v38
    %v1525 = vunpack.c.h.b16 %v38
    %v1526 = vunpack.c.l.b16 %v39
    %v1527 = vunpack.c.h.b16 %v39
    %v1528 = vunpack.c.l.b16 %v40
    %v1529 = vunpack.c.h.b16 %v40
    %v1530 = vunpack.c.l.b16 %v41
    %v1531 = vunpack.c.h.b16 %v41
    %v1532 = vunpack.c.l.b16 %v42
    %v1533 = vunpack.c.h.b16 %v42
    %v1534 = vunpack.c.l.b16 %v43
    %v1535 = vunpack.c.h.b16 %v43
    %v1536 = vunpack.c.l.b16 %v44
    %v1537 = vunpack.c.h.b16 %v44
    %v1538 = vunpack.c.l.b16 %v45
    %v1539 = vunpack.c.h.b16 %v45
    %v1540 = vunpack.c.l.b16 %v46
    %v1541 = vunpack.c.h.b16 %v46
    %v1542 = vunpack.c.l.b16 %v47
    %v1543 = vunpack.c.h.b16 %v47
    %v1544 = vunpack.c.l.b16 %v48
    %v1545 = vunpack.c.h.b16 %v48
    %v1546 = vunpack.c.l.b16 %v49
    %v1547 = vunpack.c.h.b16 %v49
    %v1548 = vunpack.c.l.b16 %v50
    %v1549 = vunpack.c.h.b16 %v50
    %v1550 = vunpack.c.l.b16 %v51
    %v1551 = vunpack.c.h.b16 %v51
    %v1552 = vunpack.c.l.b16 %v52
    %v1553 = vunpack.c.h.b16 %v52
    %v1554 = vunpack.c.l.b16 %v53
    %v1555 = vunpack.c.h.b16 %v53
    %v1556 = vunpack.c.l.b16 %v54
    %v1557 = vunpack.c.h.b16 %v54
    %v1558 = vunpack.c.l.b16 %v55
    %v1559 = vunpack.c.h.b16 %v55
    %v1560 = vunpack.c.l.b16 %v56
    %v1561 = vunpack.c.h.b16 %v56
    %v1562 = vunpack.c.l.b16 %v57
    %v1563 = vunpack.c.h.b16 %v57
    %v1564 = vunpack.c.l.b16 %v58
    %v1565 = vunpack.c.h.b16 %v58
    %v1566 = vunpack.c.l.b16 %v59
    %v1567 = vunpack.c.h.b16 %v59
    %v1568 = vunpack.c.l.b16 %v60
    %v1569 = vunpack.c.h.b16 %v60
    %v1570 = vunpack.c.l.b16 %v61
    %v1571 = vunpack.c.h.b16 %v61
    %v1572 = vunpack.c.l.b16 %v62
    %v1573 = vunpack.c.h.b16 %v62
    %v1574 = vunpack.c.l.b16 %v63
    %v1575 = vunpack.c.h.b16 %v63
    %v1576 = vunpack.c.l.b16 %v64
    %v1577 = vunpack.c.h.b16 %v64
    %v1578 = vunpack.c.l.b16 %v65
    %v1579 = vunpack.c.h.b16 %v65
    %v1580 = vunpack.c.l.b16 %v66
    %v1581 = vunpack.c.h.b16 %v66
    %v1582 = vunpack.c.l.b16 %v67
    %v1583 = vunpack.c.h.b16 %v67
    %v1584 = vunpack.c.l.b16 %v68
    %v1585 = vunpack.c.h.b16 %v68
    %v1586 = vunpack.c.l.b16 %v69
    %v1587 = vunpack.c.h.b16 %v69
    %v1588 = vunpack.c.l.b16 %v70
    %v1589 = vunpack.c.h.b16 %v70
    %v1590 = vunpack.c.l.b16 %v71
    %v1591 = vunpack.c.h.b16 %v71
    %v1592 = vunpack.c.l.b16 %v72
    %v1593 = vunpack.c.h.b16 %v72
    %v1594 = vunpack.c.l.b16 %v73
    %v1595 = vunpack.c.h.b16 %v73
    %v1596 = vunpack.c.l.b16 %v74
    %v1597 = vunpack.c.h.b16 %v74
    %v1598 = vunpack.c.l.b16 %v75
    %v1599 = vunpack.c.h.b16 %v75
    %v1600 = vunpack.c.l.b16 %v76
    %v1601 = vunpack.c.h.b16 %v76
    %v1602 = vunpack.c.l.b16 %v77
    %v1603 = vunpack.c.h.b16 %v77
    %v1604 = vunpack.c.l.b16 %v78
    %v1605 = vunpack.c.h.b16 %v78
    %v1606 = vunpack.c.l.b16 %v79
    %v1607 = vunpack.c.h.b16 %v79
    %v1608 = vunpack.c.l.b16 %v80
    %v1609 = vunpack.c.h.b16 %v80
    %v1610 = vunpack.c.l.b16 %v81
    %v1611 = vunpack.c.h.b16 %v81
    %v1612 = vunpack.c.l.b16 %v82
    %v1613 = vunpack.c.h.b16 %v82
    %v1614 = vunpack.c.l.b16 %v83
    %v1615 = vunpack.c.h.b16 %v83
    %v1616 = vunpack.c.l.b16 %v84
    %v1617 = vunpack.c.h.b16 %v84
    %v1618 = vunpack.c.l.b16 %v85
    %v1619 = vunpack.c.h.b16 %v85
    %v1620 = vunpack.c.l.b16 %v86
    %v1621 = vunpack.c.h.b16 %v86
    %v1622 = vunpack.c.l.b16 %v87
    %v1623 = vunpack.c.h.b16 %v87
    %v1624 = vunpack.c.l.b16 %v88
    %v1625 = vunpack.c.h.b16 %v88
    %v1626 = vunpack.c.l.b16 %v89
    %v1627 = vunpack.c.h.b16 %v89
    %v1628 = vunpack.c.l.b16 %v90
    %v1629 = vunpack.c.h.b16 %v90
    %v1630 = vunpack.c.l.b16 %v91
    %v1631 = vunpack.c.h.b16 %v91
    %v1632 = vunpack.c.l.b16 %v92
    %v1633 = vunpack.c.h.b16 %v92
    %v1634 = vunpack.c.l.b16 %v93
    %v1635 = vunpack.c.h.b16 %v93
    %v1636 = vunpack.c.l.b16 %v94
    %v1637 = vunpack.c.h.b16 %v94
    %v1638 = vunpack.c.l.b16 %v95
    %v1639 = vunpack.c.h.b16 %v95
    %v1640 = vunpack.c.l.b16 %v96
    %v1641 = vunpack.c.h.b16 %v96
    %v1642 = vunpack.c.l.b16 %v97
    %v1643 = vunpack.c.h.b16 %v97
    %v1644 = vunpack.c.l.b16 %v98
    %v1645 = vunpack.c.h.b16 %v98
    %v1646 = vunpack.c.l.b16 %v99
    %v1647 = vunpack.c.h.b16 %v99
    %v1648 = vunpack.c.l.b16 %v100
    %v1649 = vunpack.c.h.b16 %v100
    %v1650 = vunpack.c.l.b16 %v101
    %v1651 = vunpack.c.h.b16 %v101
    %v1652 = vunpack.c.l.b16 %v102
    %v1653 = vunpack.c.h.b16 %v102
    %v1654 = vunpack.c.l.b16 %v103
    %v1655 = vunpack.c.h.b16 %v103
    %v1656 = vunpack.c.l.b16 %v104
    %v1657 = vunpack.c.h.b16 %v104
    %v1658 = vunpack.c.l.b16 %v105
    %v1659 = vunpack.c.h.b16 %v105
    %v1660 = vunpack.c.l.b16 %v106
    %v1661 = vunpack.c.h.b16 %v106
    %v1662 = vunpack.c.l.b16 %v107
    %v1663 = vunpack.c.h.b16 %v107
    %v1664 = vunpack.c.l.b16 %v108
    %v1665 = vunpack.c.h.b16 %v108
    %v1666 = vunpack.c.l.b16 %v109
    %v1667 = vunpack.c.h.b16 %v109
    %v1668 = vunpack.c.l.b16 %v110
    %v1669 = vunpack.c.h.b16 %v110
    %v1670 = vunpack.c.l.b16 %v111
    %v1671 = vunpack.c.h.b16 %v111
    %v1672 = vunpack.c.l.b16 %v112
    %v1673 = vunpack.c.h.b16 %v112
    %v1674 = vunpack.c.l.b16 %v113
    %v1675 = vunpack.c.h.b16 %v113
    %v1676 = vunpack.c.l.b16 %v114
    %v1677 = vunpack.c.h.b16 %v114
    %v1678 = vunpack.c.l.b16 %v115
    %v1679 = vunpack.c.l.b16 %v116
    %v1680 = vunpack.c.h.b16 %v116
    %v1681 = vunpack.c.l.b16 %v117
    %v1682 = vunpack.c.h.b16 %v117
    %v1683 = vunpack.c.l.b16 %v118
    %v1684 = vunpack.c.h.b16 %v118
    %v1685 = vunpack.c.l.b16 %v119
    %v1686 = vunpack.c.h.b16 %v119
    %v1687 = vunpack.c.l.b16 %v120
    %v1688 = vunpack.c.h.b16 %v120
    %v1689 = vunpack.c.l.b16 %v121
    %v1690 = vunpack.c.h.b16 %v121
    %v1691 = vunpack.c.l.b16 %v122
    %v1692 = vunpack.c.h.b16 %v122
    %v1693 = vunpack.c.l.b16 %v123
    %v1694 = vunpack.c.h.b16 %v123
    %v1695 = vunpack.c.l.b16 %v124
    %v1696 = vunpack.c.h.b16 %v124
    %v1697 = vunpack.c.l.b16 %v125
    %v1698 = vunpack.c.h.b16 %v125
    %v1699 = vunpack.c.l.b16 %v126
    %v1700 = vunpack.c.h.b16 %v126
    %v1701 = vunpack.c.l.b16 %v127
    %v1702 = vunpack.c.h.b16 %v127
    %v1703 = vunpack.c.l.b16 %v128
    %v1704 = vunpack.c.h.b16 %v128
    %v1705 = vunpack.c.l.b16 %v129
    %v1706 = vunpack.c.h.b16 %v129
    %v1707 = vunpack.c.l.b16 %v130
    %v1708 = vunpack.c.h.b16 %v130
    %v1709 = vunpack.c.l.b16 %v131
    %v1710 = vunpack.c.h.b16 %v131
    %v1711 = vunpack.c.l.b16 %v132
    %v1712 = vunpack.c.h.b16 %v132
    %v1713 = vunpack.c.l.b16 %v133
    %v1714 = vunpack.c.h.b16 %v133
    %v1715 = vunpack.c.l.b16 %v134
    %v1716 = vunpack.c.h.b16 %v134
    %v1717 = vunpack.c.l.b16 %v135
    %v1718 = vunpack.c.h.b16 %v135
    %v1719 = vunpack.c.l.b16 %v136
    %v1720 = vunpack.c.h.b16 %v136
    %v1721 = vunpack.c.l.b16 %v137
    %v1722 = vunpack.c.h.b16 %v137
    %v1723 = vunpack.c.l.b16 %v138
    %v1724 = vunpack.c.h.b16 %v138
    %v1725 = vunpack.c.l.b16 %v139
    %v1726 = vunpack.c.h.b16 %v139
    %v1727 = vunpack.c.l.b16 %v140
    %v1728 = vunpack.c.h.b16 %v140
    %v1729 = vunpack.c.l.b16 %v141
    %v1730 = vunpack.c.h.b16 %v141
    %v1731 = vunpack.c.l.b16 %v142
    %v1732 = vunpack.c.h.b16 %v142
    %v1733 = vunpack.c.l.b16 %v143
    %v1734 = vunpack.c.h.b16 %v143
    %v1735 = vunpack.c.l.b16 %v144
    %v1736 = vunpack.c.h.b16 %v144
    %v1737 = vunpack.c.l.b16 %v145
    %v1738 = vunpack.c.h.b16 %v145
    %v1739 = vunpack.c.l.b16 %v146
    %v1740 = vunpack.c.h.b16 %v146
    %v1741 = vunpack.c.l.b16 %v147
    %v1742 = vunpack.c.h.b16 %v147
    %v1743 = vunpack.c.l.b16 %v148
    %v1744 = vunpack.c.h.b16 %v148
    %v1745 = vunpack.c.l.b16 %v149
    %v1746 = vunpack.c.h.b16 %v149
    %v1747 = vunpack.c.l.b16 %v150
    %v1748 = vunpack.c.h.b16 %v150
    %v1749 = vunpack.c.l.b16 %v151
    %v1750 = vunpack.c.h.b16 %v151
    %v1751 = vunpack.c.l.b16 %v152
    %v1752 = vunpack.c.h.b16 %v152
    %v1753 = vunpack.c.l.b16 %v153
    %v1754 = vunpack.c.h.b16 %v153
    %v1755 = vunpack.c.l.b16 %v154
    %v1756 = vunpack.c.h.b16 %v154
    %v1757 = vunpack.c.l.b16 %v155
    %v1758 = vunpack.c.h.b16 %v155
    %v1759 = vunpack.c.l.b16 %v156
    %v1760 = vunpack.c.h.b16 %v156
    %v1761 = vunpack.c.l.b16 %v157
    %v1762 = vunpack.c.h.b16 %v157
    %v1763 = vunpack.c.l.b16 %v158
    %v1764 = vunpack.c.h.b16 %v158
    %v1765 = vunpack.c.l.b16 %v159
    %v1766 = vunpack.c.h.b16 %v159
    %v1767 = vunpack.c.l.b16 %v160
    %v1768 = vunpack.c.h.b16 %v160
    %v1769 = vunpack.c.l.b16 %v161
    %v1770 = vunpack.c.h.b16 %v161
    %v1771 = vunpack.c.l.b16 %v162
    %v1772 = vunpack.c.h.b16 %v162
    %v1773 = vunpack.c.l.b16 %v163
    %v1774 = vunpack.c.h.b16 %v163
    %v1775 = vunpack.c.l.b16 %v164
    %v1776 = vunpack.c.h.b16 %v164
    %v1777 = vunpack.c.l.b16 %v165
    %v1778 = vunpack.c.h.b16 %v165
    %v1779 = vunpack.c.l.b16 %v166
    %v1780 = vunpack.c.h.b16 %v166
    %v1781 = vunpack.c.l.b16 %v167
    %v1782 = vunpack.c.h.b16 %v167
    %v1783 = vunpack.c.l.b16 %v168
    %v1784 = vunpack.c.h.b16 %v168
    %v1785 = vunpack.c.l.b16 %v169
    %v1786 = vunpack.c.h.b16 %v169
    %v1787 = vunpack.c.l.b16 %v170
    %v1788 = vunpack.c.h.b16 %v170
    %v1789 = vunpack.c.l.b16 %v171
    %v1790 = vunpack.c.h.b16 %v171
    %v1791 = vunpack.c.l.b16 %v172
    %v1792 = vunpack.c.h.b16 %v172
    %v1793 = vunpack.c.l.b16 %v173
    %v1794 = vunpack.c.h.b16 %v173
    %v1795 = vunpack.c.l.b16 %v174
    %v1796 = vunpack.c.h.b16 %v174
    %v1797 = vunpack.c.l.b16 %v175
    %v1798 = vunpack.c.h.b16 %v175
    %v1799 = vunpack.c.l.b16 %v176
    %v1800 = vunpack.c.h.b16 %v176
    %v1801 = vunpack.c.l.b16 %v177
    %v1802 = vunpack.c.h.b16 %v177
    %v1803 = vunpack.c.l.b16 %v178
    %v1804 = vunpack.c.h.b16 %v178
    %v1805 = vunpack.c.l.b16 %v179
    %v1806 = vunpack.c.h.b16 %v179
    %v1807 = vunpack.c.l.b16 %v180
    %v1808 = vunpack.c.h.b16 %v180
    %v1809 = vunpack.c.l.b16 %v181
    %v1810 = vunpack.c.h.b16 %v181
    %v1811 = vunpack.c.l.b16 %v182
    %v1812 = vunpack.c.h.b16 %v182
    %v1813 = vunpack.c.l.b16 %v183
    %v1814 = vunpack.c.h.b16 %v183
    %v1815 = vunpack.c.l.b16 %v184
    %v1816 = vunpack.c.h.b16 %v184
    %v1817 = vunpack.c.l.b16 %v185
    %v1818 = vunpack.c.h.b16 %v185
    %v1819 = vunpack.c.l.b16 %v186
    %v1820 = vunpack.c.h.b16 %v186
    %v1821 = vunpack.c.l.b16 %v187
    %v1822 = vunpack.c.h.b16 %v187
    %v1823 = vunpack.c.l.b16 %v188
    %v1824 = vunpack.c.h.b16 %v188
    %v1825 = vunpack.c.l.b16 %v189
    %v1826 = vunpack.c.h.b16 %v189
    %v1827 = vunpack.c.l.b16 %v190
    %v1828 = vunpack.c.h.b16 %v190
    %v1829 = vunpack.c.l.b16 %v191
    %v1830 = vunpack.c.h.b16 %v191
    %v1831 = vunpack.c.l.b16 %v192
    %v1832 = vunpack.c.h.b16 %v192
    %v1833 = vunpack.c.l.b16 %v193
    %v1834 = vunpack.c.h.b16 %v193
    %v1835 = vunpack.c.l.b16 %v194
    %v1836 = vunpack.c.h.b16 %v194
    %v1837 = vunpack.c.l.b16 %v195
    %v1838 = vpack.c.b16 %v1679, %v1520
    %v1839 = vpack.c.b16 %v1680, %v1521
    %v1840 = vpack.c.b16 %v1681, %v1522
    %v1841 = vpack.c.b16 %v1682, %v1523
    %v1842 = vpack.c.b16 %v1683, %v1524
    %v1843 = vpack.c.b16 %v1684, %v1525
    %v1844 = vpack.c.b16 %v1685, %v1526
    %v1845 = vpack.c.b16 %v1686, %v1527
    %v1846 = vpack.c.b16 %v1687, %v1528
    %v1847 = vpack.c.b16 %v1688, %v1529
    %v1848 = vpack.c.b16 %v1689, %v1530
    %v1849 = vpack.c.b16 %v1690, %v1531
    %v1850 = vpack.c.b16 %v1691, %v1532
    %v1851 = vpack.c.b16 %v1692, %v1533
    %v1852 = vpack.c.b16 %v1693, %v1534
    %v1853 = vpack.c.b16 %v1694, %v1535
    %v1854 = vpack.c.b16 %v1695, %v1536
    %v1855 = vpack.c.b16 %v1696, %v1537
    %v1856 = vpack.c.b16 %v1697, %v1538
    %v1857 = vpack.c.b16 %v1698, %v1539
    %v1858 = vpack.c.b16 %v1699, %v1540
    %v1859 = vpack.c.b16 %v1700, %v1541
    %v1860 = vpack.c.b16 %v1701, %v1542
    %v1861 = vpack.c.b16 %v1702, %v1543
    %v1862 = vpack.c.b16 %v1703, %v1544
    %v1863 = vpack.c.b16 %v1704, %v1545
    %v1864 = vpack.c.b16 %v1705, %v1546
    %v1865 = vpack.c.b16 %v1706, %v1547
    %v1866 = vpack.c.b16 %v1707, %v1548
    %v1867 = vpack.c.b16 %v1708, %v1549
    %v1868 = vpack.c.b16 %v1709, %v1550
    %v1869 = vpack.c.b16 %v1710, %v1551
    %v1870 = vpack.c.b16 %v1711, %v1552
    %v1871 = vpack.c.b16 %v1712, %v1553
    %v1872 = vpack.c.b16 %v1713, %v1554
    %v1873 = vpack.c.b16 %v1714, %v1555
    %v1874 = vpack.c.b16 %v1715, %v1556
    %v1875 = vpack.c.b16 %v1716, %v1557
    %v1876 = vpack.c.b16 %v1717, %v1558
    %v1877 = vpack.c.b16 %v1718, %v1559
    %v1878 = vpack.c.b16 %v1719, %v1560
    %v1879 = vpack.c.b16 %v1720, %v1561
    %v1880 = vpack.c.b16 %v1721, %v1562
    %v1881 = vpack.c.b16 %v1722, %v1563
    %v1882 = vpack.c.b16 %v1723, %v1564
    %v1883 = vpack.c.b16 %v1724, %v1565
    %v1884 = vpack.c.b16 %v1725, %v1566
    %v1885 = vpack.c.b16 %v1726, %v1567
    %v1886 = vpack.c.b16 %v1727, %v1568
    %v1887 = vpack.c.b16 %v1728, %v1569
    %v1888 = vpack.c.b16 %v1729, %v1570
    %v1889 = vpack.c.b16 %v1730, %v1571
    %v1890 = vpack.c.b16 %v1731, %v1572
    %v1891 = vpack.c.b16 %v1732, %v1573
    %v1892 = vpack.c.b16 %v1733, %v1574
    %v1893 = vpack.c.b16 %v1734, %v1575
    %v1894 = vpack.c.b16 %v1735, %v1576
    %v1895 = vpack.c.b16 %v1736, %v1577
    %v1896 = vpack.c.b16 %v1737, %v1578
    %v1897 = vpack.c.b16 %v1738, %v1579
    %v1898 = vpack.c.b16 %v1739, %v1580
    %v1899 = vpack.c.b16 %v1740, %v1581
    %v1900 = vpack.c.b16 %v1741, %v1582
    %v1901 = vpack.c.b16 %v1742, %v1583
    %v1902 = vpack.c.b16 %v1743, %v1584
    %v1903 = vpack.c.b16 %v1744, %v1585
    %v1904 = vpack.c.b16 %v1745, %v1586
    %v1905 = vpack.c.b16 %v1746, %v1587
    %v1906 = vpack.c.b16 %v1747, %v1588
    %v1907 = vpack.c.b16 %v1748, %v1589
    %v1908 = vpack.c.b16 %v1749, %v1590
    %v1909 = vpack.c.b16 %v1750, %v1591
    %v1910 = vpack.c.b16 %v1751, %v1592
    %v1911 = vpack.c.b16 %v1752, %v1593
    %v1912 = vpack.c.b16 %v1753, %v1594
    %v1913 = vpack.c.b16 %v1754, %v1595
    %v1914 = vpack.c.b16 %v1755, %v1596
    %v1915 = vpack.c.b16 %v1756, %v1597
    %v1916 = vpack.c.b16 %v1757, %v1598
    %v1917 = vpack.c.b16 %v1758, %v1599
    %v1918 = vpack.c.b16 %v1759, %v1600
    %v1919 = vpack.c.b16 %v1760, %v1601
    %v1920 = vpack.c.b16 %v1761, %v1602
    %v1921 = vpack.c.b16 %v1762, %v1603
    %v1922 = vpack.c.b16 %v1763, %v1604
    %v1923 = vpack.c.b16 %v1764, %v1605
    %v1924 = vpack.c.b16 %v1765, %v1606
    %v1925 = vpack.c.b16 %v1766, %v1607
    %v1926 = vpack.c.b16 %v1767, %v1608
    %v1927 = vpack.c.b16 %v1768, %v1609
    %v1928 = vpack.c.b16 %v1769, %v1610
    %v1929 = vpack.c.b16 %v1770, %v1611
    %v1930 = vpack.c.b16 %v1771, %v1612
    %v1931 = vpack.c.b16 %v1772, %v1613
    %v1932 = vpack.c.b16 %v1773, %v1614
    %v1933 = vpack.c.b16 %v1774, %v1615
    %v1934 = vpack.c.b16 %v1775, %v1616
    %v1935 = vpack.c.b16 %v1776, %v1617
    %v1936 = vpack.c.b16 %v1777, %v1618
    %v1937 = vpack.c.b16 %v1778, %v1619
    %v1938 = vpack.c.b16 %v1779, %v1620
    %v1939 = vpack.c.b16 %v1780, %v1621
    %v1940 = vpack.c.b16 %v1781, %v1622
    %v1941 = vpack.c.b16 %v1782, %v1623
    %v1942 = vpack.c.b16 %v1783, %v1624
    %v1943 = vpack.c.b16 %v1784, %v1625
    %v1944 = vpack.c.b16 %v1785, %v1626
    %v1945 = vpack.c.b16 %v1786, %v1627
    %v1946 = vpack.c.b16 %v1787, %v1628
    %v1947 = vpack.c.b16 %v1788, %v1629
    %v1948 = vpack.c.b16 %v1789, %v1630
    %v1949 = vpack.c.b16 %v1790, %v1631
    %v1950 = vpack.c.b16 %v1791, %v1632
    %v1951 = vpack.c.b16 %v1792, %v1633
    %v1952 = vpack.c.b16 %v1793, %v1634
    %v1953 = vpack.c.b16 %v1794, %v1635
    %v1954 = vpack.c.b16 %v1795, %v1636
    %v1955 = vpack.c.b16 %v1796, %v1637
    %v1956 = vpack.c.b16 %v1797, %v1638
    %v1957 = vpack.c.b16 %v1798, %v1639
    %v1958 = vpack.c.b16 %v1799, %v1640
    %v1959 = vpack.c.b16 %v1800, %v1641
    %v1960 = vpack.c.b16 %v1801, %v1642
    %v1961 = vpack.c.b16 %v1802, %v1643
    %v1962 = vpack.c.b16 %v1803, %v1644
    %v1963 = vpack.c.b16 %v1804, %v1645
    %v1964 = vpack.c.b16 %v1805, %v1646
    %v1965 = vpack.c.b16 %v1806, %v1647
    %v1966 = vpack.c.b16 %v1807, %v1648
    %v1967 = vpack.c.b16 %v1808, %v1649
    %v1968 = vpack.c.b16 %v1809, %v1650
    %v1969 = vpack.c.b16 %v1810, %v1651
    %v1970 = vpack.c.b16 %v1811, %v1652
    %v1971 = vpack.c.b16 %v1812, %v1653
    %v1972 = vpack.c.b16 %v1813, %v1654
    %v1973 = vpack.c.b16 %v1814, %v1655
    %v1974 = vpack.c.b16 %v1815, %v1656
    %v1975 = vpack.c.b16 %v1816, %v1657
    %v1976 = vpack.c.b16 %v1817, %v1658
    %v1977 = vpack.c.b16 %v1818, %v1659
    %v1978 = vpack.c.b16 %v1819, %v1660
    %v1979 = vpack.c.b16 %v1820, %v1661
    %v1980 = vpack.c.b16 %v1821, %v1662
    %v1981 = vpack.c.b16 %v1822, %v1663
    %v1982 = vpack.c.b16 %v1823, %v1664
    %v1983 = vpack.c.b16 %v1824, %v1665
    %v1984 = vpack.c.b16 %v1825, %v1666
    %v1985 = vpack.c.b16 %v1826, %v1667
    %v1986 = vpack.c.b16 %v1827, %v1668
    %v1987 = vpack.c.b16 %v1828, %v1669
    %v1988 = vpack.c.b16 %v1829, %v1670
    %v1989 = vpack.c.b16 %v1830, %v1671
    %v1990 = vpack.c.b16 %v1831, %v1672
    %v1991 = vpack.c.b16 %v1832, %v1673
    %v1992 = vpack.c.b16 %v1833, %v1674
    %v1993 = vpack.c.b16 %v1834, %v1675
    %v1994 = vpack.c.b16 %v1835, %v1676
    %v1995 = vpack.c.b16 %v1836, %v1677
    %v1996 = vpack.c.b16 %v1837, %v1678
    %vm2155 = vcmask 785408
    %v2157 = vsel %vm2155, %v1200, 0
    %v2160 = vsel %vm2155, %v1996, 0
    %2162 = vmatprep.subr.bf16.mxu0 %v1839
    %2163 = vmatpush1.bf16.xpose.msra.mxu0 %v1838
    %2164 = vmatprep.subr.bf16.mxu0 0
    %2165 = vmatpush1.bf16.xpose.msra.mxu0 0
    %2166 = vmatprep.subr.bf16.mxu0 0
    %2167 = vmatpush1.bf16.xpose.msra.mxu0 0
    %2168 = vmatprep.subr.bf16.mxu0 0
    %2169 = vmatpush1.bf16.xpose.msra.mxu0 0
    %2170 = vmatprep.subr.bf16.mxu0 0
    %2171 = vmatpush1.bf16.xpose.msra.mxu0 0
    %2172 = vmatprep.subr.bf16.mxu0 0
    %2173 = vmatpush1.bf16.xpose.msra.mxu0 0
    %2174 = vmatprep.subr.bf16.mxu0 0
    %2175 = vmatpush1.bf16.xpose.msra.mxu0 0
    %2176 = vmatprep.subr.bf16.mxu0 0
    %2177 = vmatpush1.bf16.xpose.msra.mxu0 0
    %2178 = vmatprep.subr.bf16.mxu0 0
    %2179 = vmatpush1.bf16.xpose.msra.mxu0 0
    %2180 = vmatprep.subr.bf16.mxu0 0
    %2181 = vmatpush1.bf16.xpose.msra.mxu0 0
    %2182 = vmatprep.subr.bf16.mxu0 0
    %2183 = vmatpush1.bf16.xpose.msra.mxu0 0
    %2184 = vmatprep.subr.bf16.mxu0 0
    %2185 = vmatpush1.bf16.xpose.msra.mxu0 0
    %2186 = vmatprep.subr.bf16.mxu0 0
    %2187 = vmatpush1.bf16.xpose.msra.mxu0 0
    %2188 = vmatprep.subr.bf16.mxu0 0
    %2189 = vmatpush1.bf16.xpose.msra.mxu0 0
    %2190 = vmatprep.subr.bf16.mxu0 0
    %2191 = vmatpush1.bf16.xpose.msra.mxu0 0
    %2192 = vmatprep.subr.bf16.mxu0 0
    %2193 = vmatpush1.bf16.xpose.msra.mxu0 0
    %2194 = vmatprep.mubr.bf16.mxu0 %v260
    %2195 = vmatmul.mubr.bf16.gmra.mrb[0].mxu0 %v246
    %v2196 = vpop.f32.mrb[0].mxu0
    %v2197 = vadd.f32 %v201, %v2196
    %v2198 = vpop.f32.mrb[0].mxu0
    %v2199 = vpop.f32.mrb[0].mxu0
    %v2200 = vpop.f32.mrb[0].mxu0
    %2201 = vdwg.mxu0
    %2202 = vmatprep.subr.bf16.mxu0 %v1841
    %2203 = vmatpush1.bf16.xpose.msra.mxu0 %v1840
    %2204 = vmatprep.subr.bf16.mxu0 0
    %2205 = vmatpush1.bf16.xpose.msra.mxu0 0
    %2206 = vmatprep.subr.bf16.mxu0 0
    %2207 = vmatpush1.bf16.xpose.msra.mxu0 0
    %2208 = vmatprep.subr.bf16.mxu0 0
    %2209 = vmatpush1.bf16.xpose.msra.mxu0 0
    %2210 = vmatprep.subr.bf16.mxu0 0
    %2211 = vmatpush1.bf16.xpose.msra.mxu0 0
    %2212 = vmatprep.subr.bf16.mxu0 0
    %2213 = vmatpush1.bf16.xpose.msra.mxu0 0
    %2214 = vmatprep.subr.bf16.mxu0 0
    %2215 = vmatpush1.bf16.xpose.msra.mxu0 0
    %2216 = vmatprep.subr.bf16.mxu0 0
    %2217 = vmatpush1.bf16.xpose.msra.mxu0 0
    %2218 = vmatprep.subr.bf16.mxu0 0
    %2219 = vmatpush1.bf16.xpose.msra.mxu0 0
    %2220 = vmatprep.subr.bf16.mxu0 0
    %2221 = vmatpush1.bf16.xpose.msra.mxu0 0
    %2222 = vmatprep.subr.bf16.mxu0 0
    %2223 = vmatpush1.bf16.xpose.msra.mxu0 0
    %2224 = vmatprep.subr.bf16.mxu0 0
    %2225 = vmatpush1.bf16.xpose.msra.mxu0 0
    %2226 = vmatprep.subr.bf16.mxu0 0
    %2227 = vmatpush1.bf16.xpose.msra.mxu0 0
    %2228 = vmatprep.subr.bf16.mxu0 0
    %2229 = vmatpush1.bf16.xpose.msra.mxu0 0
    %2230 = vmatprep.subr.bf16.mxu0 0
    %2231 = vmatpush1.bf16.xpose.msra.mxu0 0
    %2232 = vmatprep.subr.bf16.mxu0 0
    %2233 = vmatpush1.bf16.xpose.msra.mxu0 0
    %2234 = vmatprep.mubr.bf16.mxu0 %v270
    %2235 = vmatmul.mubr.bf16.gmra.mrb[0].mxu0 %v268
    %v2236 = vpop.f32.mrb[0].mxu0
    %v2237 = vadd.f32 %v2197, %v2236
    %v2238 = vpop.f32.mrb[0].mxu0
    %v2239 = vpop.f32.mrb[0].mxu0
    %v2240 = vpop.f32.mrb[0].mxu0
    %2241 = vdwg.mxu0
    %2242 = vmatprep.subr.bf16.mxu0 %v1843
    %2243 = vmatpush1.bf16.xpose.msra.mxu0 %v1842
    %2244 = vmatprep.subr.bf16.mxu0 0
    %2245 = vmatpush1.bf16.xpose.msra.mxu0 0
    %2246 = vmatprep.subr.bf16.mxu0 0
    %2247 = vmatpush1.bf16.xpose.msra.mxu0 0
    %2248 = vmatprep.subr.bf16.mxu0 0
    %2249 = vmatpush1.bf16.xpose.msra.mxu0 0
    %2250 = vmatprep.subr.bf16.mxu0 0
    %2251 = vmatpush1.bf16.xpose.msra.mxu0 0
    %2252 = vmatprep.subr.bf16.mxu0 0
    %2253 = vmatpush1.bf16.xpose.msra.mxu0 0
    %2254 = vmatprep.subr.bf16.mxu0 0
    %2255 = vmatpush1.bf16.xpose.msra.mxu0 0
    %2256 = vmatprep.subr.bf16.mxu0 0
    %2257 = vmatpush1.bf16.xpose.msra.mxu0 0
    %2258 = vmatprep.subr.bf16.mxu0 0
    %2259 = vmatpush1.bf16.xpose.msra.mxu0 0
    %2260 = vmatprep.subr.bf16.mxu0 0
    %2261 = vmatpush1.bf16.xpose.msra.mxu0 0
    %2262 = vmatprep.subr.bf16.mxu0 0
    %2263 = vmatpush1.bf16.xpose.msra.mxu0 0
    %2264 = vmatprep.subr.bf16.mxu0 0
    %2265 = vmatpush1.bf16.xpose.msra.mxu0 0
    %2266 = vmatprep.subr.bf16.mxu0 0
    %2267 = vmatpush1.bf16.xpose.msra.mxu0 0
    %2268 = vmatprep.subr.bf16.mxu0 0
    %2269 = vmatpush1.bf16.xpose.msra.mxu0 0
    %2270 = vmatprep.subr.bf16.mxu0 0
    %2271 = vmatpush1.bf16.xpose.msra.mxu0 0
    %2272 = vmatprep.subr.bf16.mxu0 0
    %2273 = vmatpush1.bf16.xpose.msra.mxu0 0
    %2274 = vmatprep.mubr.bf16.mxu0 %v267
    %2275 = vmatmul.mubr.bf16.gmra.mrb[0].mxu0 %v253
    %v2276 = vpop.f32.mrb[0].mxu0
    %v2277 = vadd.f32 %v2237, %v2276
    %v2278 = vpop.f32.mrb[0].mxu0
    %v2279 = vpop.f32.mrb[0].mxu0
    %v2280 = vpop.f32.mrb[0].mxu0
    %2281 = vdwg.mxu0
    %2282 = vmatprep.subr.bf16.mxu0 %v1845
    %2283 = vmatpush1.bf16.xpose.msra.mxu0 %v1844
    %2284 = vmatprep.subr.bf16.mxu0 0
    %2285 = vmatpush1.bf16.xpose.msra.mxu0 0
    %2286 = vmatprep.subr.bf16.mxu0 0
    %2287 = vmatpush1.bf16.xpose.msra.mxu0 0
    %2288 = vmatprep.subr.bf16.mxu0 0
    %2289 = vmatpush1.bf16.xpose.msra.mxu0 0
    %2290 = vmatprep.subr.bf16.mxu0 0
    %2291 = vmatpush1.bf16.xpose.msra.mxu0 0
    %2292 = vmatprep.subr.bf16.mxu0 0
    %2293 = vmatpush1.bf16.xpose.msra.mxu0 0
    %2294 = vmatprep.subr.bf16.mxu0 0
    %2295 = vmatpush1.bf16.xpose.msra.mxu0 0
    %2296 = vmatprep.subr.bf16.mxu0 0
    %2297 = vmatpush1.bf16.xpose.msra.mxu0 0
    %2298 = vmatprep.subr.bf16.mxu0 0
    %2299 = vmatpush1.bf16.xpose.msra.mxu0 0
    %2300 = vmatprep.subr.bf16.mxu0 0
    %2301 = vmatpush1.bf16.xpose.msra.mxu0 0
    %2302 = vmatprep.subr.bf16.mxu0 0
    %2303 = vmatpush1.bf16.xpose.msra.mxu0 0
    %2304 = vmatprep.subr.bf16.mxu0 0
    %2305 = vmatpush1.bf16.xpose.msra.mxu0 0
    %2306 = vmatprep.subr.bf16.mxu0 0
    %2307 = vmatpush1.bf16.xpose.msra.mxu0 0
    %2308 = vmatprep.subr.bf16.mxu0 0
    %2309 = vmatpush1.bf16.xpose.msra.mxu0 0
    %2310 = vmatprep.subr.bf16.mxu0 0
    %2311 = vmatpush1.bf16.xpose.msra.mxu0 0
    %2312 = vmatprep.subr.bf16.mxu0 0
    %2313 = vmatpush1.bf16.xpose.msra.mxu0 0
    %2314 = vmatprep.mubr.bf16.mxu0 %v271
    %2315 = vmatmul.mubr.bf16.gmra.mrb[0].mxu0 %v269
    %v2316 = vpop.f32.mrb[0].mxu0
    %v2317 = vadd.f32 %v2277, %v2316
    %v2318 = vpop.f32.mrb[0].mxu0
    %v2319 = vpop.f32.mrb[0].mxu0
    %v2320 = vpop.f32.mrb[0].mxu0
    %2321 = vdwg.mxu0
    %2322 = vmatprep.subr.bf16.mxu0 %v1847
    %2323 = vmatpush1.bf16.xpose.msra.mxu0 %v1846
    %2324 = vmatprep.subr.bf16.mxu0 0
    %2325 = vmatpush1.bf16.xpose.msra.mxu0 0
    %2326 = vmatprep.subr.bf16.mxu0 0
    %2327 = vmatpush1.bf16.xpose.msra.mxu0 0
    %2328 = vmatprep.subr.bf16.mxu0 0
    %2329 = vmatpush1.bf16.xpose.msra.mxu0 0
    %2330 = vmatprep.subr.bf16.mxu0 0
    %2331 = vmatpush1.bf16.xpose.msra.mxu0 0
    %2332 = vmatprep.subr.bf16.mxu0 0
    %2333 = vmatpush1.bf16.xpose.msra.mxu0 0
    %2334 = vmatprep.subr.bf16.mxu0 0
    %2335 = vmatpush1.bf16.xpose.msra.mxu0 0
    %2336 = vmatprep.subr.bf16.mxu0 0
    %2337 = vmatpush1.bf16.xpose.msra.mxu0 0
    %2338 = vmatprep.subr.bf16.mxu0 0
    %2339 = vmatpush1.bf16.xpose.msra.mxu0 0
    %2340 = vmatprep.subr.bf16.mxu0 0
    %2341 = vmatpush1.bf16.xpose.msra.mxu0 0
    %2342 = vmatprep.subr.bf16.mxu0 0
    %2343 = vmatpush1.bf16.xpose.msra.mxu0 0
    %2344 = vmatprep.subr.bf16.mxu0 0
    %2345 = vmatpush1.bf16.xpose.msra.mxu0 0
    %2346 = vmatprep.subr.bf16.mxu0 0
    %2347 = vmatpush1.bf16.xpose.msra.mxu0 0
    %2348 = vmatprep.subr.bf16.mxu0 0
    %2349 = vmatpush1.bf16.xpose.msra.mxu0 0
    %2350 = vmatprep.subr.bf16.mxu0 0
    %2351 = vmatpush1.bf16.xpose.msra.mxu0 0
    %2352 = vmatprep.subr.bf16.mxu0 0
    %2353 = vmatpush1.bf16.xpose.msra.mxu0 0
    %2354 = vmatprep.mubr.bf16.mxu0 %v309
    %2355 = vmatmul.mubr.bf16.gmra.mrb[0].mxu0 %v295
    %v2356 = vpop.f32.mrb[0].mxu0
    %v2357 = vadd.f32 %v2317, %v2356
    %v2358 = vpop.f32.mrb[0].mxu0
    %v2359 = vpop.f32.mrb[0].mxu0
    %v2360 = vpop.f32.mrb[0].mxu0
    %2361 = vdwg.mxu0
    %2362 = vmatprep.subr.bf16.mxu0 %v1849
    %2363 = vmatpush1.bf16.xpose.msra.mxu0 %v1848
    %2364 = vmatprep.subr.bf16.mxu0 0
    %2365 = vmatpush1.bf16.xpose.msra.mxu0 0
    %2366 = vmatprep.subr.bf16.mxu0 0
    %2367 = vmatpush1.bf16.xpose.msra.mxu0 0
    %2368 = vmatprep.subr.bf16.mxu0 0
    %2369 = vmatpush1.bf16.xpose.msra.mxu0 0
    %2370 = vmatprep.subr.bf16.mxu0 0
    %2371 = vmatpush1.bf16.xpose.msra.mxu0 0
    %2372 = vmatprep.subr.bf16.mxu0 0
    %2373 = vmatpush1.bf16.xpose.msra.mxu0 0
    %2374 = vmatprep.subr.bf16.mxu0 0
    %2375 = vmatpush1.bf16.xpose.msra.mxu0 0
    %2376 = vmatprep.subr.bf16.mxu0 0
    %2377 = vmatpush1.bf16.xpose.msra.mxu0 0
    %2378 = vmatprep.subr.bf16.mxu0 0
    %2379 = vmatpush1.bf16.xpose.msra.mxu0 0
    %2380 = vmatprep.subr.bf16.mxu0 0
    %2381 = vmatpush1.bf16.xpose.msra.mxu0 0
    %2382 = vmatprep.subr.bf16.mxu0 0
    %2383 = vmatpush1.bf16.xpose.msra.mxu0 0
    %2384 = vmatprep.subr.bf16.mxu0 0
    %2385 = vmatpush1.bf16.xpose.msra.mxu0 0
    %2386 = vmatprep.subr.bf16.mxu0 0
    %2387 = vmatpush1.bf16.xpose.msra.mxu0 0
    %2388 = vmatprep.subr.bf16.mxu0 0
    %2389 = vmatpush1.bf16.xpose.msra.mxu0 0
    %2390 = vmatprep.subr.bf16.mxu0 0
    %2391 = vmatpush1.bf16.xpose.msra.mxu0 0
    %2392 = vmatprep.subr.bf16.mxu0 0
    %2393 = vmatpush1.bf16.xpose.msra.mxu0 0
    %2394 = vmatprep.mubr.bf16.mxu0 %v319
    %2395 = vmatmul.mubr.bf16.gmra.mrb[0].mxu0 %v317
    %v2396 = vpop.f32.mrb[0].mxu0
    %v2397 = vadd.f32 %v2357, %v2396
    %v2398 = vpop.f32.mrb[0].mxu0
    %v2399 = vpop.f32.mrb[0].mxu0
    %v2400 = vpop.f32.mrb[0].mxu0
    %2401 = vdwg.mxu0
    %2402 = vmatprep.subr.bf16.mxu0 %v1851
    %2403 = vmatpush1.bf16.xpose.msra.mxu0 %v1850
    %2404 = vmatprep.subr.bf16.mxu0 0
    %2405 = vmatpush1.bf16.xpose.msra.mxu0 0
    %2406 = vmatprep.subr.bf16.mxu0 0
    %2407 = vmatpush1.bf16.xpose.msra.mxu0 0
    %2408 = vmatprep.subr.bf16.mxu0 0
    %2409 = vmatpush1.bf16.xpose.msra.mxu0 0
    %2410 = vmatprep.subr.bf16.mxu0 0
    %2411 = vmatpush1.bf16.xpose.msra.mxu0 0
    %2412 = vmatprep.subr.bf16.mxu0 0
    %2413 = vmatpush1.bf16.xpose.msra.mxu0 0
    %2414 = vmatprep.subr.bf16.mxu0 0
    %2415 = vmatpush1.bf16.xpose.msra.mxu0 0
    %2416 = vmatprep.subr.bf16.mxu0 0
    %2417 = vmatpush1.bf16.xpose.msra.mxu0 0
    %2418 = vmatprep.subr.bf16.mxu0 0
    %2419 = vmatpush1.bf16.xpose.msra.mxu0 0
    %2420 = vmatprep.subr.bf16.mxu0 0
    %2421 = vmatpush1.bf16.xpose.msra.mxu0 0
    %2422 = vmatprep.subr.bf16.mxu0 0
    %2423 = vmatpush1.bf16.xpose.msra.mxu0 0
    %2424 = vmatprep.subr.bf16.mxu0 0
    %2425 = vmatpush1.bf16.xpose.msra.mxu0 0
    %2426 = vmatprep.subr.bf16.mxu0 0
    %2427 = vmatpush1.bf16.xpose.msra.mxu0 0
    %2428 = vmatprep.subr.bf16.mxu0 0
    %2429 = vmatpush1.bf16.xpose.msra.mxu0 0
    %2430 = vmatprep.subr.bf16.mxu0 0
    %2431 = vmatpush1.bf16.xpose.msra.mxu0 0
    %2432 = vmatprep.subr.bf16.mxu0 0
    %2433 = vmatpush1.bf16.xpose.msra.mxu0 0
    %2434 = vmatprep.mubr.bf16.mxu0 %v316
    %2435 = vmatmul.mubr.bf16.gmra.mrb[0].mxu0 %v302
    %v2436 = vpop.f32.mrb[0].mxu0
    %v2437 = vadd.f32 %v2397, %v2436
    %v2438 = vpop.f32.mrb[0].mxu0
    %v2439 = vpop.f32.mrb[0].mxu0
    %v2440 = vpop.f32.mrb[0].mxu0
    %2441 = vdwg.mxu0
    %2442 = vmatprep.subr.bf16.mxu0 %v1853
    %2443 = vmatpush1.bf16.xpose.msra.mxu0 %v1852
    %2444 = vmatprep.subr.bf16.mxu0 0
    %2445 = vmatpush1.bf16.xpose.msra.mxu0 0
    %2446 = vmatprep.subr.bf16.mxu0 0
    %2447 = vmatpush1.bf16.xpose.msra.mxu0 0
    %2448 = vmatprep.subr.bf16.mxu0 0
    %2449 = vmatpush1.bf16.xpose.msra.mxu0 0
    %2450 = vmatprep.subr.bf16.mxu0 0
    %2451 = vmatpush1.bf16.xpose.msra.mxu0 0
    %2452 = vmatprep.subr.bf16.mxu0 0
    %2453 = vmatpush1.bf16.xpose.msra.mxu0 0
    %2454 = vmatprep.subr.bf16.mxu0 0
    %2455 = vmatpush1.bf16.xpose.msra.mxu0 0
    %2456 = vmatprep.subr.bf16.mxu0 0
    %2457 = vmatpush1.bf16.xpose.msra.mxu0 0
    %2458 = vmatprep.subr.bf16.mxu0 0
    %2459 = vmatpush1.bf16.xpose.msra.mxu0 0
    %2460 = vmatprep.subr.bf16.mxu0 0
    %2461 = vmatpush1.bf16.xpose.msra.mxu0 0
    %2462 = vmatprep.subr.bf16.mxu0 0
    %2463 = vmatpush1.bf16.xpose.msra.mxu0 0
    %2464 = vmatprep.subr.bf16.mxu0 0
    %2465 = vmatpush1.bf16.xpose.msra.mxu0 0
    %2466 = vmatprep.subr.bf16.mxu0 0
    %2467 = vmatpush1.bf16.xpose.msra.mxu0 0
    %2468 = vmatprep.subr.bf16.mxu0 0
    %2469 = vmatpush1.bf16.xpose.msra.mxu0 0
    %2470 = vmatprep.subr.bf16.mxu0 0
    %2471 = vmatpush1.bf16.xpose.msra.mxu0 0
    %2472 = vmatprep.subr.bf16.mxu0 0
    %2473 = vmatpush1.bf16.xpose.msra.mxu0 0
    %2474 = vmatprep.mubr.bf16.mxu0 %v320
    %2475 = vmatmul.mubr.bf16.gmra.mrb[0].mxu0 %v318
    %v2476 = vpop.f32.mrb[0].mxu0
    %v2477 = vadd.f32 %v2437, %v2476
    %v2478 = vpop.f32.mrb[0].mxu0
    %v2479 = vpop.f32.mrb[0].mxu0
    %v2480 = vpop.f32.mrb[0].mxu0
    %2481 = vdwg.mxu0
    %2482 = vmatprep.subr.bf16.mxu0 %v1855
    %2483 = vmatpush1.bf16.xpose.msra.mxu0 %v1854
    %2484 = vmatprep.subr.bf16.mxu0 0
    %2485 = vmatpush1.bf16.xpose.msra.mxu0 0
    %2486 = vmatprep.subr.bf16.mxu0 0
    %2487 = vmatpush1.bf16.xpose.msra.mxu0 0
    %2488 = vmatprep.subr.bf16.mxu0 0
    %2489 = vmatpush1.bf16.xpose.msra.mxu0 0
    %2490 = vmatprep.subr.bf16.mxu0 0
    %2491 = vmatpush1.bf16.xpose.msra.mxu0 0
    %2492 = vmatprep.subr.bf16.mxu0 0
    %2493 = vmatpush1.bf16.xpose.msra.mxu0 0
    %2494 = vmatprep.subr.bf16.mxu0 0
    %2495 = vmatpush1.bf16.xpose.msra.mxu0 0
    %2496 = vmatprep.subr.bf16.mxu0 0
    %2497 = vmatpush1.bf16.xpose.msra.mxu0 0
    %2498 = vmatprep.subr.bf16.mxu0 0
    %2499 = vmatpush1.bf16.xpose.msra.mxu0 0
    %2500 = vmatprep.subr.bf16.mxu0 0
    %2501 = vmatpush1.bf16.xpose.msra.mxu0 0
    %2502 = vmatprep.subr.bf16.mxu0 0
    %2503 = vmatpush1.bf16.xpose.msra.mxu0 0
    %2504 = vmatprep.subr.bf16.mxu0 0
    %2505 = vmatpush1.bf16.xpose.msra.mxu0 0
    %2506 = vmatprep.subr.bf16.mxu0 0
    %2507 = vmatpush1.bf16.xpose.msra.mxu0 0
    %2508 = vmatprep.subr.bf16.mxu0 0
    %2509 = vmatpush1.bf16.xpose.msra.mxu0 0
    %2510 = vmatprep.subr.bf16.mxu0 0
    %2511 = vmatpush1.bf16.xpose.msra.mxu0 0
    %2512 = vmatprep.subr.bf16.mxu0 0
    %2513 = vmatpush1.bf16.xpose.msra.mxu0 0
    %2514 = vmatprep.mubr.bf16.mxu0 %v358
    %2515 = vmatmul.mubr.bf16.gmra.mrb[0].mxu0 %v344
    %v2516 = vpop.f32.mrb[0].mxu0
    %v2517 = vadd.f32 %v2477, %v2516
    %v2518 = vpop.f32.mrb[0].mxu0
    %v2519 = vpop.f32.mrb[0].mxu0
    %v2520 = vpop.f32.mrb[0].mxu0
    %2521 = vdwg.mxu0
    %2522 = vmatprep.subr.bf16.mxu0 %v1857
    %2523 = vmatpush1.bf16.xpose.msra.mxu0 %v1856
    %2524 = vmatprep.subr.bf16.mxu0 0
    %2525 = vmatpush1.bf16.xpose.msra.mxu0 0
    %2526 = vmatprep.subr.bf16.mxu0 0
    %2527 = vmatpush1.bf16.xpose.msra.mxu0 0
    %2528 = vmatprep.subr.bf16.mxu0 0
    %2529 = vmatpush1.bf16.xpose.msra.mxu0 0
    %2530 = vmatprep.subr.bf16.mxu0 0
    %2531 = vmatpush1.bf16.xpose.msra.mxu0 0
    %2532 = vmatprep.subr.bf16.mxu0 0
    %2533 = vmatpush1.bf16.xpose.msra.mxu0 0
    %2534 = vmatprep.subr.bf16.mxu0 0
    %2535 = vmatpush1.bf16.xpose.msra.mxu0 0
    %2536 = vmatprep.subr.bf16.mxu0 0
    %2537 = vmatpush1.bf16.xpose.msra.mxu0 0
    %2538 = vmatprep.subr.bf16.mxu0 0
    %2539 = vmatpush1.bf16.xpose.msra.mxu0 0
    %2540 = vmatprep.subr.bf16.mxu0 0
    %2541 = vmatpush1.bf16.xpose.msra.mxu0 0
    %2542 = vmatprep.subr.bf16.mxu0 0
    %2543 = vmatpush1.bf16.xpose.msra.mxu0 0
    %2544 = vmatprep.subr.bf16.mxu0 0
    %2545 = vmatpush1.bf16.xpose.msra.mxu0 0
    %2546 = vmatprep.subr.bf16.mxu0 0
    %2547 = vmatpush1.bf16.xpose.msra.mxu0 0
    %2548 = vmatprep.subr.bf16.mxu0 0
    %2549 = vmatpush1.bf16.xpose.msra.mxu0 0
    %2550 = vmatprep.subr.bf16.mxu0 0
    %2551 = vmatpush1.bf16.xpose.msra.mxu0 0
    %2552 = vmatprep.subr.bf16.mxu0 0
    %2553 = vmatpush1.bf16.xpose.msra.mxu0 0
    %2554 = vmatprep.mubr.bf16.mxu0 %v368
    %2555 = vmatmul.mubr.bf16.gmra.mrb[0].mxu0 %v366
    %v2556 = vpop.f32.mrb[0].mxu0
    %v2557 = vadd.f32 %v2517, %v2556
    %v2558 = vpop.f32.mrb[0].mxu0
    %v2559 = vpop.f32.mrb[0].mxu0
    %v2560 = vpop.f32.mrb[0].mxu0
    %2561 = vdwg.mxu0
    %2562 = vmatprep.subr.bf16.mxu0 %v1859
    %2563 = vmatpush1.bf16.xpose.msra.mxu0 %v1858
    %2564 = vmatprep.subr.bf16.mxu0 0
    %2565 = vmatpush1.bf16.xpose.msra.mxu0 0
    %2566 = vmatprep.subr.bf16.mxu0 0
    %2567 = vmatpush1.bf16.xpose.msra.mxu0 0
    %2568 = vmatprep.subr.bf16.mxu0 0
    %2569 = vmatpush1.bf16.xpose.msra.mxu0 0
    %2570 = vmatprep.subr.bf16.mxu0 0
    %2571 = vmatpush1.bf16.xpose.msra.mxu0 0
    %2572 = vmatprep.subr.bf16.mxu0 0
    %2573 = vmatpush1.bf16.xpose.msra.mxu0 0
    %2574 = vmatprep.subr.bf16.mxu0 0
    %2575 = vmatpush1.bf16.xpose.msra.mxu0 0
    %2576 = vmatprep.subr.bf16.mxu0 0
    %2577 = vmatpush1.bf16.xpose.msra.mxu0 0
    %2578 = vmatprep.subr.bf16.mxu0 0
    %2579 = vmatpush1.bf16.xpose.msra.mxu0 0
    %2580 = vmatprep.subr.bf16.mxu0 0
    %2581 = vmatpush1.bf16.xpose.msra.mxu0 0
    %2582 = vmatprep.subr.bf16.mxu0 0
    %2583 = vmatpush1.bf16.xpose.msra.mxu0 0
    %2584 = vmatprep.subr.bf16.mxu0 0
    %2585 = vmatpush1.bf16.xpose.msra.mxu0 0
    %2586 = vmatprep.subr.bf16.mxu0 0
    %2587 = vmatpush1.bf16.xpose.msra.mxu0 0
    %2588 = vmatprep.subr.bf16.mxu0 0
    %2589 = vmatpush1.bf16.xpose.msra.mxu0 0
    %2590 = vmatprep.subr.bf16.mxu0 0
    %2591 = vmatpush1.bf16.xpose.msra.mxu0 0
    %2592 = vmatprep.subr.bf16.mxu0 0
    %2593 = vmatpush1.bf16.xpose.msra.mxu0 0
    %2594 = vmatprep.mubr.bf16.mxu0 %v365
    %2595 = vmatmul.mubr.bf16.gmra.mrb[0].mxu0 %v351
    %v2596 = vpop.f32.mrb[0].mxu0
    %v2597 = vadd.f32 %v2557, %v2596
    %v2598 = vpop.f32.mrb[0].mxu0
    %v2599 = vpop.f32.mrb[0].mxu0
    %v2600 = vpop.f32.mrb[0].mxu0
    %2601 = vdwg.mxu0
    %2602 = vmatprep.subr.bf16.mxu0 %v1861
    %2603 = vmatpush1.bf16.xpose.msra.mxu0 %v1860
    %2604 = vmatprep.subr.bf16.mxu0 0
    %2605 = vmatpush1.bf16.xpose.msra.mxu0 0
    %2606 = vmatprep.subr.bf16.mxu0 0
    %2607 = vmatpush1.bf16.xpose.msra.mxu0 0
    %2608 = vmatprep.subr.bf16.mxu0 0
    %2609 = vmatpush1.bf16.xpose.msra.mxu0 0
    %2610 = vmatprep.subr.bf16.mxu0 0
    %2611 = vmatpush1.bf16.xpose.msra.mxu0 0
    %2612 = vmatprep.subr.bf16.mxu0 0
    %2613 = vmatpush1.bf16.xpose.msra.mxu0 0
    %2614 = vmatprep.subr.bf16.mxu0 0
    %2615 = vmatpush1.bf16.xpose.msra.mxu0 0
    %2616 = vmatprep.subr.bf16.mxu0 0
    %2617 = vmatpush1.bf16.xpose.msra.mxu0 0
    %2618 = vmatprep.subr.bf16.mxu0 0
    %2619 = vmatpush1.bf16.xpose.msra.mxu0 0
    %2620 = vmatprep.subr.bf16.mxu0 0
    %2621 = vmatpush1.bf16.xpose.msra.mxu0 0
    %2622 = vmatprep.subr.bf16.mxu0 0
    %2623 = vmatpush1.bf16.xpose.msra.mxu0 0
    %2624 = vmatprep.subr.bf16.mxu0 0
    %2625 = vmatpush1.bf16.xpose.msra.mxu0 0
    %2626 = vmatprep.subr.bf16.mxu0 0
    %2627 = vmatpush1.bf16.xpose.msra.mxu0 0
    %2628 = vmatprep.subr.bf16.mxu0 0
    %2629 = vmatpush1.bf16.xpose.msra.mxu0 0
    %2630 = vmatprep.subr.bf16.mxu0 0
    %2631 = vmatpush1.bf16.xpose.msra.mxu0 0
    %2632 = vmatprep.subr.bf16.mxu0 0
    %2633 = vmatpush1.bf16.xpose.msra.mxu0 0
    %2634 = vmatprep.mubr.bf16.mxu0 %v369
    %2635 = vmatmul.mubr.bf16.gmra.mrb[0].mxu0 %v367
    %v2636 = vpop.f32.mrb[0].mxu0
    %v2637 = vadd.f32 %v2597, %v2636
    %v2638 = vpop.f32.mrb[0].mxu0
    %v2639 = vpop.f32.mrb[0].mxu0
    %v2640 = vpop.f32.mrb[0].mxu0
    %2641 = vdwg.mxu0
    %2642 = vmatprep.subr.bf16.mxu0 %v1863
    %2643 = vmatpush1.bf16.xpose.msra.mxu0 %v1862
    %2644 = vmatprep.subr.bf16.mxu0 0
    %2645 = vmatpush1.bf16.xpose.msra.mxu0 0
    %2646 = vmatprep.subr.bf16.mxu0 0
    %2647 = vmatpush1.bf16.xpose.msra.mxu0 0
    %2648 = vmatprep.subr.bf16.mxu0 0
    %2649 = vmatpush1.bf16.xpose.msra.mxu0 0
    %2650 = vmatprep.subr.bf16.mxu0 0
    %2651 = vmatpush1.bf16.xpose.msra.mxu0 0
    %2652 = vmatprep.subr.bf16.mxu0 0
    %2653 = vmatpush1.bf16.xpose.msra.mxu0 0
    %2654 = vmatprep.subr.bf16.mxu0 0
    %2655 = vmatpush1.bf16.xpose.msra.mxu0 0
    %2656 = vmatprep.subr.bf16.mxu0 0
    %2657 = vmatpush1.bf16.xpose.msra.mxu0 0
    %2658 = vmatprep.subr.bf16.mxu0 0
    %2659 = vmatpush1.bf16.xpose.msra.mxu0 0
    %2660 = vmatprep.subr.bf16.mxu0 0
    %2661 = vmatpush1.bf16.xpose.msra.mxu0 0
    %2662 = vmatprep.subr.bf16.mxu0 0
    %2663 = vmatpush1.bf16.xpose.msra.mxu0 0
    %2664 = vmatprep.subr.bf16.mxu0 0
    %2665 = vmatpush1.bf16.xpose.msra.mxu0 0
    %2666 = vmatprep.subr.bf16.mxu0 0
    %2667 = vmatpush1.bf16.xpose.msra.mxu0 0
    %2668 = vmatprep.subr.bf16.mxu0 0
    %2669 = vmatpush1.bf16.xpose.msra.mxu0 0
    %2670 = vmatprep.subr.bf16.mxu0 0
    %2671 = vmatpush1.bf16.xpose.msra.mxu0 0
    %2672 = vmatprep.subr.bf16.mxu0 0
    %2673 = vmatpush1.bf16.xpose.msra.mxu0 0
    %2674 = vmatprep.mubr.bf16.mxu0 %v407
    %2675 = vmatmul.mubr.bf16.gmra.mrb[0].mxu0 %v393
    %v2676 = vpop.f32.mrb[0].mxu0
    %v2677 = vadd.f32 %v2637, %v2676
    %v2678 = vpop.f32.mrb[0].mxu0
    %v2679 = vpop.f32.mrb[0].mxu0
    %v2680 = vpop.f32.mrb[0].mxu0
    %2681 = vdwg.mxu0
    %2682 = vmatprep.subr.bf16.mxu0 %v1865
    %2683 = vmatpush1.bf16.xpose.msra.mxu0 %v1864
    %2684 = vmatprep.subr.bf16.mxu0 0
    %2685 = vmatpush1.bf16.xpose.msra.mxu0 0
    %2686 = vmatprep.subr.bf16.mxu0 0
    %2687 = vmatpush1.bf16.xpose.msra.mxu0 0
    %2688 = vmatprep.subr.bf16.mxu0 0
    %2689 = vmatpush1.bf16.xpose.msra.mxu0 0
    %2690 = vmatprep.subr.bf16.mxu0 0
    %2691 = vmatpush1.bf16.xpose.msra.mxu0 0
    %2692 = vmatprep.subr.bf16.mxu0 0
    %2693 = vmatpush1.bf16.xpose.msra.mxu0 0
    %2694 = vmatprep.subr.bf16.mxu0 0
    %2695 = vmatpush1.bf16.xpose.msra.mxu0 0
    %2696 = vmatprep.subr.bf16.mxu0 0
    %2697 = vmatpush1.bf16.xpose.msra.mxu0 0
    %2698 = vmatprep.subr.bf16.mxu0 0
    %2699 = vmatpush1.bf16.xpose.msra.mxu0 0
    %2700 = vmatprep.subr.bf16.mxu0 0
    %2701 = vmatpush1.bf16.xpose.msra.mxu0 0
    %2702 = vmatprep.subr.bf16.mxu0 0
    %2703 = vmatpush1.bf16.xpose.msra.mxu0 0
    %2704 = vmatprep.subr.bf16.mxu0 0
    %2705 = vmatpush1.bf16.xpose.msra.mxu0 0
    %2706 = vmatprep.subr.bf16.mxu0 0
    %2707 = vmatpush1.bf16.xpose.msra.mxu0 0
    %2708 = vmatprep.subr.bf16.mxu0 0
    %2709 = vmatpush1.bf16.xpose.msra.mxu0 0
    %2710 = vmatprep.subr.bf16.mxu0 0
    %2711 = vmatpush1.bf16.xpose.msra.mxu0 0
    %2712 = vmatprep.subr.bf16.mxu0 0
    %2713 = vmatpush1.bf16.xpose.msra.mxu0 0
    %2714 = vmatprep.mubr.bf16.mxu0 %v417
    %2715 = vmatmul.mubr.bf16.gmra.mrb[0].mxu0 %v415
    %v2716 = vpop.f32.mrb[0].mxu0
    %v2717 = vadd.f32 %v2677, %v2716
    %v2718 = vpop.f32.mrb[0].mxu0
    %v2719 = vpop.f32.mrb[0].mxu0
    %v2720 = vpop.f32.mrb[0].mxu0
    %2721 = vdwg.mxu0
    %2722 = vmatprep.subr.bf16.mxu0 %v1867
    %2723 = vmatpush1.bf16.xpose.msra.mxu0 %v1866
    %2724 = vmatprep.subr.bf16.mxu0 0
    %2725 = vmatpush1.bf16.xpose.msra.mxu0 0
    %2726 = vmatprep.subr.bf16.mxu0 0
    %2727 = vmatpush1.bf16.xpose.msra.mxu0 0
    %2728 = vmatprep.subr.bf16.mxu0 0
    %2729 = vmatpush1.bf16.xpose.msra.mxu0 0
    %2730 = vmatprep.subr.bf16.mxu0 0
    %2731 = vmatpush1.bf16.xpose.msra.mxu0 0
    %2732 = vmatprep.subr.bf16.mxu0 0
    %2733 = vmatpush1.bf16.xpose.msra.mxu0 0
    %2734 = vmatprep.subr.bf16.mxu0 0
    %2735 = vmatpush1.bf16.xpose.msra.mxu0 0
    %2736 = vmatprep.subr.bf16.mxu0 0
    %2737 = vmatpush1.bf16.xpose.msra.mxu0 0
    %2738 = vmatprep.subr.bf16.mxu0 0
    %2739 = vmatpush1.bf16.xpose.msra.mxu0 0
    %2740 = vmatprep.subr.bf16.mxu0 0
    %2741 = vmatpush1.bf16.xpose.msra.mxu0 0
    %2742 = vmatprep.subr.bf16.mxu0 0
    %2743 = vmatpush1.bf16.xpose.msra.mxu0 0
    %2744 = vmatprep.subr.bf16.mxu0 0
    %2745 = vmatpush1.bf16.xpose.msra.mxu0 0
    %2746 = vmatprep.subr.bf16.mxu0 0
    %2747 = vmatpush1.bf16.xpose.msra.mxu0 0
    %2748 = vmatprep.subr.bf16.mxu0 0
    %2749 = vmatpush1.bf16.xpose.msra.mxu0 0
    %2750 = vmatprep.subr.bf16.mxu0 0
    %2751 = vmatpush1.bf16.xpose.msra.mxu0 0
    %2752 = vmatprep.subr.bf16.mxu0 0
    %2753 = vmatpush1.bf16.xpose.msra.mxu0 0
    %2754 = vmatprep.mubr.bf16.mxu0 %v414
    %2755 = vmatmul.mubr.bf16.gmra.mrb[0].mxu0 %v400
    %v2756 = vpop.f32.mrb[0].mxu0
    %v2757 = vadd.f32 %v2717, %v2756
    %v2758 = vpop.f32.mrb[0].mxu0
    %v2759 = vpop.f32.mrb[0].mxu0
    %v2760 = vpop.f32.mrb[0].mxu0
    %2761 = vdwg.mxu0
    %2762 = vmatprep.subr.bf16.mxu0 %v1869
    %2763 = vmatpush1.bf16.xpose.msra.mxu0 %v1868
    %2764 = vmatprep.subr.bf16.mxu0 0
    %2765 = vmatpush1.bf16.xpose.msra.mxu0 0
    %2766 = vmatprep.subr.bf16.mxu0 0
    %2767 = vmatpush1.bf16.xpose.msra.mxu0 0
    %2768 = vmatprep.subr.bf16.mxu0 0
    %2769 = vmatpush1.bf16.xpose.msra.mxu0 0
    %2770 = vmatprep.subr.bf16.mxu0 0
    %2771 = vmatpush1.bf16.xpose.msra.mxu0 0
    %2772 = vmatprep.subr.bf16.mxu0 0
    %2773 = vmatpush1.bf16.xpose.msra.mxu0 0
    %2774 = vmatprep.subr.bf16.mxu0 0
    %2775 = vmatpush1.bf16.xpose.msra.mxu0 0
    %2776 = vmatprep.subr.bf16.mxu0 0
    %2777 = vmatpush1.bf16.xpose.msra.mxu0 0
    %2778 = vmatprep.subr.bf16.mxu0 0
    %2779 = vmatpush1.bf16.xpose.msra.mxu0 0
    %2780 = vmatprep.subr.bf16.mxu0 0
    %2781 = vmatpush1.bf16.xpose.msra.mxu0 0
    %2782 = vmatprep.subr.bf16.mxu0 0
    %2783 = vmatpush1.bf16.xpose.msra.mxu0 0
    %2784 = vmatprep.subr.bf16.mxu0 0
    %2785 = vmatpush1.bf16.xpose.msra.mxu0 0
    %2786 = vmatprep.subr.bf16.mxu0 0
    %2787 = vmatpush1.bf16.xpose.msra.mxu0 0
    %2788 = vmatprep.subr.bf16.mxu0 0
    %2789 = vmatpush1.bf16.xpose.msra.mxu0 0
    %2790 = vmatprep.subr.bf16.mxu0 0
    %2791 = vmatpush1.bf16.xpose.msra.mxu0 0
    %2792 = vmatprep.subr.bf16.mxu0 0
    %2793 = vmatpush1.bf16.xpose.msra.mxu0 0
    %2794 = vmatprep.mubr.bf16.mxu0 %v418
    %2795 = vmatmul.mubr.bf16.gmra.mrb[0].mxu0 %v416
    %v2796 = vpop.f32.mrb[0].mxu0
    %v2797 = vadd.f32 %v2757, %v2796
    %v2798 = vpop.f32.mrb[0].mxu0
    %v2799 = vpop.f32.mrb[0].mxu0
    %v2800 = vpop.f32.mrb[0].mxu0
    %2801 = vdwg.mxu0
    %2802 = vmatprep.subr.bf16.mxu0 %v1871
    %2803 = vmatpush1.bf16.xpose.msra.mxu0 %v1870
    %2804 = vmatprep.subr.bf16.mxu0 0
    %2805 = vmatpush1.bf16.xpose.msra.mxu0 0
    %2806 = vmatprep.subr.bf16.mxu0 0
    %2807 = vmatpush1.bf16.xpose.msra.mxu0 0
    %2808 = vmatprep.subr.bf16.mxu0 0
    %2809 = vmatpush1.bf16.xpose.msra.mxu0 0
    %2810 = vmatprep.subr.bf16.mxu0 0
    %2811 = vmatpush1.bf16.xpose.msra.mxu0 0
    %2812 = vmatprep.subr.bf16.mxu0 0
    %2813 = vmatpush1.bf16.xpose.msra.mxu0 0
    %2814 = vmatprep.subr.bf16.mxu0 0
    %2815 = vmatpush1.bf16.xpose.msra.mxu0 0
    %2816 = vmatprep.subr.bf16.mxu0 0
    %2817 = vmatpush1.bf16.xpose.msra.mxu0 0
    %2818 = vmatprep.subr.bf16.mxu0 0
    %2819 = vmatpush1.bf16.xpose.msra.mxu0 0
    %2820 = vmatprep.subr.bf16.mxu0 0
    %2821 = vmatpush1.bf16.xpose.msra.mxu0 0
    %2822 = vmatprep.subr.bf16.mxu0 0
    %2823 = vmatpush1.bf16.xpose.msra.mxu0 0
    %2824 = vmatprep.subr.bf16.mxu0 0
    %2825 = vmatpush1.bf16.xpose.msra.mxu0 0
    %2826 = vmatprep.subr.bf16.mxu0 0
    %2827 = vmatpush1.bf16.xpose.msra.mxu0 0
    %2828 = vmatprep.subr.bf16.mxu0 0
    %2829 = vmatpush1.bf16.xpose.msra.mxu0 0
    %2830 = vmatprep.subr.bf16.mxu0 0
    %2831 = vmatpush1.bf16.xpose.msra.mxu0 0
    %2832 = vmatprep.subr.bf16.mxu0 0
    %2833 = vmatpush1.bf16.xpose.msra.mxu0 0
    %2834 = vmatprep.mubr.bf16.mxu0 %v456
    %2835 = vmatmul.mubr.bf16.gmra.mrb[0].mxu0 %v442
    %v2836 = vpop.f32.mrb[0].mxu0
    %v2837 = vadd.f32 %v2797, %v2836
    %v2838 = vpop.f32.mrb[0].mxu0
    %v2839 = vpop.f32.mrb[0].mxu0
    %v2840 = vpop.f32.mrb[0].mxu0
    %2841 = vdwg.mxu0
    %2842 = vmatprep.subr.bf16.mxu0 %v1873
    %2843 = vmatpush1.bf16.xpose.msra.mxu0 %v1872
    %2844 = vmatprep.subr.bf16.mxu0 0
    %2845 = vmatpush1.bf16.xpose.msra.mxu0 0
    %2846 = vmatprep.subr.bf16.mxu0 0
    %2847 = vmatpush1.bf16.xpose.msra.mxu0 0
    %2848 = vmatprep.subr.bf16.mxu0 0
    %2849 = vmatpush1.bf16.xpose.msra.mxu0 0
    %2850 = vmatprep.subr.bf16.mxu0 0
    %2851 = vmatpush1.bf16.xpose.msra.mxu0 0
    %2852 = vmatprep.subr.bf16.mxu0 0
    %2853 = vmatpush1.bf16.xpose.msra.mxu0 0
    %2854 = vmatprep.subr.bf16.mxu0 0
    %2855 = vmatpush1.bf16.xpose.msra.mxu0 0
    %2856 = vmatprep.subr.bf16.mxu0 0
    %2857 = vmatpush1.bf16.xpose.msra.mxu0 0
    %2858 = vmatprep.subr.bf16.mxu0 0
    %2859 = vmatpush1.bf16.xpose.msra.mxu0 0
    %2860 = vmatprep.subr.bf16.mxu0 0
    %2861 = vmatpush1.bf16.xpose.msra.mxu0 0
    %2862 = vmatprep.subr.bf16.mxu0 0
    %2863 = vmatpush1.bf16.xpose.msra.mxu0 0
    %2864 = vmatprep.subr.bf16.mxu0 0
    %2865 = vmatpush1.bf16.xpose.msra.mxu0 0
    %2866 = vmatprep.subr.bf16.mxu0 0
    %2867 = vmatpush1.bf16.xpose.msra.mxu0 0
    %2868 = vmatprep.subr.bf16.mxu0 0
    %2869 = vmatpush1.bf16.xpose.msra.mxu0 0
    %2870 = vmatprep.subr.bf16.mxu0 0
    %2871 = vmatpush1.bf16.xpose.msra.mxu0 0
    %2872 = vmatprep.subr.bf16.mxu0 0
    %2873 = vmatpush1.bf16.xpose.msra.mxu0 0
    %2874 = vmatprep.mubr.bf16.mxu0 %v466
    %2875 = vmatmul.mubr.bf16.gmra.mrb[0].mxu0 %v464
    %v2876 = vpop.f32.mrb[0].mxu0
    %v2877 = vadd.f32 %v2837, %v2876
    %v2878 = vpop.f32.mrb[0].mxu0
    %v2879 = vpop.f32.mrb[0].mxu0
    %v2880 = vpop.f32.mrb[0].mxu0
    %2881 = vdwg.mxu0
    %2882 = vmatprep.subr.bf16.mxu0 %v1875
    %2883 = vmatpush1.bf16.xpose.msra.mxu0 %v1874
    %2884 = vmatprep.subr.bf16.mxu0 0
    %2885 = vmatpush1.bf16.xpose.msra.mxu0 0
    %2886 = vmatprep.subr.bf16.mxu0 0
    %2887 = vmatpush1.bf16.xpose.msra.mxu0 0
    %2888 = vmatprep.subr.bf16.mxu0 0
    %2889 = vmatpush1.bf16.xpose.msra.mxu0 0
    %2890 = vmatprep.subr.bf16.mxu0 0
    %2891 = vmatpush1.bf16.xpose.msra.mxu0 0
    %2892 = vmatprep.subr.bf16.mxu0 0
    %2893 = vmatpush1.bf16.xpose.msra.mxu0 0
    %2894 = vmatprep.subr.bf16.mxu0 0
    %2895 = vmatpush1.bf16.xpose.msra.mxu0 0
    %2896 = vmatprep.subr.bf16.mxu0 0
    %2897 = vmatpush1.bf16.xpose.msra.mxu0 0
    %2898 = vmatprep.subr.bf16.mxu0 0
    %2899 = vmatpush1.bf16.xpose.msra.mxu0 0
    %2900 = vmatprep.subr.bf16.mxu0 0
    %2901 = vmatpush1.bf16.xpose.msra.mxu0 0
    %2902 = vmatprep.subr.bf16.mxu0 0
    %2903 = vmatpush1.bf16.xpose.msra.mxu0 0
    %2904 = vmatprep.subr.bf16.mxu0 0
    %2905 = vmatpush1.bf16.xpose.msra.mxu0 0
    %2906 = vmatprep.subr.bf16.mxu0 0
    %2907 = vmatpush1.bf16.xpose.msra.mxu0 0
    %2908 = vmatprep.subr.bf16.mxu0 0
    %2909 = vmatpush1.bf16.xpose.msra.mxu0 0
    %2910 = vmatprep.subr.bf16.mxu0 0
    %2911 = vmatpush1.bf16.xpose.msra.mxu0 0
    %2912 = vmatprep.subr.bf16.mxu0 0
    %2913 = vmatpush1.bf16.xpose.msra.mxu0 0
    %2914 = vmatprep.mubr.bf16.mxu0 %v463
    %2915 = vmatmul.mubr.bf16.gmra.mrb[0].mxu0 %v449
    %v2916 = vpop.f32.mrb[0].mxu0
    %v2917 = vadd.f32 %v2877, %v2916
    %v2918 = vpop.f32.mrb[0].mxu0
    %v2919 = vpop.f32.mrb[0].mxu0
    %v2920 = vpop.f32.mrb[0].mxu0
    %2921 = vdwg.mxu0
    %2922 = vmatprep.subr.bf16.mxu0 %v1877
    %2923 = vmatpush1.bf16.xpose.msra.mxu0 %v1876
    %2924 = vmatprep.subr.bf16.mxu0 0
    %2925 = vmatpush1.bf16.xpose.msra.mxu0 0
    %2926 = vmatprep.subr.bf16.mxu0 0
    %2927 = vmatpush1.bf16.xpose.msra.mxu0 0
    %2928 = vmatprep.subr.bf16.mxu0 0
    %2929 = vmatpush1.bf16.xpose.msra.mxu0 0
    %2930 = vmatprep.subr.bf16.mxu0 0
    %2931 = vmatpush1.bf16.xpose.msra.mxu0 0
    %2932 = vmatprep.subr.bf16.mxu0 0
    %2933 = vmatpush1.bf16.xpose.msra.mxu0 0
    %2934 = vmatprep.subr.bf16.mxu0 0
    %2935 = vmatpush1.bf16.xpose.msra.mxu0 0
    %2936 = vmatprep.subr.bf16.mxu0 0
    %2937 = vmatpush1.bf16.xpose.msra.mxu0 0
    %2938 = vmatprep.subr.bf16.mxu0 0
    %2939 = vmatpush1.bf16.xpose.msra.mxu0 0
    %2940 = vmatprep.subr.bf16.mxu0 0
    %2941 = vmatpush1.bf16.xpose.msra.mxu0 0
    %2942 = vmatprep.subr.bf16.mxu0 0
    %2943 = vmatpush1.bf16.xpose.msra.mxu0 0
    %2944 = vmatprep.subr.bf16.mxu0 0
    %2945 = vmatpush1.bf16.xpose.msra.mxu0 0
    %2946 = vmatprep.subr.bf16.mxu0 0
    %2947 = vmatpush1.bf16.xpose.msra.mxu0 0
    %2948 = vmatprep.subr.bf16.mxu0 0
    %2949 = vmatpush1.bf16.xpose.msra.mxu0 0
    %2950 = vmatprep.subr.bf16.mxu0 0
    %2951 = vmatpush1.bf16.xpose.msra.mxu0 0
    %2952 = vmatprep.subr.bf16.mxu0 0
    %2953 = vmatpush1.bf16.xpose.msra.mxu0 0
    %2954 = vmatprep.mubr.bf16.mxu0 %v467
    %2955 = vmatmul.mubr.bf16.gmra.mrb[0].mxu0 %v465
    %v2956 = vpop.f32.mrb[0].mxu0
    %v2957 = vadd.f32 %v2917, %v2956
    %v2958 = vpop.f32.mrb[0].mxu0
    %v2959 = vpop.f32.mrb[0].mxu0
    %v2960 = vpop.f32.mrb[0].mxu0
    %2961 = vdwg.mxu0
    %2962 = vmatprep.subr.bf16.mxu0 %v1879
    %2963 = vmatpush1.bf16.xpose.msra.mxu0 %v1878
    %2964 = vmatprep.subr.bf16.mxu0 0
    %2965 = vmatpush1.bf16.xpose.msra.mxu0 0
    %2966 = vmatprep.subr.bf16.mxu0 0
    %2967 = vmatpush1.bf16.xpose.msra.mxu0 0
    %2968 = vmatprep.subr.bf16.mxu0 0
    %2969 = vmatpush1.bf16.xpose.msra.mxu0 0
    %2970 = vmatprep.subr.bf16.mxu0 0
    %2971 = vmatpush1.bf16.xpose.msra.mxu0 0
    %2972 = vmatprep.subr.bf16.mxu0 0
    %2973 = vmatpush1.bf16.xpose.msra.mxu0 0
    %2974 = vmatprep.subr.bf16.mxu0 0
    %2975 = vmatpush1.bf16.xpose.msra.mxu0 0
    %2976 = vmatprep.subr.bf16.mxu0 0
    %2977 = vmatpush1.bf16.xpose.msra.mxu0 0
    %2978 = vmatprep.subr.bf16.mxu0 0
    %2979 = vmatpush1.bf16.xpose.msra.mxu0 0
    %2980 = vmatprep.subr.bf16.mxu0 0
    %2981 = vmatpush1.bf16.xpose.msra.mxu0 0
    %2982 = vmatprep.subr.bf16.mxu0 0
    %2983 = vmatpush1.bf16.xpose.msra.mxu0 0
    %2984 = vmatprep.subr.bf16.mxu0 0
    %2985 = vmatpush1.bf16.xpose.msra.mxu0 0
    %2986 = vmatprep.subr.bf16.mxu0 0
    %2987 = vmatpush1.bf16.xpose.msra.mxu0 0
    %2988 = vmatprep.subr.bf16.mxu0 0
    %2989 = vmatpush1.bf16.xpose.msra.mxu0 0
    %2990 = vmatprep.subr.bf16.mxu0 0
    %2991 = vmatpush1.bf16.xpose.msra.mxu0 0
    %2992 = vmatprep.subr.bf16.mxu0 0
    %2993 = vmatpush1.bf16.xpose.msra.mxu0 0
    %2994 = vmatprep.mubr.bf16.mxu0 %v505
    %2995 = vmatmul.mubr.bf16.gmra.mrb[0].mxu0 %v491
    %v2996 = vpop.f32.mrb[0].mxu0
    %v2997 = vadd.f32 %v2957, %v2996
    %v2998 = vpop.f32.mrb[0].mxu0
    %v2999 = vpop.f32.mrb[0].mxu0
    %v3000 = vpop.f32.mrb[0].mxu0
    %3001 = vdwg.mxu0
    %3002 = vmatprep.subr.bf16.mxu0 %v1881
    %3003 = vmatpush1.bf16.xpose.msra.mxu0 %v1880
    %3004 = vmatprep.subr.bf16.mxu0 0
    %3005 = vmatpush1.bf16.xpose.msra.mxu0 0
    %3006 = vmatprep.subr.bf16.mxu0 0
    %3007 = vmatpush1.bf16.xpose.msra.mxu0 0
    %3008 = vmatprep.subr.bf16.mxu0 0
    %3009 = vmatpush1.bf16.xpose.msra.mxu0 0
    %3010 = vmatprep.subr.bf16.mxu0 0
    %3011 = vmatpush1.bf16.xpose.msra.mxu0 0
    %3012 = vmatprep.subr.bf16.mxu0 0
    %3013 = vmatpush1.bf16.xpose.msra.mxu0 0
    %3014 = vmatprep.subr.bf16.mxu0 0
    %3015 = vmatpush1.bf16.xpose.msra.mxu0 0
    %3016 = vmatprep.subr.bf16.mxu0 0
    %3017 = vmatpush1.bf16.xpose.msra.mxu0 0
    %3018 = vmatprep.subr.bf16.mxu0 0
    %3019 = vmatpush1.bf16.xpose.msra.mxu0 0
    %3020 = vmatprep.subr.bf16.mxu0 0
    %3021 = vmatpush1.bf16.xpose.msra.mxu0 0
    %3022 = vmatprep.subr.bf16.mxu0 0
    %3023 = vmatpush1.bf16.xpose.msra.mxu0 0
    %3024 = vmatprep.subr.bf16.mxu0 0
    %3025 = vmatpush1.bf16.xpose.msra.mxu0 0
    %3026 = vmatprep.subr.bf16.mxu0 0
    %3027 = vmatpush1.bf16.xpose.msra.mxu0 0
    %3028 = vmatprep.subr.bf16.mxu0 0
    %3029 = vmatpush1.bf16.xpose.msra.mxu0 0
    %3030 = vmatprep.subr.bf16.mxu0 0
    %3031 = vmatpush1.bf16.xpose.msra.mxu0 0
    %3032 = vmatprep.subr.bf16.mxu0 0
    %3033 = vmatpush1.bf16.xpose.msra.mxu0 0
    %3034 = vmatprep.mubr.bf16.mxu0 %v515
    %3035 = vmatmul.mubr.bf16.gmra.mrb[0].mxu0 %v513
    %v3036 = vpop.f32.mrb[0].mxu0
    %v3037 = vadd.f32 %v2997, %v3036
    %v3038 = vpop.f32.mrb[0].mxu0
    %v3039 = vpop.f32.mrb[0].mxu0
    %v3040 = vpop.f32.mrb[0].mxu0
    %3041 = vdwg.mxu0
    %3042 = vmatprep.subr.bf16.mxu0 %v1883
    %3043 = vmatpush1.bf16.xpose.msra.mxu0 %v1882
    %3044 = vmatprep.subr.bf16.mxu0 0
    %3045 = vmatpush1.bf16.xpose.msra.mxu0 0
    %3046 = vmatprep.subr.bf16.mxu0 0
    %3047 = vmatpush1.bf16.xpose.msra.mxu0 0
    %3048 = vmatprep.subr.bf16.mxu0 0
    %3049 = vmatpush1.bf16.xpose.msra.mxu0 0
    %3050 = vmatprep.subr.bf16.mxu0 0
    %3051 = vmatpush1.bf16.xpose.msra.mxu0 0
    %3052 = vmatprep.subr.bf16.mxu0 0
    %3053 = vmatpush1.bf16.xpose.msra.mxu0 0
    %3054 = vmatprep.subr.bf16.mxu0 0
    %3055 = vmatpush1.bf16.xpose.msra.mxu0 0
    %3056 = vmatprep.subr.bf16.mxu0 0
    %3057 = vmatpush1.bf16.xpose.msra.mxu0 0
    %3058 = vmatprep.subr.bf16.mxu0 0
    %3059 = vmatpush1.bf16.xpose.msra.mxu0 0
    %3060 = vmatprep.subr.bf16.mxu0 0
    %3061 = vmatpush1.bf16.xpose.msra.mxu0 0
    %3062 = vmatprep.subr.bf16.mxu0 0
    %3063 = vmatpush1.bf16.xpose.msra.mxu0 0
    %3064 = vmatprep.subr.bf16.mxu0 0
    %3065 = vmatpush1.bf16.xpose.msra.mxu0 0
    %3066 = vmatprep.subr.bf16.mxu0 0
    %3067 = vmatpush1.bf16.xpose.msra.mxu0 0
    %3068 = vmatprep.subr.bf16.mxu0 0
    %3069 = vmatpush1.bf16.xpose.msra.mxu0 0
    %3070 = vmatprep.subr.bf16.mxu0 0
    %3071 = vmatpush1.bf16.xpose.msra.mxu0 0
    %3072 = vmatprep.subr.bf16.mxu0 0
    %3073 = vmatpush1.bf16.xpose.msra.mxu0 0
    %3074 = vmatprep.mubr.bf16.mxu0 %v512
    %3075 = vmatmul.mubr.bf16.gmra.mrb[0].mxu0 %v498
    %v3076 = vpop.f32.mrb[0].mxu0
    %v3077 = vadd.f32 %v3037, %v3076
    %v3078 = vpop.f32.mrb[0].mxu0
    %v3079 = vpop.f32.mrb[0].mxu0
    %v3080 = vpop.f32.mrb[0].mxu0
    %3081 = vdwg.mxu0
    %3082 = vmatprep.subr.bf16.mxu0 %v1885
    %3083 = vmatpush1.bf16.xpose.msra.mxu0 %v1884
    %3084 = vmatprep.subr.bf16.mxu0 0
    %3085 = vmatpush1.bf16.xpose.msra.mxu0 0
    %3086 = vmatprep.subr.bf16.mxu0 0
    %3087 = vmatpush1.bf16.xpose.msra.mxu0 0
    %3088 = vmatprep.subr.bf16.mxu0 0
    %3089 = vmatpush1.bf16.xpose.msra.mxu0 0
    %3090 = vmatprep.subr.bf16.mxu0 0
    %3091 = vmatpush1.bf16.xpose.msra.mxu0 0
    %3092 = vmatprep.subr.bf16.mxu0 0
    %3093 = vmatpush1.bf16.xpose.msra.mxu0 0
    %3094 = vmatprep.subr.bf16.mxu0 0
    %3095 = vmatpush1.bf16.xpose.msra.mxu0 0
    %3096 = vmatprep.subr.bf16.mxu0 0
    %3097 = vmatpush1.bf16.xpose.msra.mxu0 0
    %3098 = vmatprep.subr.bf16.mxu0 0
    %3099 = vmatpush1.bf16.xpose.msra.mxu0 0
    %3100 = vmatprep.subr.bf16.mxu0 0
    %3101 = vmatpush1.bf16.xpose.msra.mxu0 0
    %3102 = vmatprep.subr.bf16.mxu0 0
    %3103 = vmatpush1.bf16.xpose.msra.mxu0 0
    %3104 = vmatprep.subr.bf16.mxu0 0
    %3105 = vmatpush1.bf16.xpose.msra.mxu0 0
    %3106 = vmatprep.subr.bf16.mxu0 0
    %3107 = vmatpush1.bf16.xpose.msra.mxu0 0
    %3108 = vmatprep.subr.bf16.mxu0 0
    %3109 = vmatpush1.bf16.xpose.msra.mxu0 0
    %3110 = vmatprep.subr.bf16.mxu0 0
    %3111 = vmatpush1.bf16.xpose.msra.mxu0 0
    %3112 = vmatprep.subr.bf16.mxu0 0
    %3113 = vmatpush1.bf16.xpose.msra.mxu0 0
    %3114 = vmatprep.mubr.bf16.mxu0 %v516
    %3115 = vmatmul.mubr.bf16.gmra.mrb[0].mxu0 %v514
    %v3116 = vpop.f32.mrb[0].mxu0
    %v3117 = vadd.f32 %v3077, %v3116
    %v3118 = vpop.f32.mrb[0].mxu0
    %v3119 = vpop.f32.mrb[0].mxu0
    %v3120 = vpop.f32.mrb[0].mxu0
    %3121 = vdwg.mxu0
    %3122 = vmatprep.subr.bf16.mxu0 %v1887
    %3123 = vmatpush1.bf16.xpose.msra.mxu0 %v1886
    %3124 = vmatprep.subr.bf16.mxu0 0
    %3125 = vmatpush1.bf16.xpose.msra.mxu0 0
    %3126 = vmatprep.subr.bf16.mxu0 0
    %3127 = vmatpush1.bf16.xpose.msra.mxu0 0
    %3128 = vmatprep.subr.bf16.mxu0 0
    %3129 = vmatpush1.bf16.xpose.msra.mxu0 0
    %3130 = vmatprep.subr.bf16.mxu0 0
    %3131 = vmatpush1.bf16.xpose.msra.mxu0 0
    %3132 = vmatprep.subr.bf16.mxu0 0
    %3133 = vmatpush1.bf16.xpose.msra.mxu0 0
    %3134 = vmatprep.subr.bf16.mxu0 0
    %3135 = vmatpush1.bf16.xpose.msra.mxu0 0
    %3136 = vmatprep.subr.bf16.mxu0 0
    %3137 = vmatpush1.bf16.xpose.msra.mxu0 0
    %3138 = vmatprep.subr.bf16.mxu0 0
    %3139 = vmatpush1.bf16.xpose.msra.mxu0 0
    %3140 = vmatprep.subr.bf16.mxu0 0
    %3141 = vmatpush1.bf16.xpose.msra.mxu0 0
    %3142 = vmatprep.subr.bf16.mxu0 0
    %3143 = vmatpush1.bf16.xpose.msra.mxu0 0
    %3144 = vmatprep.subr.bf16.mxu0 0
    %3145 = vmatpush1.bf16.xpose.msra.mxu0 0
    %3146 = vmatprep.subr.bf16.mxu0 0
    %3147 = vmatpush1.bf16.xpose.msra.mxu0 0
    %3148 = vmatprep.subr.bf16.mxu0 0
    %3149 = vmatpush1.bf16.xpose.msra.mxu0 0
    %3150 = vmatprep.subr.bf16.mxu0 0
    %3151 = vmatpush1.bf16.xpose.msra.mxu0 0
    %3152 = vmatprep.subr.bf16.mxu0 0
    %3153 = vmatpush1.bf16.xpose.msra.mxu0 0
    %3154 = vmatprep.mubr.bf16.mxu0 %v554
    %3155 = vmatmul.mubr.bf16.gmra.mrb[0].mxu0 %v540
    %v3156 = vpop.f32.mrb[0].mxu0
    %v3157 = vadd.f32 %v3117, %v3156
    %v3158 = vpop.f32.mrb[0].mxu0
    %v3159 = vpop.f32.mrb[0].mxu0
    %v3160 = vpop.f32.mrb[0].mxu0
    %3161 = vdwg.mxu0
    %3162 = vmatprep.subr.bf16.mxu0 %v1889
    %3163 = vmatpush1.bf16.xpose.msra.mxu0 %v1888
    %3164 = vmatprep.subr.bf16.mxu0 0
    %3165 = vmatpush1.bf16.xpose.msra.mxu0 0
    %3166 = vmatprep.subr.bf16.mxu0 0
    %3167 = vmatpush1.bf16.xpose.msra.mxu0 0
    %3168 = vmatprep.subr.bf16.mxu0 0
    %3169 = vmatpush1.bf16.xpose.msra.mxu0 0
    %3170 = vmatprep.subr.bf16.mxu0 0
    %3171 = vmatpush1.bf16.xpose.msra.mxu0 0
    %3172 = vmatprep.subr.bf16.mxu0 0
    %3173 = vmatpush1.bf16.xpose.msra.mxu0 0
    %3174 = vmatprep.subr.bf16.mxu0 0
    %3175 = vmatpush1.bf16.xpose.msra.mxu0 0
    %3176 = vmatprep.subr.bf16.mxu0 0
    %3177 = vmatpush1.bf16.xpose.msra.mxu0 0
    %3178 = vmatprep.subr.bf16.mxu0 0
    %3179 = vmatpush1.bf16.xpose.msra.mxu0 0
    %3180 = vmatprep.subr.bf16.mxu0 0
    %3181 = vmatpush1.bf16.xpose.msra.mxu0 0
    %3182 = vmatprep.subr.bf16.mxu0 0
    %3183 = vmatpush1.bf16.xpose.msra.mxu0 0
    %3184 = vmatprep.subr.bf16.mxu0 0
    %3185 = vmatpush1.bf16.xpose.msra.mxu0 0
    %3186 = vmatprep.subr.bf16.mxu0 0
    %3187 = vmatpush1.bf16.xpose.msra.mxu0 0
    %3188 = vmatprep.subr.bf16.mxu0 0
    %3189 = vmatpush1.bf16.xpose.msra.mxu0 0
    %3190 = vmatprep.subr.bf16.mxu0 0
    %3191 = vmatpush1.bf16.xpose.msra.mxu0 0
    %3192 = vmatprep.subr.bf16.mxu0 0
    %3193 = vmatpush1.bf16.xpose.msra.mxu0 0
    %3194 = vmatprep.mubr.bf16.mxu0 %v564
    %3195 = vmatmul.mubr.bf16.gmra.mrb[0].mxu0 %v562
    %v3196 = vpop.f32.mrb[0].mxu0
    %v3197 = vadd.f32 %v3157, %v3196
    %v3198 = vpop.f32.mrb[0].mxu0
    %v3199 = vpop.f32.mrb[0].mxu0
    %v3200 = vpop.f32.mrb[0].mxu0
    %3201 = vdwg.mxu0
    %3202 = vmatprep.subr.bf16.mxu0 %v1891
    %3203 = vmatpush1.bf16.xpose.msra.mxu0 %v1890
    %3204 = vmatprep.subr.bf16.mxu0 0
    %3205 = vmatpush1.bf16.xpose.msra.mxu0 0
    %3206 = vmatprep.subr.bf16.mxu0 0
    %3207 = vmatpush1.bf16.xpose.msra.mxu0 0
    %3208 = vmatprep.subr.bf16.mxu0 0
    %3209 = vmatpush1.bf16.xpose.msra.mxu0 0
    %3210 = vmatprep.subr.bf16.mxu0 0
    %3211 = vmatpush1.bf16.xpose.msra.mxu0 0
    %3212 = vmatprep.subr.bf16.mxu0 0
    %3213 = vmatpush1.bf16.xpose.msra.mxu0 0
    %3214 = vmatprep.subr.bf16.mxu0 0
    %3215 = vmatpush1.bf16.xpose.msra.mxu0 0
    %3216 = vmatprep.subr.bf16.mxu0 0
    %3217 = vmatpush1.bf16.xpose.msra.mxu0 0
    %3218 = vmatprep.subr.bf16.mxu0 0
    %3219 = vmatpush1.bf16.xpose.msra.mxu0 0
    %3220 = vmatprep.subr.bf16.mxu0 0
    %3221 = vmatpush1.bf16.xpose.msra.mxu0 0
    %3222 = vmatprep.subr.bf16.mxu0 0
    %3223 = vmatpush1.bf16.xpose.msra.mxu0 0
    %3224 = vmatprep.subr.bf16.mxu0 0
    %3225 = vmatpush1.bf16.xpose.msra.mxu0 0
    %3226 = vmatprep.subr.bf16.mxu0 0
    %3227 = vmatpush1.bf16.xpose.msra.mxu0 0
    %3228 = vmatprep.subr.bf16.mxu0 0
    %3229 = vmatpush1.bf16.xpose.msra.mxu0 0
    %3230 = vmatprep.subr.bf16.mxu0 0
    %3231 = vmatpush1.bf16.xpose.msra.mxu0 0
    %3232 = vmatprep.subr.bf16.mxu0 0
    %3233 = vmatpush1.bf16.xpose.msra.mxu0 0
    %3234 = vmatprep.mubr.bf16.mxu0 %v561
    %3235 = vmatmul.mubr.bf16.gmra.mrb[0].mxu0 %v547
    %v3236 = vpop.f32.mrb[0].mxu0
    %v3237 = vadd.f32 %v3197, %v3236
    %v3238 = vpop.f32.mrb[0].mxu0
    %v3239 = vpop.f32.mrb[0].mxu0
    %v3240 = vpop.f32.mrb[0].mxu0
    %3241 = vdwg.mxu0
    %3242 = vmatprep.subr.bf16.mxu0 %v1893
    %3243 = vmatpush1.bf16.xpose.msra.mxu0 %v1892
    %3244 = vmatprep.subr.bf16.mxu0 0
    %3245 = vmatpush1.bf16.xpose.msra.mxu0 0
    %3246 = vmatprep.subr.bf16.mxu0 0
    %3247 = vmatpush1.bf16.xpose.msra.mxu0 0
    %3248 = vmatprep.subr.bf16.mxu0 0
    %3249 = vmatpush1.bf16.xpose.msra.mxu0 0
    %3250 = vmatprep.subr.bf16.mxu0 0
    %3251 = vmatpush1.bf16.xpose.msra.mxu0 0
    %3252 = vmatprep.subr.bf16.mxu0 0
    %3253 = vmatpush1.bf16.xpose.msra.mxu0 0
    %3254 = vmatprep.subr.bf16.mxu0 0
    %3255 = vmatpush1.bf16.xpose.msra.mxu0 0
    %3256 = vmatprep.subr.bf16.mxu0 0
    %3257 = vmatpush1.bf16.xpose.msra.mxu0 0
    %3258 = vmatprep.subr.bf16.mxu0 0
    %3259 = vmatpush1.bf16.xpose.msra.mxu0 0
    %3260 = vmatprep.subr.bf16.mxu0 0
    %3261 = vmatpush1.bf16.xpose.msra.mxu0 0
    %3262 = vmatprep.subr.bf16.mxu0 0
    %3263 = vmatpush1.bf16.xpose.msra.mxu0 0
    %3264 = vmatprep.subr.bf16.mxu0 0
    %3265 = vmatpush1.bf16.xpose.msra.mxu0 0
    %3266 = vmatprep.subr.bf16.mxu0 0
    %3267 = vmatpush1.bf16.xpose.msra.mxu0 0
    %3268 = vmatprep.subr.bf16.mxu0 0
    %3269 = vmatpush1.bf16.xpose.msra.mxu0 0
    %3270 = vmatprep.subr.bf16.mxu0 0
    %3271 = vmatpush1.bf16.xpose.msra.mxu0 0
    %3272 = vmatprep.subr.bf16.mxu0 0
    %3273 = vmatpush1.bf16.xpose.msra.mxu0 0
    %3274 = vmatprep.mubr.bf16.mxu0 %v565
    %3275 = vmatmul.mubr.bf16.gmra.mrb[0].mxu0 %v563
    %v3276 = vpop.f32.mrb[0].mxu0
    %v3277 = vadd.f32 %v3237, %v3276
    %v3278 = vpop.f32.mrb[0].mxu0
    %v3279 = vpop.f32.mrb[0].mxu0
    %v3280 = vpop.f32.mrb[0].mxu0
    %3281 = vdwg.mxu0
    %3282 = vmatprep.subr.bf16.mxu0 %v1895
    %3283 = vmatpush1.bf16.xpose.msra.mxu0 %v1894
    %3284 = vmatprep.subr.bf16.mxu0 0
    %3285 = vmatpush1.bf16.xpose.msra.mxu0 0
    %3286 = vmatprep.subr.bf16.mxu0 0
    %3287 = vmatpush1.bf16.xpose.msra.mxu0 0
    %3288 = vmatprep.subr.bf16.mxu0 0
    %3289 = vmatpush1.bf16.xpose.msra.mxu0 0
    %3290 = vmatprep.subr.bf16.mxu0 0
    %3291 = vmatpush1.bf16.xpose.msra.mxu0 0
    %3292 = vmatprep.subr.bf16.mxu0 0
    %3293 = vmatpush1.bf16.xpose.msra.mxu0 0
    %3294 = vmatprep.subr.bf16.mxu0 0
    %3295 = vmatpush1.bf16.xpose.msra.mxu0 0
    %3296 = vmatprep.subr.bf16.mxu0 0
    %3297 = vmatpush1.bf16.xpose.msra.mxu0 0
    %3298 = vmatprep.subr.bf16.mxu0 0
    %3299 = vmatpush1.bf16.xpose.msra.mxu0 0
    %3300 = vmatprep.subr.bf16.mxu0 0
    %3301 = vmatpush1.bf16.xpose.msra.mxu0 0
    %3302 = vmatprep.subr.bf16.mxu0 0
    %3303 = vmatpush1.bf16.xpose.msra.mxu0 0
    %3304 = vmatprep.subr.bf16.mxu0 0
    %3305 = vmatpush1.bf16.xpose.msra.mxu0 0
    %3306 = vmatprep.subr.bf16.mxu0 0
    %3307 = vmatpush1.bf16.xpose.msra.mxu0 0
    %3308 = vmatprep.subr.bf16.mxu0 0
    %3309 = vmatpush1.bf16.xpose.msra.mxu0 0
    %3310 = vmatprep.subr.bf16.mxu0 0
    %3311 = vmatpush1.bf16.xpose.msra.mxu0 0
    %3312 = vmatprep.subr.bf16.mxu0 0
    %3313 = vmatpush1.bf16.xpose.msra.mxu0 0
    %3314 = vmatprep.mubr.bf16.mxu0 %v603
    %3315 = vmatmul.mubr.bf16.gmra.mrb[0].mxu0 %v589
    %v3316 = vpop.f32.mrb[0].mxu0
    %v3317 = vadd.f32 %v3277, %v3316
    %v3318 = vpop.f32.mrb[0].mxu0
    %v3319 = vpop.f32.mrb[0].mxu0
    %v3320 = vpop.f32.mrb[0].mxu0
    %3321 = vdwg.mxu0
    %3322 = vmatprep.subr.bf16.mxu0 %v1897
    %3323 = vmatpush1.bf16.xpose.msra.mxu0 %v1896
    %3324 = vmatprep.subr.bf16.mxu0 0
    %3325 = vmatpush1.bf16.xpose.msra.mxu0 0
    %3326 = vmatprep.subr.bf16.mxu0 0
    %3327 = vmatpush1.bf16.xpose.msra.mxu0 0
    %3328 = vmatprep.subr.bf16.mxu0 0
    %3329 = vmatpush1.bf16.xpose.msra.mxu0 0
    %3330 = vmatprep.subr.bf16.mxu0 0
    %3331 = vmatpush1.bf16.xpose.msra.mxu0 0
    %3332 = vmatprep.subr.bf16.mxu0 0
    %3333 = vmatpush1.bf16.xpose.msra.mxu0 0
    %3334 = vmatprep.subr.bf16.mxu0 0
    %3335 = vmatpush1.bf16.xpose.msra.mxu0 0
    %3336 = vmatprep.subr.bf16.mxu0 0
    %3337 = vmatpush1.bf16.xpose.msra.mxu0 0
    %3338 = vmatprep.subr.bf16.mxu0 0
    %3339 = vmatpush1.bf16.xpose.msra.mxu0 0
    %3340 = vmatprep.subr.bf16.mxu0 0
    %3341 = vmatpush1.bf16.xpose.msra.mxu0 0
    %3342 = vmatprep.subr.bf16.mxu0 0
    %3343 = vmatpush1.bf16.xpose.msra.mxu0 0
    %3344 = vmatprep.subr.bf16.mxu0 0
    %3345 = vmatpush1.bf16.xpose.msra.mxu0 0
    %3346 = vmatprep.subr.bf16.mxu0 0
    %3347 = vmatpush1.bf16.xpose.msra.mxu0 0
    %3348 = vmatprep.subr.bf16.mxu0 0
    %3349 = vmatpush1.bf16.xpose.msra.mxu0 0
    %3350 = vmatprep.subr.bf16.mxu0 0
    %3351 = vmatpush1.bf16.xpose.msra.mxu0 0
    %3352 = vmatprep.subr.bf16.mxu0 0
    %3353 = vmatpush1.bf16.xpose.msra.mxu0 0
    %3354 = vmatprep.mubr.bf16.mxu0 %v613
    %3355 = vmatmul.mubr.bf16.gmra.mrb[0].mxu0 %v611
    %v3356 = vpop.f32.mrb[0].mxu0
    %v3357 = vadd.f32 %v3317, %v3356
    %v3358 = vpop.f32.mrb[0].mxu0
    %v3359 = vpop.f32.mrb[0].mxu0
    %v3360 = vpop.f32.mrb[0].mxu0
    %3361 = vdwg.mxu0
    %3362 = vmatprep.subr.bf16.mxu0 %v1899
    %3363 = vmatpush1.bf16.xpose.msra.mxu0 %v1898
    %3364 = vmatprep.subr.bf16.mxu0 0
    %3365 = vmatpush1.bf16.xpose.msra.mxu0 0
    %3366 = vmatprep.subr.bf16.mxu0 0
    %3367 = vmatpush1.bf16.xpose.msra.mxu0 0
    %3368 = vmatprep.subr.bf16.mxu0 0
    %3369 = vmatpush1.bf16.xpose.msra.mxu0 0
    %3370 = vmatprep.subr.bf16.mxu0 0
    %3371 = vmatpush1.bf16.xpose.msra.mxu0 0
    %3372 = vmatprep.subr.bf16.mxu0 0
    %3373 = vmatpush1.bf16.xpose.msra.mxu0 0
    %3374 = vmatprep.subr.bf16.mxu0 0
    %3375 = vmatpush1.bf16.xpose.msra.mxu0 0
    %3376 = vmatprep.subr.bf16.mxu0 0
    %3377 = vmatpush1.bf16.xpose.msra.mxu0 0
    %3378 = vmatprep.subr.bf16.mxu0 0
    %3379 = vmatpush1.bf16.xpose.msra.mxu0 0
    %3380 = vmatprep.subr.bf16.mxu0 0
    %3381 = vmatpush1.bf16.xpose.msra.mxu0 0
    %3382 = vmatprep.subr.bf16.mxu0 0
    %3383 = vmatpush1.bf16.xpose.msra.mxu0 0
    %3384 = vmatprep.subr.bf16.mxu0 0
    %3385 = vmatpush1.bf16.xpose.msra.mxu0 0
    %3386 = vmatprep.subr.bf16.mxu0 0
    %3387 = vmatpush1.bf16.xpose.msra.mxu0 0
    %3388 = vmatprep.subr.bf16.mxu0 0
    %3389 = vmatpush1.bf16.xpose.msra.mxu0 0
    %3390 = vmatprep.subr.bf16.mxu0 0
    %3391 = vmatpush1.bf16.xpose.msra.mxu0 0
    %3392 = vmatprep.subr.bf16.mxu0 0
    %3393 = vmatpush1.bf16.xpose.msra.mxu0 0
    %3394 = vmatprep.mubr.bf16.mxu0 %v610
    %3395 = vmatmul.mubr.bf16.gmra.mrb[0].mxu0 %v596
    %v3396 = vpop.f32.mrb[0].mxu0
    %v3397 = vadd.f32 %v3357, %v3396
    %v3398 = vpop.f32.mrb[0].mxu0
    %v3399 = vpop.f32.mrb[0].mxu0
    %v3400 = vpop.f32.mrb[0].mxu0
    %3401 = vdwg.mxu0
    %3402 = vmatprep.subr.bf16.mxu0 %v1901
    %3403 = vmatpush1.bf16.xpose.msra.mxu0 %v1900
    %3404 = vmatprep.subr.bf16.mxu0 0
    %3405 = vmatpush1.bf16.xpose.msra.mxu0 0
    %3406 = vmatprep.subr.bf16.mxu0 0
    %3407 = vmatpush1.bf16.xpose.msra.mxu0 0
    %3408 = vmatprep.subr.bf16.mxu0 0
    %3409 = vmatpush1.bf16.xpose.msra.mxu0 0
    %3410 = vmatprep.subr.bf16.mxu0 0
    %3411 = vmatpush1.bf16.xpose.msra.mxu0 0
    %3412 = vmatprep.subr.bf16.mxu0 0
    %3413 = vmatpush1.bf16.xpose.msra.mxu0 0
    %3414 = vmatprep.subr.bf16.mxu0 0
    %3415 = vmatpush1.bf16.xpose.msra.mxu0 0
    %3416 = vmatprep.subr.bf16.mxu0 0
    %3417 = vmatpush1.bf16.xpose.msra.mxu0 0
    %3418 = vmatprep.subr.bf16.mxu0 0
    %3419 = vmatpush1.bf16.xpose.msra.mxu0 0
    %3420 = vmatprep.subr.bf16.mxu0 0
    %3421 = vmatpush1.bf16.xpose.msra.mxu0 0
    %3422 = vmatprep.subr.bf16.mxu0 0
    %3423 = vmatpush1.bf16.xpose.msra.mxu0 0
    %3424 = vmatprep.subr.bf16.mxu0 0
    %3425 = vmatpush1.bf16.xpose.msra.mxu0 0
    %3426 = vmatprep.subr.bf16.mxu0 0
    %3427 = vmatpush1.bf16.xpose.msra.mxu0 0
    %3428 = vmatprep.subr.bf16.mxu0 0
    %3429 = vmatpush1.bf16.xpose.msra.mxu0 0
    %3430 = vmatprep.subr.bf16.mxu0 0
    %3431 = vmatpush1.bf16.xpose.msra.mxu0 0
    %3432 = vmatprep.subr.bf16.mxu0 0
    %3433 = vmatpush1.bf16.xpose.msra.mxu0 0
    %3434 = vmatprep.mubr.bf16.mxu0 %v614
    %3435 = vmatmul.mubr.bf16.gmra.mrb[0].mxu0 %v612
    %v3436 = vpop.f32.mrb[0].mxu0
    %v3437 = vadd.f32 %v3397, %v3436
    %v3438 = vpop.f32.mrb[0].mxu0
    %v3439 = vpop.f32.mrb[0].mxu0
    %v3440 = vpop.f32.mrb[0].mxu0
    %3441 = vdwg.mxu0
    %3442 = vmatprep.subr.bf16.mxu0 %v1903
    %3443 = vmatpush1.bf16.xpose.msra.mxu0 %v1902
    %3444 = vmatprep.subr.bf16.mxu0 0
    %3445 = vmatpush1.bf16.xpose.msra.mxu0 0
    %3446 = vmatprep.subr.bf16.mxu0 0
    %3447 = vmatpush1.bf16.xpose.msra.mxu0 0
    %3448 = vmatprep.subr.bf16.mxu0 0
    %3449 = vmatpush1.bf16.xpose.msra.mxu0 0
    %3450 = vmatprep.subr.bf16.mxu0 0
    %3451 = vmatpush1.bf16.xpose.msra.mxu0 0
    %3452 = vmatprep.subr.bf16.mxu0 0
    %3453 = vmatpush1.bf16.xpose.msra.mxu0 0
    %3454 = vmatprep.subr.bf16.mxu0 0
    %3455 = vmatpush1.bf16.xpose.msra.mxu0 0
    %3456 = vmatprep.subr.bf16.mxu0 0
    %3457 = vmatpush1.bf16.xpose.msra.mxu0 0
    %3458 = vmatprep.subr.bf16.mxu0 0
    %3459 = vmatpush1.bf16.xpose.msra.mxu0 0
    %3460 = vmatprep.subr.bf16.mxu0 0
    %3461 = vmatpush1.bf16.xpose.msra.mxu0 0
    %3462 = vmatprep.subr.bf16.mxu0 0
    %3463 = vmatpush1.bf16.xpose.msra.mxu0 0
    %3464 = vmatprep.subr.bf16.mxu0 0
    %3465 = vmatpush1.bf16.xpose.msra.mxu0 0
    %3466 = vmatprep.subr.bf16.mxu0 0
    %3467 = vmatpush1.bf16.xpose.msra.mxu0 0
    %3468 = vmatprep.subr.bf16.mxu0 0
    %3469 = vmatpush1.bf16.xpose.msra.mxu0 0
    %3470 = vmatprep.subr.bf16.mxu0 0
    %3471 = vmatpush1.bf16.xpose.msra.mxu0 0
    %3472 = vmatprep.subr.bf16.mxu0 0
    %3473 = vmatpush1.bf16.xpose.msra.mxu0 0
    %3474 = vmatprep.mubr.bf16.mxu0 %v652
    %3475 = vmatmul.mubr.bf16.gmra.mrb[0].mxu0 %v638
    %v3476 = vpop.f32.mrb[0].mxu0
    %v3477 = vadd.f32 %v3437, %v3476
    %v3478 = vpop.f32.mrb[0].mxu0
    %v3479 = vpop.f32.mrb[0].mxu0
    %v3480 = vpop.f32.mrb[0].mxu0
    %3481 = vdwg.mxu0
    %3482 = vmatprep.subr.bf16.mxu0 %v1905
    %3483 = vmatpush1.bf16.xpose.msra.mxu0 %v1904
    %3484 = vmatprep.subr.bf16.mxu0 0
    %3485 = vmatpush1.bf16.xpose.msra.mxu0 0
    %3486 = vmatprep.subr.bf16.mxu0 0
    %3487 = vmatpush1.bf16.xpose.msra.mxu0 0
    %3488 = vmatprep.subr.bf16.mxu0 0
    %3489 = vmatpush1.bf16.xpose.msra.mxu0 0
    %3490 = vmatprep.subr.bf16.mxu0 0
    %3491 = vmatpush1.bf16.xpose.msra.mxu0 0
    %3492 = vmatprep.subr.bf16.mxu0 0
    %3493 = vmatpush1.bf16.xpose.msra.mxu0 0
    %3494 = vmatprep.subr.bf16.mxu0 0
    %3495 = vmatpush1.bf16.xpose.msra.mxu0 0
    %3496 = vmatprep.subr.bf16.mxu0 0
    %3497 = vmatpush1.bf16.xpose.msra.mxu0 0
    %3498 = vmatprep.subr.bf16.mxu0 0
    %3499 = vmatpush1.bf16.xpose.msra.mxu0 0
    %3500 = vmatprep.subr.bf16.mxu0 0
    %3501 = vmatpush1.bf16.xpose.msra.mxu0 0
    %3502 = vmatprep.subr.bf16.mxu0 0
    %3503 = vmatpush1.bf16.xpose.msra.mxu0 0
    %3504 = vmatprep.subr.bf16.mxu0 0
    %3505 = vmatpush1.bf16.xpose.msra.mxu0 0
    %3506 = vmatprep.subr.bf16.mxu0 0
    %3507 = vmatpush1.bf16.xpose.msra.mxu0 0
    %3508 = vmatprep.subr.bf16.mxu0 0
    %3509 = vmatpush1.bf16.xpose.msra.mxu0 0
    %3510 = vmatprep.subr.bf16.mxu0 0
    %3511 = vmatpush1.bf16.xpose.msra.mxu0 0
    %3512 = vmatprep.subr.bf16.mxu0 0
    %3513 = vmatpush1.bf16.xpose.msra.mxu0 0
    %3514 = vmatprep.mubr.bf16.mxu0 %v662
    %3515 = vmatmul.mubr.bf16.gmra.mrb[0].mxu0 %v660
    %v3516 = vpop.f32.mrb[0].mxu0
    %v3517 = vadd.f32 %v3477, %v3516
    %v3518 = vpop.f32.mrb[0].mxu0
    %v3519 = vpop.f32.mrb[0].mxu0
    %v3520 = vpop.f32.mrb[0].mxu0
    %3521 = vdwg.mxu0
    %3522 = vmatprep.subr.bf16.mxu0 %v1907
    %3523 = vmatpush1.bf16.xpose.msra.mxu0 %v1906
    %3524 = vmatprep.subr.bf16.mxu0 0
    %3525 = vmatpush1.bf16.xpose.msra.mxu0 0
    %3526 = vmatprep.subr.bf16.mxu0 0
    %3527 = vmatpush1.bf16.xpose.msra.mxu0 0
    %3528 = vmatprep.subr.bf16.mxu0 0
    %3529 = vmatpush1.bf16.xpose.msra.mxu0 0
    %3530 = vmatprep.subr.bf16.mxu0 0
    %3531 = vmatpush1.bf16.xpose.msra.mxu0 0
    %3532 = vmatprep.subr.bf16.mxu0 0
    %3533 = vmatpush1.bf16.xpose.msra.mxu0 0
    %3534 = vmatprep.subr.bf16.mxu0 0
    %3535 = vmatpush1.bf16.xpose.msra.mxu0 0
    %3536 = vmatprep.subr.bf16.mxu0 0
    %3537 = vmatpush1.bf16.xpose.msra.mxu0 0
    %3538 = vmatprep.subr.bf16.mxu0 0
    %3539 = vmatpush1.bf16.xpose.msra.mxu0 0
    %3540 = vmatprep.subr.bf16.mxu0 0
    %3541 = vmatpush1.bf16.xpose.msra.mxu0 0
    %3542 = vmatprep.subr.bf16.mxu0 0
    %3543 = vmatpush1.bf16.xpose.msra.mxu0 0
    %3544 = vmatprep.subr.bf16.mxu0 0
    %3545 = vmatpush1.bf16.xpose.msra.mxu0 0
    %3546 = vmatprep.subr.bf16.mxu0 0
    %3547 = vmatpush1.bf16.xpose.msra.mxu0 0
    %3548 = vmatprep.subr.bf16.mxu0 0
    %3549 = vmatpush1.bf16.xpose.msra.mxu0 0
    %3550 = vmatprep.subr.bf16.mxu0 0
    %3551 = vmatpush1.bf16.xpose.msra.mxu0 0
    %3552 = vmatprep.subr.bf16.mxu0 0
    %3553 = vmatpush1.bf16.xpose.msra.mxu0 0
    %3554 = vmatprep.mubr.bf16.mxu0 %v659
    %3555 = vmatmul.mubr.bf16.gmra.mrb[0].mxu0 %v645
    %v3556 = vpop.f32.mrb[0].mxu0
    %v3557 = vadd.f32 %v3517, %v3556
    %v3558 = vpop.f32.mrb[0].mxu0
    %v3559 = vpop.f32.mrb[0].mxu0
    %v3560 = vpop.f32.mrb[0].mxu0
    %3561 = vdwg.mxu0
    %3562 = vmatprep.subr.bf16.mxu0 %v1909
    %3563 = vmatpush1.bf16.xpose.msra.mxu0 %v1908
    %3564 = vmatprep.subr.bf16.mxu0 0
    %3565 = vmatpush1.bf16.xpose.msra.mxu0 0
    %3566 = vmatprep.subr.bf16.mxu0 0
    %3567 = vmatpush1.bf16.xpose.msra.mxu0 0
    %3568 = vmatprep.subr.bf16.mxu0 0
    %3569 = vmatpush1.bf16.xpose.msra.mxu0 0
    %3570 = vmatprep.subr.bf16.mxu0 0
    %3571 = vmatpush1.bf16.xpose.msra.mxu0 0
    %3572 = vmatprep.subr.bf16.mxu0 0
    %3573 = vmatpush1.bf16.xpose.msra.mxu0 0
    %3574 = vmatprep.subr.bf16.mxu0 0
    %3575 = vmatpush1.bf16.xpose.msra.mxu0 0
    %3576 = vmatprep.subr.bf16.mxu0 0
    %3577 = vmatpush1.bf16.xpose.msra.mxu0 0
    %3578 = vmatprep.subr.bf16.mxu0 0
    %3579 = vmatpush1.bf16.xpose.msra.mxu0 0
    %3580 = vmatprep.subr.bf16.mxu0 0
    %3581 = vmatpush1.bf16.xpose.msra.mxu0 0
    %3582 = vmatprep.subr.bf16.mxu0 0
    %3583 = vmatpush1.bf16.xpose.msra.mxu0 0
    %3584 = vmatprep.subr.bf16.mxu0 0
    %3585 = vmatpush1.bf16.xpose.msra.mxu0 0
    %3586 = vmatprep.subr.bf16.mxu0 0
    %3587 = vmatpush1.bf16.xpose.msra.mxu0 0
    %3588 = vmatprep.subr.bf16.mxu0 0
    %3589 = vmatpush1.bf16.xpose.msra.mxu0 0
    %3590 = vmatprep.subr.bf16.mxu0 0
    %3591 = vmatpush1.bf16.xpose.msra.mxu0 0
    %3592 = vmatprep.subr.bf16.mxu0 0
    %3593 = vmatpush1.bf16.xpose.msra.mxu0 0
    %3594 = vmatprep.mubr.bf16.mxu0 %v663
    %3595 = vmatmul.mubr.bf16.gmra.mrb[0].mxu0 %v661
    %v3596 = vpop.f32.mrb[0].mxu0
    %v3597 = vadd.f32 %v3557, %v3596
    %v3598 = vpop.f32.mrb[0].mxu0
    %v3599 = vpop.f32.mrb[0].mxu0
    %v3600 = vpop.f32.mrb[0].mxu0
    %3601 = vdwg.mxu0
    %3602 = vmatprep.subr.bf16.mxu0 %v1911
    %3603 = vmatpush1.bf16.xpose.msra.mxu0 %v1910
    %3604 = vmatprep.subr.bf16.mxu0 0
    %3605 = vmatpush1.bf16.xpose.msra.mxu0 0
    %3606 = vmatprep.subr.bf16.mxu0 0
    %3607 = vmatpush1.bf16.xpose.msra.mxu0 0
    %3608 = vmatprep.subr.bf16.mxu0 0
    %3609 = vmatpush1.bf16.xpose.msra.mxu0 0
    %3610 = vmatprep.subr.bf16.mxu0 0
    %3611 = vmatpush1.bf16.xpose.msra.mxu0 0
    %3612 = vmatprep.subr.bf16.mxu0 0
    %3613 = vmatpush1.bf16.xpose.msra.mxu0 0
    %3614 = vmatprep.subr.bf16.mxu0 0
    %3615 = vmatpush1.bf16.xpose.msra.mxu0 0
    %3616 = vmatprep.subr.bf16.mxu0 0
    %3617 = vmatpush1.bf16.xpose.msra.mxu0 0
    %3618 = vmatprep.subr.bf16.mxu0 0
    %3619 = vmatpush1.bf16.xpose.msra.mxu0 0
    %3620 = vmatprep.subr.bf16.mxu0 0
    %3621 = vmatpush1.bf16.xpose.msra.mxu0 0
    %3622 = vmatprep.subr.bf16.mxu0 0
    %3623 = vmatpush1.bf16.xpose.msra.mxu0 0
    %3624 = vmatprep.subr.bf16.mxu0 0
    %3625 = vmatpush1.bf16.xpose.msra.mxu0 0
    %3626 = vmatprep.subr.bf16.mxu0 0
    %3627 = vmatpush1.bf16.xpose.msra.mxu0 0
    %3628 = vmatprep.subr.bf16.mxu0 0
    %3629 = vmatpush1.bf16.xpose.msra.mxu0 0
    %3630 = vmatprep.subr.bf16.mxu0 0
    %3631 = vmatpush1.bf16.xpose.msra.mxu0 0
    %3632 = vmatprep.subr.bf16.mxu0 0
    %3633 = vmatpush1.bf16.xpose.msra.mxu0 0
    %3634 = vmatprep.mubr.bf16.mxu0 %v701
    %3635 = vmatmul.mubr.bf16.gmra.mrb[0].mxu0 %v687
    %v3636 = vpop.f32.mrb[0].mxu0
    %v3637 = vadd.f32 %v3597, %v3636
    %v3638 = vpop.f32.mrb[0].mxu0
    %v3639 = vpop.f32.mrb[0].mxu0
    %v3640 = vpop.f32.mrb[0].mxu0
    %3641 = vdwg.mxu0
    %3642 = vmatprep.subr.bf16.mxu0 %v1913
    %3643 = vmatpush1.bf16.xpose.msra.mxu0 %v1912
    %3644 = vmatprep.subr.bf16.mxu0 0
    %3645 = vmatpush1.bf16.xpose.msra.mxu0 0
    %3646 = vmatprep.subr.bf16.mxu0 0
    %3647 = vmatpush1.bf16.xpose.msra.mxu0 0
    %3648 = vmatprep.subr.bf16.mxu0 0
    %3649 = vmatpush1.bf16.xpose.msra.mxu0 0
    %3650 = vmatprep.subr.bf16.mxu0 0
    %3651 = vmatpush1.bf16.xpose.msra.mxu0 0
    %3652 = vmatprep.subr.bf16.mxu0 0
    %3653 = vmatpush1.bf16.xpose.msra.mxu0 0
    %3654 = vmatprep.subr.bf16.mxu0 0
    %3655 = vmatpush1.bf16.xpose.msra.mxu0 0
    %3656 = vmatprep.subr.bf16.mxu0 0
    %3657 = vmatpush1.bf16.xpose.msra.mxu0 0
    %3658 = vmatprep.subr.bf16.mxu0 0
    %3659 = vmatpush1.bf16.xpose.msra.mxu0 0
    %3660 = vmatprep.subr.bf16.mxu0 0
    %3661 = vmatpush1.bf16.xpose.msra.mxu0 0
    %3662 = vmatprep.subr.bf16.mxu0 0
    %3663 = vmatpush1.bf16.xpose.msra.mxu0 0
    %3664 = vmatprep.subr.bf16.mxu0 0
    %3665 = vmatpush1.bf16.xpose.msra.mxu0 0
    %3666 = vmatprep.subr.bf16.mxu0 0
    %3667 = vmatpush1.bf16.xpose.msra.mxu0 0
    %3668 = vmatprep.subr.bf16.mxu0 0
    %3669 = vmatpush1.bf16.xpose.msra.mxu0 0
    %3670 = vmatprep.subr.bf16.mxu0 0
    %3671 = vmatpush1.bf16.xpose.msra.mxu0 0
    %3672 = vmatprep.subr.bf16.mxu0 0
    %3673 = vmatpush1.bf16.xpose.msra.mxu0 0
    %3674 = vmatprep.mubr.bf16.mxu0 %v711
    %3675 = vmatmul.mubr.bf16.gmra.mrb[0].mxu0 %v709
    %v3676 = vpop.f32.mrb[0].mxu0
    %v3677 = vadd.f32 %v3637, %v3676
    %v3678 = vpop.f32.mrb[0].mxu0
    %v3679 = vpop.f32.mrb[0].mxu0
    %v3680 = vpop.f32.mrb[0].mxu0
    %3681 = vdwg.mxu0
    %3682 = vmatprep.subr.bf16.mxu0 %v1915
    %3683 = vmatpush1.bf16.xpose.msra.mxu0 %v1914
    %3684 = vmatprep.subr.bf16.mxu0 0
    %3685 = vmatpush1.bf16.xpose.msra.mxu0 0
    %3686 = vmatprep.subr.bf16.mxu0 0
    %3687 = vmatpush1.bf16.xpose.msra.mxu0 0
    %3688 = vmatprep.subr.bf16.mxu0 0
    %3689 = vmatpush1.bf16.xpose.msra.mxu0 0
    %3690 = vmatprep.subr.bf16.mxu0 0
    %3691 = vmatpush1.bf16.xpose.msra.mxu0 0
    %3692 = vmatprep.subr.bf16.mxu0 0
    %3693 = vmatpush1.bf16.xpose.msra.mxu0 0
    %3694 = vmatprep.subr.bf16.mxu0 0
    %3695 = vmatpush1.bf16.xpose.msra.mxu0 0
    %3696 = vmatprep.subr.bf16.mxu0 0
    %3697 = vmatpush1.bf16.xpose.msra.mxu0 0
    %3698 = vmatprep.subr.bf16.mxu0 0
    %3699 = vmatpush1.bf16.xpose.msra.mxu0 0
    %3700 = vmatprep.subr.bf16.mxu0 0
    %3701 = vmatpush1.bf16.xpose.msra.mxu0 0
    %3702 = vmatprep.subr.bf16.mxu0 0
    %3703 = vmatpush1.bf16.xpose.msra.mxu0 0
    %3704 = vmatprep.subr.bf16.mxu0 0
    %3705 = vmatpush1.bf16.xpose.msra.mxu0 0
    %3706 = vmatprep.subr.bf16.mxu0 0
    %3707 = vmatpush1.bf16.xpose.msra.mxu0 0
    %3708 = vmatprep.subr.bf16.mxu0 0
    %3709 = vmatpush1.bf16.xpose.msra.mxu0 0
    %3710 = vmatprep.subr.bf16.mxu0 0
    %3711 = vmatpush1.bf16.xpose.msra.mxu0 0
    %3712 = vmatprep.subr.bf16.mxu0 0
    %3713 = vmatpush1.bf16.xpose.msra.mxu0 0
    %3714 = vmatprep.mubr.bf16.mxu0 %v708
    %3715 = vmatmul.mubr.bf16.gmra.mrb[0].mxu0 %v694
    %v3716 = vpop.f32.mrb[0].mxu0
    %v3717 = vadd.f32 %v3677, %v3716
    %v3718 = vpop.f32.mrb[0].mxu0
    %v3719 = vpop.f32.mrb[0].mxu0
    %v3720 = vpop.f32.mrb[0].mxu0
    %3721 = vdwg.mxu0
    %3722 = vmatprep.subr.bf16.mxu0 %v1917
    %3723 = vmatpush1.bf16.xpose.msra.mxu0 %v1916
    %3724 = vmatprep.subr.bf16.mxu0 0
    %3725 = vmatpush1.bf16.xpose.msra.mxu0 0
    %3726 = vmatprep.subr.bf16.mxu0 0
    %3727 = vmatpush1.bf16.xpose.msra.mxu0 0
    %3728 = vmatprep.subr.bf16.mxu0 0
    %3729 = vmatpush1.bf16.xpose.msra.mxu0 0
    %3730 = vmatprep.subr.bf16.mxu0 0
    %3731 = vmatpush1.bf16.xpose.msra.mxu0 0
    %3732 = vmatprep.subr.bf16.mxu0 0
    %3733 = vmatpush1.bf16.xpose.msra.mxu0 0
    %3734 = vmatprep.subr.bf16.mxu0 0
    %3735 = vmatpush1.bf16.xpose.msra.mxu0 0
    %3736 = vmatprep.subr.bf16.mxu0 0
    %3737 = vmatpush1.bf16.xpose.msra.mxu0 0
    %3738 = vmatprep.subr.bf16.mxu0 0
    %3739 = vmatpush1.bf16.xpose.msra.mxu0 0
    %3740 = vmatprep.subr.bf16.mxu0 0
    %3741 = vmatpush1.bf16.xpose.msra.mxu0 0
    %3742 = vmatprep.subr.bf16.mxu0 0
    %3743 = vmatpush1.bf16.xpose.msra.mxu0 0
    %3744 = vmatprep.subr.bf16.mxu0 0
    %3745 = vmatpush1.bf16.xpose.msra.mxu0 0
    %3746 = vmatprep.subr.bf16.mxu0 0
    %3747 = vmatpush1.bf16.xpose.msra.mxu0 0
    %3748 = vmatprep.subr.bf16.mxu0 0
    %3749 = vmatpush1.bf16.xpose.msra.mxu0 0
    %3750 = vmatprep.subr.bf16.mxu0 0
    %3751 = vmatpush1.bf16.xpose.msra.mxu0 0
    %3752 = vmatprep.subr.bf16.mxu0 0
    %3753 = vmatpush1.bf16.xpose.msra.mxu0 0
    %3754 = vmatprep.mubr.bf16.mxu0 %v712
    %3755 = vmatmul.mubr.bf16.gmra.mrb[0].mxu0 %v710
    %v3756 = vpop.f32.mrb[0].mxu0
    %v3757 = vadd.f32 %v3717, %v3756
    %v3758 = vpop.f32.mrb[0].mxu0
    %v3759 = vpop.f32.mrb[0].mxu0
    %v3760 = vpop.f32.mrb[0].mxu0
    %3761 = vdwg.mxu0
    %3762 = vmatprep.subr.bf16.mxu0 %v1919
    %3763 = vmatpush1.bf16.xpose.msra.mxu0 %v1918
    %3764 = vmatprep.subr.bf16.mxu0 0
    %3765 = vmatpush1.bf16.xpose.msra.mxu0 0
    %3766 = vmatprep.subr.bf16.mxu0 0
    %3767 = vmatpush1.bf16.xpose.msra.mxu0 0
    %3768 = vmatprep.subr.bf16.mxu0 0
    %3769 = vmatpush1.bf16.xpose.msra.mxu0 0
    %3770 = vmatprep.subr.bf16.mxu0 0
    %3771 = vmatpush1.bf16.xpose.msra.mxu0 0
    %3772 = vmatprep.subr.bf16.mxu0 0
    %3773 = vmatpush1.bf16.xpose.msra.mxu0 0
    %3774 = vmatprep.subr.bf16.mxu0 0
    %3775 = vmatpush1.bf16.xpose.msra.mxu0 0
    %3776 = vmatprep.subr.bf16.mxu0 0
    %3777 = vmatpush1.bf16.xpose.msra.mxu0 0
    %3778 = vmatprep.subr.bf16.mxu0 0
    %3779 = vmatpush1.bf16.xpose.msra.mxu0 0
    %3780 = vmatprep.subr.bf16.mxu0 0
    %3781 = vmatpush1.bf16.xpose.msra.mxu0 0
    %3782 = vmatprep.subr.bf16.mxu0 0
    %3783 = vmatpush1.bf16.xpose.msra.mxu0 0
    %3784 = vmatprep.subr.bf16.mxu0 0
    %3785 = vmatpush1.bf16.xpose.msra.mxu0 0
    %3786 = vmatprep.subr.bf16.mxu0 0
    %3787 = vmatpush1.bf16.xpose.msra.mxu0 0
    %3788 = vmatprep.subr.bf16.mxu0 0
    %3789 = vmatpush1.bf16.xpose.msra.mxu0 0
    %3790 = vmatprep.subr.bf16.mxu0 0
    %3791 = vmatpush1.bf16.xpose.msra.mxu0 0
    %3792 = vmatprep.subr.bf16.mxu0 0
    %3793 = vmatpush1.bf16.xpose.msra.mxu0 0
    %3794 = vmatprep.mubr.bf16.mxu0 %v750
    %3795 = vmatmul.mubr.bf16.gmra.mrb[0].mxu0 %v736
    %v3796 = vpop.f32.mrb[0].mxu0
    %v3797 = vadd.f32 %v3757, %v3796
    %v3798 = vpop.f32.mrb[0].mxu0
    %v3799 = vpop.f32.mrb[0].mxu0
    %v3800 = vpop.f32.mrb[0].mxu0
    %3801 = vdwg.mxu0
    %3802 = vmatprep.subr.bf16.mxu0 %v1921
    %3803 = vmatpush1.bf16.xpose.msra.mxu0 %v1920
    %3804 = vmatprep.subr.bf16.mxu0 0
    %3805 = vmatpush1.bf16.xpose.msra.mxu0 0
    %3806 = vmatprep.subr.bf16.mxu0 0
    %3807 = vmatpush1.bf16.xpose.msra.mxu0 0
    %3808 = vmatprep.subr.bf16.mxu0 0
    %3809 = vmatpush1.bf16.xpose.msra.mxu0 0
    %3810 = vmatprep.subr.bf16.mxu0 0
    %3811 = vmatpush1.bf16.xpose.msra.mxu0 0
    %3812 = vmatprep.subr.bf16.mxu0 0
    %3813 = vmatpush1.bf16.xpose.msra.mxu0 0
    %3814 = vmatprep.subr.bf16.mxu0 0
    %3815 = vmatpush1.bf16.xpose.msra.mxu0 0
    %3816 = vmatprep.subr.bf16.mxu0 0
    %3817 = vmatpush1.bf16.xpose.msra.mxu0 0
    %3818 = vmatprep.subr.bf16.mxu0 0
    %3819 = vmatpush1.bf16.xpose.msra.mxu0 0
    %3820 = vmatprep.subr.bf16.mxu0 0
    %3821 = vmatpush1.bf16.xpose.msra.mxu0 0
    %3822 = vmatprep.subr.bf16.mxu0 0
    %3823 = vmatpush1.bf16.xpose.msra.mxu0 0
    %3824 = vmatprep.subr.bf16.mxu0 0
    %3825 = vmatpush1.bf16.xpose.msra.mxu0 0
    %3826 = vmatprep.subr.bf16.mxu0 0
    %3827 = vmatpush1.bf16.xpose.msra.mxu0 0
    %3828 = vmatprep.subr.bf16.mxu0 0
    %3829 = vmatpush1.bf16.xpose.msra.mxu0 0
    %3830 = vmatprep.subr.bf16.mxu0 0
    %3831 = vmatpush1.bf16.xpose.msra.mxu0 0
    %3832 = vmatprep.subr.bf16.mxu0 0
    %3833 = vmatpush1.bf16.xpose.msra.mxu0 0
    %3834 = vmatprep.mubr.bf16.mxu0 %v760
    %3835 = vmatmul.mubr.bf16.gmra.mrb[0].mxu0 %v758
    %v3836 = vpop.f32.mrb[0].mxu0
    %v3837 = vadd.f32 %v3797, %v3836
    %v3838 = vpop.f32.mrb[0].mxu0
    %v3839 = vpop.f32.mrb[0].mxu0
    %v3840 = vpop.f32.mrb[0].mxu0
    %3841 = vdwg.mxu0
    %3842 = vmatprep.subr.bf16.mxu0 %v1923
    %3843 = vmatpush1.bf16.xpose.msra.mxu0 %v1922
    %3844 = vmatprep.subr.bf16.mxu0 0
    %3845 = vmatpush1.bf16.xpose.msra.mxu0 0
    %3846 = vmatprep.subr.bf16.mxu0 0
    %3847 = vmatpush1.bf16.xpose.msra.mxu0 0
    %3848 = vmatprep.subr.bf16.mxu0 0
    %3849 = vmatpush1.bf16.xpose.msra.mxu0 0
    %3850 = vmatprep.subr.bf16.mxu0 0
    %3851 = vmatpush1.bf16.xpose.msra.mxu0 0
    %3852 = vmatprep.subr.bf16.mxu0 0
    %3853 = vmatpush1.bf16.xpose.msra.mxu0 0
    %3854 = vmatprep.subr.bf16.mxu0 0
    %3855 = vmatpush1.bf16.xpose.msra.mxu0 0
    %3856 = vmatprep.subr.bf16.mxu0 0
    %3857 = vmatpush1.bf16.xpose.msra.mxu0 0
    %3858 = vmatprep.subr.bf16.mxu0 0
    %3859 = vmatpush1.bf16.xpose.msra.mxu0 0
    %3860 = vmatprep.subr.bf16.mxu0 0
    %3861 = vmatpush1.bf16.xpose.msra.mxu0 0
    %3862 = vmatprep.subr.bf16.mxu0 0
    %3863 = vmatpush1.bf16.xpose.msra.mxu0 0
    %3864 = vmatprep.subr.bf16.mxu0 0
    %3865 = vmatpush1.bf16.xpose.msra.mxu0 0
    %3866 = vmatprep.subr.bf16.mxu0 0
    %3867 = vmatpush1.bf16.xpose.msra.mxu0 0
    %3868 = vmatprep.subr.bf16.mxu0 0
    %3869 = vmatpush1.bf16.xpose.msra.mxu0 0
    %3870 = vmatprep.subr.bf16.mxu0 0
    %3871 = vmatpush1.bf16.xpose.msra.mxu0 0
    %3872 = vmatprep.subr.bf16.mxu0 0
    %3873 = vmatpush1.bf16.xpose.msra.mxu0 0
    %3874 = vmatprep.mubr.bf16.mxu0 %v757
    %3875 = vmatmul.mubr.bf16.gmra.mrb[0].mxu0 %v743
    %v3876 = vpop.f32.mrb[0].mxu0
    %v3877 = vadd.f32 %v3837, %v3876
    %v3878 = vpop.f32.mrb[0].mxu0
    %v3879 = vpop.f32.mrb[0].mxu0
    %v3880 = vpop.f32.mrb[0].mxu0
    %3881 = vdwg.mxu0
    %3882 = vmatprep.subr.bf16.mxu0 %v1925
    %3883 = vmatpush1.bf16.xpose.msra.mxu0 %v1924
    %3884 = vmatprep.subr.bf16.mxu0 0
    %3885 = vmatpush1.bf16.xpose.msra.mxu0 0
    %3886 = vmatprep.subr.bf16.mxu0 0
    %3887 = vmatpush1.bf16.xpose.msra.mxu0 0
    %3888 = vmatprep.subr.bf16.mxu0 0
    %3889 = vmatpush1.bf16.xpose.msra.mxu0 0
    %3890 = vmatprep.subr.bf16.mxu0 0
    %3891 = vmatpush1.bf16.xpose.msra.mxu0 0
    %3892 = vmatprep.subr.bf16.mxu0 0
    %3893 = vmatpush1.bf16.xpose.msra.mxu0 0
    %3894 = vmatprep.subr.bf16.mxu0 0
    %3895 = vmatpush1.bf16.xpose.msra.mxu0 0
    %3896 = vmatprep.subr.bf16.mxu0 0
    %3897 = vmatpush1.bf16.xpose.msra.mxu0 0
    %3898 = vmatprep.subr.bf16.mxu0 0
    %3899 = vmatpush1.bf16.xpose.msra.mxu0 0
    %3900 = vmatprep.subr.bf16.mxu0 0
    %3901 = vmatpush1.bf16.xpose.msra.mxu0 0
    %3902 = vmatprep.subr.bf16.mxu0 0
    %3903 = vmatpush1.bf16.xpose.msra.mxu0 0
    %3904 = vmatprep.subr.bf16.mxu0 0
    %3905 = vmatpush1.bf16.xpose.msra.mxu0 0
    %3906 = vmatprep.subr.bf16.mxu0 0
    %3907 = vmatpush1.bf16.xpose.msra.mxu0 0
    %3908 = vmatprep.subr.bf16.mxu0 0
    %3909 = vmatpush1.bf16.xpose.msra.mxu0 0
    %3910 = vmatprep.subr.bf16.mxu0 0
    %3911 = vmatpush1.bf16.xpose.msra.mxu0 0
    %3912 = vmatprep.subr.bf16.mxu0 0
    %3913 = vmatpush1.bf16.xpose.msra.mxu0 0
    %3914 = vmatprep.mubr.bf16.mxu0 %v761
    %3915 = vmatmul.mubr.bf16.gmra.mrb[0].mxu0 %v759
    %v3916 = vpop.f32.mrb[0].mxu0
    %v3917 = vadd.f32 %v3877, %v3916
    %v3918 = vpop.f32.mrb[0].mxu0
    %v3919 = vpop.f32.mrb[0].mxu0
    %v3920 = vpop.f32.mrb[0].mxu0
    %3921 = vdwg.mxu0
    %3922 = vmatprep.subr.bf16.mxu0 %v1927
    %3923 = vmatpush1.bf16.xpose.msra.mxu0 %v1926
    %3924 = vmatprep.subr.bf16.mxu0 0
    %3925 = vmatpush1.bf16.xpose.msra.mxu0 0
    %3926 = vmatprep.subr.bf16.mxu0 0
    %3927 = vmatpush1.bf16.xpose.msra.mxu0 0
    %3928 = vmatprep.subr.bf16.mxu0 0
    %3929 = vmatpush1.bf16.xpose.msra.mxu0 0
    %3930 = vmatprep.subr.bf16.mxu0 0
    %3931 = vmatpush1.bf16.xpose.msra.mxu0 0
    %3932 = vmatprep.subr.bf16.mxu0 0
    %3933 = vmatpush1.bf16.xpose.msra.mxu0 0
    %3934 = vmatprep.subr.bf16.mxu0 0
    %3935 = vmatpush1.bf16.xpose.msra.mxu0 0
    %3936 = vmatprep.subr.bf16.mxu0 0
    %3937 = vmatpush1.bf16.xpose.msra.mxu0 0
    %3938 = vmatprep.subr.bf16.mxu0 0
    %3939 = vmatpush1.bf16.xpose.msra.mxu0 0
    %3940 = vmatprep.subr.bf16.mxu0 0
    %3941 = vmatpush1.bf16.xpose.msra.mxu0 0
    %3942 = vmatprep.subr.bf16.mxu0 0
    %3943 = vmatpush1.bf16.xpose.msra.mxu0 0
    %3944 = vmatprep.subr.bf16.mxu0 0
    %3945 = vmatpush1.bf16.xpose.msra.mxu0 0
    %3946 = vmatprep.subr.bf16.mxu0 0
    %3947 = vmatpush1.bf16.xpose.msra.mxu0 0
    %3948 = vmatprep.subr.bf16.mxu0 0
    %3949 = vmatpush1.bf16.xpose.msra.mxu0 0
    %3950 = vmatprep.subr.bf16.mxu0 0
    %3951 = vmatpush1.bf16.xpose.msra.mxu0 0
    %3952 = vmatprep.subr.bf16.mxu0 0
    %3953 = vmatpush1.bf16.xpose.msra.mxu0 0
    %3954 = vmatprep.mubr.bf16.mxu0 %v799
    %3955 = vmatmul.mubr.bf16.gmra.mrb[0].mxu0 %v785
    %v3956 = vpop.f32.mrb[0].mxu0
    %v3957 = vadd.f32 %v3917, %v3956
    %v3958 = vpop.f32.mrb[0].mxu0
    %v3959 = vpop.f32.mrb[0].mxu0
    %v3960 = vpop.f32.mrb[0].mxu0
    %3961 = vdwg.mxu0
    %3962 = vmatprep.subr.bf16.mxu0 %v1929
    %3963 = vmatpush1.bf16.xpose.msra.mxu0 %v1928
    %3964 = vmatprep.subr.bf16.mxu0 0
    %3965 = vmatpush1.bf16.xpose.msra.mxu0 0
    %3966 = vmatprep.subr.bf16.mxu0 0
    %3967 = vmatpush1.bf16.xpose.msra.mxu0 0
    %3968 = vmatprep.subr.bf16.mxu0 0
    %3969 = vmatpush1.bf16.xpose.msra.mxu0 0
    %3970 = vmatprep.subr.bf16.mxu0 0
    %3971 = vmatpush1.bf16.xpose.msra.mxu0 0
    %3972 = vmatprep.subr.bf16.mxu0 0
    %3973 = vmatpush1.bf16.xpose.msra.mxu0 0
    %3974 = vmatprep.subr.bf16.mxu0 0
    %3975 = vmatpush1.bf16.xpose.msra.mxu0 0
    %3976 = vmatprep.subr.bf16.mxu0 0
    %3977 = vmatpush1.bf16.xpose.msra.mxu0 0
    %3978 = vmatprep.subr.bf16.mxu0 0
    %3979 = vmatpush1.bf16.xpose.msra.mxu0 0
    %3980 = vmatprep.subr.bf16.mxu0 0
    %3981 = vmatpush1.bf16.xpose.msra.mxu0 0
    %3982 = vmatprep.subr.bf16.mxu0 0
    %3983 = vmatpush1.bf16.xpose.msra.mxu0 0
    %3984 = vmatprep.subr.bf16.mxu0 0
    %3985 = vmatpush1.bf16.xpose.msra.mxu0 0
    %3986 = vmatprep.subr.bf16.mxu0 0
    %3987 = vmatpush1.bf16.xpose.msra.mxu0 0
    %3988 = vmatprep.subr.bf16.mxu0 0
    %3989 = vmatpush1.bf16.xpose.msra.mxu0 0
    %3990 = vmatprep.subr.bf16.mxu0 0
    %3991 = vmatpush1.bf16.xpose.msra.mxu0 0
    %3992 = vmatprep.subr.bf16.mxu0 0
    %3993 = vmatpush1.bf16.xpose.msra.mxu0 0
    %3994 = vmatprep.mubr.bf16.mxu0 %v809
    %3995 = vmatmul.mubr.bf16.gmra.mrb[0].mxu0 %v807
    %v3996 = vpop.f32.mrb[0].mxu0
    %v3997 = vadd.f32 %v3957, %v3996
    %v3998 = vpop.f32.mrb[0].mxu0
    %v3999 = vpop.f32.mrb[0].mxu0
    %v4000 = vpop.f32.mrb[0].mxu0
    %4001 = vdwg.mxu0
    %4002 = vmatprep.subr.bf16.mxu0 %v1931
    %4003 = vmatpush1.bf16.xpose.msra.mxu0 %v1930
    %4004 = vmatprep.subr.bf16.mxu0 0
    %4005 = vmatpush1.bf16.xpose.msra.mxu0 0
    %4006 = vmatprep.subr.bf16.mxu0 0
    %4007 = vmatpush1.bf16.xpose.msra.mxu0 0
    %4008 = vmatprep.subr.bf16.mxu0 0
    %4009 = vmatpush1.bf16.xpose.msra.mxu0 0
    %4010 = vmatprep.subr.bf16.mxu0 0
    %4011 = vmatpush1.bf16.xpose.msra.mxu0 0
    %4012 = vmatprep.subr.bf16.mxu0 0
    %4013 = vmatpush1.bf16.xpose.msra.mxu0 0
    %4014 = vmatprep.subr.bf16.mxu0 0
    %4015 = vmatpush1.bf16.xpose.msra.mxu0 0
    %4016 = vmatprep.subr.bf16.mxu0 0
    %4017 = vmatpush1.bf16.xpose.msra.mxu0 0
    %4018 = vmatprep.subr.bf16.mxu0 0
    %4019 = vmatpush1.bf16.xpose.msra.mxu0 0
    %4020 = vmatprep.subr.bf16.mxu0 0
    %4021 = vmatpush1.bf16.xpose.msra.mxu0 0
    %4022 = vmatprep.subr.bf16.mxu0 0
    %4023 = vmatpush1.bf16.xpose.msra.mxu0 0
    %4024 = vmatprep.subr.bf16.mxu0 0
    %4025 = vmatpush1.bf16.xpose.msra.mxu0 0
    %4026 = vmatprep.subr.bf16.mxu0 0
    %4027 = vmatpush1.bf16.xpose.msra.mxu0 0
    %4028 = vmatprep.subr.bf16.mxu0 0
    %4029 = vmatpush1.bf16.xpose.msra.mxu0 0
    %4030 = vmatprep.subr.bf16.mxu0 0
    %4031 = vmatpush1.bf16.xpose.msra.mxu0 0
    %4032 = vmatprep.subr.bf16.mxu0 0
    %4033 = vmatpush1.bf16.xpose.msra.mxu0 0
    %4034 = vmatprep.mubr.bf16.mxu0 %v806
    %4035 = vmatmul.mubr.bf16.gmra.mrb[0].mxu0 %v792
    %v4036 = vpop.f32.mrb[0].mxu0
    %v4037 = vadd.f32 %v3997, %v4036
    %v4038 = vpop.f32.mrb[0].mxu0
    %v4039 = vpop.f32.mrb[0].mxu0
    %v4040 = vpop.f32.mrb[0].mxu0
    %4041 = vdwg.mxu0
    %4042 = vmatprep.subr.bf16.mxu0 %v1933
    %4043 = vmatpush1.bf16.xpose.msra.mxu0 %v1932
    %4044 = vmatprep.subr.bf16.mxu0 0
    %4045 = vmatpush1.bf16.xpose.msra.mxu0 0
    %4046 = vmatprep.subr.bf16.mxu0 0
    %4047 = vmatpush1.bf16.xpose.msra.mxu0 0
    %4048 = vmatprep.subr.bf16.mxu0 0
    %4049 = vmatpush1.bf16.xpose.msra.mxu0 0
    %4050 = vmatprep.subr.bf16.mxu0 0
    %4051 = vmatpush1.bf16.xpose.msra.mxu0 0
    %4052 = vmatprep.subr.bf16.mxu0 0
    %4053 = vmatpush1.bf16.xpose.msra.mxu0 0
    %4054 = vmatprep.subr.bf16.mxu0 0
    %4055 = vmatpush1.bf16.xpose.msra.mxu0 0
    %4056 = vmatprep.subr.bf16.mxu0 0
    %4057 = vmatpush1.bf16.xpose.msra.mxu0 0
    %4058 = vmatprep.subr.bf16.mxu0 0
    %4059 = vmatpush1.bf16.xpose.msra.mxu0 0
    %4060 = vmatprep.subr.bf16.mxu0 0
    %4061 = vmatpush1.bf16.xpose.msra.mxu0 0
    %4062 = vmatprep.subr.bf16.mxu0 0
    %4063 = vmatpush1.bf16.xpose.msra.mxu0 0
    %4064 = vmatprep.subr.bf16.mxu0 0
    %4065 = vmatpush1.bf16.xpose.msra.mxu0 0
    %4066 = vmatprep.subr.bf16.mxu0 0
    %4067 = vmatpush1.bf16.xpose.msra.mxu0 0
    %4068 = vmatprep.subr.bf16.mxu0 0
    %4069 = vmatpush1.bf16.xpose.msra.mxu0 0
    %4070 = vmatprep.subr.bf16.mxu0 0
    %4071 = vmatpush1.bf16.xpose.msra.mxu0 0
    %4072 = vmatprep.subr.bf16.mxu0 0
    %4073 = vmatpush1.bf16.xpose.msra.mxu0 0
    %4074 = vmatprep.mubr.bf16.mxu0 %v810
    %4075 = vmatmul.mubr.bf16.gmra.mrb[0].mxu0 %v808
    %v4076 = vpop.f32.mrb[0].mxu0
    %v4077 = vadd.f32 %v4037, %v4076
    %v4078 = vpop.f32.mrb[0].mxu0
    %v4079 = vpop.f32.mrb[0].mxu0
    %v4080 = vpop.f32.mrb[0].mxu0
    %4081 = vdwg.mxu0
    %4082 = vmatprep.subr.bf16.mxu0 %v1935
    %4083 = vmatpush1.bf16.xpose.msra.mxu0 %v1934
    %4084 = vmatprep.subr.bf16.mxu0 0
    %4085 = vmatpush1.bf16.xpose.msra.mxu0 0
    %4086 = vmatprep.subr.bf16.mxu0 0
    %4087 = vmatpush1.bf16.xpose.msra.mxu0 0
    %4088 = vmatprep.subr.bf16.mxu0 0
    %4089 = vmatpush1.bf16.xpose.msra.mxu0 0
    %4090 = vmatprep.subr.bf16.mxu0 0
    %4091 = vmatpush1.bf16.xpose.msra.mxu0 0
    %4092 = vmatprep.subr.bf16.mxu0 0
    %4093 = vmatpush1.bf16.xpose.msra.mxu0 0
    %4094 = vmatprep.subr.bf16.mxu0 0
    %4095 = vmatpush1.bf16.xpose.msra.mxu0 0
    %4096 = vmatprep.subr.bf16.mxu0 0
    %4097 = vmatpush1.bf16.xpose.msra.mxu0 0
    %4098 = vmatprep.subr.bf16.mxu0 0
    %4099 = vmatpush1.bf16.xpose.msra.mxu0 0
    %4100 = vmatprep.subr.bf16.mxu0 0
    %4101 = vmatpush1.bf16.xpose.msra.mxu0 0
    %4102 = vmatprep.subr.bf16.mxu0 0
    %4103 = vmatpush1.bf16.xpose.msra.mxu0 0
    %4104 = vmatprep.subr.bf16.mxu0 0
    %4105 = vmatpush1.bf16.xpose.msra.mxu0 0
    %4106 = vmatprep.subr.bf16.mxu0 0
    %4107 = vmatpush1.bf16.xpose.msra.mxu0 0
    %4108 = vmatprep.subr.bf16.mxu0 0
    %4109 = vmatpush1.bf16.xpose.msra.mxu0 0
    %4110 = vmatprep.subr.bf16.mxu0 0
    %4111 = vmatpush1.bf16.xpose.msra.mxu0 0
    %4112 = vmatprep.subr.bf16.mxu0 0
    %4113 = vmatpush1.bf16.xpose.msra.mxu0 0
    %4114 = vmatprep.mubr.bf16.mxu0 %v848
    %4115 = vmatmul.mubr.bf16.gmra.mrb[0].mxu0 %v834
    %v4116 = vpop.f32.mrb[0].mxu0
    %v4117 = vadd.f32 %v4077, %v4116
    %v4118 = vpop.f32.mrb[0].mxu0
    %v4119 = vpop.f32.mrb[0].mxu0
    %v4120 = vpop.f32.mrb[0].mxu0
    %4121 = vdwg.mxu0
    %4122 = vmatprep.subr.bf16.mxu0 %v1937
    %4123 = vmatpush1.bf16.xpose.msra.mxu0 %v1936
    %4124 = vmatprep.subr.bf16.mxu0 0
    %4125 = vmatpush1.bf16.xpose.msra.mxu0 0
    %4126 = vmatprep.subr.bf16.mxu0 0
    %4127 = vmatpush1.bf16.xpose.msra.mxu0 0
    %4128 = vmatprep.subr.bf16.mxu0 0
    %4129 = vmatpush1.bf16.xpose.msra.mxu0 0
    %4130 = vmatprep.subr.bf16.mxu0 0
    %4131 = vmatpush1.bf16.xpose.msra.mxu0 0
    %4132 = vmatprep.subr.bf16.mxu0 0
    %4133 = vmatpush1.bf16.xpose.msra.mxu0 0
    %4134 = vmatprep.subr.bf16.mxu0 0
    %4135 = vmatpush1.bf16.xpose.msra.mxu0 0
    %4136 = vmatprep.subr.bf16.mxu0 0
    %4137 = vmatpush1.bf16.xpose.msra.mxu0 0
    %4138 = vmatprep.subr.bf16.mxu0 0
    %4139 = vmatpush1.bf16.xpose.msra.mxu0 0
    %4140 = vmatprep.subr.bf16.mxu0 0
    %4141 = vmatpush1.bf16.xpose.msra.mxu0 0
    %4142 = vmatprep.subr.bf16.mxu0 0
    %4143 = vmatpush1.bf16.xpose.msra.mxu0 0
    %4144 = vmatprep.subr.bf16.mxu0 0
    %4145 = vmatpush1.bf16.xpose.msra.mxu0 0
    %4146 = vmatprep.subr.bf16.mxu0 0
    %4147 = vmatpush1.bf16.xpose.msra.mxu0 0
    %4148 = vmatprep.subr.bf16.mxu0 0
    %4149 = vmatpush1.bf16.xpose.msra.mxu0 0
    %4150 = vmatprep.subr.bf16.mxu0 0
    %4151 = vmatpush1.bf16.xpose.msra.mxu0 0
    %4152 = vmatprep.subr.bf16.mxu0 0
    %4153 = vmatpush1.bf16.xpose.msra.mxu0 0
    %4154 = vmatprep.mubr.bf16.mxu0 %v858
    %4155 = vmatmul.mubr.bf16.gmra.mrb[0].mxu0 %v856
    %v4156 = vpop.f32.mrb[0].mxu0
    %v4157 = vadd.f32 %v4117, %v4156
    %v4158 = vpop.f32.mrb[0].mxu0
    %v4159 = vpop.f32.mrb[0].mxu0
    %v4160 = vpop.f32.mrb[0].mxu0
    %4161 = vdwg.mxu0
    %4162 = vmatprep.subr.bf16.mxu0 %v1939
    %4163 = vmatpush1.bf16.xpose.msra.mxu0 %v1938
    %4164 = vmatprep.subr.bf16.mxu0 0
    %4165 = vmatpush1.bf16.xpose.msra.mxu0 0
    %4166 = vmatprep.subr.bf16.mxu0 0
    %4167 = vmatpush1.bf16.xpose.msra.mxu0 0
    %4168 = vmatprep.subr.bf16.mxu0 0
    %4169 = vmatpush1.bf16.xpose.msra.mxu0 0
    %4170 = vmatprep.subr.bf16.mxu0 0
    %4171 = vmatpush1.bf16.xpose.msra.mxu0 0
    %4172 = vmatprep.subr.bf16.mxu0 0
    %4173 = vmatpush1.bf16.xpose.msra.mxu0 0
    %4174 = vmatprep.subr.bf16.mxu0 0
    %4175 = vmatpush1.bf16.xpose.msra.mxu0 0
    %4176 = vmatprep.subr.bf16.mxu0 0
    %4177 = vmatpush1.bf16.xpose.msra.mxu0 0
    %4178 = vmatprep.subr.bf16.mxu0 0
    %4179 = vmatpush1.bf16.xpose.msra.mxu0 0
    %4180 = vmatprep.subr.bf16.mxu0 0
    %4181 = vmatpush1.bf16.xpose.msra.mxu0 0
    %4182 = vmatprep.subr.bf16.mxu0 0
    %4183 = vmatpush1.bf16.xpose.msra.mxu0 0
    %4184 = vmatprep.subr.bf16.mxu0 0
    %4185 = vmatpush1.bf16.xpose.msra.mxu0 0
    %4186 = vmatprep.subr.bf16.mxu0 0
    %4187 = vmatpush1.bf16.xpose.msra.mxu0 0
    %4188 = vmatprep.subr.bf16.mxu0 0
    %4189 = vmatpush1.bf16.xpose.msra.mxu0 0
    %4190 = vmatprep.subr.bf16.mxu0 0
    %4191 = vmatpush1.bf16.xpose.msra.mxu0 0
    %4192 = vmatprep.subr.bf16.mxu0 0
    %4193 = vmatpush1.bf16.xpose.msra.mxu0 0
    %4194 = vmatprep.mubr.bf16.mxu0 %v855
    %4195 = vmatmul.mubr.bf16.gmra.mrb[0].mxu0 %v841
    %v4196 = vpop.f32.mrb[0].mxu0
    %v4197 = vadd.f32 %v4157, %v4196
    %v4198 = vpop.f32.mrb[0].mxu0
    %v4199 = vpop.f32.mrb[0].mxu0
    %v4200 = vpop.f32.mrb[0].mxu0
    %4201 = vdwg.mxu0
    %4202 = vmatprep.subr.bf16.mxu0 %v1941
    %4203 = vmatpush1.bf16.xpose.msra.mxu0 %v1940
    %4204 = vmatprep.subr.bf16.mxu0 0
    %4205 = vmatpush1.bf16.xpose.msra.mxu0 0
    %4206 = vmatprep.subr.bf16.mxu0 0
    %4207 = vmatpush1.bf16.xpose.msra.mxu0 0
    %4208 = vmatprep.subr.bf16.mxu0 0
    %4209 = vmatpush1.bf16.xpose.msra.mxu0 0
    %4210 = vmatprep.subr.bf16.mxu0 0
    %4211 = vmatpush1.bf16.xpose.msra.mxu0 0
    %4212 = vmatprep.subr.bf16.mxu0 0
    %4213 = vmatpush1.bf16.xpose.msra.mxu0 0
    %4214 = vmatprep.subr.bf16.mxu0 0
    %4215 = vmatpush1.bf16.xpose.msra.mxu0 0
    %4216 = vmatprep.subr.bf16.mxu0 0
    %4217 = vmatpush1.bf16.xpose.msra.mxu0 0
    %4218 = vmatprep.subr.bf16.mxu0 0
    %4219 = vmatpush1.bf16.xpose.msra.mxu0 0
    %4220 = vmatprep.subr.bf16.mxu0 0
    %4221 = vmatpush1.bf16.xpose.msra.mxu0 0
    %4222 = vmatprep.subr.bf16.mxu0 0
    %4223 = vmatpush1.bf16.xpose.msra.mxu0 0
    %4224 = vmatprep.subr.bf16.mxu0 0
    %4225 = vmatpush1.bf16.xpose.msra.mxu0 0
    %4226 = vmatprep.subr.bf16.mxu0 0
    %4227 = vmatpush1.bf16.xpose.msra.mxu0 0
    %4228 = vmatprep.subr.bf16.mxu0 0
    %4229 = vmatpush1.bf16.xpose.msra.mxu0 0
    %4230 = vmatprep.subr.bf16.mxu0 0
    %4231 = vmatpush1.bf16.xpose.msra.mxu0 0
    %4232 = vmatprep.subr.bf16.mxu0 0
    %4233 = vmatpush1.bf16.xpose.msra.mxu0 0
    %4234 = vmatprep.mubr.bf16.mxu0 %v859
    %4235 = vmatmul.mubr.bf16.gmra.mrb[0].mxu0 %v857
    %v4236 = vpop.f32.mrb[0].mxu0
    %v4237 = vadd.f32 %v4197, %v4236
    %v4238 = vpop.f32.mrb[0].mxu0
    %v4239 = vpop.f32.mrb[0].mxu0
    %v4240 = vpop.f32.mrb[0].mxu0
    %4241 = vdwg.mxu0
    %4242 = vmatprep.subr.bf16.mxu0 %v1943
    %4243 = vmatpush1.bf16.xpose.msra.mxu0 %v1942
    %4244 = vmatprep.subr.bf16.mxu0 0
    %4245 = vmatpush1.bf16.xpose.msra.mxu0 0
    %4246 = vmatprep.subr.bf16.mxu0 0
    %4247 = vmatpush1.bf16.xpose.msra.mxu0 0
    %4248 = vmatprep.subr.bf16.mxu0 0
    %4249 = vmatpush1.bf16.xpose.msra.mxu0 0
    %4250 = vmatprep.subr.bf16.mxu0 0
    %4251 = vmatpush1.bf16.xpose.msra.mxu0 0
    %4252 = vmatprep.subr.bf16.mxu0 0
    %4253 = vmatpush1.bf16.xpose.msra.mxu0 0
    %4254 = vmatprep.subr.bf16.mxu0 0
    %4255 = vmatpush1.bf16.xpose.msra.mxu0 0
    %4256 = vmatprep.subr.bf16.mxu0 0
    %4257 = vmatpush1.bf16.xpose.msra.mxu0 0
    %4258 = vmatprep.subr.bf16.mxu0 0
    %4259 = vmatpush1.bf16.xpose.msra.mxu0 0
    %4260 = vmatprep.subr.bf16.mxu0 0
    %4261 = vmatpush1.bf16.xpose.msra.mxu0 0
    %4262 = vmatprep.subr.bf16.mxu0 0
    %4263 = vmatpush1.bf16.xpose.msra.mxu0 0
    %4264 = vmatprep.subr.bf16.mxu0 0
    %4265 = vmatpush1.bf16.xpose.msra.mxu0 0
    %4266 = vmatprep.subr.bf16.mxu0 0
    %4267 = vmatpush1.bf16.xpose.msra.mxu0 0
    %4268 = vmatprep.subr.bf16.mxu0 0
    %4269 = vmatpush1.bf16.xpose.msra.mxu0 0
    %4270 = vmatprep.subr.bf16.mxu0 0
    %4271 = vmatpush1.bf16.xpose.msra.mxu0 0
    %4272 = vmatprep.subr.bf16.mxu0 0
    %4273 = vmatpush1.bf16.xpose.msra.mxu0 0
    %4274 = vmatprep.mubr.bf16.mxu0 %v897
    %4275 = vmatmul.mubr.bf16.gmra.mrb[0].mxu0 %v883
    %v4276 = vpop.f32.mrb[0].mxu0
    %v4277 = vadd.f32 %v4237, %v4276
    %v4278 = vpop.f32.mrb[0].mxu0
    %v4279 = vpop.f32.mrb[0].mxu0
    %v4280 = vpop.f32.mrb[0].mxu0
    %4281 = vdwg.mxu0
    %4282 = vmatprep.subr.bf16.mxu0 %v1945
    %4283 = vmatpush1.bf16.xpose.msra.mxu0 %v1944
    %4284 = vmatprep.subr.bf16.mxu0 0
    %4285 = vmatpush1.bf16.xpose.msra.mxu0 0
    %4286 = vmatprep.subr.bf16.mxu0 0
    %4287 = vmatpush1.bf16.xpose.msra.mxu0 0
    %4288 = vmatprep.subr.bf16.mxu0 0
    %4289 = vmatpush1.bf16.xpose.msra.mxu0 0
    %4290 = vmatprep.subr.bf16.mxu0 0
    %4291 = vmatpush1.bf16.xpose.msra.mxu0 0
    %4292 = vmatprep.subr.bf16.mxu0 0
    %4293 = vmatpush1.bf16.xpose.msra.mxu0 0
    %4294 = vmatprep.subr.bf16.mxu0 0
    %4295 = vmatpush1.bf16.xpose.msra.mxu0 0
    %4296 = vmatprep.subr.bf16.mxu0 0
    %4297 = vmatpush1.bf16.xpose.msra.mxu0 0
    %4298 = vmatprep.subr.bf16.mxu0 0
    %4299 = vmatpush1.bf16.xpose.msra.mxu0 0
    %4300 = vmatprep.subr.bf16.mxu0 0
    %4301 = vmatpush1.bf16.xpose.msra.mxu0 0
    %4302 = vmatprep.subr.bf16.mxu0 0
    %4303 = vmatpush1.bf16.xpose.msra.mxu0 0
    %4304 = vmatprep.subr.bf16.mxu0 0
    %4305 = vmatpush1.bf16.xpose.msra.mxu0 0
    %4306 = vmatprep.subr.bf16.mxu0 0
    %4307 = vmatpush1.bf16.xpose.msra.mxu0 0
    %4308 = vmatprep.subr.bf16.mxu0 0
    %4309 = vmatpush1.bf16.xpose.msra.mxu0 0
    %4310 = vmatprep.subr.bf16.mxu0 0
    %4311 = vmatpush1.bf16.xpose.msra.mxu0 0
    %4312 = vmatprep.subr.bf16.mxu0 0
    %4313 = vmatpush1.bf16.xpose.msra.mxu0 0
    %4314 = vmatprep.mubr.bf16.mxu0 %v907
    %4315 = vmatmul.mubr.bf16.gmra.mrb[0].mxu0 %v905
    %v4316 = vpop.f32.mrb[0].mxu0
    %v4317 = vadd.f32 %v4277, %v4316
    %v4318 = vpop.f32.mrb[0].mxu0
    %v4319 = vpop.f32.mrb[0].mxu0
    %v4320 = vpop.f32.mrb[0].mxu0
    %4321 = vdwg.mxu0
    %4322 = vmatprep.subr.bf16.mxu0 %v1947
    %4323 = vmatpush1.bf16.xpose.msra.mxu0 %v1946
    %4324 = vmatprep.subr.bf16.mxu0 0
    %4325 = vmatpush1.bf16.xpose.msra.mxu0 0
    %4326 = vmatprep.subr.bf16.mxu0 0
    %4327 = vmatpush1.bf16.xpose.msra.mxu0 0
    %4328 = vmatprep.subr.bf16.mxu0 0
    %4329 = vmatpush1.bf16.xpose.msra.mxu0 0
    %4330 = vmatprep.subr.bf16.mxu0 0
    %4331 = vmatpush1.bf16.xpose.msra.mxu0 0
    %4332 = vmatprep.subr.bf16.mxu0 0
    %4333 = vmatpush1.bf16.xpose.msra.mxu0 0
    %4334 = vmatprep.subr.bf16.mxu0 0
    %4335 = vmatpush1.bf16.xpose.msra.mxu0 0
    %4336 = vmatprep.subr.bf16.mxu0 0
    %4337 = vmatpush1.bf16.xpose.msra.mxu0 0
    %4338 = vmatprep.subr.bf16.mxu0 0
    %4339 = vmatpush1.bf16.xpose.msra.mxu0 0
    %4340 = vmatprep.subr.bf16.mxu0 0
    %4341 = vmatpush1.bf16.xpose.msra.mxu0 0
    %4342 = vmatprep.subr.bf16.mxu0 0
    %4343 = vmatpush1.bf16.xpose.msra.mxu0 0
    %4344 = vmatprep.subr.bf16.mxu0 0
    %4345 = vmatpush1.bf16.xpose.msra.mxu0 0
    %4346 = vmatprep.subr.bf16.mxu0 0
    %4347 = vmatpush1.bf16.xpose.msra.mxu0 0
    %4348 = vmatprep.subr.bf16.mxu0 0
    %4349 = vmatpush1.bf16.xpose.msra.mxu0 0
    %4350 = vmatprep.subr.bf16.mxu0 0
    %4351 = vmatpush1.bf16.xpose.msra.mxu0 0
    %4352 = vmatprep.subr.bf16.mxu0 0
    %4353 = vmatpush1.bf16.xpose.msra.mxu0 0
    %4354 = vmatprep.mubr.bf16.mxu0 %v904
    %4355 = vmatmul.mubr.bf16.gmra.mrb[0].mxu0 %v890
    %v4356 = vpop.f32.mrb[0].mxu0
    %v4357 = vadd.f32 %v4317, %v4356
    %v4358 = vpop.f32.mrb[0].mxu0
    %v4359 = vpop.f32.mrb[0].mxu0
    %v4360 = vpop.f32.mrb[0].mxu0
    %4361 = vdwg.mxu0
    %4362 = vmatprep.subr.bf16.mxu0 %v1949
    %4363 = vmatpush1.bf16.xpose.msra.mxu0 %v1948
    %4364 = vmatprep.subr.bf16.mxu0 0
    %4365 = vmatpush1.bf16.xpose.msra.mxu0 0
    %4366 = vmatprep.subr.bf16.mxu0 0
    %4367 = vmatpush1.bf16.xpose.msra.mxu0 0
    %4368 = vmatprep.subr.bf16.mxu0 0
    %4369 = vmatpush1.bf16.xpose.msra.mxu0 0
    %4370 = vmatprep.subr.bf16.mxu0 0
    %4371 = vmatpush1.bf16.xpose.msra.mxu0 0
    %4372 = vmatprep.subr.bf16.mxu0 0
    %4373 = vmatpush1.bf16.xpose.msra.mxu0 0
    %4374 = vmatprep.subr.bf16.mxu0 0
    %4375 = vmatpush1.bf16.xpose.msra.mxu0 0
    %4376 = vmatprep.subr.bf16.mxu0 0
    %4377 = vmatpush1.bf16.xpose.msra.mxu0 0
    %4378 = vmatprep.subr.bf16.mxu0 0
    %4379 = vmatpush1.bf16.xpose.msra.mxu0 0
    %4380 = vmatprep.subr.bf16.mxu0 0
    %4381 = vmatpush1.bf16.xpose.msra.mxu0 0
    %4382 = vmatprep.subr.bf16.mxu0 0
    %4383 = vmatpush1.bf16.xpose.msra.mxu0 0
    %4384 = vmatprep.subr.bf16.mxu0 0
    %4385 = vmatpush1.bf16.xpose.msra.mxu0 0
    %4386 = vmatprep.subr.bf16.mxu0 0
    %4387 = vmatpush1.bf16.xpose.msra.mxu0 0
    %4388 = vmatprep.subr.bf16.mxu0 0
    %4389 = vmatpush1.bf16.xpose.msra.mxu0 0
    %4390 = vmatprep.subr.bf16.mxu0 0
    %4391 = vmatpush1.bf16.xpose.msra.mxu0 0
    %4392 = vmatprep.subr.bf16.mxu0 0
    %4393 = vmatpush1.bf16.xpose.msra.mxu0 0
    %4394 = vmatprep.mubr.bf16.mxu0 %v908
    %4395 = vmatmul.mubr.bf16.gmra.mrb[0].mxu0 %v906
    %v4396 = vpop.f32.mrb[0].mxu0
    %v4397 = vadd.f32 %v4357, %v4396
    %v4398 = vpop.f32.mrb[0].mxu0
    %v4399 = vpop.f32.mrb[0].mxu0
    %v4400 = vpop.f32.mrb[0].mxu0
    %4401 = vdwg.mxu0
    %4402 = vmatprep.subr.bf16.mxu0 %v1951
    %4403 = vmatpush1.bf16.xpose.msra.mxu0 %v1950
    %4404 = vmatprep.subr.bf16.mxu0 0
    %4405 = vmatpush1.bf16.xpose.msra.mxu0 0
    %4406 = vmatprep.subr.bf16.mxu0 0
    %4407 = vmatpush1.bf16.xpose.msra.mxu0 0
    %4408 = vmatprep.subr.bf16.mxu0 0
    %4409 = vmatpush1.bf16.xpose.msra.mxu0 0
    %4410 = vmatprep.subr.bf16.mxu0 0
    %4411 = vmatpush1.bf16.xpose.msra.mxu0 0
    %4412 = vmatprep.subr.bf16.mxu0 0
    %4413 = vmatpush1.bf16.xpose.msra.mxu0 0
    %4414 = vmatprep.subr.bf16.mxu0 0
    %4415 = vmatpush1.bf16.xpose.msra.mxu0 0
    %4416 = vmatprep.subr.bf16.mxu0 0
    %4417 = vmatpush1.bf16.xpose.msra.mxu0 0
    %4418 = vmatprep.subr.bf16.mxu0 0
    %4419 = vmatpush1.bf16.xpose.msra.mxu0 0
    %4420 = vmatprep.subr.bf16.mxu0 0
    %4421 = vmatpush1.bf16.xpose.msra.mxu0 0
    %4422 = vmatprep.subr.bf16.mxu0 0
    %4423 = vmatpush1.bf16.xpose.msra.mxu0 0
    %4424 = vmatprep.subr.bf16.mxu0 0
    %4425 = vmatpush1.bf16.xpose.msra.mxu0 0
    %4426 = vmatprep.subr.bf16.mxu0 0
    %4427 = vmatpush1.bf16.xpose.msra.mxu0 0
    %4428 = vmatprep.subr.bf16.mxu0 0
    %4429 = vmatpush1.bf16.xpose.msra.mxu0 0
    %4430 = vmatprep.subr.bf16.mxu0 0
    %4431 = vmatpush1.bf16.xpose.msra.mxu0 0
    %4432 = vmatprep.subr.bf16.mxu0 0
    %4433 = vmatpush1.bf16.xpose.msra.mxu0 0
    %4434 = vmatprep.mubr.bf16.mxu0 %v946
    %4435 = vmatmul.mubr.bf16.gmra.mrb[0].mxu0 %v932
    %v4436 = vpop.f32.mrb[0].mxu0
    %v4437 = vadd.f32 %v4397, %v4436
    %v4438 = vpop.f32.mrb[0].mxu0
    %v4439 = vpop.f32.mrb[0].mxu0
    %v4440 = vpop.f32.mrb[0].mxu0
    %4441 = vdwg.mxu0
    %4442 = vmatprep.subr.bf16.mxu0 %v1953
    %4443 = vmatpush1.bf16.xpose.msra.mxu0 %v1952
    %4444 = vmatprep.subr.bf16.mxu0 0
    %4445 = vmatpush1.bf16.xpose.msra.mxu0 0
    %4446 = vmatprep.subr.bf16.mxu0 0
    %4447 = vmatpush1.bf16.xpose.msra.mxu0 0
    %4448 = vmatprep.subr.bf16.mxu0 0
    %4449 = vmatpush1.bf16.xpose.msra.mxu0 0
    %4450 = vmatprep.subr.bf16.mxu0 0
    %4451 = vmatpush1.bf16.xpose.msra.mxu0 0
    %4452 = vmatprep.subr.bf16.mxu0 0
    %4453 = vmatpush1.bf16.xpose.msra.mxu0 0
    %4454 = vmatprep.subr.bf16.mxu0 0
    %4455 = vmatpush1.bf16.xpose.msra.mxu0 0
    %4456 = vmatprep.subr.bf16.mxu0 0
    %4457 = vmatpush1.bf16.xpose.msra.mxu0 0
    %4458 = vmatprep.subr.bf16.mxu0 0
    %4459 = vmatpush1.bf16.xpose.msra.mxu0 0
    %4460 = vmatprep.subr.bf16.mxu0 0
    %4461 = vmatpush1.bf16.xpose.msra.mxu0 0
    %4462 = vmatprep.subr.bf16.mxu0 0
    %4463 = vmatpush1.bf16.xpose.msra.mxu0 0
    %4464 = vmatprep.subr.bf16.mxu0 0
    %4465 = vmatpush1.bf16.xpose.msra.mxu0 0
    %4466 = vmatprep.subr.bf16.mxu0 0
    %4467 = vmatpush1.bf16.xpose.msra.mxu0 0
    %4468 = vmatprep.subr.bf16.mxu0 0
    %4469 = vmatpush1.bf16.xpose.msra.mxu0 0
    %4470 = vmatprep.subr.bf16.mxu0 0
    %4471 = vmatpush1.bf16.xpose.msra.mxu0 0
    %4472 = vmatprep.subr.bf16.mxu0 0
    %4473 = vmatpush1.bf16.xpose.msra.mxu0 0
    %4474 = vmatprep.mubr.bf16.mxu0 %v956
    %4475 = vmatmul.mubr.bf16.gmra.mrb[0].mxu0 %v954
    %v4476 = vpop.f32.mrb[0].mxu0
    %v4477 = vadd.f32 %v4437, %v4476
    %v4478 = vpop.f32.mrb[0].mxu0
    %v4479 = vpop.f32.mrb[0].mxu0
    %v4480 = vpop.f32.mrb[0].mxu0
    %4481 = vdwg.mxu0
    %4482 = vmatprep.subr.bf16.mxu0 %v1955
    %4483 = vmatpush1.bf16.xpose.msra.mxu0 %v1954
    %4484 = vmatprep.subr.bf16.mxu0 0
    %4485 = vmatpush1.bf16.xpose.msra.mxu0 0
    %4486 = vmatprep.subr.bf16.mxu0 0
    %4487 = vmatpush1.bf16.xpose.msra.mxu0 0
    %4488 = vmatprep.subr.bf16.mxu0 0
    %4489 = vmatpush1.bf16.xpose.msra.mxu0 0
    %4490 = vmatprep.subr.bf16.mxu0 0
    %4491 = vmatpush1.bf16.xpose.msra.mxu0 0
    %4492 = vmatprep.subr.bf16.mxu0 0
    %4493 = vmatpush1.bf16.xpose.msra.mxu0 0
    %4494 = vmatprep.subr.bf16.mxu0 0
    %4495 = vmatpush1.bf16.xpose.msra.mxu0 0
    %4496 = vmatprep.subr.bf16.mxu0 0
    %4497 = vmatpush1.bf16.xpose.msra.mxu0 0
    %4498 = vmatprep.subr.bf16.mxu0 0
    %4499 = vmatpush1.bf16.xpose.msra.mxu0 0
    %4500 = vmatprep.subr.bf16.mxu0 0
    %4501 = vmatpush1.bf16.xpose.msra.mxu0 0
    %4502 = vmatprep.subr.bf16.mxu0 0
    %4503 = vmatpush1.bf16.xpose.msra.mxu0 0
    %4504 = vmatprep.subr.bf16.mxu0 0
    %4505 = vmatpush1.bf16.xpose.msra.mxu0 0
    %4506 = vmatprep.subr.bf16.mxu0 0
    %4507 = vmatpush1.bf16.xpose.msra.mxu0 0
    %4508 = vmatprep.subr.bf16.mxu0 0
    %4509 = vmatpush1.bf16.xpose.msra.mxu0 0
    %4510 = vmatprep.subr.bf16.mxu0 0
    %4511 = vmatpush1.bf16.xpose.msra.mxu0 0
    %4512 = vmatprep.subr.bf16.mxu0 0
    %4513 = vmatpush1.bf16.xpose.msra.mxu0 0
    %4514 = vmatprep.mubr.bf16.mxu0 %v953
    %4515 = vmatmul.mubr.bf16.gmra.mrb[0].mxu0 %v939
    %v4516 = vpop.f32.mrb[0].mxu0
    %v4517 = vadd.f32 %v4477, %v4516
    %v4518 = vpop.f32.mrb[0].mxu0
    %v4519 = vpop.f32.mrb[0].mxu0
    %v4520 = vpop.f32.mrb[0].mxu0
    %4521 = vdwg.mxu0
    %4522 = vmatprep.subr.bf16.mxu0 %v1957
    %4523 = vmatpush1.bf16.xpose.msra.mxu0 %v1956
    %4524 = vmatprep.subr.bf16.mxu0 0
    %4525 = vmatpush1.bf16.xpose.msra.mxu0 0
    %4526 = vmatprep.subr.bf16.mxu0 0
    %4527 = vmatpush1.bf16.xpose.msra.mxu0 0
    %4528 = vmatprep.subr.bf16.mxu0 0
    %4529 = vmatpush1.bf16.xpose.msra.mxu0 0
    %4530 = vmatprep.subr.bf16.mxu0 0
    %4531 = vmatpush1.bf16.xpose.msra.mxu0 0
    %4532 = vmatprep.subr.bf16.mxu0 0
    %4533 = vmatpush1.bf16.xpose.msra.mxu0 0
    %4534 = vmatprep.subr.bf16.mxu0 0
    %4535 = vmatpush1.bf16.xpose.msra.mxu0 0
    %4536 = vmatprep.subr.bf16.mxu0 0
    %4537 = vmatpush1.bf16.xpose.msra.mxu0 0
    %4538 = vmatprep.subr.bf16.mxu0 0
    %4539 = vmatpush1.bf16.xpose.msra.mxu0 0
    %4540 = vmatprep.subr.bf16.mxu0 0
    %4541 = vmatpush1.bf16.xpose.msra.mxu0 0
    %4542 = vmatprep.subr.bf16.mxu0 0
    %4543 = vmatpush1.bf16.xpose.msra.mxu0 0
    %4544 = vmatprep.subr.bf16.mxu0 0
    %4545 = vmatpush1.bf16.xpose.msra.mxu0 0
    %4546 = vmatprep.subr.bf16.mxu0 0
    %4547 = vmatpush1.bf16.xpose.msra.mxu0 0
    %4548 = vmatprep.subr.bf16.mxu0 0
    %4549 = vmatpush1.bf16.xpose.msra.mxu0 0
    %4550 = vmatprep.subr.bf16.mxu0 0
    %4551 = vmatpush1.bf16.xpose.msra.mxu0 0
    %4552 = vmatprep.subr.bf16.mxu0 0
    %4553 = vmatpush1.bf16.xpose.msra.mxu0 0
    %4554 = vmatprep.mubr.bf16.mxu0 %v957
    %4555 = vmatmul.mubr.bf16.gmra.mrb[0].mxu0 %v955
    %v4556 = vpop.f32.mrb[0].mxu0
    %v4557 = vadd.f32 %v4517, %v4556
    %v4558 = vpop.f32.mrb[0].mxu0
    %v4559 = vpop.f32.mrb[0].mxu0
    %v4560 = vpop.f32.mrb[0].mxu0
    %4561 = vdwg.mxu0
    %4562 = vmatprep.subr.bf16.mxu0 %v1959
    %4563 = vmatpush1.bf16.xpose.msra.mxu0 %v1958
    %4564 = vmatprep.subr.bf16.mxu0 0
    %4565 = vmatpush1.bf16.xpose.msra.mxu0 0
    %4566 = vmatprep.subr.bf16.mxu0 0
    %4567 = vmatpush1.bf16.xpose.msra.mxu0 0
    %4568 = vmatprep.subr.bf16.mxu0 0
    %4569 = vmatpush1.bf16.xpose.msra.mxu0 0
    %4570 = vmatprep.subr.bf16.mxu0 0
    %4571 = vmatpush1.bf16.xpose.msra.mxu0 0
    %4572 = vmatprep.subr.bf16.mxu0 0
    %4573 = vmatpush1.bf16.xpose.msra.mxu0 0
    %4574 = vmatprep.subr.bf16.mxu0 0
    %4575 = vmatpush1.bf16.xpose.msra.mxu0 0
    %4576 = vmatprep.subr.bf16.mxu0 0
    %4577 = vmatpush1.bf16.xpose.msra.mxu0 0
    %4578 = vmatprep.subr.bf16.mxu0 0
    %4579 = vmatpush1.bf16.xpose.msra.mxu0 0
    %4580 = vmatprep.subr.bf16.mxu0 0
    %4581 = vmatpush1.bf16.xpose.msra.mxu0 0
    %4582 = vmatprep.subr.bf16.mxu0 0
    %4583 = vmatpush1.bf16.xpose.msra.mxu0 0
    %4584 = vmatprep.subr.bf16.mxu0 0
    %4585 = vmatpush1.bf16.xpose.msra.mxu0 0
    %4586 = vmatprep.subr.bf16.mxu0 0
    %4587 = vmatpush1.bf16.xpose.msra.mxu0 0
    %4588 = vmatprep.subr.bf16.mxu0 0
    %4589 = vmatpush1.bf16.xpose.msra.mxu0 0
    %4590 = vmatprep.subr.bf16.mxu0 0
    %4591 = vmatpush1.bf16.xpose.msra.mxu0 0
    %4592 = vmatprep.subr.bf16.mxu0 0
    %4593 = vmatpush1.bf16.xpose.msra.mxu0 0
    %4594 = vmatprep.mubr.bf16.mxu0 %v995
    %4595 = vmatmul.mubr.bf16.gmra.mrb[0].mxu0 %v981
    %v4596 = vpop.f32.mrb[0].mxu0
    %v4597 = vadd.f32 %v4557, %v4596
    %v4598 = vpop.f32.mrb[0].mxu0
    %v4599 = vpop.f32.mrb[0].mxu0
    %v4600 = vpop.f32.mrb[0].mxu0
    %4601 = vdwg.mxu0
    %4602 = vmatprep.subr.bf16.mxu0 %v1961
    %4603 = vmatpush1.bf16.xpose.msra.mxu0 %v1960
    %4604 = vmatprep.subr.bf16.mxu0 0
    %4605 = vmatpush1.bf16.xpose.msra.mxu0 0
    %4606 = vmatprep.subr.bf16.mxu0 0
    %4607 = vmatpush1.bf16.xpose.msra.mxu0 0
    %4608 = vmatprep.subr.bf16.mxu0 0
    %4609 = vmatpush1.bf16.xpose.msra.mxu0 0
    %4610 = vmatprep.subr.bf16.mxu0 0
    %4611 = vmatpush1.bf16.xpose.msra.mxu0 0
    %4612 = vmatprep.subr.bf16.mxu0 0
    %4613 = vmatpush1.bf16.xpose.msra.mxu0 0
    %4614 = vmatprep.subr.bf16.mxu0 0
    %4615 = vmatpush1.bf16.xpose.msra.mxu0 0
    %4616 = vmatprep.subr.bf16.mxu0 0
    %4617 = vmatpush1.bf16.xpose.msra.mxu0 0
    %4618 = vmatprep.subr.bf16.mxu0 0
    %4619 = vmatpush1.bf16.xpose.msra.mxu0 0
    %4620 = vmatprep.subr.bf16.mxu0 0
    %4621 = vmatpush1.bf16.xpose.msra.mxu0 0
    %4622 = vmatprep.subr.bf16.mxu0 0
    %4623 = vmatpush1.bf16.xpose.msra.mxu0 0
    %4624 = vmatprep.subr.bf16.mxu0 0
    %4625 = vmatpush1.bf16.xpose.msra.mxu0 0
    %4626 = vmatprep.subr.bf16.mxu0 0
    %4627 = vmatpush1.bf16.xpose.msra.mxu0 0
    %4628 = vmatprep.subr.bf16.mxu0 0
    %4629 = vmatpush1.bf16.xpose.msra.mxu0 0
    %4630 = vmatprep.subr.bf16.mxu0 0
    %4631 = vmatpush1.bf16.xpose.msra.mxu0 0
    %4632 = vmatprep.subr.bf16.mxu0 0
    %4633 = vmatpush1.bf16.xpose.msra.mxu0 0
    %4634 = vmatprep.mubr.bf16.mxu0 %v1005
    %4635 = vmatmul.mubr.bf16.gmra.mrb[0].mxu0 %v1003
    %v4636 = vpop.f32.mrb[0].mxu0
    %v4637 = vadd.f32 %v4597, %v4636
    %v4638 = vpop.f32.mrb[0].mxu0
    %v4639 = vpop.f32.mrb[0].mxu0
    %v4640 = vpop.f32.mrb[0].mxu0
    %4641 = vdwg.mxu0
    %4642 = vmatprep.subr.bf16.mxu0 %v1963
    %4643 = vmatpush1.bf16.xpose.msra.mxu0 %v1962
    %4644 = vmatprep.subr.bf16.mxu0 0
    %4645 = vmatpush1.bf16.xpose.msra.mxu0 0
    %4646 = vmatprep.subr.bf16.mxu0 0
    %4647 = vmatpush1.bf16.xpose.msra.mxu0 0
    %4648 = vmatprep.subr.bf16.mxu0 0
    %4649 = vmatpush1.bf16.xpose.msra.mxu0 0
    %4650 = vmatprep.subr.bf16.mxu0 0
    %4651 = vmatpush1.bf16.xpose.msra.mxu0 0
    %4652 = vmatprep.subr.bf16.mxu0 0
    %4653 = vmatpush1.bf16.xpose.msra.mxu0 0
    %4654 = vmatprep.subr.bf16.mxu0 0
    %4655 = vmatpush1.bf16.xpose.msra.mxu0 0
    %4656 = vmatprep.subr.bf16.mxu0 0
    %4657 = vmatpush1.bf16.xpose.msra.mxu0 0
    %4658 = vmatprep.subr.bf16.mxu0 0
    %4659 = vmatpush1.bf16.xpose.msra.mxu0 0
    %4660 = vmatprep.subr.bf16.mxu0 0
    %4661 = vmatpush1.bf16.xpose.msra.mxu0 0
    %4662 = vmatprep.subr.bf16.mxu0 0
    %4663 = vmatpush1.bf16.xpose.msra.mxu0 0
    %4664 = vmatprep.subr.bf16.mxu0 0
    %4665 = vmatpush1.bf16.xpose.msra.mxu0 0
    %4666 = vmatprep.subr.bf16.mxu0 0
    %4667 = vmatpush1.bf16.xpose.msra.mxu0 0
    %4668 = vmatprep.subr.bf16.mxu0 0
    %4669 = vmatpush1.bf16.xpose.msra.mxu0 0
    %4670 = vmatprep.subr.bf16.mxu0 0
    %4671 = vmatpush1.bf16.xpose.msra.mxu0 0
    %4672 = vmatprep.subr.bf16.mxu0 0
    %4673 = vmatpush1.bf16.xpose.msra.mxu0 0
    %4674 = vmatprep.mubr.bf16.mxu0 %v1002
    %4675 = vmatmul.mubr.bf16.gmra.mrb[0].mxu0 %v988
    %v4676 = vpop.f32.mrb[0].mxu0
    %v4677 = vadd.f32 %v4637, %v4676
    %v4678 = vpop.f32.mrb[0].mxu0
    %v4679 = vpop.f32.mrb[0].mxu0
    %v4680 = vpop.f32.mrb[0].mxu0
    %4681 = vdwg.mxu0
    %4682 = vmatprep.subr.bf16.mxu0 %v1965
    %4683 = vmatpush1.bf16.xpose.msra.mxu0 %v1964
    %4684 = vmatprep.subr.bf16.mxu0 0
    %4685 = vmatpush1.bf16.xpose.msra.mxu0 0
    %4686 = vmatprep.subr.bf16.mxu0 0
    %4687 = vmatpush1.bf16.xpose.msra.mxu0 0
    %4688 = vmatprep.subr.bf16.mxu0 0
    %4689 = vmatpush1.bf16.xpose.msra.mxu0 0
    %4690 = vmatprep.subr.bf16.mxu0 0
    %4691 = vmatpush1.bf16.xpose.msra.mxu0 0
    %4692 = vmatprep.subr.bf16.mxu0 0
    %4693 = vmatpush1.bf16.xpose.msra.mxu0 0
    %4694 = vmatprep.subr.bf16.mxu0 0
    %4695 = vmatpush1.bf16.xpose.msra.mxu0 0
    %4696 = vmatprep.subr.bf16.mxu0 0
    %4697 = vmatpush1.bf16.xpose.msra.mxu0 0
    %4698 = vmatprep.subr.bf16.mxu0 0
    %4699 = vmatpush1.bf16.xpose.msra.mxu0 0
    %4700 = vmatprep.subr.bf16.mxu0 0
    %4701 = vmatpush1.bf16.xpose.msra.mxu0 0
    %4702 = vmatprep.subr.bf16.mxu0 0
    %4703 = vmatpush1.bf16.xpose.msra.mxu0 0
    %4704 = vmatprep.subr.bf16.mxu0 0
    %4705 = vmatpush1.bf16.xpose.msra.mxu0 0
    %4706 = vmatprep.subr.bf16.mxu0 0
    %4707 = vmatpush1.bf16.xpose.msra.mxu0 0
    %4708 = vmatprep.subr.bf16.mxu0 0
    %4709 = vmatpush1.bf16.xpose.msra.mxu0 0
    %4710 = vmatprep.subr.bf16.mxu0 0
    %4711 = vmatpush1.bf16.xpose.msra.mxu0 0
    %4712 = vmatprep.subr.bf16.mxu0 0
    %4713 = vmatpush1.bf16.xpose.msra.mxu0 0
    %4714 = vmatprep.mubr.bf16.mxu0 %v1006
    %4715 = vmatmul.mubr.bf16.gmra.mrb[0].mxu0 %v1004
    %v4716 = vpop.f32.mrb[0].mxu0
    %v4717 = vadd.f32 %v4677, %v4716
    %v4718 = vpop.f32.mrb[0].mxu0
    %v4719 = vpop.f32.mrb[0].mxu0
    %v4720 = vpop.f32.mrb[0].mxu0
    %4721 = vdwg.mxu0
    %4722 = vmatprep.subr.bf16.mxu0 %v1967
    %4723 = vmatpush1.bf16.xpose.msra.mxu0 %v1966
    %4724 = vmatprep.subr.bf16.mxu0 0
    %4725 = vmatpush1.bf16.xpose.msra.mxu0 0
    %4726 = vmatprep.subr.bf16.mxu0 0
    %4727 = vmatpush1.bf16.xpose.msra.mxu0 0
    %4728 = vmatprep.subr.bf16.mxu0 0
    %4729 = vmatpush1.bf16.xpose.msra.mxu0 0
    %4730 = vmatprep.subr.bf16.mxu0 0
    %4731 = vmatpush1.bf16.xpose.msra.mxu0 0
    %4732 = vmatprep.subr.bf16.mxu0 0
    %4733 = vmatpush1.bf16.xpose.msra.mxu0 0
    %4734 = vmatprep.subr.bf16.mxu0 0
    %4735 = vmatpush1.bf16.xpose.msra.mxu0 0
    %4736 = vmatprep.subr.bf16.mxu0 0
    %4737 = vmatpush1.bf16.xpose.msra.mxu0 0
    %4738 = vmatprep.subr.bf16.mxu0 0
    %4739 = vmatpush1.bf16.xpose.msra.mxu0 0
    %4740 = vmatprep.subr.bf16.mxu0 0
    %4741 = vmatpush1.bf16.xpose.msra.mxu0 0
    %4742 = vmatprep.subr.bf16.mxu0 0
    %4743 = vmatpush1.bf16.xpose.msra.mxu0 0
    %4744 = vmatprep.subr.bf16.mxu0 0
    %4745 = vmatpush1.bf16.xpose.msra.mxu0 0
    %4746 = vmatprep.subr.bf16.mxu0 0
    %4747 = vmatpush1.bf16.xpose.msra.mxu0 0
    %4748 = vmatprep.subr.bf16.mxu0 0
    %4749 = vmatpush1.bf16.xpose.msra.mxu0 0
    %4750 = vmatprep.subr.bf16.mxu0 0
    %4751 = vmatpush1.bf16.xpose.msra.mxu0 0
    %4752 = vmatprep.subr.bf16.mxu0 0
    %4753 = vmatpush1.bf16.xpose.msra.mxu0 0
    %4754 = vmatprep.mubr.bf16.mxu0 %v1044
    %4755 = vmatmul.mubr.bf16.gmra.mrb[0].mxu0 %v1030
    %v4756 = vpop.f32.mrb[0].mxu0
    %v4757 = vadd.f32 %v4717, %v4756
    %v4758 = vpop.f32.mrb[0].mxu0
    %v4759 = vpop.f32.mrb[0].mxu0
    %v4760 = vpop.f32.mrb[0].mxu0
    %4761 = vdwg.mxu0
    %4762 = vmatprep.subr.bf16.mxu0 %v1969
    %4763 = vmatpush1.bf16.xpose.msra.mxu0 %v1968
    %4764 = vmatprep.subr.bf16.mxu0 0
    %4765 = vmatpush1.bf16.xpose.msra.mxu0 0
    %4766 = vmatprep.subr.bf16.mxu0 0
    %4767 = vmatpush1.bf16.xpose.msra.mxu0 0
    %4768 = vmatprep.subr.bf16.mxu0 0
    %4769 = vmatpush1.bf16.xpose.msra.mxu0 0
    %4770 = vmatprep.subr.bf16.mxu0 0
    %4771 = vmatpush1.bf16.xpose.msra.mxu0 0
    %4772 = vmatprep.subr.bf16.mxu0 0
    %4773 = vmatpush1.bf16.xpose.msra.mxu0 0
    %4774 = vmatprep.subr.bf16.mxu0 0
    %4775 = vmatpush1.bf16.xpose.msra.mxu0 0
    %4776 = vmatprep.subr.bf16.mxu0 0
    %4777 = vmatpush1.bf16.xpose.msra.mxu0 0
    %4778 = vmatprep.subr.bf16.mxu0 0
    %4779 = vmatpush1.bf16.xpose.msra.mxu0 0
    %4780 = vmatprep.subr.bf16.mxu0 0
    %4781 = vmatpush1.bf16.xpose.msra.mxu0 0
    %4782 = vmatprep.subr.bf16.mxu0 0
    %4783 = vmatpush1.bf16.xpose.msra.mxu0 0
    %4784 = vmatprep.subr.bf16.mxu0 0
    %4785 = vmatpush1.bf16.xpose.msra.mxu0 0
    %4786 = vmatprep.subr.bf16.mxu0 0
    %4787 = vmatpush1.bf16.xpose.msra.mxu0 0
    %4788 = vmatprep.subr.bf16.mxu0 0
    %4789 = vmatpush1.bf16.xpose.msra.mxu0 0
    %4790 = vmatprep.subr.bf16.mxu0 0
    %4791 = vmatpush1.bf16.xpose.msra.mxu0 0
    %4792 = vmatprep.subr.bf16.mxu0 0
    %4793 = vmatpush1.bf16.xpose.msra.mxu0 0
    %4794 = vmatprep.mubr.bf16.mxu0 %v1054
    %4795 = vmatmul.mubr.bf16.gmra.mrb[0].mxu0 %v1052
    %v4796 = vpop.f32.mrb[0].mxu0
    %v4797 = vadd.f32 %v4757, %v4796
    %v4798 = vpop.f32.mrb[0].mxu0
    %v4799 = vpop.f32.mrb[0].mxu0
    %v4800 = vpop.f32.mrb[0].mxu0
    %4801 = vdwg.mxu0
    %4802 = vmatprep.subr.bf16.mxu0 %v1971
    %4803 = vmatpush1.bf16.xpose.msra.mxu0 %v1970
    %4804 = vmatprep.subr.bf16.mxu0 0
    %4805 = vmatpush1.bf16.xpose.msra.mxu0 0
    %4806 = vmatprep.subr.bf16.mxu0 0
    %4807 = vmatpush1.bf16.xpose.msra.mxu0 0
    %4808 = vmatprep.subr.bf16.mxu0 0
    %4809 = vmatpush1.bf16.xpose.msra.mxu0 0
    %4810 = vmatprep.subr.bf16.mxu0 0
    %4811 = vmatpush1.bf16.xpose.msra.mxu0 0
    %4812 = vmatprep.subr.bf16.mxu0 0
    %4813 = vmatpush1.bf16.xpose.msra.mxu0 0
    %4814 = vmatprep.subr.bf16.mxu0 0
    %4815 = vmatpush1.bf16.xpose.msra.mxu0 0
    %4816 = vmatprep.subr.bf16.mxu0 0
    %4817 = vmatpush1.bf16.xpose.msra.mxu0 0
    %4818 = vmatprep.subr.bf16.mxu0 0
    %4819 = vmatpush1.bf16.xpose.msra.mxu0 0
    %4820 = vmatprep.subr.bf16.mxu0 0
    %4821 = vmatpush1.bf16.xpose.msra.mxu0 0
    %4822 = vmatprep.subr.bf16.mxu0 0
    %4823 = vmatpush1.bf16.xpose.msra.mxu0 0
    %4824 = vmatprep.subr.bf16.mxu0 0
    %4825 = vmatpush1.bf16.xpose.msra.mxu0 0
    %4826 = vmatprep.subr.bf16.mxu0 0
    %4827 = vmatpush1.bf16.xpose.msra.mxu0 0
    %4828 = vmatprep.subr.bf16.mxu0 0
    %4829 = vmatpush1.bf16.xpose.msra.mxu0 0
    %4830 = vmatprep.subr.bf16.mxu0 0
    %4831 = vmatpush1.bf16.xpose.msra.mxu0 0
    %4832 = vmatprep.subr.bf16.mxu0 0
    %4833 = vmatpush1.bf16.xpose.msra.mxu0 0
    %4834 = vmatprep.mubr.bf16.mxu0 %v1051
    %4835 = vmatmul.mubr.bf16.gmra.mrb[0].mxu0 %v1037
    %v4836 = vpop.f32.mrb[0].mxu0
    %v4837 = vadd.f32 %v4797, %v4836
    %v4838 = vpop.f32.mrb[0].mxu0
    %v4839 = vpop.f32.mrb[0].mxu0
    %v4840 = vpop.f32.mrb[0].mxu0
    %4841 = vdwg.mxu0
    %4842 = vmatprep.subr.bf16.mxu0 %v1973
    %4843 = vmatpush1.bf16.xpose.msra.mxu0 %v1972
    %4844 = vmatprep.subr.bf16.mxu0 0
    %4845 = vmatpush1.bf16.xpose.msra.mxu0 0
    %4846 = vmatprep.subr.bf16.mxu0 0
    %4847 = vmatpush1.bf16.xpose.msra.mxu0 0
    %4848 = vmatprep.subr.bf16.mxu0 0
    %4849 = vmatpush1.bf16.xpose.msra.mxu0 0
    %4850 = vmatprep.subr.bf16.mxu0 0
    %4851 = vmatpush1.bf16.xpose.msra.mxu0 0
    %4852 = vmatprep.subr.bf16.mxu0 0
    %4853 = vmatpush1.bf16.xpose.msra.mxu0 0
    %4854 = vmatprep.subr.bf16.mxu0 0
    %4855 = vmatpush1.bf16.xpose.msra.mxu0 0
    %4856 = vmatprep.subr.bf16.mxu0 0
    %4857 = vmatpush1.bf16.xpose.msra.mxu0 0
    %4858 = vmatprep.subr.bf16.mxu0 0
    %4859 = vmatpush1.bf16.xpose.msra.mxu0 0
    %4860 = vmatprep.subr.bf16.mxu0 0
    %4861 = vmatpush1.bf16.xpose.msra.mxu0 0
    %4862 = vmatprep.subr.bf16.mxu0 0
    %4863 = vmatpush1.bf16.xpose.msra.mxu0 0
    %4864 = vmatprep.subr.bf16.mxu0 0
    %4865 = vmatpush1.bf16.xpose.msra.mxu0 0
    %4866 = vmatprep.subr.bf16.mxu0 0
    %4867 = vmatpush1.bf16.xpose.msra.mxu0 0
    %4868 = vmatprep.subr.bf16.mxu0 0
    %4869 = vmatpush1.bf16.xpose.msra.mxu0 0
    %4870 = vmatprep.subr.bf16.mxu0 0
    %4871 = vmatpush1.bf16.xpose.msra.mxu0 0
    %4872 = vmatprep.subr.bf16.mxu0 0
    %4873 = vmatpush1.bf16.xpose.msra.mxu0 0
    %4874 = vmatprep.mubr.bf16.mxu0 %v1055
    %4875 = vmatmul.mubr.bf16.gmra.mrb[0].mxu0 %v1053
    %v4876 = vpop.f32.mrb[0].mxu0
    %v4877 = vadd.f32 %v4837, %v4876
    %v4878 = vpop.f32.mrb[0].mxu0
    %v4879 = vpop.f32.mrb[0].mxu0
    %v4880 = vpop.f32.mrb[0].mxu0
    %4881 = vdwg.mxu0
    %4882 = vmatprep.subr.bf16.mxu0 %v1975
    %4883 = vmatpush1.bf16.xpose.msra.mxu0 %v1974
    %4884 = vmatprep.subr.bf16.mxu0 0
    %4885 = vmatpush1.bf16.xpose.msra.mxu0 0
    %4886 = vmatprep.subr.bf16.mxu0 0
    %4887 = vmatpush1.bf16.xpose.msra.mxu0 0
    %4888 = vmatprep.subr.bf16.mxu0 0
    %4889 = vmatpush1.bf16.xpose.msra.mxu0 0
    %4890 = vmatprep.subr.bf16.mxu0 0
    %4891 = vmatpush1.bf16.xpose.msra.mxu0 0
    %4892 = vmatprep.subr.bf16.mxu0 0
    %4893 = vmatpush1.bf16.xpose.msra.mxu0 0
    %4894 = vmatprep.subr.bf16.mxu0 0
    %4895 = vmatpush1.bf16.xpose.msra.mxu0 0
    %4896 = vmatprep.subr.bf16.mxu0 0
    %4897 = vmatpush1.bf16.xpose.msra.mxu0 0
    %4898 = vmatprep.subr.bf16.mxu0 0
    %4899 = vmatpush1.bf16.xpose.msra.mxu0 0
    %4900 = vmatprep.subr.bf16.mxu0 0
    %4901 = vmatpush1.bf16.xpose.msra.mxu0 0
    %4902 = vmatprep.subr.bf16.mxu0 0
    %4903 = vmatpush1.bf16.xpose.msra.mxu0 0
    %4904 = vmatprep.subr.bf16.mxu0 0
    %4905 = vmatpush1.bf16.xpose.msra.mxu0 0
    %4906 = vmatprep.subr.bf16.mxu0 0
    %4907 = vmatpush1.bf16.xpose.msra.mxu0 0
    %4908 = vmatprep.subr.bf16.mxu0 0
    %4909 = vmatpush1.bf16.xpose.msra.mxu0 0
    %4910 = vmatprep.subr.bf16.mxu0 0
    %4911 = vmatpush1.bf16.xpose.msra.mxu0 0
    %4912 = vmatprep.subr.bf16.mxu0 0
    %4913 = vmatpush1.bf16.xpose.msra.mxu0 0
    %4914 = vmatprep.mubr.bf16.mxu0 %v1093
    %4915 = vmatmul.mubr.bf16.gmra.mrb[0].mxu0 %v1079
    %v4916 = vpop.f32.mrb[0].mxu0
    %v4917 = vadd.f32 %v4877, %v4916
    %v4918 = vpop.f32.mrb[0].mxu0
    %v4919 = vpop.f32.mrb[0].mxu0
    %v4920 = vpop.f32.mrb[0].mxu0
    %4921 = vdwg.mxu0
    %4922 = vmatprep.subr.bf16.mxu0 %v1977
    %4923 = vmatpush1.bf16.xpose.msra.mxu0 %v1976
    %4924 = vmatprep.subr.bf16.mxu0 0
    %4925 = vmatpush1.bf16.xpose.msra.mxu0 0
    %4926 = vmatprep.subr.bf16.mxu0 0
    %4927 = vmatpush1.bf16.xpose.msra.mxu0 0
    %4928 = vmatprep.subr.bf16.mxu0 0
    %4929 = vmatpush1.bf16.xpose.msra.mxu0 0
    %4930 = vmatprep.subr.bf16.mxu0 0
    %4931 = vmatpush1.bf16.xpose.msra.mxu0 0
    %4932 = vmatprep.subr.bf16.mxu0 0
    %4933 = vmatpush1.bf16.xpose.msra.mxu0 0
    %4934 = vmatprep.subr.bf16.mxu0 0
    %4935 = vmatpush1.bf16.xpose.msra.mxu0 0
    %4936 = vmatprep.subr.bf16.mxu0 0
    %4937 = vmatpush1.bf16.xpose.msra.mxu0 0
    %4938 = vmatprep.subr.bf16.mxu0 0
    %4939 = vmatpush1.bf16.xpose.msra.mxu0 0
    %4940 = vmatprep.subr.bf16.mxu0 0
    %4941 = vmatpush1.bf16.xpose.msra.mxu0 0
    %4942 = vmatprep.subr.bf16.mxu0 0
    %4943 = vmatpush1.bf16.xpose.msra.mxu0 0
    %4944 = vmatprep.subr.bf16.mxu0 0
    %4945 = vmatpush1.bf16.xpose.msra.mxu0 0
    %4946 = vmatprep.subr.bf16.mxu0 0
    %4947 = vmatpush1.bf16.xpose.msra.mxu0 0
    %4948 = vmatprep.subr.bf16.mxu0 0
    %4949 = vmatpush1.bf16.xpose.msra.mxu0 0
    %4950 = vmatprep.subr.bf16.mxu0 0
    %4951 = vmatpush1.bf16.xpose.msra.mxu0 0
    %4952 = vmatprep.subr.bf16.mxu0 0
    %4953 = vmatpush1.bf16.xpose.msra.mxu0 0
    %4954 = vmatprep.mubr.bf16.mxu0 %v1103
    %4955 = vmatmul.mubr.bf16.gmra.mrb[0].mxu0 %v1101
    %v4956 = vpop.f32.mrb[0].mxu0
    %v4957 = vadd.f32 %v4917, %v4956
    %v4958 = vpop.f32.mrb[0].mxu0
    %v4959 = vpop.f32.mrb[0].mxu0
    %v4960 = vpop.f32.mrb[0].mxu0
    %4961 = vdwg.mxu0
    %4962 = vmatprep.subr.bf16.mxu0 %v1979
    %4963 = vmatpush1.bf16.xpose.msra.mxu0 %v1978
    %4964 = vmatprep.subr.bf16.mxu0 0
    %4965 = vmatpush1.bf16.xpose.msra.mxu0 0
    %4966 = vmatprep.subr.bf16.mxu0 0
    %4967 = vmatpush1.bf16.xpose.msra.mxu0 0
    %4968 = vmatprep.subr.bf16.mxu0 0
    %4969 = vmatpush1.bf16.xpose.msra.mxu0 0
    %4970 = vmatprep.subr.bf16.mxu0 0
    %4971 = vmatpush1.bf16.xpose.msra.mxu0 0
    %4972 = vmatprep.subr.bf16.mxu0 0
    %4973 = vmatpush1.bf16.xpose.msra.mxu0 0
    %4974 = vmatprep.subr.bf16.mxu0 0
    %4975 = vmatpush1.bf16.xpose.msra.mxu0 0
    %4976 = vmatprep.subr.bf16.mxu0 0
    %4977 = vmatpush1.bf16.xpose.msra.mxu0 0
    %4978 = vmatprep.subr.bf16.mxu0 0
    %4979 = vmatpush1.bf16.xpose.msra.mxu0 0
    %4980 = vmatprep.subr.bf16.mxu0 0
    %4981 = vmatpush1.bf16.xpose.msra.mxu0 0
    %4982 = vmatprep.subr.bf16.mxu0 0
    %4983 = vmatpush1.bf16.xpose.msra.mxu0 0
    %4984 = vmatprep.subr.bf16.mxu0 0
    %4985 = vmatpush1.bf16.xpose.msra.mxu0 0
    %4986 = vmatprep.subr.bf16.mxu0 0
    %4987 = vmatpush1.bf16.xpose.msra.mxu0 0
    %4988 = vmatprep.subr.bf16.mxu0 0
    %4989 = vmatpush1.bf16.xpose.msra.mxu0 0
    %4990 = vmatprep.subr.bf16.mxu0 0
    %4991 = vmatpush1.bf16.xpose.msra.mxu0 0
    %4992 = vmatprep.subr.bf16.mxu0 0
    %4993 = vmatpush1.bf16.xpose.msra.mxu0 0
    %4994 = vmatprep.mubr.bf16.mxu0 %v1100
    %4995 = vmatmul.mubr.bf16.gmra.mrb[0].mxu0 %v1086
    %v4996 = vpop.f32.mrb[0].mxu0
    %v4997 = vadd.f32 %v4957, %v4996
    %v4998 = vpop.f32.mrb[0].mxu0
    %v4999 = vpop.f32.mrb[0].mxu0
    %v5000 = vpop.f32.mrb[0].mxu0
    %5001 = vdwg.mxu0
    %5002 = vmatprep.subr.bf16.mxu0 %v1981
    %5003 = vmatpush1.bf16.xpose.msra.mxu0 %v1980
    %5004 = vmatprep.subr.bf16.mxu0 0
    %5005 = vmatpush1.bf16.xpose.msra.mxu0 0
    %5006 = vmatprep.subr.bf16.mxu0 0
    %5007 = vmatpush1.bf16.xpose.msra.mxu0 0
    %5008 = vmatprep.subr.bf16.mxu0 0
    %5009 = vmatpush1.bf16.xpose.msra.mxu0 0
    %5010 = vmatprep.subr.bf16.mxu0 0
    %5011 = vmatpush1.bf16.xpose.msra.mxu0 0
    %5012 = vmatprep.subr.bf16.mxu0 0
    %5013 = vmatpush1.bf16.xpose.msra.mxu0 0
    %5014 = vmatprep.subr.bf16.mxu0 0
    %5015 = vmatpush1.bf16.xpose.msra.mxu0 0
    %5016 = vmatprep.subr.bf16.mxu0 0
    %5017 = vmatpush1.bf16.xpose.msra.mxu0 0
    %5018 = vmatprep.subr.bf16.mxu0 0
    %5019 = vmatpush1.bf16.xpose.msra.mxu0 0
    %5020 = vmatprep.subr.bf16.mxu0 0
    %5021 = vmatpush1.bf16.xpose.msra.mxu0 0
    %5022 = vmatprep.subr.bf16.mxu0 0
    %5023 = vmatpush1.bf16.xpose.msra.mxu0 0
    %5024 = vmatprep.subr.bf16.mxu0 0
    %5025 = vmatpush1.bf16.xpose.msra.mxu0 0
    %5026 = vmatprep.subr.bf16.mxu0 0
    %5027 = vmatpush1.bf16.xpose.msra.mxu0 0
    %5028 = vmatprep.subr.bf16.mxu0 0
    %5029 = vmatpush1.bf16.xpose.msra.mxu0 0
    %5030 = vmatprep.subr.bf16.mxu0 0
    %5031 = vmatpush1.bf16.xpose.msra.mxu0 0
    %5032 = vmatprep.subr.bf16.mxu0 0
    %5033 = vmatpush1.bf16.xpose.msra.mxu0 0
    %5034 = vmatprep.mubr.bf16.mxu0 %v1104
    %5035 = vmatmul.mubr.bf16.gmra.mrb[0].mxu0 %v1102
    %v5036 = vpop.f32.mrb[0].mxu0
    %v5037 = vadd.f32 %v4997, %v5036
    %v5038 = vpop.f32.mrb[0].mxu0
    %v5039 = vpop.f32.mrb[0].mxu0
    %v5040 = vpop.f32.mrb[0].mxu0
    %5041 = vdwg.mxu0
    %5042 = vmatprep.subr.bf16.mxu0 %v1983
    %5043 = vmatpush1.bf16.xpose.msra.mxu0 %v1982
    %5044 = vmatprep.subr.bf16.mxu0 0
    %5045 = vmatpush1.bf16.xpose.msra.mxu0 0
    %5046 = vmatprep.subr.bf16.mxu0 0
    %5047 = vmatpush1.bf16.xpose.msra.mxu0 0
    %5048 = vmatprep.subr.bf16.mxu0 0
    %5049 = vmatpush1.bf16.xpose.msra.mxu0 0
    %5050 = vmatprep.subr.bf16.mxu0 0
    %5051 = vmatpush1.bf16.xpose.msra.mxu0 0
    %5052 = vmatprep.subr.bf16.mxu0 0
    %5053 = vmatpush1.bf16.xpose.msra.mxu0 0
    %5054 = vmatprep.subr.bf16.mxu0 0
    %5055 = vmatpush1.bf16.xpose.msra.mxu0 0
    %5056 = vmatprep.subr.bf16.mxu0 0
    %5057 = vmatpush1.bf16.xpose.msra.mxu0 0
    %5058 = vmatprep.subr.bf16.mxu0 0
    %5059 = vmatpush1.bf16.xpose.msra.mxu0 0
    %5060 = vmatprep.subr.bf16.mxu0 0
    %5061 = vmatpush1.bf16.xpose.msra.mxu0 0
    %5062 = vmatprep.subr.bf16.mxu0 0
    %5063 = vmatpush1.bf16.xpose.msra.mxu0 0
    %5064 = vmatprep.subr.bf16.mxu0 0
    %5065 = vmatpush1.bf16.xpose.msra.mxu0 0
    %5066 = vmatprep.subr.bf16.mxu0 0
    %5067 = vmatpush1.bf16.xpose.msra.mxu0 0
    %5068 = vmatprep.subr.bf16.mxu0 0
    %5069 = vmatpush1.bf16.xpose.msra.mxu0 0
    %5070 = vmatprep.subr.bf16.mxu0 0
    %5071 = vmatpush1.bf16.xpose.msra.mxu0 0
    %5072 = vmatprep.subr.bf16.mxu0 0
    %5073 = vmatpush1.bf16.xpose.msra.mxu0 0
    %5074 = vmatprep.mubr.bf16.mxu0 %v1142
    %5075 = vmatmul.mubr.bf16.gmra.mrb[0].mxu0 %v1128
    %v5076 = vpop.f32.mrb[0].mxu0
    %v5077 = vadd.f32 %v5037, %v5076
    %v5078 = vpop.f32.mrb[0].mxu0
    %v5079 = vpop.f32.mrb[0].mxu0
    %v5080 = vpop.f32.mrb[0].mxu0
    %5081 = vdwg.mxu0
    %5082 = vmatprep.subr.bf16.mxu0 %v1985
    %5083 = vmatpush1.bf16.xpose.msra.mxu0 %v1984
    %5084 = vmatprep.subr.bf16.mxu0 0
    %5085 = vmatpush1.bf16.xpose.msra.mxu0 0
    %5086 = vmatprep.subr.bf16.mxu0 0
    %5087 = vmatpush1.bf16.xpose.msra.mxu0 0
    %5088 = vmatprep.subr.bf16.mxu0 0
    %5089 = vmatpush1.bf16.xpose.msra.mxu0 0
    %5090 = vmatprep.subr.bf16.mxu0 0
    %5091 = vmatpush1.bf16.xpose.msra.mxu0 0
    %5092 = vmatprep.subr.bf16.mxu0 0
    %5093 = vmatpush1.bf16.xpose.msra.mxu0 0
    %5094 = vmatprep.subr.bf16.mxu0 0
    %5095 = vmatpush1.bf16.xpose.msra.mxu0 0
    %5096 = vmatprep.subr.bf16.mxu0 0
    %5097 = vmatpush1.bf16.xpose.msra.mxu0 0
    %5098 = vmatprep.subr.bf16.mxu0 0
    %5099 = vmatpush1.bf16.xpose.msra.mxu0 0
    %5100 = vmatprep.subr.bf16.mxu0 0
    %5101 = vmatpush1.bf16.xpose.msra.mxu0 0
    %5102 = vmatprep.subr.bf16.mxu0 0
    %5103 = vmatpush1.bf16.xpose.msra.mxu0 0
    %5104 = vmatprep.subr.bf16.mxu0 0
    %5105 = vmatpush1.bf16.xpose.msra.mxu0 0
    %5106 = vmatprep.subr.bf16.mxu0 0
    %5107 = vmatpush1.bf16.xpose.msra.mxu0 0
    %5108 = vmatprep.subr.bf16.mxu0 0
    %5109 = vmatpush1.bf16.xpose.msra.mxu0 0
    %5110 = vmatprep.subr.bf16.mxu0 0
    %5111 = vmatpush1.bf16.xpose.msra.mxu0 0
    %5112 = vmatprep.subr.bf16.mxu0 0
    %5113 = vmatpush1.bf16.xpose.msra.mxu0 0
    %5114 = vmatprep.mubr.bf16.mxu0 %v1152
    %5115 = vmatmul.mubr.bf16.gmra.mrb[0].mxu0 %v1150
    %v5116 = vpop.f32.mrb[0].mxu0
    %v5117 = vadd.f32 %v5077, %v5116
    %v5118 = vpop.f32.mrb[0].mxu0
    %v5119 = vpop.f32.mrb[0].mxu0
    %v5120 = vpop.f32.mrb[0].mxu0
    %5121 = vdwg.mxu0
    %5122 = vmatprep.subr.bf16.mxu0 %v1987
    %5123 = vmatpush1.bf16.xpose.msra.mxu0 %v1986
    %5124 = vmatprep.subr.bf16.mxu0 0
    %5125 = vmatpush1.bf16.xpose.msra.mxu0 0
    %5126 = vmatprep.subr.bf16.mxu0 0
    %5127 = vmatpush1.bf16.xpose.msra.mxu0 0
    %5128 = vmatprep.subr.bf16.mxu0 0
    %5129 = vmatpush1.bf16.xpose.msra.mxu0 0
    %5130 = vmatprep.subr.bf16.mxu0 0
    %5131 = vmatpush1.bf16.xpose.msra.mxu0 0
    %5132 = vmatprep.subr.bf16.mxu0 0
    %5133 = vmatpush1.bf16.xpose.msra.mxu0 0
    %5134 = vmatprep.subr.bf16.mxu0 0
    %5135 = vmatpush1.bf16.xpose.msra.mxu0 0
    %5136 = vmatprep.subr.bf16.mxu0 0
    %5137 = vmatpush1.bf16.xpose.msra.mxu0 0
    %5138 = vmatprep.subr.bf16.mxu0 0
    %5139 = vmatpush1.bf16.xpose.msra.mxu0 0
    %5140 = vmatprep.subr.bf16.mxu0 0
    %5141 = vmatpush1.bf16.xpose.msra.mxu0 0
    %5142 = vmatprep.subr.bf16.mxu0 0
    %5143 = vmatpush1.bf16.xpose.msra.mxu0 0
    %5144 = vmatprep.subr.bf16.mxu0 0
    %5145 = vmatpush1.bf16.xpose.msra.mxu0 0
    %5146 = vmatprep.subr.bf16.mxu0 0
    %5147 = vmatpush1.bf16.xpose.msra.mxu0 0
    %5148 = vmatprep.subr.bf16.mxu0 0
    %5149 = vmatpush1.bf16.xpose.msra.mxu0 0
    %5150 = vmatprep.subr.bf16.mxu0 0
    %5151 = vmatpush1.bf16.xpose.msra.mxu0 0
    %5152 = vmatprep.subr.bf16.mxu0 0
    %5153 = vmatpush1.bf16.xpose.msra.mxu0 0
    %5154 = vmatprep.mubr.bf16.mxu0 %v1149
    %5155 = vmatmul.mubr.bf16.gmra.mrb[0].mxu0 %v1135
    %v5156 = vpop.f32.mrb[0].mxu0
    %v5157 = vadd.f32 %v5117, %v5156
    %v5158 = vpop.f32.mrb[0].mxu0
    %v5159 = vpop.f32.mrb[0].mxu0
    %v5160 = vpop.f32.mrb[0].mxu0
    %5161 = vdwg.mxu0
    %5162 = vmatprep.subr.bf16.mxu0 %v1989
    %5163 = vmatpush1.bf16.xpose.msra.mxu0 %v1988
    %5164 = vmatprep.subr.bf16.mxu0 0
    %5165 = vmatpush1.bf16.xpose.msra.mxu0 0
    %5166 = vmatprep.subr.bf16.mxu0 0
    %5167 = vmatpush1.bf16.xpose.msra.mxu0 0
    %5168 = vmatprep.subr.bf16.mxu0 0
    %5169 = vmatpush1.bf16.xpose.msra.mxu0 0
    %5170 = vmatprep.subr.bf16.mxu0 0
    %5171 = vmatpush1.bf16.xpose.msra.mxu0 0
    %5172 = vmatprep.subr.bf16.mxu0 0
    %5173 = vmatpush1.bf16.xpose.msra.mxu0 0
    %5174 = vmatprep.subr.bf16.mxu0 0
    %5175 = vmatpush1.bf16.xpose.msra.mxu0 0
    %5176 = vmatprep.subr.bf16.mxu0 0
    %5177 = vmatpush1.bf16.xpose.msra.mxu0 0
    %5178 = vmatprep.subr.bf16.mxu0 0
    %5179 = vmatpush1.bf16.xpose.msra.mxu0 0
    %5180 = vmatprep.subr.bf16.mxu0 0
    %5181 = vmatpush1.bf16.xpose.msra.mxu0 0
    %5182 = vmatprep.subr.bf16.mxu0 0
    %5183 = vmatpush1.bf16.xpose.msra.mxu0 0
    %5184 = vmatprep.subr.bf16.mxu0 0
    %5185 = vmatpush1.bf16.xpose.msra.mxu0 0
    %5186 = vmatprep.subr.bf16.mxu0 0
    %5187 = vmatpush1.bf16.xpose.msra.mxu0 0
    %5188 = vmatprep.subr.bf16.mxu0 0
    %5189 = vmatpush1.bf16.xpose.msra.mxu0 0
    %5190 = vmatprep.subr.bf16.mxu0 0
    %5191 = vmatpush1.bf16.xpose.msra.mxu0 0
    %5192 = vmatprep.subr.bf16.mxu0 0
    %5193 = vmatpush1.bf16.xpose.msra.mxu0 0
    %5194 = vmatprep.mubr.bf16.mxu0 %v1153
    %5195 = vmatmul.mubr.bf16.gmra.mrb[0].mxu0 %v1151
    %v5196 = vpop.f32.mrb[0].mxu0
    %v5197 = vadd.f32 %v5157, %v5196
    %v5198 = vpop.f32.mrb[0].mxu0
    %v5199 = vpop.f32.mrb[0].mxu0
    %v5200 = vpop.f32.mrb[0].mxu0
    %5201 = vdwg.mxu0
    %5202 = vmatprep.subr.bf16.mxu0 %v1991
    %5203 = vmatpush1.bf16.xpose.msra.mxu0 %v1990
    %5204 = vmatprep.subr.bf16.mxu0 0
    %5205 = vmatpush1.bf16.xpose.msra.mxu0 0
    %5206 = vmatprep.subr.bf16.mxu0 0
    %5207 = vmatpush1.bf16.xpose.msra.mxu0 0
    %5208 = vmatprep.subr.bf16.mxu0 0
    %5209 = vmatpush1.bf16.xpose.msra.mxu0 0
    %5210 = vmatprep.subr.bf16.mxu0 0
    %5211 = vmatpush1.bf16.xpose.msra.mxu0 0
    %5212 = vmatprep.subr.bf16.mxu0 0
    %5213 = vmatpush1.bf16.xpose.msra.mxu0 0
    %5214 = vmatprep.subr.bf16.mxu0 0
    %5215 = vmatpush1.bf16.xpose.msra.mxu0 0
    %5216 = vmatprep.subr.bf16.mxu0 0
    %5217 = vmatpush1.bf16.xpose.msra.mxu0 0
    %5218 = vmatprep.subr.bf16.mxu0 0
    %5219 = vmatpush1.bf16.xpose.msra.mxu0 0
    %5220 = vmatprep.subr.bf16.mxu0 0
    %5221 = vmatpush1.bf16.xpose.msra.mxu0 0
    %5222 = vmatprep.subr.bf16.mxu0 0
    %5223 = vmatpush1.bf16.xpose.msra.mxu0 0
    %5224 = vmatprep.subr.bf16.mxu0 0
    %5225 = vmatpush1.bf16.xpose.msra.mxu0 0
    %5226 = vmatprep.subr.bf16.mxu0 0
    %5227 = vmatpush1.bf16.xpose.msra.mxu0 0
    %5228 = vmatprep.subr.bf16.mxu0 0
    %5229 = vmatpush1.bf16.xpose.msra.mxu0 0
    %5230 = vmatprep.subr.bf16.mxu0 0
    %5231 = vmatpush1.bf16.xpose.msra.mxu0 0
    %5232 = vmatprep.subr.bf16.mxu0 0
    %5233 = vmatpush1.bf16.xpose.msra.mxu0 0
    %5234 = vmatprep.mubr.bf16.mxu0 %v1191
    %5235 = vmatmul.mubr.bf16.gmra.mrb[0].mxu0 %v1177
    %v5236 = vpop.f32.mrb[0].mxu0
    %v5237 = vadd.f32 %v5197, %v5236
    %v5238 = vpop.f32.mrb[0].mxu0
    %v5239 = vpop.f32.mrb[0].mxu0
    %v5240 = vpop.f32.mrb[0].mxu0
    %5241 = vdwg.mxu0
    %5242 = vmatprep.subr.bf16.mxu0 %v1993
    %5243 = vmatpush1.bf16.xpose.msra.mxu0 %v1992
    %5244 = vmatprep.subr.bf16.mxu0 0
    %5245 = vmatpush1.bf16.xpose.msra.mxu0 0
    %5246 = vmatprep.subr.bf16.mxu0 0
    %5247 = vmatpush1.bf16.xpose.msra.mxu0 0
    %5248 = vmatprep.subr.bf16.mxu0 0
    %5249 = vmatpush1.bf16.xpose.msra.mxu0 0
    %5250 = vmatprep.subr.bf16.mxu0 0
    %5251 = vmatpush1.bf16.xpose.msra.mxu0 0
    %5252 = vmatprep.subr.bf16.mxu0 0
    %5253 = vmatpush1.bf16.xpose.msra.mxu0 0
    %5254 = vmatprep.subr.bf16.mxu0 0
    %5255 = vmatpush1.bf16.xpose.msra.mxu0 0
    %5256 = vmatprep.subr.bf16.mxu0 0
    %5257 = vmatpush1.bf16.xpose.msra.mxu0 0
    %5258 = vmatprep.subr.bf16.mxu0 0
    %5259 = vmatpush1.bf16.xpose.msra.mxu0 0
    %5260 = vmatprep.subr.bf16.mxu0 0
    %5261 = vmatpush1.bf16.xpose.msra.mxu0 0
    %5262 = vmatprep.subr.bf16.mxu0 0
    %5263 = vmatpush1.bf16.xpose.msra.mxu0 0
    %5264 = vmatprep.subr.bf16.mxu0 0
    %5265 = vmatpush1.bf16.xpose.msra.mxu0 0
    %5266 = vmatprep.subr.bf16.mxu0 0
    %5267 = vmatpush1.bf16.xpose.msra.mxu0 0
    %5268 = vmatprep.subr.bf16.mxu0 0
    %5269 = vmatpush1.bf16.xpose.msra.mxu0 0
    %5270 = vmatprep.subr.bf16.mxu0 0
    %5271 = vmatpush1.bf16.xpose.msra.mxu0 0
    %5272 = vmatprep.subr.bf16.mxu0 0
    %5273 = vmatpush1.bf16.xpose.msra.mxu0 0
    %5274 = vmatprep.mubr.bf16.mxu0 %v1201
    %5275 = vmatmul.mubr.bf16.gmra.mrb[0].mxu0 %v1199
    %v5276 = vpop.f32.mrb[0].mxu0
    %v5277 = vadd.f32 %v5237, %v5276
    %v5278 = vpop.f32.mrb[0].mxu0
    %v5279 = vpop.f32.mrb[0].mxu0
    %v5280 = vpop.f32.mrb[0].mxu0
    %5281 = vdwg.mxu0
    %5282 = vmatprep.subr.bf16.mxu0 %v1995
    %5283 = vmatpush1.bf16.xpose.msra.mxu0 %v1994
    %5284 = vmatprep.subr.bf16.mxu0 0
    %5285 = vmatpush1.bf16.xpose.msra.mxu0 0
    %5286 = vmatprep.subr.bf16.mxu0 0
    %5287 = vmatpush1.bf16.xpose.msra.mxu0 0
    %5288 = vmatprep.subr.bf16.mxu0 0
    %5289 = vmatpush1.bf16.xpose.msra.mxu0 0
    %5290 = vmatprep.subr.bf16.mxu0 0
    %5291 = vmatpush1.bf16.xpose.msra.mxu0 0
    %5292 = vmatprep.subr.bf16.mxu0 0
    %5293 = vmatpush1.bf16.xpose.msra.mxu0 0
    %5294 = vmatprep.subr.bf16.mxu0 0
    %5295 = vmatpush1.bf16.xpose.msra.mxu0 0
    %5296 = vmatprep.subr.bf16.mxu0 0
    %5297 = vmatpush1.bf16.xpose.msra.mxu0 0
    %5298 = vmatprep.subr.bf16.mxu0 0
    %5299 = vmatpush1.bf16.xpose.msra.mxu0 0
    %5300 = vmatprep.subr.bf16.mxu0 0
    %5301 = vmatpush1.bf16.xpose.msra.mxu0 0
    %5302 = vmatprep.subr.bf16.mxu0 0
    %5303 = vmatpush1.bf16.xpose.msra.mxu0 0
    %5304 = vmatprep.subr.bf16.mxu0 0
    %5305 = vmatpush1.bf16.xpose.msra.mxu0 0
    %5306 = vmatprep.subr.bf16.mxu0 0
    %5307 = vmatpush1.bf16.xpose.msra.mxu0 0
    %5308 = vmatprep.subr.bf16.mxu0 0
    %5309 = vmatpush1.bf16.xpose.msra.mxu0 0
    %5310 = vmatprep.subr.bf16.mxu0 0
    %5311 = vmatpush1.bf16.xpose.msra.mxu0 0
    %5312 = vmatprep.subr.bf16.mxu0 0
    %5313 = vmatpush1.bf16.xpose.msra.mxu0 0
    %5314 = vmatprep.mubr.bf16.mxu0 %v1198
    %5315 = vmatmul.mubr.bf16.gmra.mrb[0].mxu0 %v1184
    %v5316 = vpop.f32.mrb[0].mxu0
    %v5317 = vadd.f32 %v5277, %v5316
    %v5318 = vpop.f32.mrb[0].mxu0
    %v5319 = vpop.f32.mrb[0].mxu0
    %v5320 = vpop.f32.mrb[0].mxu0
    %5321 = vdwg.mxu0
    %5322 = vmatprep.subr.bf16.mxu0 0
    %5323 = vmatpush1.bf16.xpose.msra.mxu0 %v2160
    %5324 = vmatprep.subr.bf16.mxu0 0
    %5325 = vmatpush1.bf16.xpose.msra.mxu0 0
    %5326 = vmatprep.subr.bf16.mxu0 0
    %5327 = vmatpush1.bf16.xpose.msra.mxu0 0
    %5328 = vmatprep.subr.bf16.mxu0 0
    %5329 = vmatpush1.bf16.xpose.msra.mxu0 0
    %5330 = vmatprep.subr.bf16.mxu0 0
    %5331 = vmatpush1.bf16.xpose.msra.mxu0 0
    %5332 = vmatprep.subr.bf16.mxu0 0
    %5333 = vmatpush1.bf16.xpose.msra.mxu0 0
    %5334 = vmatprep.subr.bf16.mxu0 0
    %5335 = vmatpush1.bf16.xpose.msra.mxu0 0
    %5336 = vmatprep.subr.bf16.mxu0 0
    %5337 = vmatpush1.bf16.xpose.msra.mxu0 0
    %5338 = vmatprep.subr.bf16.mxu0 0
    %5339 = vmatpush1.bf16.xpose.msra.mxu0 0
    %5340 = vmatprep.subr.bf16.mxu0 0
    %5341 = vmatpush1.bf16.xpose.msra.mxu0 0
    %5342 = vmatprep.subr.bf16.mxu0 0
    %5343 = vmatpush1.bf16.xpose.msra.mxu0 0
    %5344 = vmatprep.subr.bf16.mxu0 0
    %5345 = vmatpush1.bf16.xpose.msra.mxu0 0
    %5346 = vmatprep.subr.bf16.mxu0 0
    %5347 = vmatpush1.bf16.xpose.msra.mxu0 0
    %5348 = vmatprep.subr.bf16.mxu0 0
    %5349 = vmatpush1.bf16.xpose.msra.mxu0 0
    %5350 = vmatprep.subr.bf16.mxu0 0
    %5351 = vmatpush1.bf16.xpose.msra.mxu0 0
    %5352 = vmatprep.subr.bf16.mxu0 0
    %5353 = vmatpush1.bf16.xpose.msra.mxu0 0
    %5354 = vmatprep.mubr.bf16.mxu0 0
    %5355 = vmatmul.mubr.bf16.gmra.mrb[0].mxu0 %v2157
    %v5356 = vpop.f32.mrb[0].mxu0
    %v5357 = vadd.f32 %v5317, %v5356
    %v5358 = vpop.f32.mrb[0].mxu0
    %v5359 = vpop.f32.mrb[0].mxu0
    %v5360 = vpop.f32.mrb[0].mxu0
    %5361 = vdwg.mxu0
    %vm5362 = vcmask 74752
    %5363 = vst.msk [vmem:[#allocation2] sm:$0x3] %vm5362, %v5357
    // Predicated region
    $region14: #{cnn_forward.5} parent=1 // pred_check
      _
    $region15: #{cnn_forward.5} parent=1 // pred_check_branch
      %5365 = sbr.rel (0) target = $region17
    $region16: #{cnn_forward.5} parent=1 // pred_region
      %s5367 = ssub.s32 32, 32
      %5368 = vsyncadd [#allocation3], %s5367
      %s5370 = sshll.u32 [#allocation2], 4
      %s5371 = int_to_ptr.vmem [resolvable:$true] %s5370
      %5373 = dma.vmem_to_hbm [thread:$0]  %s5371, 32, %s3, [#allocation3]
    $region17: #{cnn_forward.5} parent=1 // pred_fallthru
      _
    // Predicated region
    $region18: #{cnn_forward.5} parent=1 // pred_check
      _
    $region19: #{cnn_forward.5} parent=1 // pred_check_branch
      %5375 = sbr.rel (0) target = $region21
    $region20: #{cnn_forward.5} parent=1 // pred_region
      %5376 = dma.done [#allocation3], 32
    $region21: #{cnn_forward.5} parent=1 // pred_fallthru
      _
    %5377 = vsyncpa [#allocation3], 1

</llo_original>
